<compile_context>
chip_gen: v7x
topology: tpu7x:2x2x1
jax: 0.10.0
libtpu: 0.0.40
codegen_flags: <defaults>
</compile_context>

<pallas_src>
import functools
import math

import jax
import jax.numpy as jnp
from jax import lax
from jax.experimental import pallas as pl
from jax.experimental.pallas import tpu as pltpu

LN_EPS = 1e-12


def _pick_vmem_limit():
    # Per-generation scoped-VMEM budget: <= 48 MiB and <= half of physical VMEM.
    try:
        cap = int(pltpu.get_tpu_info().vmem_capacity_bytes)
    except Exception:
        cap = 64 * 1024 * 1024
    return max(16 * 1024 * 1024, min(48 * 1024 * 1024, cap // 2))


_VMEM_LIMIT = _pick_vmem_limit()


def _round_up(x, m):
    return ((x + m - 1) // m) * m


def _pick_tile(dim, pref):
    """Largest multiple of 128 <= pref that divides round_up(dim, 128)."""
    dp = _round_up(dim, 128)
    best, t = 128, 128
    while t <= min(pref, dp):
        if dp % t == 0:
            best = t
        t += 128
    return best, dp


def _gelu_tanh(y):
    c = math.sqrt(2.0 / math.pi)
    return 0.5 * y * (1.0 + jnp.tanh(c * (y + 0.044715 * y * y * y)))


# ----------------------------------------------------------------------------
# Pallas kernels
# ----------------------------------------------------------------------------
def _mm_kernel(a_ref, b_ref, bias_ref, o_ref, acc_ref, *, activation):
    """Tiled matmul, K-reduction grid axis last; bias + activation fused in the
    last-K epilogue."""
    k = pl.program_id(2)

    @pl.when(k == 0)
    def _():
        acc_ref[...] = jnp.zeros_like(acc_ref)

    acc_ref[...] += jnp.dot(a_ref[...], b_ref[...],
                            preferred_element_type=jnp.float32)

    @pl.when(k == pl.num_programs(2) - 1)
    def _():
        y = acc_ref[...] + bias_ref[...]
        if activation == "gelu":
            y = _gelu_tanh(y)
        o_ref[...] = y.astype(o_ref.dtype)


def _mm_res_ln_kernel(a_ref, b_ref, bias_ref, res_ref, g_ref, beta_ref,
                      o_ref, acc_ref):
    """Matmul with full-row output tile (tn = H); bias + residual add +
    LayerNorm fused into the last-K epilogue."""
    k = pl.program_id(1)

    @pl.when(k == 0)
    def _():
        acc_ref[...] = jnp.zeros_like(acc_ref)

    acc_ref[...] += jnp.dot(a_ref[...], b_ref[...],
                            preferred_element_type=jnp.float32)

    @pl.when(k == pl.num_programs(1) - 1)
    def _():
        y = acc_ref[...] + bias_ref[...] + res_ref[...].astype(jnp.float32)
        mean = jnp.mean(y, axis=-1, keepdims=True)
        d = y - mean
        var = jnp.mean(d * d, axis=-1, keepdims=True)
        o_ref[...] = (d * lax.rsqrt(var + LN_EPS) * g_ref[...]
                      + beta_ref[...]).astype(o_ref.dtype)


def _attn_kernel(q_ref, k_ref, v_ref, m_ref, o_ref, *, scale, g_heads, dh):
    """One (batch, head-group) slice of softmax(QK^T*scale + mask) @ V.
    Blocks are (1, S, G*dh) views straight into the fused QKV buffer."""
    qb = q_ref[0]            # (S, G*dh) bf16
    kb = k_ref[0]            # (S, G*dh) bf16
    vb = v_ref[0]            # (S, G*dh) bf16
    mb = m_ref[0]            # (1, S)    f32 key-side mask bias

    outs = []
    for g in range(g_heads):                       # static unroll (G small)
        lo, hi = g * dh, (g + 1) * dh
        s = lax.dot_general(qb[:, lo:hi], kb[:, lo:hi],
                            (((1,), (1,)), ((), ())),
                            preferred_element_type=jnp.float32)
        s = s * scale + mb                         # (S, S) f32
        mx = jnp.max(s, axis=-1, keepdims=True)
        p = jnp.exp(s - mx)
        denom = jnp.sum(p, axis=-1, keepdims=True)
        o = jnp.dot(p.astype(vb.dtype), vb[:, lo:hi],
                    preferred_element_type=jnp.float32)
        # Post-PV normalization on the EUP instead of S*S VPU divides.
        o = o * pl.reciprocal(denom, approx=True)
        outs.append(o)

    o_full = outs[0] if g_heads == 1 else jnp.concatenate(outs, axis=-1)
    o_ref[0] = o_full.astype(o_ref.dtype)          # (S, G*dh), lane-dense store


def _emb_ln_kernel(w_ref, p_ref, t_ref, g_ref, b_ref, o_ref):
    y = w_ref[...] + p_ref[...] + t_ref[...]
    mean = jnp.mean(y, axis=-1, keepdims=True)
    d = y - mean
    var = jnp.mean(d * d, axis=-1, keepdims=True)
    o_ref[...] = (d * lax.rsqrt(var + LN_EPS) * g_ref[...]
                  + b_ref[...]).astype(o_ref.dtype)


# ----------------------------------------------------------------------------
# pallas_call wrappers
# ----------------------------------------------------------------------------
def pallas_matmul_bias(a, b, bias, activation="none", out_dtype=jnp.bfloat16,
                       tm_pref=128, tn_pref=256, tk_pref=512):
    """a: (M, K), b: (K, N), bias: (N,) -> (M, N) out_dtype.
    Operands are used as bf16 (weights are pre-cast at init)."""
    M, K = a.shape
    K2, N = b.shape
    assert K == K2
    tm, Mp = _pick_tile(M, tm_pref)
    tn, Np = _pick_tile(N, tn_pref)
    tk, Kp = _pick_tile(K, tk_pref)

    a_p = a.astype(jnp.bfloat16)
    if (Mp, Kp) != (M, K):
        a_p = jnp.pad(a_p, ((0, Mp - M), (0, Kp - K)))
    b_p = b.astype(jnp.bfloat16)
    if (Kp, Np) != (K, N):
        b_p = jnp.pad(b_p, ((0, Kp - K), (0, Np - N)))
    bias_p = bias.astype(jnp.float32).reshape(1, N)
    if Np != N:
        bias_p = jnp.pad(bias_p, ((0, 0), (0, Np - N)))

    grid = (Mp // tm, Np // tn, Kp // tk)
    kernel = functools.partial(_mm_kernel, activation=activation)
    out = pl.pallas_call(
        kernel,
        out_shape=jax.ShapeDtypeStruct((Mp, Np), out_dtype),
        grid_spec=pltpu.PrefetchScalarGridSpec(
            num_scalar_prefetch=0,
            grid=grid,
            in_specs=[
                pl.BlockSpec((tm, tk), lambda i, j, k: (i, k)),
                pl.BlockSpec((tk, tn), lambda i, j, k: (k, j)),
                pl.BlockSpec((1, tn), lambda i, j, k: (0, j)),
            ],
            out_specs=pl.BlockSpec((tm, tn), lambda i, j, k: (i, j)),
            scratch_shapes=[pltpu.VMEM((tm, tn), jnp.float32)],
        ),
        compiler_params=pltpu.CompilerParams(
            dimension_semantics=("parallel", "parallel", "arbitrary"),
            vmem_limit_bytes=_VMEM_LIMIT,
        ),
    )(a_p, b_p, bias_p)
    if (Mp, Np) != (M, N):
        out = out[:M, :N]
    return out


def pallas_matmul_res_ln(a, b, bias, residual, gamma, beta,
                         out_dtype=jnp.bfloat16, tm_pref=128, tk_pref=512):
    """(a @ b + bias + residual) -> LayerNorm(gamma, beta). Output width N must
    be a multiple of 128 (BERT hidden sizes are)."""
    M, K = a.shape
    K2, N = b.shape
    assert K == K2 and N % 128 == 0
    tm, Mp = _pick_tile(M, tm_pref)
    tk, Kp = _pick_tile(K, tk_pref)

    a_p = a.astype(jnp.bfloat16)
    if (Mp, Kp) != (M, K):
        a_p = jnp.pad(a_p, ((0, Mp - M), (0, Kp - K)))
    b_p = b.astype(jnp.bfloat16)
    if Kp != K:
        b_p = jnp.pad(b_p, ((0, Kp - K), (0, 0)))
    res_p = residual.astype(jnp.bfloat16)
    if Mp != M:
        res_p = jnp.pad(res_p, ((0, Mp - M), (0, 0)))
    bias_p = bias.astype(jnp.float32).reshape(1, N)
    g_p = gamma.astype(jnp.float32).reshape(1, N)
    be_p = beta.astype(jnp.float32).reshape(1, N)

    grid = (Mp // tm, Kp // tk)
    out = pl.pallas_call(
        _mm_res_ln_kernel,
        out_shape=jax.ShapeDtypeStruct((Mp, N), out_dtype),
        grid_spec=pltpu.PrefetchScalarGridSpec(
            num_scalar_prefetch=0,
            grid=grid,
            in_specs=[
                pl.BlockSpec((tm, tk), lambda i, k: (i, k)),
                pl.BlockSpec((tk, N), lambda i, k: (k, 0)),
                pl.BlockSpec((1, N), lambda i, k: (0, 0)),
                pl.BlockSpec((tm, N), lambda i, k: (i, 0)),
                pl.BlockSpec((1, N), lambda i, k: (0, 0)),
                pl.BlockSpec((1, N), lambda i, k: (0, 0)),
            ],
            out_specs=pl.BlockSpec((tm, N), lambda i, k: (i, 0)),
            scratch_shapes=[pltpu.VMEM((tm, N), jnp.float32)],
        ),
        compiler_params=pltpu.CompilerParams(
            dimension_semantics=("parallel", "arbitrary"),
            vmem_limit_bytes=_VMEM_LIMIT,
        ),
    )(a_p, b_p, bias_p, res_p, g_p, be_p)
    if Mp != M:
        out = out[:M]
    return out


def pallas_attention(qkv, mask_bias, nh, dh):
    """qkv: (B, S, 3H) bf16, mask_bias: (B, 1, S) f32 -> (B, S, H) bf16.
    BlockSpec index maps slice Q/K/V head-groups directly out of the fused QKV
    buffer; no XLA split-heads transposes."""
    B, S, threeH = qkv.shape
    H = threeH // 3
    assert nh * dh == H

    # Smallest head-group G with (G*dh) lane-dense (multiple of 128) and nh % G == 0.
    G = 1
    for g in range(1, nh + 1):
        if nh % g == 0 and (g * dh) % 128 == 0:
            G = g
            break
    n_groups = nh // G
    Gd = G * dh

    kernel = functools.partial(_attn_kernel, scale=1.0 / math.sqrt(dh),
                               g_heads=G, dh=dh)
    return pl.pallas_call(
        kernel,
        out_shape=jax.ShapeDtypeStruct((B, S, H), jnp.bfloat16),
        grid_spec=pltpu.PrefetchScalarGridSpec(
            num_scalar_prefetch=0,
            grid=(B, n_groups),
            in_specs=[
                pl.BlockSpec((1, S, Gd), lambda b, g: (b, 0, g)),
                pl.BlockSpec((1, S, Gd), lambda b, g: (b, 0, n_groups + g)),
                pl.BlockSpec((1, S, Gd), lambda b, g: (b, 0, 2 * n_groups + g)),
                pl.BlockSpec((1, 1, S), lambda b, g: (b, 0, 0)),
            ],
            out_specs=pl.BlockSpec((1, S, Gd), lambda b, g: (b, 0, g)),
        ),
        compiler_params=pltpu.CompilerParams(
            dimension_semantics=("parallel", "parallel"),
            vmem_limit_bytes=_VMEM_LIMIT,
        ),
    )(qkv, qkv, qkv, mask_bias.astype(jnp.float32))


def pallas_emb_layernorm(w, p, t, gamma, beta):
    """Embedding sum + LayerNorm, row-tiled; output bf16."""
    M, H = w.shape
    rt, Mp = _pick_tile(M, 512)
    if Mp // rt < 2:  # keep >=2 parallel blocks when possible (v7x: 2 TCs)
        rt, Mp = _pick_tile(M, max(128, Mp // 2))

    def pad_rows(x):
        x = x.astype(jnp.float32)
        return jnp.pad(x, ((0, Mp - M), (0, 0))) if Mp != M else x

    args = [pad_rows(w), pad_rows(p), pad_rows(t),
            gamma.astype(jnp.float32).reshape(1, H),
            beta.astype(jnp.float32).reshape(1, H)]
    out = pl.pallas_call(
        _emb_ln_kernel,
        out_shape=jax.ShapeDtypeStruct((Mp, H), jnp.bfloat16),
        grid_spec=pltpu.PrefetchScalarGridSpec(
            num_scalar_prefetch=0,
            grid=(Mp // rt,),
            in_specs=[pl.BlockSpec((rt, H), lambda i: (i, 0))] * 3
                     + [pl.BlockSpec((1, H), lambda i: (0, 0))] * 2,
            out_specs=pl.BlockSpec((rt, H), lambda i: (i, 0)),
        ),
        compiler_params=pltpu.CompilerParams(
            dimension_semantics=("parallel",),
            vmem_limit_bytes=_VMEM_LIMIT,
        ),
    )(*args)
    return out[:M] if Mp != M else out


# ----------------------------------------------------------------------------
# BERT forward (glue: gathers / reshapes; compute: Pallas kernels)
# ----------------------------------------------------------------------------
def bert_embeddings(ep, input_ids, token_type_ids):
    B, S = input_ids.shape
    # Embedding gathers done in XLA glue (data-dependent gather).
    w = jnp.take(ep["word"], input_ids.reshape(-1), axis=0)        # (B*S, H)
    p = jnp.tile(ep["pos"][:S], (B, 1))                            # (B*S, H)
    t = jnp.take(ep["type"], token_type_ids.reshape(-1), axis=0)   # (B*S, H)
    return pallas_emb_layernorm(w, p, t, ep["ln_g"], ep["ln_b"])   # bf16


def bert_layer(lp, x, mask_bias, B, S, H, nh, dh):
    M = B * S
    # Fused QKV projection: one (H, 3H) matmul, bf16 out.
    qkv = pallas_matmul_bias(x, lp["qkv_w"], lp["qkv_b"])          # (M, 3H)
    ctx = pallas_attention(qkv.reshape(B, S, 3 * H), mask_bias, nh, dh)
    ctx = ctx.reshape(M, H)                                        # free reshape

    # Output projection + residual + LayerNorm fused.
    x = pallas_matmul_res_ln(ctx, lp["o_w"], lp["o_b"], x,
                             lp["ln1_g"], lp["ln1_b"])
    # FFN up (GELU fused) then down + residual + LayerNorm fused.
    inter = pallas_matmul_bias(x, lp["i_w"], lp["i_b"], activation="gelu")
    x = pallas_matmul_res_ln(inter, lp["f_w"], lp["f_b"], x,
                             lp["ln2_g"], lp["ln2_b"])
    return x


def cross_entropy(logits, labels):
    logits = logits.astype(jnp.float32)
    m = jnp.max(logits, axis=-1, keepdims=True)
    lse = m + jnp.log(jnp.sum(jnp.exp(logits - m), axis=-1, keepdims=True))
    logp = logits - lse
    nll = -jnp.take_along_axis(logp, labels[:, None], axis=1)[:, 0]
    return jnp.mean(nll)


def bert_classifier_forward(params, cfg, x, y):
    """Mirrors Bert_Classifier.forward: x is (input_ids, attention_mask) or
    (_, _, input_ids, attention_mask, token_type_ids); y are class labels.
    Returns (loss, logits) like the HF SequenceClassifierOutput."""
    if len(x) > 2:
        _, _, input_ids, attention_mask, token_type_ids = x
    else:
        input_ids, attention_mask = x
        token_type_ids = jnp.zeros_like(input_ids)

    B, S = input_ids.shape
    H, nh = cfg["hidden"], cfg["heads"]
    dh = H // nh

    hidden = bert_embeddings(params["emb"], input_ids, token_type_ids)  # (B*S, H) bf16

    # Key-side mask bias, kept at (B, 1, S); broadcast over heads via index_map.
    mask_bias = ((1.0 - attention_mask.astype(jnp.float32)) * -1e9)[:, None, :]

    for lp in params["layers"]:
        hidden = bert_layer(lp, hidden, mask_bias, B, S, H, nh, dh)

    # Pooler + classifier: tiny (M=B, N=n_classes) matmuls -> plain XLA; a Pallas
    # kernel here would pay 128-row padding + launch overhead and idle one TC.
    cls_tok = hidden.reshape(B, S, H)[:, 0, :].astype(jnp.float32)       # (B, H)
    pooled = jnp.tanh(cls_tok @ params["pooler_w"] + params["pooler_b"])
    logits = pooled @ params["cls_w"] + params["cls_b"]                  # (B, C)

    loss = cross_entropy(logits, y)
    return loss, logits


# ----------------------------------------------------------------------------
# Deterministic parameter initialization (synthetic small BERT config)
# ----------------------------------------------------------------------------
class KeyGen:
    def __init__(self, seed):
        self._key = jax.random.PRNGKey(seed)

    def __call__(self):
        self._key, sub = jax.random.split(self._key)
        return sub


def _dense(kg, cin, cout, dtype=jnp.float32):
    w = (0.02 * jax.random.normal(kg(), (cin, cout), jnp.float32)).astype(dtype)
    b = jnp.zeros((cout,), jnp.float32)
    return w, b


def init_params(cfg, seed=0):
    kg = KeyGen(seed)
    H, I = cfg["hidden"], cfg["intermediate"]
    emb = {
        "word": 0.02 * jax.random.normal(kg(), (cfg["vocab"], H), jnp.float32),
        "pos": 0.02 * jax.random.normal(kg(), (cfg["max_pos"], H), jnp.float32),
        "type": 0.02 * jax.random.normal(kg(), (cfg["type_vocab"], H), jnp.float32),
        "ln_g": jnp.ones((H,), jnp.float32),
        "ln_b": jnp.zeros((H,), jnp.float32),
    }
    layers = []
    for _ in range(cfg["layers"]):
        # Large encoder weights stored pre-cast to bf16 (no per-forward cast pass).
        qkv_w, qkv_b = _dense(kg, H, 3 * H, jnp.bfloat16)
        o_w, o_b = _dense(kg, H, H, jnp.bfloat16)
        i_w, i_b = _dense(kg, H, I, jnp.bfloat16)
        f_w, f_b = _dense(kg, I, H, jnp.bfloat16)
        layers.append({
            "qkv_w": qkv_w, "qkv_b": qkv_b,
            "o_w": o_w, "o_b": o_b,
            "ln1_g": jnp.ones((H,), jnp.float32), "ln1_b": jnp.zeros((H,), jnp.float32),
            "i_w": i_w, "i_b": i_b,
            "f_w": f_w, "f_b": f_b,
            "ln2_g": jnp.ones((H,), jnp.float32), "ln2_b": jnp.zeros((H,), jnp.float32),
        })
    pooler_w, pooler_b = _dense(kg, H, H)            # f32: used in XLA head
    cls_w, cls_b = _dense(kg, H, cfg["n_classes"])   # f32: used in XLA head
    return {"emb": emb, "layers": layers,
            "pooler_w": pooler_w, "pooler_b": pooler_b,
            "cls_w": cls_w, "cls_b": cls_b}


# ----------------------------------------------------------------------------
# Demo
# ----------------------------------------------------------------------------
if __name__ == "__main__":
    cfg = dict(vocab=1000, hidden=128, heads=2, layers=2, intermediate=512,
               max_pos=128, type_vocab=2, n_classes=5, seq=128, batch=2)

    params = init_params(cfg, seed=0)

    key = jax.random.PRNGKey(0)
    k1, k2 = jax.random.split(key)
    B, S = cfg["batch"], cfg["seq"]
    input_ids = jax.random.randint(k1, (B, S), 0, cfg["vocab"], dtype=jnp.int32)
    attention_mask = jnp.ones((B, S), jnp.int32).at[1, S - 32:].set(0)  # pad tail of item 1
    labels = jax.random.randint(k2, (B,), 0, cfg["n_classes"], dtype=jnp.int32)

    @jax.jit
    def run(params, input_ids, attention_mask, labels):
        return bert_classifier_forward(params, cfg, (input_ids, attention_mask), labels)

    loss, logits = run(params, input_ids, attention_mask, labels)
    loss, logits = jax.block_until_ready((loss, logits))

    assert logits.shape == (B, cfg["n_classes"]), logits.shape
    assert bool(jnp.isfinite(loss)) and bool(jnp.all(jnp.isfinite(logits)))
    print("KERNEL_OK")
</pallas_src>

<mosaic_0001>
module attributes {stable_mosaic.version = 11 : i64} {
  func.func @_mm_kernel(%arg0: i32, %arg1: i32, %arg2: i32, %arg3: memref<128x128xbf16, #tpu.memory_space<vmem>>, %arg4: memref<128x128xbf16, #tpu.memory_space<vmem>>, %arg5: memref<1x128xf32, #tpu.memory_space<vmem>>, %arg6: memref<128x128xbf16, #tpu.memory_space<vmem>>, %arg7: memref<128x128xf32, #tpu.memory_space<vmem>>) attributes {dimension_semantics = [#tpu.dimension_semantics<parallel>, #tpu.dimension_semantics<parallel>, #tpu.dimension_semantics<arbitrary>], iteration_bounds = array<i64: 2, 3, 1>, scalar_prefetch = 0 : i64, scratch_operands = 1 : i64, tpu.core_type = #tpu.core_type<tc>, window_params = [{transform_indices = @transform_0, window_bounds = array<i64: 128, 128>}, {transform_indices = @transform_1, window_bounds = array<i64: 128, 128>}, {transform_indices = @transform_2, window_bounds = array<i64: 1, 128>}, {transform_indices = @transform_3, window_bounds = array<i64: 128, 128>}]} {
    %c0_i32 = arith.constant 0 : i32
    %0 = arith.cmpi eq, %arg2, %c0_i32 : i32
    %1 = arith.extui %0 : i1 to i32
    %c0_i32_0 = arith.constant 0 : i32
    %2 = arith.cmpi ne, %1, %c0_i32_0 : i32
    scf.if %2 {
      %cst_10 = arith.constant 0.000000e+00 : f32
      %12 = vector.broadcast %cst_10 : f32 to vector<128x128xf32>
      %c0_11 = arith.constant 0 : index
      %c0_12 = arith.constant 0 : index
      %13 = vector.load %arg7[%c0_11, %c0_12] : memref<128x128xf32, #tpu.memory_space<vmem>>, vector<128x128xf32>
      tpu.vector_store %arg7[%c0_11, %c0_12], %12 {strides = array<i32>} : memref<128x128xf32, #tpu.memory_space<vmem>>, vector<128x128xf32>,
    } else {
    }
    %c0 = arith.constant 0 : index
    %c0_1 = arith.constant 0 : index
    %3 = vector.load %arg7[%c0, %c0_1] : memref<128x128xf32, #tpu.memory_space<vmem>>, vector<128x128xf32>
    %c0_2 = arith.constant 0 : index
    %c0_3 = arith.constant 0 : index
    %4 = vector.load %arg3[%c0_2, %c0_3] : memref<128x128xbf16, #tpu.memory_space<vmem>>, vector<128x128xbf16>
    %c0_4 = arith.constant 0 : index
    %c0_5 = arith.constant 0 : index
    %5 = vector.load %arg4[%c0_4, %c0_5] : memref<128x128xbf16, #tpu.memory_space<vmem>>, vector<128x128xbf16>
    %cst = arith.constant dense<0.000000e+00> : vector<128x128xf32>
    %6 = tpu.matmul %4, %5, %cst {dimension_numbers = #tpu.dot_dimension_numbers<[1], [0], [0], [1], [0, 0, 1, 1], [], []>} : vector<128x128xbf16>, vector<128x128xbf16>, vector<128x128xf32> -> vector<128x128xf32>
    %7 = arith.addf %3, %6 : vector<128x128xf32>
    %c0_6 = arith.constant 0 : index
    %c0_7 = arith.constant 0 : index
    %8 = vector.load %arg7[%c0_6, %c0_7] : memref<128x128xf32, #tpu.memory_space<vmem>>, vector<128x128xf32>
    tpu.vector_store %arg7[%c0_6, %c0_7], %7 {strides = array<i32>} : memref<128x128xf32, #tpu.memory_space<vmem>>, vector<128x128xf32>,
    %c0_i32_8 = arith.constant 0 : i32
    %9 = arith.cmpi eq, %arg2, %c0_i32_8 : i32
    %10 = arith.extui %9 : i1 to i32
    %c0_i32_9 = arith.constant 0 : i32
    %11 = arith.cmpi ne, %10, %c0_i32_9 : i32
    scf.if %11 {
      %c0_10 = arith.constant 0 : index
      %c0_11 = arith.constant 0 : index
      %12 = vector.load %arg7[%c0_10, %c0_11] : memref<128x128xf32, #tpu.memory_space<vmem>>, vector<128x128xf32>
      %c0_12 = arith.constant 0 : index
      %c0_13 = arith.constant 0 : index
      %13 = vector.load %arg5[%c0_12, %c0_13] : memref<1x128xf32, #tpu.memory_space<vmem>>, vector<1x128xf32>
      %14 = vector.broadcast %13 : vector<1x128xf32> to vector<128x128xf32>
      %15 = arith.addf %12, %14 : vector<128x128xf32>
      %16 = arith.truncf %15 : vector<128x128xf32> to vector<128x128xbf16>
      %c0_14 = arith.constant 0 : index
      %c0_15 = arith.constant 0 : index
      %17 = vector.load %arg6[%c0_14, %c0_15] : memref<128x128xbf16, #tpu.memory_space<vmem>>, vector<128x128xbf16>
      tpu.vector_store %arg6[%c0_14, %c0_15], %16 {strides = array<i32>} : memref<128x128xbf16, #tpu.memory_space<vmem>>, vector<128x128xbf16>,
    } else {
    }
    return
  }
  func.func @transform_0(%arg0: i32, %arg1: i32, %arg2: i32) -> (i32, i32) {
    %c0_i32 = arith.constant 0 : i32
    return %arg0, %arg2 : i32, i32
  }
  func.func @transform_1(%arg0: i32, %arg1: i32, %arg2: i32) -> (i32, i32) {
    %c0_i32 = arith.constant 0 : i32
    return %arg2, %arg1 : i32, i32
  }
  func.func @transform_2(%arg0: i32, %arg1: i32, %arg2: i32) -> (i32, i32) {
    %c0_i32 = arith.constant 0 : i32
    %c0_i32_0 = arith.constant 0 : i32
    return %c0_i32, %arg1 : i32, i32
  }
  func.func @transform_3(%arg0: i32, %arg1: i32, %arg2: i32) -> (i32, i32) {
    %c0_i32 = arith.constant 0 : i32
    return %arg0, %arg1 : i32, i32
  }
}

module attributes {stable_mosaic.version = 11 : i64} {
  func.func @_emb_ln_kernel(%arg0: i32, %arg1: memref<128x128xf32, #tpu.memory_space<vmem>>, %arg2: memref<128x128xf32, #tpu.memory_space<vmem>>, %arg3: memref<128x128xf32, #tpu.memory_space<vmem>>, %arg4: memref<1x128xf32, #tpu.memory_space<vmem>>, %arg5: memref<1x128xf32, #tpu.memory_space<vmem>>, %arg6: memref<128x128xbf16, #tpu.memory_space<vmem>>) attributes {dimension_semantics = [#tpu.dimension_semantics<parallel>], iteration_bounds = array<i64: 2>, scalar_prefetch = 0 : i64, scratch_operands = 0 : i64, tpu.core_type = #tpu.core_type<tc>, window_params = [{transform_indices = @transform_0, window_bounds = array<i64: 128, 128>}, {transform_indices = @transform_1, window_bounds = array<i64: 128, 128>}, {transform_indices = @transform_2, window_bounds = array<i64: 128, 128>}, {pipeline_mode = #tpu.pipeline_mode<synchronous>, transform_indices = @transform_3, window_bounds = array<i64: 1, 128>}, {pipeline_mode = #tpu.pipeline_mode<synchronous>, transform_indices = @transform_4, window_bounds = array<i64: 1, 128>}, {transform_indices = @transform_5, window_bounds = array<i64: 128, 128>}]} {
    %c0 = arith.constant 0 : index
    %c0_0 = arith.constant 0 : index
    %0 = vector.load %arg1[%c0, %c0_0] : memref<128x128xf32, #tpu.memory_space<vmem>>, vector<128x128xf32>
    %c0_1 = arith.constant 0 : index
    %c0_2 = arith.constant 0 : index
    %1 = vector.load %arg2[%c0_1, %c0_2] : memref<128x128xf32, #tpu.memory_space<vmem>>, vector<128x128xf32>
    %2 = arith.addf %0, %1 : vector<128x128xf32>
    %c0_3 = arith.constant 0 : index
    %c0_4 = arith.constant 0 : index
    %3 = vector.load %arg3[%c0_3, %c0_4] : memref<128x128xf32, #tpu.memory_space<vmem>>, vector<128x128xf32>
    %4 = arith.addf %2, %3 : vector<128x128xf32>
    %cst = arith.constant dense<0.000000e+00> : vector<128xf32>
    %5 = vector.multi_reduction <add>, %4, %cst [1] : vector<128x128xf32> to vector<128xf32>
    %6 = vector.shape_cast %5 : vector<128xf32> to vector<128x1xf32>
    %cst_5 = arith.constant 1.280000e+02 : f32
    %7 = vector.broadcast %cst_5 : f32 to vector<128x1xf32>
    %8 = arith.divf %6, %7 : vector<128x1xf32>
    %9 = vector.broadcast %8 : vector<128x1xf32> to vector<128x128xf32>
    %10 = arith.subf %4, %9 : vector<128x128xf32>
    %11 = arith.mulf %10, %10 : vector<128x128xf32>
    %cst_6 = arith.constant dense<0.000000e+00> : vector<128xf32>
    %12 = vector.multi_reduction <add>, %11, %cst_6 [1] : vector<128x128xf32> to vector<128xf32>
    %13 = vector.shape_cast %12 : vector<128xf32> to vector<128x1xf32>
    %cst_7 = arith.constant 1.280000e+02 : f32
    %14 = vector.broadcast %cst_7 : f32 to vector<128x1xf32>
    %15 = arith.divf %13, %14 : vector<128x1xf32>
    %cst_8 = arith.constant 9.99999996E-13 : f32
    %16 = vector.broadcast %cst_8 : f32 to vector<128x1xf32>
    %17 = arith.addf %15, %16 : vector<128x1xf32>
    %18 = math.rsqrt %17 : vector<128x1xf32>
    %19 = vector.broadcast %18 : vector<128x1xf32> to vector<128x128xf32>
    %20 = arith.mulf %10, %19 : vector<128x128xf32>
    %c0_9 = arith.constant 0 : index
    %c0_10 = arith.constant 0 : index
    %21 = vector.load %arg4[%c0_9, %c0_10] : memref<1x128xf32, #tpu.memory_space<vmem>>, vector<1x128xf32>
    %22 = vector.broadcast %21 : vector<1x128xf32> to vector<128x128xf32>
    %23 = arith.mulf %20, %22 : vector<128x128xf32>
    %c0_11 = arith.constant 0 : index
    %c0_12 = arith.constant 0 : index
    %24 = vector.load %arg5[%c0_11, %c0_12] : memref<1x128xf32, #tpu.memory_space<vmem>>, vector<1x128xf32>
    %25 = vector.broadcast %24 : vector<1x128xf32> to vector<128x128xf32>
    %26 = arith.addf %23, %25 : vector<128x128xf32>
    %27 = arith.truncf %26 : vector<128x128xf32> to vector<128x128xbf16>
    %c0_13 = arith.constant 0 : index
    %c0_14 = arith.constant 0 : index
    %28 = vector.load %arg6[%c0_13, %c0_14] : memref<128x128xbf16, #tpu.memory_space<vmem>>, vector<128x128xbf16>
    tpu.vector_store %arg6[%c0_13, %c0_14], %27 {strides = array<i32>} : memref<128x128xbf16, #tpu.memory_space<vmem>>, vector<128x128xbf16>,
    return
  }
  func.func @transform_0(%arg0: i32) -> (i32, i32) {
    %c0_i32 = arith.constant 0 : i32
    %c0_i32_0 = arith.constant 0 : i32
    return %arg0, %c0_i32 : i32, i32
  }
  func.func @transform_1(%arg0: i32) -> (i32, i32) {
    %c0_i32 = arith.constant 0 : i32
    %c0_i32_0 = arith.constant 0 : i32
    return %arg0, %c0_i32 : i32, i32
  }
  func.func @transform_2(%arg0: i32) -> (i32, i32) {
    %c0_i32 = arith.constant 0 : i32
    %c0_i32_0 = arith.constant 0 : i32
    return %arg0, %c0_i32 : i32, i32
  }
  func.func @transform_3(%arg0: i32) -> (i32, i32) {
    %c0_i32 = arith.constant 0 : i32
    %c0_i32_0 = arith.constant 0 : i32
    %c0_i32_1 = arith.constant 0 : i32
    return %c0_i32, %c0_i32_0 : i32, i32
  }
  func.func @transform_4(%arg0: i32) -> (i32, i32) {
    %c0_i32 = arith.constant 0 : i32
    %c0_i32_0 = arith.constant 0 : i32
    %c0_i32_1 = arith.constant 0 : i32
    return %c0_i32, %c0_i32_0 : i32, i32
  }
  func.func @transform_5(%arg0: i32) -> (i32, i32) {
    %c0_i32 = arith.constant 0 : i32
    %c0_i32_0 = arith.constant 0 : i32
    return %arg0, %c0_i32 : i32, i32
  }
}

module attributes {stable_mosaic.version = 11 : i64} {
  func.func @_attn_kernel(%arg0: i32, %arg1: i32, %arg2: memref<1x128x128xbf16, #tpu.memory_space<vmem>>, %arg3: memref<1x128x128xbf16, #tpu.memory_space<vmem>>, %arg4: memref<1x128x128xbf16, #tpu.memory_space<vmem>>, %arg5: memref<1x1x128xf32, #tpu.memory_space<vmem>>, %arg6: memref<1x128x128xbf16, #tpu.memory_space<vmem>>) attributes {dimension_semantics = [#tpu.dimension_semantics<parallel>, #tpu.dimension_semantics<parallel>], iteration_bounds = array<i64: 2, 1>, scalar_prefetch = 0 : i64, scratch_operands = 0 : i64, tpu.core_type = #tpu.core_type<tc>, window_params = [{transform_indices = @transform_0, window_bounds = array<i64: 1, 128, 128>}, {transform_indices = @transform_1, window_bounds = array<i64: 1, 128, 128>}, {transform_indices = @transform_2, window_bounds = array<i64: 1, 128, 128>}, {transform_indices = @transform_3, window_bounds = array<i64: 1, 1, 128>}, {transform_indices = @transform_4, window_bounds = array<i64: 1, 128, 128>}]} {
    %c0 = arith.constant 0 : index
    %c0_0 = arith.constant 0 : index
    %c0_1 = arith.constant 0 : index
    %0 = vector.load %arg2[%c0, %c0_0, %c0_1] : memref<1x128x128xbf16, #tpu.memory_space<vmem>>, vector<1x128x128xbf16>
    %1 = vector.shape_cast %0 : vector<1x128x128xbf16> to vector<128x128xbf16>
    %c0_2 = arith.constant 0 : index
    %c0_3 = arith.constant 0 : index
    %c0_4 = arith.constant 0 : index
    %2 = vector.load %arg3[%c0_2, %c0_3, %c0_4] : memref<1x128x128xbf16, #tpu.memory_space<vmem>>, vector<1x128x128xbf16>
    %3 = vector.shape_cast %2 : vector<1x128x128xbf16> to vector<128x128xbf16>
    %c0_5 = arith.constant 0 : index
    %c0_6 = arith.constant 0 : index
    %c0_7 = arith.constant 0 : index
    %4 = vector.load %arg4[%c0_5, %c0_6, %c0_7] : memref<1x128x128xbf16, #tpu.memory_space<vmem>>, vector<1x128x128xbf16>
    %5 = vector.shape_cast %4 : vector<1x128x128xbf16> to vector<128x128xbf16>
    %c0_8 = arith.constant 0 : index
    %c0_9 = arith.constant 0 : index
    %c0_10 = arith.constant 0 : index
    %6 = vector.load %arg5[%c0_8, %c0_9, %c0_10] : memref<1x1x128xf32, #tpu.memory_space<vmem>>, vector<1x1x128xf32>
    %7 = vector.shape_cast %6 : vector<1x1x128xf32> to vector<1x128xf32>
    %8 = vector.extract_strided_slice %1 {offsets = [0, 0], sizes = [128, 64], strides = [1, 1]} : vector<128x128xbf16> to vector<128x64xbf16>
    %9 = vector.extract_strided_slice %3 {offsets = [0, 0], sizes = [128, 64], strides = [1, 1]} : vector<128x128xbf16> to vector<128x64xbf16>
    %cst = arith.constant dense<0.000000e+00> : vector<128x128xf32>
    %10 = tpu.matmul %8, %9, %cst {dimension_numbers = #tpu.dot_dimension_numbers<[1], [1], [0], [0], [0, 0, 1, 0], [], []>} : vector<128x64xbf16>, vector<128x64xbf16>, vector<128x128xf32> -> vector<128x128xf32>
    %cst_11 = arith.constant 1.250000e-01 : f32
    %11 = vector.broadcast %cst_11 : f32 to vector<128x128xf32>
    %12 = arith.mulf %10, %11 : vector<128x128xf32>
    %13 = vector.broadcast %7 : vector<1x128xf32> to vector<128x128xf32>
    %14 = arith.addf %12, %13 : vector<128x128xf32>
    %cst_12 = arith.constant dense<0xFF800000> : vector<128xf32>
    %15 = vector.multi_reduction <maximumf>, %14, %cst_12 [1] : vector<128x128xf32> to vector<128xf32>
    %16 = vector.shape_cast %15 : vector<128xf32> to vector<128x1xf32>
    %17 = vector.broadcast %16 : vector<128x1xf32> to vector<128x128xf32>
    %18 = arith.subf %14, %17 : vector<128x128xf32>
    %19 = math.exp %18 : vector<128x128xf32>
    %cst_13 = arith.constant dense<0.000000e+00> : vector<128xf32>
    %20 = vector.multi_reduction <add>, %19, %cst_13 [1] : vector<128x128xf32> to vector<128xf32>
    %21 = vector.shape_cast %20 : vector<128xf32> to vector<128x1xf32>
    %22 = arith.truncf %19 : vector<128x128xf32> to vector<128x128xbf16>
    %23 = vector.extract_strided_slice %5 {offsets = [0, 0], sizes = [128, 64], strides = [1, 1]} : vector<128x128xbf16> to vector<128x64xbf16>
    %cst_14 = arith.constant dense<0.000000e+00> : vector<128x64xf32>
    %24 = tpu.matmul %22, %23, %cst_14 {dimension_numbers = #tpu.dot_dimension_numbers<[1], [0], [0], [1], [0, 0, 1, 1], [], []>} : vector<128x128xbf16>, vector<128x64xbf16>, vector<128x64xf32> -> vector<128x64xf32>
    %25 = tpu.reciprocal %21 {approx = true} : vector<128x1xf32> -> vector<128x1xf32>
    %26 = vector.broadcast %25 : vector<128x1xf32> to vector<128x64xf32>
    %27 = arith.mulf %24, %26 : vector<128x64xf32>
    %28 = vector.extract_strided_slice %1 {offsets = [0, 64], sizes = [128, 64], strides = [1, 1]} : vector<128x128xbf16> to vector<128x64xbf16>
    %29 = vector.extract_strided_slice %3 {offsets = [0, 64], sizes = [128, 64], strides = [1, 1]} : vector<128x128xbf16> to vector<128x64xbf16>
    %cst_15 = arith.constant dense<0.000000e+00> : vector<128x128xf32>
    %30 = tpu.matmul %28, %29, %cst_15 {dimension_numbers = #tpu.dot_dimension_numbers<[1], [1], [0], [0], [0, 0, 1, 0], [], []>} : vector<128x64xbf16>, vector<128x64xbf16>, vector<128x128xf32> -> vector<128x128xf32>
    %cst_16 = arith.constant 1.250000e-01 : f32
    %31 = vector.broadcast %cst_16 : f32 to vector<128x128xf32>
    %32 = arith.mulf %30, %31 : vector<128x128xf32>
    %33 = vector.broadcast %7 : vector<1x128xf32> to vector<128x128xf32>
    %34 = arith.addf %32, %33 : vector<128x128xf32>
    %cst_17 = arith.constant dense<0xFF800000> : vector<128xf32>
    %35 = vector.multi_reduction <maximumf>, %34, %cst_17 [1] : vector<128x128xf32> to vector<128xf32>
    %36 = vector.shape_cast %35 : vector<128xf32> to vector<128x1xf32>
    %37 = vector.broadcast %36 : vector<128x1xf32> to vector<128x128xf32>
    %38 = arith.subf %34, %37 : vector<128x128xf32>
    %39 = math.exp %38 : vector<128x128xf32>
    %cst_18 = arith.constant dense<0.000000e+00> : vector<128xf32>
    %40 = vector.multi_reduction <add>, %39, %cst_18 [1] : vector<128x128xf32> to vector<128xf32>
    %41 = vector.shape_cast %40 : vector<128xf32> to vector<128x1xf32>
    %42 = arith.truncf %39 : vector<128x128xf32> to vector<128x128xbf16>
    %43 = vector.extract_strided_slice %5 {offsets = [0, 64], sizes = [128, 64], strides = [1, 1]} : vector<128x128xbf16> to vector<128x64xbf16>
    %cst_19 = arith.constant dense<0.000000e+00> : vector<128x64xf32>
    %44 = tpu.matmul %42, %43, %cst_19 {dimension_numbers = #tpu.dot_dimension_numbers<[1], [0], [0], [1], [0, 0, 1, 1], [], []>} : vector<128x128xbf16>, vector<128x64xbf16>, vector<128x64xf32> -> vector<128x64xf32>
    %45 = tpu.reciprocal %41 {approx = true} : vector<128x1xf32> -> vector<128x1xf32>
    %46 = vector.broadcast %45 : vector<128x1xf32> to vector<128x64xf32>
    %47 = arith.mulf %44, %46 : vector<128x64xf32>
    %48 = tpu.concatenate %27, %47 in 1 : vector<128x64xf32>, vector<128x64xf32> -> vector<128x128xf32>
    %49 = arith.truncf %48 : vector<128x128xf32> to vector<128x128xbf16>
    %c0_20 = arith.constant 0 : index
    %c0_21 = arith.constant 0 : index
    %c0_22 = arith.constant 0 : index
    %50 = vector.load %arg6[%c0_20, %c0_21, %c0_22] : memref<1x128x128xbf16, #tpu.memory_space<vmem>>, vector<1x128x128xbf16>
    %51 = vector.shape_cast %50 : vector<1x128x128xbf16> to vector<128x128xbf16>
    %52 = vector.shape_cast %49 : vector<128x128xbf16> to vector<1x128x128xbf16>
    tpu.vector_store %arg6[%c0_20, %c0_21, %c0_22], %52 {strides = array<i32>} : memref<1x128x128xbf16, #tpu.memory_space<vmem>>, vector<1x128x128xbf16>,
    return
  }
  func.func @transform_0(%arg0: i32, %arg1: i32) -> (i32, i32, i32) {
    %c0_i32 = arith.constant 0 : i32
    %c0_i32_0 = arith.constant 0 : i32
    return %arg0, %c0_i32, %arg1 : i32, i32, i32
  }
  func.func @transform_1(%arg0: i32, %arg1: i32) -> (i32, i32, i32) {
    %c1_i32 = arith.constant 1 : i32
    %0 = arith.addi %c1_i32, %arg1 : i32
    %c0_i32 = arith.constant 0 : i32
    %c0_i32_0 = arith.constant 0 : i32
    return %arg0, %c0_i32, %0 : i32, i32, i32
  }
  func.func @transform_2(%arg0: i32, %arg1: i32) -> (i32, i32, i32) {
    %c2_i32 = arith.constant 2 : i32
    %0 = arith.addi %c2_i32, %arg1 : i32
    %c0_i32 = arith.constant 0 : i32
    %c0_i32_0 = arith.constant 0 : i32
    return %arg0, %c0_i32, %0 : i32, i32, i32
  }
  func.func @transform_3(%arg0: i32, %arg1: i32) -> (i32, i32, i32) {
    %c0_i32 = arith.constant 0 : i32
    %c0_i32_0 = arith.constant 0 : i32
    %c0_i32_1 = arith.constant 0 : i32
    return %arg0, %c0_i32, %c0_i32_0 : i32, i32, i32
  }
  func.func @transform_4(%arg0: i32, %arg1: i32) -> (i32, i32, i32) {
    %c0_i32 = arith.constant 0 : i32
    %c0_i32_0 = arith.constant 0 : i32
    return %arg0, %c0_i32, %arg1 : i32, i32, i32
  }
}

module attributes {stable_mosaic.version = 11 : i64} {
  func.func @_mm_res_ln_kernel(%arg0: i32, %arg1: i32, %arg2: memref<128x128xbf16, #tpu.memory_space<vmem>>, %arg3: memref<128x128xbf16, #tpu.memory_space<vmem>>, %arg4: memref<1x128xf32, #tpu.memory_space<vmem>>, %arg5: memref<128x128xbf16, #tpu.memory_space<vmem>>, %arg6: memref<1x128xf32, #tpu.memory_space<vmem>>, %arg7: memref<1x128xf32, #tpu.memory_space<vmem>>, %arg8: memref<128x128xbf16, #tpu.memory_space<vmem>>, %arg9: memref<128x128xf32, #tpu.memory_space<vmem>>) attributes {dimension_semantics = [#tpu.dimension_semantics<parallel>, #tpu.dimension_semantics<arbitrary>], iteration_bounds = array<i64: 2, 1>, scalar_prefetch = 0 : i64, scratch_operands = 1 : i64, tpu.core_type = #tpu.core_type<tc>, window_params = [{transform_indices = @transform_0, window_bounds = array<i64: 128, 128>}, {transform_indices = @transform_1, window_bounds = array<i64: 128, 128>}, {pipeline_mode = #tpu.pipeline_mode<synchronous>, transform_indices = @transform_2, window_bounds = array<i64: 1, 128>}, {transform_indices = @transform_3, window_bounds = array<i64: 128, 128>}, {pipeline_mode = #tpu.pipeline_mode<synchronous>, transform_indices = @transform_4, window_bounds = array<i64: 1, 128>}, {pipeline_mode = #tpu.pipeline_mode<synchronous>, transform_indices = @transform_5, window_bounds = array<i64: 1, 128>}, {transform_indices = @transform_6, window_bounds = array<i64: 128, 128>}]} {
    %c0_i32 = arith.constant 0 : i32
    %0 = arith.cmpi eq, %arg1, %c0_i32 : i32
    %1 = arith.extui %0 : i1 to i32
    %c0_i32_0 = arith.constant 0 : i32
    %2 = arith.cmpi ne, %1, %c0_i32_0 : i32
    scf.if %2 {
      %cst_10 = arith.constant 0.000000e+00 : f32
      %12 = vector.broadcast %cst_10 : f32 to vector<128x128xf32>
      %c0_11 = arith.constant 0 : index
      %c0_12 = arith.constant 0 : index
      %13 = vector.load %arg9[%c0_11, %c0_12] : memref<128x128xf32, #tpu.memory_space<vmem>>, vector<128x128xf32>
      tpu.vector_store %arg9[%c0_11, %c0_12], %12 {strides = array<i32>} : memref<128x128xf32, #tpu.memory_space<vmem>>, vector<128x128xf32>,
    } else {
    }
    %c0 = arith.constant 0 : index
    %c0_1 = arith.constant 0 : index
    %3 = vector.load %arg9[%c0, %c0_1] : memref<128x128xf32, #tpu.memory_space<vmem>>, vector<128x128xf32>
    %c0_2 = arith.constant 0 : index
    %c0_3 = arith.constant 0 : index
    %4 = vector.load %arg2[%c0_2, %c0_3] : memref<128x128xbf16, #tpu.memory_space<vmem>>, vector<128x128xbf16>
    %c0_4 = arith.constant 0 : index
    %c0_5 = arith.constant 0 : index
    %5 = vector.load %arg3[%c0_4, %c0_5] : memref<128x128xbf16, #tpu.memory_space<vmem>>, vector<128x128xbf16>
    %cst = arith.constant dense<0.000000e+00> : vector<128x128xf32>
    %6 = tpu.matmul %4, %5, %cst {dimension_numbers = #tpu.dot_dimension_numbers<[1], [0], [0], [1], [0, 0, 1, 1], [], []>} : vector<128x128xbf16>, vector<128x128xbf16>, vector<128x128xf32> -> vector<128x128xf32>
    %7 = arith.addf %3, %6 : vector<128x128xf32>
    %c0_6 = arith.constant 0 : index
    %c0_7 = arith.constant 0 : index
    %8 = vector.load %arg9[%c0_6, %c0_7] : memref<128x128xf32, #tpu.memory_space<vmem>>, vector<128x128xf32>
    tpu.vector_store %arg9[%c0_6, %c0_7], %7 {strides = array<i32>} : memref<128x128xf32, #tpu.memory_space<vmem>>, vector<128x128xf32>,
    %c0_i32_8 = arith.constant 0 : i32
    %9 = arith.cmpi eq, %arg1, %c0_i32_8 : i32
    %10 = arith.extui %9 : i1 to i32
    %c0_i32_9 = arith.constant 0 : i32
    %11 = arith.cmpi ne, %10, %c0_i32_9 : i32
    scf.if %11 {
      %c0_10 = arith.constant 0 : index
      %c0_11 = arith.constant 0 : index
      %12 = vector.load %arg9[%c0_10, %c0_11] : memref<128x128xf32, #tpu.memory_space<vmem>>, vector<128x128xf32>
      %c0_12 = arith.constant 0 : index
      %c0_13 = arith.constant 0 : index
      %13 = vector.load %arg4[%c0_12, %c0_13] : memref<1x128xf32, #tpu.memory_space<vmem>>, vector<1x128xf32>
      %14 = vector.broadcast %13 : vector<1x128xf32> to vector<128x128xf32>
      %15 = arith.addf %12, %14 : vector<128x128xf32>
      %c0_14 = arith.constant 0 : index
      %c0_15 = arith.constant 0 : index
      %16 = vector.load %arg5[%c0_14, %c0_15] : memref<128x128xbf16, #tpu.memory_space<vmem>>, vector<128x128xbf16>
      %17 = arith.extf %16 : vector<128x128xbf16> to vector<128x128xf32>
      %18 = arith.addf %15, %17 : vector<128x128xf32>
      %cst_16 = arith.constant dense<0.000000e+00> : vector<128xf32>
      %19 = vector.multi_reduction <add>, %18, %cst_16 [1] : vector<128x128xf32> to vector<128xf32>
      %20 = vector.shape_cast %19 : vector<128xf32> to vector<128x1xf32>
      %cst_17 = arith.constant 1.280000e+02 : f32
      %21 = vector.broadcast %cst_17 : f32 to vector<128x1xf32>
      %22 = arith.divf %20, %21 : vector<128x1xf32>
      %23 = vector.broadcast %22 : vector<128x1xf32> to vector<128x128xf32>
      %24 = arith.subf %18, %23 : vector<128x128xf32>
      %25 = arith.mulf %24, %24 : vector<128x128xf32>
      %cst_18 = arith.constant dense<0.000000e+00> : vector<128xf32>
      %26 = vector.multi_reduction <add>, %25, %cst_18 [1] : vector<128x128xf32> to vector<128xf32>
      %27 = vector.shape_cast %26 : vector<128xf32> to vector<128x1xf32>
      %cst_19 = arith.constant 1.280000e+02 : f32
      %28 = vector.broadcast %cst_19 : f32 to vector<128x1xf32>
      %29 = arith.divf %27, %28 : vector<128x1xf32>
      %cst_20 = arith.constant 9.99999996E-13 : f32
      %30 = vector.broadcast %cst_20 : f32 to vector<128x1xf32>
      %31 = arith.addf %29, %30 : vector<128x1xf32>
      %32 = math.rsqrt %31 : vector<128x1xf32>
      %33 = vector.broadcast %32 : vector<128x1xf32> to vector<128x128xf32>
      %34 = arith.mulf %24, %33 : vector<128x128xf32>
      %c0_21 = arith.constant 0 : index
      %c0_22 = arith.constant 0 : index
      %35 = vector.load %arg6[%c0_21, %c0_22] : memref<1x128xf32, #tpu.memory_space<vmem>>, vector<1x128xf32>
      %36 = vector.broadcast %35 : vector<1x128xf32> to vector<128x128xf32>
      %37 = arith.mulf %34, %36 : vector<128x128xf32>
      %c0_23 = arith.constant 0 : index
      %c0_24 = arith.constant 0 : index
      %38 = vector.load %arg7[%c0_23, %c0_24] : memref<1x128xf32, #tpu.memory_space<vmem>>, vector<1x128xf32>
      %39 = vector.broadcast %38 : vector<1x128xf32> to vector<128x128xf32>
      %40 = arith.addf %37, %39 : vector<128x128xf32>
      %41 = arith.truncf %40 : vector<128x128xf32> to vector<128x128xbf16>
      %c0_25 = arith.constant 0 : index
      %c0_26 = arith.constant 0 : index
      %42 = vector.load %arg8[%c0_25, %c0_26] : memref<128x128xbf16, #tpu.memory_space<vmem>>, vector<128x128xbf16>
      tpu.vector_store %arg8[%c0_25, %c0_26], %41 {strides = array<i32>} : memref<128x128xbf16, #tpu.memory_space<vmem>>, vector<128x128xbf16>,
    } else {
    }
    return
  }
  func.func @transform_0(%arg0: i32, %arg1: i32) -> (i32, i32) {
    %c0_i32 = arith.constant 0 : i32
    return %arg0, %arg1 : i32, i32
  }
  func.func @transform_1(%arg0: i32, %arg1: i32) -> (i32, i32) {
    %c0_i32 = arith.constant 0 : i32
    %c0_i32_0 = arith.constant 0 : i32
    return %arg1, %c0_i32 : i32, i32
  }
  func.func @transform_2(%arg0: i32, %arg1: i32) -> (i32, i32) {
    %c0_i32 = arith.constant 0 : i32
    %c0_i32_0 = arith.constant 0 : i32
    %c0_i32_1 = arith.constant 0 : i32
    return %c0_i32, %c0_i32_0 : i32, i32
  }
  func.func @transform_3(%arg0: i32, %arg1: i32) -> (i32, i32) {
    %c0_i32 = arith.constant 0 : i32
    %c0_i32_0 = arith.constant 0 : i32
    return %arg0, %c0_i32 : i32, i32
  }
  func.func @transform_4(%arg0: i32, %arg1: i32) -> (i32, i32) {
    %c0_i32 = arith.constant 0 : i32
    %c0_i32_0 = arith.constant 0 : i32
    %c0_i32_1 = arith.constant 0 : i32
    return %c0_i32, %c0_i32_0 : i32, i32
  }
  func.func @transform_5(%arg0: i32, %arg1: i32) -> (i32, i32) {
    %c0_i32 = arith.constant 0 : i32
    %c0_i32_0 = arith.constant 0 : i32
    %c0_i32_1 = arith.constant 0 : i32
    return %c0_i32, %c0_i32_0 : i32, i32
  }
  func.func @transform_6(%arg0: i32, %arg1: i32) -> (i32, i32) {
    %c0_i32 = arith.constant 0 : i32
    %c0_i32_0 = arith.constant 0 : i32
    return %arg0, %c0_i32 : i32, i32
  }
}

module attributes {stable_mosaic.version = 11 : i64} {
  func.func @_mm_kernel(%arg0: i32, %arg1: i32, %arg2: i32, %arg3: memref<128x128xbf16, #tpu.memory_space<vmem>>, %arg4: memref<128x256xbf16, #tpu.memory_space<vmem>>, %arg5: memref<1x256xf32, #tpu.memory_space<vmem>>, %arg6: memref<128x256xbf16, #tpu.memory_space<vmem>>, %arg7: memref<128x256xf32, #tpu.memory_space<vmem>>) attributes {dimension_semantics = [#tpu.dimension_semantics<parallel>, #tpu.dimension_semantics<parallel>, #tpu.dimension_semantics<arbitrary>], iteration_bounds = array<i64: 2, 2, 1>, scalar_prefetch = 0 : i64, scratch_operands = 1 : i64, tpu.core_type = #tpu.core_type<tc>, window_params = [{transform_indices = @transform_0, window_bounds = array<i64: 128, 128>}, {transform_indices = @transform_1, window_bounds = array<i64: 128, 256>}, {transform_indices = @transform_2, window_bounds = array<i64: 1, 256>}, {transform_indices = @transform_3, window_bounds = array<i64: 128, 256>}]} {
    %c0_i32 = arith.constant 0 : i32
    %0 = arith.cmpi eq, %arg2, %c0_i32 : i32
    %1 = arith.extui %0 : i1 to i32
    %c0_i32_0 = arith.constant 0 : i32
    %2 = arith.cmpi ne, %1, %c0_i32_0 : i32
    scf.if %2 {
      %cst_10 = arith.constant 0.000000e+00 : f32
      %12 = vector.broadcast %cst_10 : f32 to vector<128x256xf32>
      %c0_11 = arith.constant 0 : index
      %c0_12 = arith.constant 0 : index
      %13 = vector.load %arg7[%c0_11, %c0_12] : memref<128x256xf32, #tpu.memory_space<vmem>>, vector<128x256xf32>
      tpu.vector_store %arg7[%c0_11, %c0_12], %12 {strides = array<i32>} : memref<128x256xf32, #tpu.memory_space<vmem>>, vector<128x256xf32>,
    } else {
    }
    %c0 = arith.constant 0 : index
    %c0_1 = arith.constant 0 : index
    %3 = vector.load %arg7[%c0, %c0_1] : memref<128x256xf32, #tpu.memory_space<vmem>>, vector<128x256xf32>
    %c0_2 = arith.constant 0 : index
    %c0_3 = arith.constant 0 : index
    %4 = vector.load %arg3[%c0_2, %c0_3] : memref<128x128xbf16, #tpu.memory_space<vmem>>, vector<128x128xbf16>
    %c0_4 = arith.constant 0 : index
    %c0_5 = arith.constant 0 : index
    %5 = vector.load %arg4[%c0_4, %c0_5] : memref<128x256xbf16, #tpu.memory_space<vmem>>, vector<128x256xbf16>
    %cst = arith.constant dense<0.000000e+00> : vector<128x256xf32>
    %6 = tpu.matmul %4, %5, %cst {dimension_numbers = #tpu.dot_dimension_numbers<[1], [0], [0], [1], [0, 0, 1, 1], [], []>} : vector<128x128xbf16>, vector<128x256xbf16>, vector<128x256xf32> -> vector<128x256xf32>
    %7 = arith.addf %3, %6 : vector<128x256xf32>
    %c0_6 = arith.constant 0 : index
    %c0_7 = arith.constant 0 : index
    %8 = vector.load %arg7[%c0_6, %c0_7] : memref<128x256xf32, #tpu.memory_space<vmem>>, vector<128x256xf32>
    tpu.vector_store %arg7[%c0_6, %c0_7], %7 {strides = array<i32>} : memref<128x256xf32, #tpu.memory_space<vmem>>, vector<128x256xf32>,
    %c0_i32_8 = arith.constant 0 : i32
    %9 = arith.cmpi eq, %arg2, %c0_i32_8 : i32
    %10 = arith.extui %9 : i1 to i32
    %c0_i32_9 = arith.constant 0 : i32
    %11 = arith.cmpi ne, %10, %c0_i32_9 : i32
    scf.if %11 {
      %c0_10 = arith.constant 0 : index
      %c0_11 = arith.constant 0 : index
      %12 = vector.load %arg7[%c0_10, %c0_11] : memref<128x256xf32, #tpu.memory_space<vmem>>, vector<128x256xf32>
      %c0_12 = arith.constant 0 : index
      %c0_13 = arith.constant 0 : index
      %13 = vector.load %arg5[%c0_12, %c0_13] : memref<1x256xf32, #tpu.memory_space<vmem>>, vector<1x256xf32>
      %14 = vector.broadcast %13 : vector<1x256xf32> to vector<128x256xf32>
      %15 = arith.addf %12, %14 : vector<128x256xf32>
      %cst_14 = arith.constant 5.000000e-01 : f32
      %16 = vector.broadcast %cst_14 : f32 to vector<128x256xf32>
      %17 = arith.mulf %16, %15 : vector<128x256xf32>
      %cst_15 = arith.constant 4.471500e-02 : f32
      %18 = vector.broadcast %cst_15 : f32 to vector<128x256xf32>
      %19 = arith.mulf %18, %15 : vector<128x256xf32>
      %20 = arith.mulf %19, %15 : vector<128x256xf32>
      %21 = arith.mulf %20, %15 : vector<128x256xf32>
      %22 = arith.addf %15, %21 : vector<128x256xf32>
      %cst_16 = arith.constant 0.797884583 : f32
      %23 = vector.broadcast %cst_16 : f32 to vector<128x256xf32>
      %24 = arith.mulf %23, %22 : vector<128x256xf32>
      %25 = math.tanh %24 : vector<128x256xf32>
      %cst_17 = arith.constant 1.000000e+00 : f32
      %26 = vector.broadcast %cst_17 : f32 to vector<128x256xf32>
      %27 = arith.addf %26, %25 : vector<128x256xf32>
      %28 = arith.mulf %17, %27 : vector<128x256xf32>
      %29 = arith.truncf %28 : vector<128x256xf32> to vector<128x256xbf16>
      %c0_18 = arith.constant 0 : index
      %c0_19 = arith.constant 0 : index
      %30 = vector.load %arg6[%c0_18, %c0_19] : memref<128x256xbf16, #tpu.memory_space<vmem>>, vector<128x256xbf16>
      tpu.vector_store %arg6[%c0_18, %c0_19], %29 {strides = array<i32>} : memref<128x256xbf16, #tpu.memory_space<vmem>>, vector<128x256xbf16>,
    } else {
    }
    return
  }
  func.func @transform_0(%arg0: i32, %arg1: i32, %arg2: i32) -> (i32, i32) {
    %c0_i32 = arith.constant 0 : i32
    return %arg0, %arg2 : i32, i32
  }
  func.func @transform_1(%arg0: i32, %arg1: i32, %arg2: i32) -> (i32, i32) {
    %c0_i32 = arith.constant 0 : i32
    return %arg2, %arg1 : i32, i32
  }
  func.func @transform_2(%arg0: i32, %arg1: i32, %arg2: i32) -> (i32, i32) {
    %c0_i32 = arith.constant 0 : i32
    %c0_i32_0 = arith.constant 0 : i32
    return %c0_i32, %arg1 : i32, i32
  }
  func.func @transform_3(%arg0: i32, %arg1: i32, %arg2: i32) -> (i32, i32) {
    %c0_i32 = arith.constant 0 : i32
    return %arg0, %arg1 : i32, i32
  }
}

module attributes {stable_mosaic.version = 11 : i64} {
  func.func @_mm_res_ln_kernel(%arg0: i32, %arg1: i32, %arg2: memref<128x512xbf16, #tpu.memory_space<vmem>>, %arg3: memref<512x128xbf16, #tpu.memory_space<vmem>>, %arg4: memref<1x128xf32, #tpu.memory_space<vmem>>, %arg5: memref<128x128xbf16, #tpu.memory_space<vmem>>, %arg6: memref<1x128xf32, #tpu.memory_space<vmem>>, %arg7: memref<1x128xf32, #tpu.memory_space<vmem>>, %arg8: memref<128x128xbf16, #tpu.memory_space<vmem>>, %arg9: memref<128x128xf32, #tpu.memory_space<vmem>>) attributes {dimension_semantics = [#tpu.dimension_semantics<parallel>, #tpu.dimension_semantics<arbitrary>], iteration_bounds = array<i64: 2, 1>, scalar_prefetch = 0 : i64, scratch_operands = 1 : i64, tpu.core_type = #tpu.core_type<tc>, window_params = [{transform_indices = @transform_0, window_bounds = array<i64: 128, 512>}, {transform_indices = @transform_1, window_bounds = array<i64: 512, 128>}, {pipeline_mode = #tpu.pipeline_mode<synchronous>, transform_indices = @transform_2, window_bounds = array<i64: 1, 128>}, {transform_indices = @transform_3, window_bounds = array<i64: 128, 128>}, {pipeline_mode = #tpu.pipeline_mode<synchronous>, transform_indices = @transform_4, window_bounds = array<i64: 1, 128>}, {pipeline_mode = #tpu.pipeline_mode<synchronous>, transform_indices = @transform_5, window_bounds = array<i64: 1, 128>}, {transform_indices = @transform_6, window_bounds = array<i64: 128, 128>}]} {
    %c0_i32 = arith.constant 0 : i32
    %0 = arith.cmpi eq, %arg1, %c0_i32 : i32
    %1 = arith.extui %0 : i1 to i32
    %c0_i32_0 = arith.constant 0 : i32
    %2 = arith.cmpi ne, %1, %c0_i32_0 : i32
    scf.if %2 {
      %cst_10 = arith.constant 0.000000e+00 : f32
      %12 = vector.broadcast %cst_10 : f32 to vector<128x128xf32>
      %c0_11 = arith.constant 0 : index
      %c0_12 = arith.constant 0 : index
      %13 = vector.load %arg9[%c0_11, %c0_12] : memref<128x128xf32, #tpu.memory_space<vmem>>, vector<128x128xf32>
      tpu.vector_store %arg9[%c0_11, %c0_12], %12 {strides = array<i32>} : memref<128x128xf32, #tpu.memory_space<vmem>>, vector<128x128xf32>,
    } else {
    }
    %c0 = arith.constant 0 : index
    %c0_1 = arith.constant 0 : index
    %3 = vector.load %arg9[%c0, %c0_1] : memref<128x128xf32, #tpu.memory_space<vmem>>, vector<128x128xf32>
    %c0_2 = arith.constant 0 : index
    %c0_3 = arith.constant 0 : index
    %4 = vector.load %arg2[%c0_2, %c0_3] : memref<128x512xbf16, #tpu.memory_space<vmem>>, vector<128x512xbf16>
    %c0_4 = arith.constant 0 : index
    %c0_5 = arith.constant 0 : index
    %5 = vector.load %arg3[%c0_4, %c0_5] : memref<512x128xbf16, #tpu.memory_space<vmem>>, vector<512x128xbf16>
    %cst = arith.constant dense<0.000000e+00> : vector<128x128xf32>
    %6 = tpu.matmul %4, %5, %cst {dimension_numbers = #tpu.dot_dimension_numbers<[1], [0], [0], [1], [0, 0, 1, 1], [], []>} : vector<128x512xbf16>, vector<512x128xbf16>, vector<128x128xf32> -> vector<128x128xf32>
    %7 = arith.addf %3, %6 : vector<128x128xf32>
    %c0_6 = arith.constant 0 : index
    %c0_7 = arith.constant 0 : index
    %8 = vector.load %arg9[%c0_6, %c0_7] : memref<128x128xf32, #tpu.memory_space<vmem>>, vector<128x128xf32>
    tpu.vector_store %arg9[%c0_6, %c0_7], %7 {strides = array<i32>} : memref<128x128xf32, #tpu.memory_space<vmem>>, vector<128x128xf32>,
    %c0_i32_8 = arith.constant 0 : i32
    %9 = arith.cmpi eq, %arg1, %c0_i32_8 : i32
    %10 = arith.extui %9 : i1 to i32
    %c0_i32_9 = arith.constant 0 : i32
    %11 = arith.cmpi ne, %10, %c0_i32_9 : i32
    scf.if %11 {
      %c0_10 = arith.constant 0 : index
      %c0_11 = arith.constant 0 : index
      %12 = vector.load %arg9[%c0_10, %c0_11] : memref<128x128xf32, #tpu.memory_space<vmem>>, vector<128x128xf32>
      %c0_12 = arith.constant 0 : index
      %c0_13 = arith.constant 0 : index
      %13 = vector.load %arg4[%c0_12, %c0_13] : memref<1x128xf32, #tpu.memory_space<vmem>>, vector<1x128xf32>
      %14 = vector.broadcast %13 : vector<1x128xf32> to vector<128x128xf32>
      %15 = arith.addf %12, %14 : vector<128x128xf32>
      %c0_14 = arith.constant 0 : index
      %c0_15 = arith.constant 0 : index
      %16 = vector.load %arg5[%c0_14, %c0_15] : memref<128x128xbf16, #tpu.memory_space<vmem>>, vector<128x128xbf16>
      %17 = arith.extf %16 : vector<128x128xbf16> to vector<128x128xf32>
      %18 = arith.addf %15, %17 : vector<128x128xf32>
      %cst_16 = arith.constant dense<0.000000e+00> : vector<128xf32>
      %19 = vector.multi_reduction <add>, %18, %cst_16 [1] : vector<128x128xf32> to vector<128xf32>
      %20 = vector.shape_cast %19 : vector<128xf32> to vector<128x1xf32>
      %cst_17 = arith.constant 1.280000e+02 : f32
      %21 = vector.broadcast %cst_17 : f32 to vector<128x1xf32>
      %22 = arith.divf %20, %21 : vector<128x1xf32>
      %23 = vector.broadcast %22 : vector<128x1xf32> to vector<128x128xf32>
      %24 = arith.subf %18, %23 : vector<128x128xf32>
      %25 = arith.mulf %24, %24 : vector<128x128xf32>
      %cst_18 = arith.constant dense<0.000000e+00> : vector<128xf32>
      %26 = vector.multi_reduction <add>, %25, %cst_18 [1] : vector<128x128xf32> to vector<128xf32>
      %27 = vector.shape_cast %26 : vector<128xf32> to vector<128x1xf32>
      %cst_19 = arith.constant 1.280000e+02 : f32
      %28 = vector.broadcast %cst_19 : f32 to vector<128x1xf32>
      %29 = arith.divf %27, %28 : vector<128x1xf32>
      %cst_20 = arith.constant 9.99999996E-13 : f32
      %30 = vector.broadcast %cst_20 : f32 to vector<128x1xf32>
      %31 = arith.addf %29, %30 : vector<128x1xf32>
      %32 = math.rsqrt %31 : vector<128x1xf32>
      %33 = vector.broadcast %32 : vector<128x1xf32> to vector<128x128xf32>
      %34 = arith.mulf %24, %33 : vector<128x128xf32>
      %c0_21 = arith.constant 0 : index
      %c0_22 = arith.constant 0 : index
      %35 = vector.load %arg6[%c0_21, %c0_22] : memref<1x128xf32, #tpu.memory_space<vmem>>, vector<1x128xf32>
      %36 = vector.broadcast %35 : vector<1x128xf32> to vector<128x128xf32>
      %37 = arith.mulf %34, %36 : vector<128x128xf32>
      %c0_23 = arith.constant 0 : index
      %c0_24 = arith.constant 0 : index
      %38 = vector.load %arg7[%c0_23, %c0_24] : memref<1x128xf32, #tpu.memory_space<vmem>>, vector<1x128xf32>
      %39 = vector.broadcast %38 : vector<1x128xf32> to vector<128x128xf32>
      %40 = arith.addf %37, %39 : vector<128x128xf32>
      %41 = arith.truncf %40 : vector<128x128xf32> to vector<128x128xbf16>
      %c0_25 = arith.constant 0 : index
      %c0_26 = arith.constant 0 : index
      %42 = vector.load %arg8[%c0_25, %c0_26] : memref<128x128xbf16, #tpu.memory_space<vmem>>, vector<128x128xbf16>
      tpu.vector_store %arg8[%c0_25, %c0_26], %41 {strides = array<i32>} : memref<128x128xbf16, #tpu.memory_space<vmem>>, vector<128x128xbf16>,
    } else {
    }
    return
  }
  func.func @transform_0(%arg0: i32, %arg1: i32) -> (i32, i32) {
    %c0_i32 = arith.constant 0 : i32
    return %arg0, %arg1 : i32, i32
  }
  func.func @transform_1(%arg0: i32, %arg1: i32) -> (i32, i32) {
    %c0_i32 = arith.constant 0 : i32
    %c0_i32_0 = arith.constant 0 : i32
    return %arg1, %c0_i32 : i32, i32
  }
  func.func @transform_2(%arg0: i32, %arg1: i32) -> (i32, i32) {
    %c0_i32 = arith.constant 0 : i32
    %c0_i32_0 = arith.constant 0 : i32
    %c0_i32_1 = arith.constant 0 : i32
    return %c0_i32, %c0_i32_0 : i32, i32
  }
  func.func @transform_3(%arg0: i32, %arg1: i32) -> (i32, i32) {
    %c0_i32 = arith.constant 0 : i32
    %c0_i32_0 = arith.constant 0 : i32
    return %arg0, %c0_i32 : i32, i32
  }
  func.func @transform_4(%arg0: i32, %arg1: i32) -> (i32, i32) {
    %c0_i32 = arith.constant 0 : i32
    %c0_i32_0 = arith.constant 0 : i32
    %c0_i32_1 = arith.constant 0 : i32
    return %c0_i32, %c0_i32_0 : i32, i32
  }
  func.func @transform_5(%arg0: i32, %arg1: i32) -> (i32, i32) {
    %c0_i32 = arith.constant 0 : i32
    %c0_i32_0 = arith.constant 0 : i32
    %c0_i32_1 = arith.constant 0 : i32
    return %c0_i32, %c0_i32_0 : i32, i32
  }
  func.func @transform_6(%arg0: i32, %arg1: i32) -> (i32, i32) {
    %c0_i32 = arith.constant 0 : i32
    %c0_i32_0 = arith.constant 0 : i32
    return %arg0, %c0_i32 : i32, i32
  }
}

</mosaic_0001>

<llo_original>
// kernel: run.11
$region0: #{run.11}
  #allocation0 [shape = 'u32[]', space=smem, size = 0x4, offset = 0x4, fixed_abs, tag = 'smem constant byte address 0x4 - core index']
  #allocation1 [shape = 'u32[144,128]{1,0:T(1,128)}', space=vmem, size = 0x12000, scoped, tag = 'internal scratch']
  %s0 = inlined_call_operand.vmem [shape: f32[256,128], index: 0, kind: input, shape index: {}]
  %s1 = inlined_call_operand.vmem [shape: f32[256,128], index: 1, kind: input, shape index: {}]
  %s2 = inlined_call_operand.vmem [shape: f32[256,128], index: 2, kind: input, shape index: {}]
  %s3 = inlined_call_operand.vmem [shape: f32[1,128], index: 3, kind: input, shape index: {}]
  %s4 = inlined_call_operand.vmem [shape: f32[1,128], index: 4, kind: input, shape index: {}]
  %s5 = inlined_call_operand.vmem [shape: bf16[256,128], index: 5, kind: output, shape index: {}]
  %s6 = sld [smem:[#allocation0]]
  $region53: #{run.11} parent=0
    _
  %s8 = ssub.s32 1, %s6
  %s9 = scalar_select 0, %s8, %s6
  loop: start=0, step=1, limit=4
  $region2: #{run.11} parent=0 // loop_pre_header
    _
  $region3: #{run.11} parent=0 // loop_header
    %s11 = sphi 0, %s15
    %p12 = scmp.ge.s32.totalorder %s11, 4
    %s21 = sphi 0, %s23
    %s24 = sphi 0, %s21
    %s25 = sphi 0, %s24
    %s41 = sphi 0, %s25
    %s47 = sphi 0, %s49
    %s50 = sphi 0, %s47
    %s51 = sphi 0, %s50
    %s67 = sphi 0, %s51
    %s73 = sphi 0, %s75
    %s76 = sphi 0, %s73
    %s77 = sphi 0, %s76
    %s93 = sphi 0, %s77
    %s97 = sphi 0, %s97
    %s99 = sphi 0, %s97
    %s100 = sphi 0, %s99
    %s114 = sphi 0, %s100
    %s118 = sphi 0, %s118
    %s120 = sphi 0, %s118
    %s121 = sphi 0, %s120
    %s135 = sphi 0, %s121
    %s141 = sphi 0, %s143
    %s144 = sphi 0, %s141
    %s145 = sphi 0, %s144
    %s161 = sphi 0, %s145
  $region4: #{run.11} parent=0 // loop_header_branch
    %14 = sbr.rel (%p12) target = $region8
  $region5: #{run.11} parent=0 // loop_body
    %s16 = ssub.s32 %s11, 1
    %s17 = ssub.s32 %s11, 2
    %s18 = sadd.s32 %s11, 1
    %s19 = ssub.s32 %s11, %s18
    %p20 = scmp.eq.s32.totalorder %s19, 0
    %s22 = sadd.s32 %s21, 1
    %s23 = scalar_select %p20, %s21, %s22
    %p26 = pneg %p20
    %p27 = scmp.eq.s32.totalorder %s11, 1
    %p28 = por %p26, %p27
    %p29 = scmp.ne.s32.totalorder %s21, %s24
    %p30 = scmp.eq.s32.totalorder %s11, 0
    %p31 = por %p29, %p30
    %p32 = scmp.ne.s32.totalorder %s21, %s24
    %p33 = scmp.eq.s32.totalorder %s16, 1
    %p34 = por %p32, %p33
    %p35 = scmp.ne.s32.totalorder %s24, %s25
    %p36 = scmp.eq.s32.totalorder %s16, 0
    %p37 = por %p35, %p36
    %p38 = scmp.ne.s32.totalorder %s24, %s25
    %p39 = scmp.eq.s32.totalorder %s17, 1
    %p40 = por %p38, %p39
    %p42 = scmp.ne.s32.totalorder %s25, %s41
    %p43 = scmp.eq.s32.totalorder %s17, 0
    %p44 = por %p42, %p43
    %s45 = ssub.s32 %s11, %s18
    %p46 = scmp.eq.s32.totalorder %s45, 0
    %s48 = sadd.s32 %s47, 1
    %s49 = scalar_select %p46, %s47, %s48
    %p52 = pneg %p46
    %p53 = scmp.eq.s32.totalorder %s11, 1
    %p54 = por %p52, %p53
    %p55 = scmp.ne.s32.totalorder %s47, %s50
    %p56 = scmp.eq.s32.totalorder %s11, 0
    %p57 = por %p55, %p56
    %p58 = scmp.ne.s32.totalorder %s47, %s50
    %p59 = scmp.eq.s32.totalorder %s16, 1
    %p60 = por %p58, %p59
    %p61 = scmp.ne.s32.totalorder %s50, %s51
    %p62 = scmp.eq.s32.totalorder %s16, 0
    %p63 = por %p61, %p62
    %p64 = scmp.ne.s32.totalorder %s50, %s51
    %p65 = scmp.eq.s32.totalorder %s17, 1
    %p66 = por %p64, %p65
    %p68 = scmp.ne.s32.totalorder %s51, %s67
    %p69 = scmp.eq.s32.totalorder %s17, 0
    %p70 = por %p68, %p69
    %s71 = ssub.s32 %s11, %s18
    %p72 = scmp.eq.s32.totalorder %s71, 0
    %s74 = sadd.s32 %s73, 1
    %s75 = scalar_select %p72, %s73, %s74
    %p78 = pneg %p72
    %p79 = scmp.eq.s32.totalorder %s11, 1
    %p80 = por %p78, %p79
    %p81 = scmp.ne.s32.totalorder %s73, %s76
    %p82 = scmp.eq.s32.totalorder %s11, 0
    %p83 = por %p81, %p82
    %p84 = scmp.ne.s32.totalorder %s73, %s76
    %p85 = scmp.eq.s32.totalorder %s16, 1
    %p86 = por %p84, %p85
    %p87 = scmp.ne.s32.totalorder %s76, %s77
    %p88 = scmp.eq.s32.totalorder %s16, 0
    %p89 = por %p87, %p88
    %p90 = scmp.ne.s32.totalorder %s76, %s77
    %p91 = scmp.eq.s32.totalorder %s17, 1
    %p92 = por %p90, %p91
    %p94 = scmp.ne.s32.totalorder %s77, %s93
    %p95 = scmp.eq.s32.totalorder %s17, 0
    %p96 = por %p94, %p95
    %s98 = sadd.s32 %s97, 1
    %p101 = scmp.eq.s32.totalorder %s11, 1
    %p102 = scmp.ne.s32.totalorder %s97, %s99
    %p103 = scmp.eq.s32.totalorder %s11, 0
    %p104 = por %p102, %p103
    %p105 = scmp.ne.s32.totalorder %s97, %s99
    %p106 = scmp.eq.s32.totalorder %s16, 1
    %p107 = por %p105, %p106
    %p108 = scmp.ne.s32.totalorder %s99, %s100
    %p109 = scmp.eq.s32.totalorder %s16, 0
    %p110 = por %p108, %p109
    %p111 = scmp.ne.s32.totalorder %s99, %s100
    %p112 = scmp.eq.s32.totalorder %s17, 1
    %p113 = por %p111, %p112
    %p115 = scmp.ne.s32.totalorder %s100, %s114
    %p116 = scmp.eq.s32.totalorder %s17, 0
    %p117 = por %p115, %p116
    %s119 = sadd.s32 %s118, 1
    %p122 = scmp.eq.s32.totalorder %s11, 1
    %p123 = scmp.ne.s32.totalorder %s118, %s120
    %p124 = scmp.eq.s32.totalorder %s11, 0
    %p125 = por %p123, %p124
    %p126 = scmp.ne.s32.totalorder %s118, %s120
    %p127 = scmp.eq.s32.totalorder %s16, 1
    %p128 = por %p126, %p127
    %p129 = scmp.ne.s32.totalorder %s120, %s121
    %p130 = scmp.eq.s32.totalorder %s16, 0
    %p131 = por %p129, %p130
    %p132 = scmp.ne.s32.totalorder %s120, %s121
    %p133 = scmp.eq.s32.totalorder %s17, 1
    %p134 = por %p132, %p133
    %p136 = scmp.ne.s32.totalorder %s121, %s135
    %p137 = scmp.eq.s32.totalorder %s17, 0
    %p138 = por %p136, %p137
    %s139 = ssub.s32 %s11, %s18
    %p140 = scmp.eq.s32.totalorder %s139, 0
    %s142 = sadd.s32 %s141, 1
    %s143 = scalar_select %p140, %s141, %s142
    %p146 = pneg %p140
    %p147 = scmp.eq.s32.totalorder %s11, 1
    %p148 = por %p146, %p147
    %p149 = scmp.ne.s32.totalorder %s141, %s144
    %p150 = scmp.eq.s32.totalorder %s11, 0
    %p151 = por %p149, %p150
    %p152 = scmp.ne.s32.totalorder %s141, %s144
    %p153 = scmp.eq.s32.totalorder %s16, 1
    %p154 = por %p152, %p153
    %p155 = scmp.ne.s32.totalorder %s144, %s145
    %p156 = scmp.eq.s32.totalorder %s16, 0
    %p157 = por %p155, %p156
    %p158 = scmp.ne.s32.totalorder %s144, %s145
    %p159 = scmp.eq.s32.totalorder %s17, 1
    %p160 = por %p158, %p159
    %p162 = scmp.ne.s32.totalorder %s145, %s161
    %p163 = scmp.eq.s32.totalorder %s17, 0
    %p164 = por %p162, %p163
    %p165 = scmp.le.s32.totalorder 1, %s11
    %p166 = scmp.lt.s32.totalorder %s11, 3
    %p167 = pnand %p165, %p166
    %p168 = pneg %p167
    // Predicated region
    $region9: #{run.11} parent=5 // pred_check
      _
    $region10: #{run.11} parent=5 // pred_check_branch
      %170 = sbr.rel (%p167) target = $region12
    $region11: #{run.11} parent=5 // pred_region
      %s171 = ssub.s32 %s11, 1
      // Predicated region
      $region13: #{run.11} parent=11 // pred_check
        %p172 = pneg %p110
      $region14: #{run.11} parent=11 // pred_check_branch
        %174 = sbr.rel (%p172) target = $region16
      $region15: #{run.11} parent=11 // pred_region
        _
      $region16: #{run.11} parent=11 // pred_fallthru
        _
      // Predicated region
      $region17: #{run.11} parent=11 // pred_check
        %p175 = pneg %p131
      $region18: #{run.11} parent=11 // pred_check_branch
        %177 = sbr.rel (%p175) target = $region20
      $region19: #{run.11} parent=11 // pred_region
        _
      $region20: #{run.11} parent=11 // pred_fallthru
        _
    $region12: #{run.11} parent=5 // pred_fallthru
      _
    %p178 = scmp.lt.s32.totalorder %s11, 2
    // Predicated region
    $region21: #{run.11} parent=5 // pred_check
      %p179 = pneg %p178
    $region22: #{run.11} parent=5 // pred_check_branch
      %181 = sbr.rel (%p179) target = $region24
    $region23: #{run.11} parent=5 // pred_region
      // Predicated region
      $region25: #{run.11} parent=23 // pred_check
        %p182 = pneg %p31
      $region26: #{run.11} parent=23 // pred_check_branch
        %184 = sbr.rel (%p182) target = $region28
      $region27: #{run.11} parent=23 // pred_region
        %s185 = smul.u32 16, %s11
        %p186 = scmp.lt.s32.totalorder %s185, 31
        %s187 = scalar_select %p186, %s185, 31
        %s188 = smul.addr %s187, 8
        %s189 = scalar_lea.vmem %s0, %s188
        %s190 = smul.u32 16, %s11
      $region28: #{run.11} parent=23 // pred_fallthru
        _
      // Predicated region
      $region29: #{run.11} parent=23 // pred_check
        %p191 = pneg %p57
      $region30: #{run.11} parent=23 // pred_check_branch
        %193 = sbr.rel (%p191) target = $region32
      $region31: #{run.11} parent=23 // pred_region
        %s194 = smul.u32 16, %s11
        %p195 = scmp.lt.s32.totalorder %s194, 31
        %s196 = scalar_select %p195, %s194, 31
        %s197 = smul.addr %s196, 8
        %s198 = scalar_lea.vmem %s1, %s197
        %s199 = smul.u32 16, %s11
      $region32: #{run.11} parent=23 // pred_fallthru
        _
      // Predicated region
      $region33: #{run.11} parent=23 // pred_check
        %p200 = pneg %p83
      $region34: #{run.11} parent=23 // pred_check_branch
        %202 = sbr.rel (%p200) target = $region36
      $region35: #{run.11} parent=23 // pred_region
        %s203 = smul.u32 16, %s11
        %p204 = scmp.lt.s32.totalorder %s203, 31
        %s205 = scalar_select %p204, %s203, 31
        %s206 = smul.addr %s205, 8
        %s207 = scalar_lea.vmem %s2, %s206
        %s208 = smul.u32 16, %s11
      $region36: #{run.11} parent=23 // pred_fallthru
        _
    $region24: #{run.11} parent=5 // pred_fallthru
      _
    %p209 = scmp.le.s32.totalorder 1, %s11
    %p210 = scmp.lt.s32.totalorder %s11, 3
    %p211 = pnand %p209, %p210
    %p212 = pneg %p211
    // Predicated region
    $region37: #{run.11} parent=5 // pred_check
      _
    $region38: #{run.11} parent=5 // pred_check_branch
      %214 = sbr.rel (%p211) target = $region40
    $region39: #{run.11} parent=5 // pred_region
      %s215 = ssub.s32 %s11, 1
      %s216 = smul.u32 16, %s16
      %p217 = scmp.lt.s32.totalorder %s216, 31
      %s218 = scalar_select %p217, %s216, 31
      %s219 = smul.addr %s218, 8
      %s220 = scalar_lea.vmem %s0, %s219
      %p221 = pneg %p37
      %p222 = pneg %p34
      %s223 = smul.u32 16, %s16
      %p224 = scmp.lt.s32.totalorder %s223, 31
      %s225 = scalar_select %p224, %s223, 31
      %s226 = smul.addr %s225, 8
      %s227 = scalar_lea.vmem %s1, %s226
      %p228 = pneg %p63
      %p229 = pneg %p60
      %s230 = smul.u32 16, %s16
      %p231 = scmp.lt.s32.totalorder %s230, 31
      %s232 = scalar_select %p231, %s230, 31
      %s233 = smul.addr %s232, 8
      %s234 = scalar_lea.vmem %s2, %s233
      %p235 = pneg %p89
      %p236 = pneg %p86
      %p237 = pneg %p110
      %p238 = pneg %p107
      %p239 = pneg %p131
      %p240 = pneg %p128
      %p241 = pneg %p157
      %p242 = pneg %p154
      %s243 = smul.u32 16, %s16
      %p244 = scmp.lt.s32.totalorder %s243, 31
      %s245 = scalar_select %p244, %s243, 31
      %s246 = smul.addr %s245, 4
      %s247 = scalar_lea.vmem %s5, %s246
      %s248 = smul.u32 16, %s16
      %p249 = scmp.lt.s32.totalorder %s248, 31
      %s250 = scalar_select %p249, %s248, 31
      %s251 = smul.addr %s250, 8
      %s252 = scalar_lea.vmem %s0, %s251
      %s253 = smul.u32 16, %s16
      %s254 = smul.u32 16, %s16
      %p255 = scmp.lt.s32.totalorder %s254, 31
      %s256 = scalar_select %p255, %s254, 31
      %s257 = smul.addr %s256, 8
      %s258 = scalar_lea.vmem %s1, %s257
      %s259 = smul.u32 16, %s16
      %s260 = smul.u32 16, %s16
      %p261 = scmp.lt.s32.totalorder %s260, 31
      %s262 = scalar_select %p261, %s260, 31
      %s263 = smul.addr %s262, 8
      %s264 = scalar_lea.vmem %s2, %s263
      %s265 = smul.u32 16, %s16
      %s266 = smul.u32 16, %s16
      %p267 = scmp.lt.s32.totalorder %s266, 31
      %s268 = scalar_select %p267, %s266, 31
      %s269 = smul.addr %s268, 4
      %s270 = scalar_lea.vmem %s5, %s269
      %s271 = smul.u32 16, %s16
      %v272 = vld [vmem:[%s252] sm:$0xff]
      %v273 = vld [vmem:[%s252 + $0x8] sm:$0xff]
      %v274 = vld [vmem:[%s252 + $0x10] sm:$0xff]
      %v275 = vld [vmem:[%s252 + $0x18] sm:$0xff]
      %v276 = vld [vmem:[%s252 + $0x20] sm:$0xff]
      %v277 = vld [vmem:[%s252 + $0x28] sm:$0xff]
      %v278 = vld [vmem:[%s252 + $0x30] sm:$0xff]
      %v279 = vld [vmem:[%s252 + $0x38] sm:$0xff]
      %v280 = vld [vmem:[%s252 + $0x40] sm:$0xff]
      %v281 = vld [vmem:[%s252 + $0x48] sm:$0xff]
      %v282 = vld [vmem:[%s252 + $0x50] sm:$0xff]
      %v283 = vld [vmem:[%s252 + $0x58] sm:$0xff]
      %v284 = vld [vmem:[%s252 + $0x60] sm:$0xff]
      %v285 = vld [vmem:[%s252 + $0x68] sm:$0xff]
      %v286 = vld [vmem:[%s252 + $0x70] sm:$0xff]
      %v287 = vld [vmem:[%s252 + $0x78] sm:$0xff]
      %v288 = vld [vmem:[%s258] sm:$0xff]
      %v289 = vld [vmem:[%s258 + $0x8] sm:$0xff]
      %v290 = vld [vmem:[%s258 + $0x10] sm:$0xff]
      %v291 = vld [vmem:[%s258 + $0x18] sm:$0xff]
      %v292 = vld [vmem:[%s258 + $0x20] sm:$0xff]
      %v293 = vld [vmem:[%s258 + $0x28] sm:$0xff]
      %v294 = vld [vmem:[%s258 + $0x30] sm:$0xff]
      %v295 = vld [vmem:[%s258 + $0x38] sm:$0xff]
      %v296 = vld [vmem:[%s258 + $0x40] sm:$0xff]
      %v297 = vld [vmem:[%s258 + $0x48] sm:$0xff]
      %v298 = vld [vmem:[%s258 + $0x50] sm:$0xff]
      %v299 = vld [vmem:[%s258 + $0x58] sm:$0xff]
      %v300 = vld [vmem:[%s258 + $0x60] sm:$0xff]
      %v301 = vld [vmem:[%s258 + $0x68] sm:$0xff]
      %v302 = vld [vmem:[%s258 + $0x70] sm:$0xff]
      %v303 = vld [vmem:[%s258 + $0x78] sm:$0xff]
      %v304 = vadd.f32 %v272, %v288
      %v305 = vadd.f32 %v273, %v289
      %v306 = vadd.f32 %v274, %v290
      %v307 = vadd.f32 %v275, %v291
      %v308 = vadd.f32 %v276, %v292
      %v309 = vadd.f32 %v277, %v293
      %v310 = vadd.f32 %v278, %v294
      %v311 = vadd.f32 %v279, %v295
      %v312 = vadd.f32 %v280, %v296
      %v313 = vadd.f32 %v281, %v297
      %v314 = vadd.f32 %v282, %v298
      %v315 = vadd.f32 %v283, %v299
      %v316 = vadd.f32 %v284, %v300
      %v317 = vadd.f32 %v285, %v301
      %v318 = vadd.f32 %v286, %v302
      %v319 = vadd.f32 %v287, %v303
      %v320 = vld [vmem:[%s264] sm:$0xff]
      %v321 = vld [vmem:[%s264 + $0x8] sm:$0xff]
      %v322 = vld [vmem:[%s264 + $0x10] sm:$0xff]
      %v323 = vld [vmem:[%s264 + $0x18] sm:$0xff]
      %v324 = vld [vmem:[%s264 + $0x20] sm:$0xff]
      %v325 = vld [vmem:[%s264 + $0x28] sm:$0xff]
      %v326 = vld [vmem:[%s264 + $0x30] sm:$0xff]
      %v327 = vld [vmem:[%s264 + $0x38] sm:$0xff]
      %v328 = vld [vmem:[%s264 + $0x40] sm:$0xff]
      %v329 = vld [vmem:[%s264 + $0x48] sm:$0xff]
      %v330 = vld [vmem:[%s264 + $0x50] sm:$0xff]
      %v331 = vld [vmem:[%s264 + $0x58] sm:$0xff]
      %v332 = vld [vmem:[%s264 + $0x60] sm:$0xff]
      %v333 = vld [vmem:[%s264 + $0x68] sm:$0xff]
      %v334 = vld [vmem:[%s264 + $0x70] sm:$0xff]
      %v335 = vld [vmem:[%s264 + $0x78] sm:$0xff]
      %v336 = vadd.f32 %v304, %v320
      %v337 = vadd.f32 %v305, %v321
      %v338 = vadd.f32 %v306, %v322
      %v339 = vadd.f32 %v307, %v323
      %v340 = vadd.f32 %v308, %v324
      %v341 = vadd.f32 %v309, %v325
      %v342 = vadd.f32 %v310, %v326
      %v343 = vadd.f32 %v311, %v327
      %v344 = vadd.f32 %v312, %v328
      %v345 = vadd.f32 %v313, %v329
      %v346 = vadd.f32 %v314, %v330
      %v347 = vadd.f32 %v315, %v331
      %v348 = vadd.f32 %v316, %v332
      %v349 = vadd.f32 %v317, %v333
      %v350 = vadd.f32 %v318, %v334
      %v351 = vadd.f32 %v319, %v335
      %352 = vadd.xlane.f32.xlu0 %v336
      %v353 = vpop.xlane.xlu0 %352
      %354 = vadd.xlane.f32.xlu0 %v337
      %v355 = vpop.xlane.xlu0 %354
      %356 = vadd.xlane.f32.xlu0 %v338
      %v357 = vpop.xlane.xlu0 %356
      %358 = vadd.xlane.f32.xlu0 %v339
      %v359 = vpop.xlane.xlu0 %358
      %360 = vadd.xlane.f32.xlu0 %v340
      %v361 = vpop.xlane.xlu0 %360
      %362 = vadd.xlane.f32.xlu0 %v341
      %v363 = vpop.xlane.xlu0 %362
      %364 = vadd.xlane.f32.xlu0 %v342
      %v365 = vpop.xlane.xlu0 %364
      %366 = vadd.xlane.f32.xlu0 %v343
      %v367 = vpop.xlane.xlu0 %366
      %368 = vadd.xlane.f32.xlu0 %v344
      %v369 = vpop.xlane.xlu0 %368
      %370 = vadd.xlane.f32.xlu0 %v345
      %v371 = vpop.xlane.xlu0 %370
      %372 = vadd.xlane.f32.xlu0 %v346
      %v373 = vpop.xlane.xlu0 %372
      %374 = vadd.xlane.f32.xlu0 %v347
      %v375 = vpop.xlane.xlu0 %374
      %376 = vadd.xlane.f32.xlu0 %v348
      %v377 = vpop.xlane.xlu0 %376
      %378 = vadd.xlane.f32.xlu0 %v349
      %v379 = vpop.xlane.xlu0 %378
      %380 = vadd.xlane.f32.xlu0 %v350
      %v381 = vpop.xlane.xlu0 %380
      %382 = vadd.xlane.f32.xlu0 %v351
      %v383 = vpop.xlane.xlu0 %382
      %v384 = vrcp.pop 128.0
      %v385 = vmul.f32 %v353, %v384
      %v386 = vmul.f32 %v355, %v384
      %v387 = vmul.f32 %v357, %v384
      %v388 = vmul.f32 %v359, %v384
      %v389 = vmul.f32 %v361, %v384
      %v390 = vmul.f32 %v363, %v384
      %v391 = vmul.f32 %v365, %v384
      %v392 = vmul.f32 %v367, %v384
      %v393 = vmul.f32 %v369, %v384
      %v394 = vmul.f32 %v371, %v384
      %v395 = vmul.f32 %v373, %v384
      %v396 = vmul.f32 %v375, %v384
      %v397 = vmul.f32 %v377, %v384
      %v398 = vmul.f32 %v379, %v384
      %v399 = vmul.f32 %v381, %v384
      %v400 = vmul.f32 %v383, %v384
      %v401 = vsub.f32 %v336, %v385
      %v402 = vsub.f32 %v337, %v386
      %v403 = vsub.f32 %v338, %v387
      %v404 = vsub.f32 %v339, %v388
      %v405 = vsub.f32 %v340, %v389
      %v406 = vsub.f32 %v341, %v390
      %v407 = vsub.f32 %v342, %v391
      %v408 = vsub.f32 %v343, %v392
      %v409 = vsub.f32 %v344, %v393
      %v410 = vsub.f32 %v345, %v394
      %v411 = vsub.f32 %v346, %v395
      %v412 = vsub.f32 %v347, %v396
      %v413 = vsub.f32 %v348, %v397
      %v414 = vsub.f32 %v349, %v398
      %v415 = vsub.f32 %v350, %v399
      %v416 = vsub.f32 %v351, %v400
      %v417 = vmul.f32 %v401, %v401
      %v418 = vmul.f32 %v402, %v402
      %v419 = vmul.f32 %v403, %v403
      %v420 = vmul.f32 %v404, %v404
      %v421 = vmul.f32 %v405, %v405
      %v422 = vmul.f32 %v406, %v406
      %v423 = vmul.f32 %v407, %v407
      %v424 = vmul.f32 %v408, %v408
      %v425 = vmul.f32 %v409, %v409
      %v426 = vmul.f32 %v410, %v410
      %v427 = vmul.f32 %v411, %v411
      %v428 = vmul.f32 %v412, %v412
      %v429 = vmul.f32 %v413, %v413
      %v430 = vmul.f32 %v414, %v414
      %v431 = vmul.f32 %v415, %v415
      %v432 = vmul.f32 %v416, %v416
      %433 = vadd.xlane.f32.xlu0 %v417
      %v434 = vpop.xlane.xlu0 %433
      %435 = vadd.xlane.f32.xlu0 %v418
      %v436 = vpop.xlane.xlu0 %435
      %437 = vadd.xlane.f32.xlu0 %v419
      %v438 = vpop.xlane.xlu0 %437
      %439 = vadd.xlane.f32.xlu0 %v420
      %v440 = vpop.xlane.xlu0 %439
      %441 = vadd.xlane.f32.xlu0 %v421
      %v442 = vpop.xlane.xlu0 %441
      %443 = vadd.xlane.f32.xlu0 %v422
      %v444 = vpop.xlane.xlu0 %443
      %445 = vadd.xlane.f32.xlu0 %v423
      %v446 = vpop.xlane.xlu0 %445
      %447 = vadd.xlane.f32.xlu0 %v424
      %v448 = vpop.xlane.xlu0 %447
      %449 = vadd.xlane.f32.xlu0 %v425
      %v450 = vpop.xlane.xlu0 %449
      %451 = vadd.xlane.f32.xlu0 %v426
      %v452 = vpop.xlane.xlu0 %451
      %453 = vadd.xlane.f32.xlu0 %v427
      %v454 = vpop.xlane.xlu0 %453
      %455 = vadd.xlane.f32.xlu0 %v428
      %v456 = vpop.xlane.xlu0 %455
      %457 = vadd.xlane.f32.xlu0 %v429
      %v458 = vpop.xlane.xlu0 %457
      %459 = vadd.xlane.f32.xlu0 %v430
      %v460 = vpop.xlane.xlu0 %459
      %461 = vadd.xlane.f32.xlu0 %v431
      %v462 = vpop.xlane.xlu0 %461
      %463 = vadd.xlane.f32.xlu0 %v432
      %v464 = vpop.xlane.xlu0 %463
      %v465 = vmul.f32 %v434, %v384
      %v466 = vmul.f32 %v436, %v384
      %v467 = vmul.f32 %v438, %v384
      %v468 = vmul.f32 %v440, %v384
      %v469 = vmul.f32 %v442, %v384
      %v470 = vmul.f32 %v444, %v384
      %v471 = vmul.f32 %v446, %v384
      %v472 = vmul.f32 %v448, %v384
      %v473 = vmul.f32 %v450, %v384
      %v474 = vmul.f32 %v452, %v384
      %v475 = vmul.f32 %v454, %v384
      %v476 = vmul.f32 %v456, %v384
      %v477 = vmul.f32 %v458, %v384
      %v478 = vmul.f32 %v460, %v384
      %v479 = vmul.f32 %v462, %v384
      %v480 = vmul.f32 %v464, %v384
      %v481 = vadd.f32 %v465, 1e-12
      %v482 = vadd.f32 %v466, 1e-12
      %v483 = vadd.f32 %v467, 1e-12
      %v484 = vadd.f32 %v468, 1e-12
      %v485 = vadd.f32 %v469, 1e-12
      %v486 = vadd.f32 %v470, 1e-12
      %v487 = vadd.f32 %v471, 1e-12
      %v488 = vadd.f32 %v472, 1e-12
      %v489 = vadd.f32 %v473, 1e-12
      %v490 = vadd.f32 %v474, 1e-12
      %v491 = vadd.f32 %v475, 1e-12
      %v492 = vadd.f32 %v476, 1e-12
      %v493 = vadd.f32 %v477, 1e-12
      %v494 = vadd.f32 %v478, 1e-12
      %v495 = vadd.f32 %v479, 1e-12
      %v496 = vadd.f32 %v480, 1e-12
      %v497 = vrsqrt.pop %v481
      %v498 = vrsqrt.pop %v482
      %v499 = vrsqrt.pop %v483
      %v500 = vrsqrt.pop %v484
      %v501 = vrsqrt.pop %v485
      %v502 = vrsqrt.pop %v486
      %v503 = vrsqrt.pop %v487
      %v504 = vrsqrt.pop %v488
      %v505 = vrsqrt.pop %v489
      %v506 = vrsqrt.pop %v490
      %v507 = vrsqrt.pop %v491
      %v508 = vrsqrt.pop %v492
      %v509 = vrsqrt.pop %v493
      %v510 = vrsqrt.pop %v494
      %v511 = vrsqrt.pop %v495
      %v512 = vrsqrt.pop %v496
      %v513 = vmul.f32 %v401, %v497
      %v514 = vmul.f32 %v402, %v498
      %v515 = vmul.f32 %v403, %v499
      %v516 = vmul.f32 %v404, %v500
      %v517 = vmul.f32 %v405, %v501
      %v518 = vmul.f32 %v406, %v502
      %v519 = vmul.f32 %v407, %v503
      %v520 = vmul.f32 %v408, %v504
      %v521 = vmul.f32 %v409, %v505
      %v522 = vmul.f32 %v410, %v506
      %v523 = vmul.f32 %v411, %v507
      %v524 = vmul.f32 %v412, %v508
      %v525 = vmul.f32 %v413, %v509
      %v526 = vmul.f32 %v414, %v510
      %v527 = vmul.f32 %v415, %v511
      %v528 = vmul.f32 %v416, %v512
      %v529 = vld [vmem:[%s3] sm:$0x1]
      %v531 = vlaneseq
      %v532 = vshrl.u32 %v531, 7
      %v533 = vsub.s32 0, %v532
      %v534 = vrot.slane %v529, %v533
      %v536 = vmul.f32 %v513, %v534
      %v537 = vmul.f32 %v514, %v534
      %v538 = vmul.f32 %v515, %v534
      %v539 = vmul.f32 %v516, %v534
      %v540 = vmul.f32 %v517, %v534
      %v541 = vmul.f32 %v518, %v534
      %v542 = vmul.f32 %v519, %v534
      %v543 = vmul.f32 %v520, %v534
      %v544 = vmul.f32 %v521, %v534
      %v545 = vmul.f32 %v522, %v534
      %v546 = vmul.f32 %v523, %v534
      %v547 = vmul.f32 %v524, %v534
      %v548 = vmul.f32 %v525, %v534
      %v549 = vmul.f32 %v526, %v534
      %v550 = vmul.f32 %v527, %v534
      %v551 = vmul.f32 %v528, %v534
      %v552 = vld [vmem:[%s4] sm:$0x1]
      %v554 = vlaneseq
      %v555 = vshrl.u32 %v554, 7
      %v556 = vsub.s32 0, %v555
      %v557 = vrot.slane %v552, %v556
      %v559 = vadd.f32 %v536, %v557
      %v560 = vadd.f32 %v537, %v557
      %v561 = vadd.f32 %v538, %v557
      %v562 = vadd.f32 %v539, %v557
      %v563 = vadd.f32 %v540, %v557
      %v564 = vadd.f32 %v541, %v557
      %v565 = vadd.f32 %v542, %v557
      %v566 = vadd.f32 %v543, %v557
      %v567 = vadd.f32 %v544, %v557
      %v568 = vadd.f32 %v545, %v557
      %v569 = vadd.f32 %v546, %v557
      %v570 = vadd.f32 %v547, %v557
      %v571 = vadd.f32 %v548, %v557
      %v572 = vadd.f32 %v549, %v557
      %v573 = vadd.f32 %v550, %v557
      %v574 = vadd.f32 %v551, %v557
      %v575 = vpack.c.bf16 %v560, %v559
      %v576 = vpack.c.bf16 %v562, %v561
      %v577 = vpack.c.bf16 %v564, %v563
      %v578 = vpack.c.bf16 %v566, %v565
      %v579 = vpack.c.bf16 %v568, %v567
      %v580 = vpack.c.bf16 %v570, %v569
      %v581 = vpack.c.bf16 %v572, %v571
      %v582 = vpack.c.bf16 %v574, %v573
      %v591 = vunpack.c.l.b16 %v575
      %v592 = vunpack.c.h.b16 %v575
      %v593 = vunpack.c.l.b16 %v576
      %v594 = vunpack.c.h.b16 %v576
      %v595 = vunpack.c.l.b16 %v577
      %v596 = vunpack.c.h.b16 %v577
      %v597 = vunpack.c.l.b16 %v578
      %v598 = vunpack.c.h.b16 %v578
      %v599 = vunpack.c.l.b16 %v579
      %v600 = vunpack.c.h.b16 %v579
      %v601 = vunpack.c.l.b16 %v580
      %v602 = vunpack.c.h.b16 %v580
      %v603 = vunpack.c.l.b16 %v581
      %v604 = vunpack.c.h.b16 %v581
      %v605 = vunpack.c.l.b16 %v582
      %v606 = vunpack.c.h.b16 %v582
      %v607 = vpack.c.b16 %v591, %v591
      %v608 = vpack.c.b16 %v592, %v592
      %v609 = vpack.c.b16 %v593, %v593
      %v610 = vpack.c.b16 %v594, %v594
      %v611 = vpack.c.b16 %v595, %v595
      %v612 = vpack.c.b16 %v596, %v596
      %v613 = vpack.c.b16 %v597, %v597
      %v614 = vpack.c.b16 %v598, %v598
      %v615 = vpack.c.b16 %v599, %v599
      %v616 = vpack.c.b16 %v600, %v600
      %v617 = vpack.c.b16 %v601, %v601
      %v618 = vpack.c.b16 %v602, %v602
      %v619 = vpack.c.b16 %v603, %v603
      %v620 = vpack.c.b16 %v604, %v604
      %v621 = vpack.c.b16 %v605, %v605
      %v622 = vpack.c.b16 %v606, %v606
      %639 = vst [vmem:[%s270] sm:$0xf] %v607
      %640 = vst [vmem:[%s270 + $0x4] sm:$0xf] %v608
      %641 = vst [vmem:[%s270 + $0x8] sm:$0xf] %v609
      %642 = vst [vmem:[%s270 + $0xc] sm:$0xf] %v610
      %643 = vst [vmem:[%s270 + $0x10] sm:$0xf] %v611
      %644 = vst [vmem:[%s270 + $0x14] sm:$0xf] %v612
      %645 = vst [vmem:[%s270 + $0x18] sm:$0xf] %v613
      %646 = vst [vmem:[%s270 + $0x1c] sm:$0xf] %v614
      %647 = vst [vmem:[%s270 + $0x20] sm:$0xf] %v615
      %648 = vst [vmem:[%s270 + $0x24] sm:$0xf] %v616
      %649 = vst [vmem:[%s270 + $0x28] sm:$0xf] %v617
      %650 = vst [vmem:[%s270 + $0x2c] sm:$0xf] %v618
      %651 = vst [vmem:[%s270 + $0x30] sm:$0xf] %v619
      %652 = vst [vmem:[%s270 + $0x34] sm:$0xf] %v620
      %653 = vst [vmem:[%s270 + $0x38] sm:$0xf] %v621
      %654 = vst [vmem:[%s270 + $0x3c] sm:$0xf] %v622
      %s655 = smul.u32 16, %s16
      %p656 = scmp.lt.s32.totalorder %s655, 31
      %s657 = scalar_select %p656, %s655, 31
      %s658 = smul.addr %s657, 4
      %s659 = scalar_lea.vmem %s5, %s658
      // Predicated region
      $region41: #{run.11} parent=39 // pred_check
        %p660 = pneg %p154
      $region42: #{run.11} parent=39 // pred_check_branch
        %662 = sbr.rel (%p660) target = $region44
      $region43: #{run.11} parent=39 // pred_region
        %s663 = smul.u32 16, %s16
      $region44: #{run.11} parent=39 // pred_fallthru
        _
    $region40: #{run.11} parent=5 // pred_fallthru
      _
    %p664 = scmp.le.s32.totalorder 2, %s11
    // Predicated region
    $region45: #{run.11} parent=5 // pred_check
      %p665 = pneg %p664
    $region46: #{run.11} parent=5 // pred_check_branch
      %667 = sbr.rel (%p665) target = $region48
    $region47: #{run.11} parent=5 // pred_region
      %s668 = ssub.s32 %s11, 2
      // Predicated region
      $region49: #{run.11} parent=47 // pred_check
        %p669 = pneg %p160
      $region50: #{run.11} parent=47 // pred_check_branch
        %671 = sbr.rel (%p669) target = $region52
      $region51: #{run.11} parent=47 // pred_region
        %s672 = smul.u32 16, %s17
        %p673 = scmp.lt.s32.totalorder %s672, 31
        %s674 = scalar_select %p673, %s672, 31
        %s675 = smul.addr %s674, 4
        %s676 = scalar_lea.vmem %s5, %s675
      $region52: #{run.11} parent=47 // pred_fallthru
        _
    $region48: #{run.11} parent=5 // pred_fallthru
      _
  $region6: #{run.11} parent=0 // loop_footer
    %s15 = sadd.s32 1, %s11
  $region7: #{run.11} parent=0 // loop_footer_branch
    %10 = sbr.rel target = $region3
  $region8: #{run.11} parent=0 // loop_exit
    _

// kernel: run.12
$region0: #{run.12}
  #allocation0 [shape = 'u32[]', space=smem, size = 0x4, offset = 0x4, fixed_abs, tag = 'smem constant byte address 0x4 - core index']
  #allocation1 [shape = 'u32[144,128]{1,0:T(1,128)}', space=vmem, size = 0x12000, scoped, tag = 'internal scratch']
  #allocation2 [shape = 'f32[128,128]{1,0:T(8,128)}', space=vmem, size = 0x10000, scoped, tag = 'scratch operand']
  %s0 = inlined_call_operand.vmem [shape: bf16[256,128], index: 0, kind: input, shape index: {}]
  %s1 = inlined_call_operand.vmem [shape: bf16[128,384], index: 1, kind: input, shape index: {}]
  %s2 = inlined_call_operand.vmem [shape: f32[1,384], index: 2, kind: input, shape index: {}]
  %s3 = inlined_call_operand.vmem [shape: bf16[256,384], index: 3, kind: output, shape index: {}]
  %s4 = sld [smem:[#allocation0]]
  $region131: #{run.12} parent=0
    _
  %s6 = ssub.s32 1, %s4
  %s7 = scalar_select 0, %s6, %s4
  $region1: #{run.12} parent=0
    #allocation3 [shape = 'u8[65536]{0}', space=vmem, size = 0x10000, scoped, tag = 'input window, operand 1']
    #allocation4 [shape = 'u8[65536]{0}', space=vmem, size = 0x10000, scoped, tag = 'output window, operand 0']
    loop: start=0, step=1, limit=8
    $region2: #{run.12} parent=1 // loop_pre_header
      _
    $region3: #{run.12} parent=1 // loop_header
      %s9 = sphi 0, %s13
      %p10 = scmp.ge.s32.totalorder %s9, 8
      %s16 = sphi 0, %s35
      %s17 = sphi 0, %s31
      %s18 = sphi 0, %s27
      %s19 = sphi 0, %s16
      %s20 = sphi 0, %s17
      %s21 = sphi 0, %s18
      %s22 = sphi 0, %s19
      %s23 = sphi 0, %s20
      %s24 = sphi 0, %s21
      %s40 = sphi 0, %s42
      %s43 = sphi 0, %s40
      %s44 = sphi 0, %s43
      %s60 = sphi 0, %s44
      %s68 = sphi 0, %s70
      %s71 = sphi 0, %s68
      %s72 = sphi 0, %s71
      %s88 = sphi 0, %s72
      %s94 = sphi 0, %s96
      %s97 = sphi 0, %s94
      %s98 = sphi 0, %s97
      %s114 = sphi 0, %s98
      %s122 = sphi 0, %s124
      %s125 = sphi 0, %s122
      %s126 = sphi 0, %s125
      %s142 = sphi 0, %s126
    $region4: #{run.12} parent=1 // loop_header_branch
      %12 = sbr.rel (%p10) target = $region8
    $region5: #{run.12} parent=1 // loop_body
      %s14 = ssub.s32 %s9, 1
      %s15 = ssub.s32 %s9, 2
      %s25 = sadd.s32 1, %s18
      %p26 = scmp.ge.s32.totalorder %s25, 1
      %s27 = scalar_select %p26, 0, %s25
      %s28 = sadd.s32 1, %s17
      %s29 = scalar_select %p26, %s28, %s17
      %p30 = scmp.ge.s32.totalorder %s29, 3
      %s31 = scalar_select %p30, 0, %s29
      %s32 = sadd.s32 1, %s16
      %s33 = scalar_select %p30, %s32, %s16
      %p34 = scmp.ge.s32.totalorder %s33, 2
      %s35 = scalar_select %p34, 0, %s33
      %s36 = ssub.s32 %s16, %s35
      %s37 = ssub.s32 %s18, %s27
      %s38 = sor.u32 %s36, %s37
      %p39 = scmp.eq.s32.totalorder %s38, 0
      %s41 = sadd.s32 %s40, 1
      %s42 = scalar_select %p39, %s40, %s41
      %p45 = pneg %p39
      %p46 = scmp.eq.s32.totalorder %s9, 5
      %p47 = por %p45, %p46
      %p48 = scmp.ne.s32.totalorder %s40, %s43
      %p49 = scmp.eq.s32.totalorder %s9, 0
      %p50 = por %p48, %p49
      %p51 = scmp.ne.s32.totalorder %s40, %s43
      %p52 = scmp.eq.s32.totalorder %s14, 5
      %p53 = por %p51, %p52
      %p54 = scmp.ne.s32.totalorder %s43, %s44
      %p55 = scmp.eq.s32.totalorder %s14, 0
      %p56 = por %p54, %p55
      %p57 = scmp.ne.s32.totalorder %s43, %s44
      %p58 = scmp.eq.s32.totalorder %s15, 5
      %p59 = por %p57, %p58
      %p61 = scmp.ne.s32.totalorder %s44, %s60
      %p62 = scmp.eq.s32.totalorder %s15, 0
      %p63 = por %p61, %p62
      %s64 = ssub.s32 %s18, %s27
      %s65 = ssub.s32 %s17, %s31
      %s66 = sor.u32 %s64, %s65
      %p67 = scmp.eq.s32.totalorder %s66, 0
      %s69 = sadd.s32 %s68, 1
      %s70 = scalar_select %p67, %s68, %s69
      %p73 = pneg %p67
      %p74 = scmp.eq.s32.totalorder %s9, 5
      %p75 = por %p73, %p74
      %p76 = scmp.ne.s32.totalorder %s68, %s71
      %p77 = scmp.eq.s32.totalorder %s9, 0
      %p78 = por %p76, %p77
      %p79 = scmp.ne.s32.totalorder %s68, %s71
      %p80 = scmp.eq.s32.totalorder %s14, 5
      %p81 = por %p79, %p80
      %p82 = scmp.ne.s32.totalorder %s71, %s72
      %p83 = scmp.eq.s32.totalorder %s14, 0
      %p84 = por %p82, %p83
      %p85 = scmp.ne.s32.totalorder %s71, %s72
      %p86 = scmp.eq.s32.totalorder %s15, 5
      %p87 = por %p85, %p86
      %p89 = scmp.ne.s32.totalorder %s72, %s88
      %p90 = scmp.eq.s32.totalorder %s15, 0
      %p91 = por %p89, %p90
      %s92 = ssub.s32 %s17, %s31
      %p93 = scmp.eq.s32.totalorder %s92, 0
      %s95 = sadd.s32 %s94, 1
      %s96 = scalar_select %p93, %s94, %s95
      %p99 = pneg %p93
      %p100 = scmp.eq.s32.totalorder %s9, 5
      %p101 = por %p99, %p100
      %p102 = scmp.ne.s32.totalorder %s94, %s97
      %p103 = scmp.eq.s32.totalorder %s9, 0
      %p104 = por %p102, %p103
      %p105 = scmp.ne.s32.totalorder %s94, %s97
      %p106 = scmp.eq.s32.totalorder %s14, 5
      %p107 = por %p105, %p106
      %p108 = scmp.ne.s32.totalorder %s97, %s98
      %p109 = scmp.eq.s32.totalorder %s14, 0
      %p110 = por %p108, %p109
      %p111 = scmp.ne.s32.totalorder %s97, %s98
      %p112 = scmp.eq.s32.totalorder %s15, 5
      %p113 = por %p111, %p112
      %p115 = scmp.ne.s32.totalorder %s98, %s114
      %p116 = scmp.eq.s32.totalorder %s15, 0
      %p117 = por %p115, %p116
      %s118 = ssub.s32 %s16, %s35
      %s119 = ssub.s32 %s17, %s31
      %s120 = sor.u32 %s118, %s119
      %p121 = scmp.eq.s32.totalorder %s120, 0
      %s123 = sadd.s32 %s122, 1
      %s124 = scalar_select %p121, %s122, %s123
      %p127 = pneg %p121
      %p128 = scmp.eq.s32.totalorder %s9, 5
      %p129 = por %p127, %p128
      %p130 = scmp.ne.s32.totalorder %s122, %s125
      %p131 = scmp.eq.s32.totalorder %s9, 0
      %p132 = por %p130, %p131
      %p133 = scmp.ne.s32.totalorder %s122, %s125
      %p134 = scmp.eq.s32.totalorder %s14, 5
      %p135 = por %p133, %p134
      %p136 = scmp.ne.s32.totalorder %s125, %s126
      %p137 = scmp.eq.s32.totalorder %s14, 0
      %p138 = por %p136, %p137
      %p139 = scmp.ne.s32.totalorder %s125, %s126
      %p140 = scmp.eq.s32.totalorder %s15, 5
      %p141 = por %p139, %p140
      %p143 = scmp.ne.s32.totalorder %s126, %s142
      %p144 = scmp.eq.s32.totalorder %s15, 0
      %p145 = por %p143, %p144
      %p146 = scmp.le.s32.totalorder 1, %s9
      %p147 = scmp.lt.s32.totalorder %s9, 7
      %p148 = pnand %p146, %p147
      %p149 = pneg %p148
      // Predicated region
      $region9: #{run.12} parent=5 // pred_check
        _
      $region10: #{run.12} parent=5 // pred_check_branch
        %151 = sbr.rel (%p148) target = $region12
      $region11: #{run.12} parent=5 // pred_region
        %s152 = ssub.s32 %s9, 1
      $region12: #{run.12} parent=5 // pred_fallthru
        _
      %p153 = scmp.lt.s32.totalorder %s9, 6
      // Predicated region
      $region13: #{run.12} parent=5 // pred_check
        %p154 = pneg %p153
      $region14: #{run.12} parent=5 // pred_check_branch
        %156 = sbr.rel (%p154) target = $region16
      $region15: #{run.12} parent=5 // pred_region
        // Predicated region
        $region17: #{run.12} parent=15 // pred_check
          %p157 = pneg %p50
        $region18: #{run.12} parent=15 // pred_check_branch
          %159 = sbr.rel (%p157) target = $region20
        $region19: #{run.12} parent=15 // pred_region
          %s160 = smul.u32 16, %s16
          %p161 = scmp.lt.s32.totalorder %s160, 31
          %s162 = scalar_select %p161, %s160, 31
          %p163 = scmp.lt.s32.totalorder %s18, 0
          %s164 = scalar_select %p163, %s18, 0
          %s165 = sadd.s32 %s164, %s162
          %s166 = smul.addr %s165, 4
          %s167 = scalar_lea.vmem %s0, %s166
          %s168 = smul.u32 16, %s16
        $region20: #{run.12} parent=15 // pred_fallthru
          _
        // Predicated region
        $region21: #{run.12} parent=15 // pred_check
          %p169 = pneg %p78
        $region22: #{run.12} parent=15 // pred_check_branch
          %171 = sbr.rel (%p169) target = $region24
        $region23: #{run.12} parent=15 // pred_region
          %s172 = sand.u32 %s68, 1
          %s173 = sand.u32 %s68, 1
          %s174 = smul.addr %s173, 64
          %s175 = scalar_lea.vmem [#allocation3], %s174
          %s176 = smul.u32 16, %s18
          %s177 = smul.addr %s176, 3
          %s178 = sadd.s32 %s17, %s177
          %s179 = smul.addr %s178, 4
          %s180 = scalar_lea.vmem %s1, %s179
          // Predicated region
          $region25: #{run.12} parent=23 // pred_check
            _
          $region26: #{run.12} parent=23 // pred_check_branch
            %182 = sbr.rel (0) target = $region28
          $region27: #{run.12} parent=23 // pred_region
            // Predicated region
            $region29: #{run.12} parent=27 // pred_check
              _
            $region30: #{run.12} parent=27 // pred_check_branch
              %184 = sbr.rel target = $region32
            $region31: #{run.12} parent=27 // pred_region
              // Predicated region
              $region44: #{run.12} parent=31 // pred_check
                _
              $region45: #{run.12} parent=31 // pred_check_branch
                %229 = sbr.rel (0) target = $region47
              $region46: #{run.12} parent=31 // pred_region
                loop: start=0, step=1, limit=1
                $region48: #{run.12} parent=46 // loop_pre_header
                  _
                $region49: #{run.12} parent=46 // loop_header
                  %s231 = sphi 0, %s235
                  %p232 = scmp.ge.s32.totalorder %s231, 1
                  %s236 = sphi %s180, %s180
                  %s237 = sphi %s175, %s175
                $region50: #{run.12} parent=46 // loop_header_branch
                  %234 = sbr.rel (%p232) target = $region54
                $region51: #{run.12} parent=46 // loop_body
                  _
                $region52: #{run.12} parent=46 // loop_footer
                  %s235 = sadd.s32 1, %s231
                $region53: #{run.12} parent=46 // loop_footer_branch
                  %230 = sbr.rel target = $region49
                $region54: #{run.12} parent=46 // loop_exit
                  _
                loop: start=0, step=1, limit=1
                $region55: #{run.12} parent=46 // loop_pre_header
                  _
                $region56: #{run.12} parent=46 // loop_header
                  %s240 = sphi 0, %s244
                  %p241 = scmp.ge.s32.totalorder %s240, 1
                  %s245 = sphi %s180, %s180
                  %s246 = sphi %s175, %s175
                $region57: #{run.12} parent=46 // loop_header_branch
                  %243 = sbr.rel (%p241) target = $region61
                $region58: #{run.12} parent=46 // loop_body
                  %v247 = vld [vmem:[%s245] sm:$0xf]
                  %248 = vst [vmem:[%s246] sm:$0xf] %v247
                  %v249 = vld [vmem:[%s245 + $0xc] sm:$0xf]
                  %250 = vst [vmem:[%s246 + $0x4] sm:$0xf] %v249
                  %v251 = vld [vmem:[%s245 + $0x18] sm:$0xf]
                  %252 = vst [vmem:[%s246 + $0x8] sm:$0xf] %v251
                  %v253 = vld [vmem:[%s245 + $0x24] sm:$0xf]
                  %254 = vst [vmem:[%s246 + $0xc] sm:$0xf] %v253
                  %v255 = vld [vmem:[%s245 + $0x30] sm:$0xf]
                  %256 = vst [vmem:[%s246 + $0x10] sm:$0xf] %v255
                  %v257 = vld [vmem:[%s245 + $0x3c] sm:$0xf]
                  %258 = vst [vmem:[%s246 + $0x14] sm:$0xf] %v257
                  %v259 = vld [vmem:[%s245 + $0x48] sm:$0xf]
                  %260 = vst [vmem:[%s246 + $0x18] sm:$0xf] %v259
                  %v261 = vld [vmem:[%s245 + $0x54] sm:$0xf]
                  %262 = vst [vmem:[%s246 + $0x1c] sm:$0xf] %v261
                  %v263 = vld [vmem:[%s245 + $0x60] sm:$0xf]
                  %264 = vst [vmem:[%s246 + $0x20] sm:$0xf] %v263
                  %v265 = vld [vmem:[%s245 + $0x6c] sm:$0xf]
                  %266 = vst [vmem:[%s246 + $0x24] sm:$0xf] %v265
                  %v267 = vld [vmem:[%s245 + $0x78] sm:$0xf]
                  %268 = vst [vmem:[%s246 + $0x28] sm:$0xf] %v267
                  %v269 = vld [vmem:[%s245 + $0x84] sm:$0xf]
                  %270 = vst [vmem:[%s246 + $0x2c] sm:$0xf] %v269
                  %v271 = vld [vmem:[%s245 + $0x90] sm:$0xf]
                  %272 = vst [vmem:[%s246 + $0x30] sm:$0xf] %v271
                  %v273 = vld [vmem:[%s245 + $0x9c] sm:$0xf]
                  %274 = vst [vmem:[%s246 + $0x34] sm:$0xf] %v273
                  %v275 = vld [vmem:[%s245 + $0xa8] sm:$0xf]
                  %276 = vst [vmem:[%s246 + $0x38] sm:$0xf] %v275
                  %v277 = vld [vmem:[%s245 + $0xb4] sm:$0xf]
                  %278 = vst [vmem:[%s246 + $0x3c] sm:$0xf] %v277
                $region59: #{run.12} parent=46 // loop_footer
                  %s244 = sadd.s32 1, %s240
                $region60: #{run.12} parent=46 // loop_footer_branch
                  %239 = sbr.rel target = $region56
                $region61: #{run.12} parent=46 // loop_exit
                  _
              $region47: #{run.12} parent=31 // pred_fallthru
                _
            $region32: #{run.12} parent=27 // pred_fallthru
              _
            // Predicated region
            $region33: #{run.12} parent=27 // pred_check
              _
            $region34: #{run.12} parent=27 // pred_check_branch
              %186 = sbr.rel (0) target = $region36
            $region35: #{run.12} parent=27 // pred_region
              loop: start=0, step=1, limit=1
              $region37: #{run.12} parent=35 // loop_pre_header
                _
              $region38: #{run.12} parent=35 // loop_header
                %s189 = sphi 0, %s193
                %p190 = scmp.ge.s32.totalorder %s189, 1
                %s194 = sphi %s180, %s180
                %s195 = sphi %s175, %s175
              $region39: #{run.12} parent=35 // loop_header_branch
                %192 = sbr.rel (%p190) target = $region43
              $region40: #{run.12} parent=35 // loop_body
                %v196 = vld [vmem:[%s194] sm:$0xf]
                %197 = vst [vmem:[%s195] sm:$0xf] %v196
                %v198 = vld [vmem:[%s194 + $0xc] sm:$0xf]
                %199 = vst [vmem:[%s195 + $0x4] sm:$0xf] %v198
                %v200 = vld [vmem:[%s194 + $0x18] sm:$0xf]
                %201 = vst [vmem:[%s195 + $0x8] sm:$0xf] %v200
                %v202 = vld [vmem:[%s194 + $0x24] sm:$0xf]
                %203 = vst [vmem:[%s195 + $0xc] sm:$0xf] %v202
                %v204 = vld [vmem:[%s194 + $0x30] sm:$0xf]
                %205 = vst [vmem:[%s195 + $0x10] sm:$0xf] %v204
                %v206 = vld [vmem:[%s194 + $0x3c] sm:$0xf]
                %207 = vst [vmem:[%s195 + $0x14] sm:$0xf] %v206
                %v208 = vld [vmem:[%s194 + $0x48] sm:$0xf]
                %209 = vst [vmem:[%s195 + $0x18] sm:$0xf] %v208
                %v210 = vld [vmem:[%s194 + $0x54] sm:$0xf]
                %211 = vst [vmem:[%s195 + $0x1c] sm:$0xf] %v210
                %v212 = vld [vmem:[%s194 + $0x60] sm:$0xf]
                %213 = vst [vmem:[%s195 + $0x20] sm:$0xf] %v212
                %v214 = vld [vmem:[%s194 + $0x6c] sm:$0xf]
                %215 = vst [vmem:[%s195 + $0x24] sm:$0xf] %v214
                %v216 = vld [vmem:[%s194 + $0x78] sm:$0xf]
                %217 = vst [vmem:[%s195 + $0x28] sm:$0xf] %v216
                %v218 = vld [vmem:[%s194 + $0x84] sm:$0xf]
                %219 = vst [vmem:[%s195 + $0x2c] sm:$0xf] %v218
                %v220 = vld [vmem:[%s194 + $0x90] sm:$0xf]
                %221 = vst [vmem:[%s195 + $0x30] sm:$0xf] %v220
                %v222 = vld [vmem:[%s194 + $0x9c] sm:$0xf]
                %223 = vst [vmem:[%s195 + $0x34] sm:$0xf] %v222
                %v224 = vld [vmem:[%s194 + $0xa8] sm:$0xf]
                %225 = vst [vmem:[%s195 + $0x38] sm:$0xf] %v224
                %v226 = vld [vmem:[%s194 + $0xb4] sm:$0xf]
                %227 = vst [vmem:[%s195 + $0x3c] sm:$0xf] %v226
              $region41: #{run.12} parent=35 // loop_footer
                %s193 = sadd.s32 1, %s189
              $region42: #{run.12} parent=35 // loop_footer_branch
                %188 = sbr.rel target = $region38
              $region43: #{run.12} parent=35 // loop_exit
                _
            $region36: #{run.12} parent=27 // pred_fallthru
              _
          $region28: #{run.12} parent=23 // pred_fallthru
            _
          %279 = vnop
        $region24: #{run.12} parent=15 // pred_fallthru
          _
        // Predicated region
        $region62: #{run.12} parent=15 // pred_check
          %p280 = pneg %p104
        $region63: #{run.12} parent=15 // pred_check_branch
          %282 = sbr.rel (%p280) target = $region65
        $region64: #{run.12} parent=15 // pred_region
          %p283 = scmp.lt.s32.totalorder %s17, 2
          %s284 = scalar_select %p283, %s17, 2
          %s285 = scalar_lea.vmem %s2, %s284
        $region65: #{run.12} parent=15 // pred_fallthru
          _
      $region16: #{run.12} parent=5 // pred_fallthru
        _
      %p286 = scmp.le.s32.totalorder 1, %s9
      %p287 = scmp.lt.s32.totalorder %s9, 7
      %p288 = pnand %p286, %p287
      %p289 = pneg %p288
      // Predicated region
      $region66: #{run.12} parent=5 // pred_check
        _
      $region67: #{run.12} parent=5 // pred_check_branch
        %291 = sbr.rel (%p288) target = $region69
      $region68: #{run.12} parent=5 // pred_region
        %s292 = ssub.s32 %s9, 1
        %s293 = sand.u32 %s71, 1
        %s294 = sand.u32 %s71, 1
        %s295 = smul.addr %s294, 64
        %s296 = scalar_lea.vmem [#allocation3], %s295
        // Predicated region
        $region70: #{run.12} parent=68 // pred_check
          %p297 = pneg %p84
        $region71: #{run.12} parent=68 // pred_check_branch
          %299 = sbr.rel (%p297) target = $region73
        $region72: #{run.12} parent=68 // pred_region
          _
        $region73: #{run.12} parent=68 // pred_fallthru
          _
        %s300 = smul.u32 16, %s19
        %p301 = scmp.lt.s32.totalorder %s300, 31
        %s302 = scalar_select %p301, %s300, 31
        %p303 = scmp.lt.s32.totalorder %s21, 0
        %s304 = scalar_select %p303, %s21, 0
        %s305 = sadd.s32 %s304, %s302
        %s306 = smul.addr %s305, 4
        %s307 = scalar_lea.vmem %s0, %s306
        %p308 = pneg %p56
        %p309 = pneg %p53
        %s310 = sand.u32 %s71, 1
        %s311 = sand.u32 %s71, 1
        %s312 = smul.addr %s311, 64
        %s313 = scalar_lea.vmem [#allocation3], %s312
        %p314 = pneg %p84
        %p315 = pneg %p81
        %p316 = scmp.lt.s32.totalorder %s20, 2
        %s317 = scalar_select %p316, %s20, 2
        %s318 = scalar_lea.vmem %s2, %s317
        %p319 = pneg %p110
        %p320 = pneg %p107
        %p321 = pneg %p138
        %p322 = pneg %p135
        %s323 = sand.u32 %s125, 1
        %s324 = sand.u32 %s125, 1
        %s325 = smul.addr %s324, 64
        %s326 = scalar_lea.vmem [#allocation4], %s325
        %s327 = smul.u32 16, %s19
        %p328 = scmp.lt.s32.totalorder %s327, 31
        %s329 = scalar_select %p328, %s327, 31
        %p330 = scmp.lt.s32.totalorder %s21, 0
        %s331 = scalar_select %p330, %s21, 0
        %s332 = sadd.s32 %s331, %s329
        %s333 = smul.addr %s332, 4
        %s334 = scalar_lea.vmem %s0, %s333
        %s335 = smul.u32 16, %s19
        %s336 = smul.u32 16, %s21
        %p337 = scmp.lt.s32.totalorder %s20, 2
        %s338 = scalar_select %p337, %s20, 2
        %s339 = scalar_lea.vmem %s2, %s338
        %s340 = smul.u32 16, %s19
        %p342 = scmp.eq.s32.totalorder %s21, 0
        // Predicated region
        $region74: #{run.12} parent=68 // pred_check
          %p343 = pneg %p342
        $region75: #{run.12} parent=68 // pred_check_branch
          %345 = sbr.rel (%p343) target = $region77
        $region76: #{run.12} parent=68 // pred_region
          %346 = vst [vmem:[#allocation2] sm:$0xff] 0.0
          %347 = vst [vmem:[#allocation2 + $0x8] sm:$0xff] 0.0
          %348 = vst [vmem:[#allocation2 + $0x10] sm:$0xff] 0.0
          %349 = vst [vmem:[#allocation2 + $0x18] sm:$0xff] 0.0
          %350 = vst [vmem:[#allocation2 + $0x20] sm:$0xff] 0.0
          %351 = vst [vmem:[#allocation2 + $0x28] sm:$0xff] 0.0
          %352 = vst [vmem:[#allocation2 + $0x30] sm:$0xff] 0.0
          %353 = vst [vmem:[#allocation2 + $0x38] sm:$0xff] 0.0
          %354 = vst [vmem:[#allocation2 + $0x40] sm:$0xff] 0.0
          %355 = vst [vmem:[#allocation2 + $0x48] sm:$0xff] 0.0
          %356 = vst [vmem:[#allocation2 + $0x50] sm:$0xff] 0.0
          %357 = vst [vmem:[#allocation2 + $0x58] sm:$0xff] 0.0
          %358 = vst [vmem:[#allocation2 + $0x60] sm:$0xff] 0.0
          %359 = vst [vmem:[#allocation2 + $0x68] sm:$0xff] 0.0
          %360 = vst [vmem:[#allocation2 + $0x70] sm:$0xff] 0.0
          %361 = vst [vmem:[#allocation2 + $0x78] sm:$0xff] 0.0
        $region77: #{run.12} parent=68 // pred_fallthru
          _
        %v362 = vld [vmem:[#allocation2] sm:$0xff]
        %v363 = vld [vmem:[#allocation2 + $0x8] sm:$0xff]
        %v364 = vld [vmem:[#allocation2 + $0x10] sm:$0xff]
        %v365 = vld [vmem:[#allocation2 + $0x18] sm:$0xff]
        %v366 = vld [vmem:[#allocation2 + $0x20] sm:$0xff]
        %v367 = vld [vmem:[#allocation2 + $0x28] sm:$0xff]
        %v368 = vld [vmem:[#allocation2 + $0x30] sm:$0xff]
        %v369 = vld [vmem:[#allocation2 + $0x38] sm:$0xff]
        %v370 = vld [vmem:[#allocation2 + $0x40] sm:$0xff]
        %v371 = vld [vmem:[#allocation2 + $0x48] sm:$0xff]
        %v372 = vld [vmem:[#allocation2 + $0x50] sm:$0xff]
        %v373 = vld [vmem:[#allocation2 + $0x58] sm:$0xff]
        %v374 = vld [vmem:[#allocation2 + $0x60] sm:$0xff]
        %v375 = vld [vmem:[#allocation2 + $0x68] sm:$0xff]
        %v376 = vld [vmem:[#allocation2 + $0x70] sm:$0xff]
        %v377 = vld [vmem:[#allocation2 + $0x78] sm:$0xff]
        %v378 = vld [vmem:[%s334] sm:$0xf]
        %v379 = vld [vmem:[%s334 + $0x4] sm:$0xf]
        %v380 = vld [vmem:[%s334 + $0x8] sm:$0xf]
        %v381 = vld [vmem:[%s334 + $0xc] sm:$0xf]
        %v382 = vld [vmem:[%s334 + $0x10] sm:$0xf]
        %v383 = vld [vmem:[%s334 + $0x14] sm:$0xf]
        %v384 = vld [vmem:[%s334 + $0x18] sm:$0xf]
        %v385 = vld [vmem:[%s334 + $0x1c] sm:$0xf]
        %v386 = vld [vmem:[%s334 + $0x20] sm:$0xf]
        %v387 = vld [vmem:[%s334 + $0x24] sm:$0xf]
        %v388 = vld [vmem:[%s334 + $0x28] sm:$0xf]
        %v389 = vld [vmem:[%s334 + $0x2c] sm:$0xf]
        %v390 = vld [vmem:[%s334 + $0x30] sm:$0xf]
        %v391 = vld [vmem:[%s334 + $0x34] sm:$0xf]
        %v392 = vld [vmem:[%s334 + $0x38] sm:$0xf]
        %v393 = vld [vmem:[%s334 + $0x3c] sm:$0xf]
        %v394 = vld [vmem:[%s296] sm:$0xf]
        %v395 = vld [vmem:[%s296 + $0x4] sm:$0xf]
        %v396 = vld [vmem:[%s296 + $0x8] sm:$0xf]
        %v397 = vld [vmem:[%s296 + $0xc] sm:$0xf]
        %v398 = vld [vmem:[%s296 + $0x10] sm:$0xf]
        %v399 = vld [vmem:[%s296 + $0x14] sm:$0xf]
        %v400 = vld [vmem:[%s296 + $0x18] sm:$0xf]
        %v401 = vld [vmem:[%s296 + $0x1c] sm:$0xf]
        %v402 = vld [vmem:[%s296 + $0x20] sm:$0xf]
        %v403 = vld [vmem:[%s296 + $0x24] sm:$0xf]
        %v404 = vld [vmem:[%s296 + $0x28] sm:$0xf]
        %v405 = vld [vmem:[%s296 + $0x2c] sm:$0xf]
        %v406 = vld [vmem:[%s296 + $0x30] sm:$0xf]
        %v407 = vld [vmem:[%s296 + $0x34] sm:$0xf]
        %v408 = vld [vmem:[%s296 + $0x38] sm:$0xf]
        %v409 = vld [vmem:[%s296 + $0x3c] sm:$0xf]
        %v426 = vunpack.c.l.b16 %v378
        %v427 = vunpack.c.l.b16 %v379
        %v428 = vunpack.c.l.b16 %v380
        %v429 = vunpack.c.l.b16 %v381
        %v430 = vunpack.c.l.b16 %v382
        %v431 = vunpack.c.l.b16 %v383
        %v432 = vunpack.c.l.b16 %v384
        %v433 = vunpack.c.l.b16 %v385
        %v434 = vunpack.c.l.b16 %v386
        %v435 = vunpack.c.l.b16 %v387
        %v436 = vunpack.c.l.b16 %v388
        %v437 = vunpack.c.l.b16 %v389
        %v438 = vunpack.c.l.b16 %v390
        %v439 = vunpack.c.l.b16 %v391
        %v440 = vunpack.c.l.b16 %v392
        %v441 = vunpack.c.l.b16 %v393
        %v442 = vpack.c.b16 %v427, %v426
        %v443 = vpack.c.b16 %v429, %v428
        %v444 = vpack.c.b16 %v431, %v430
        %v445 = vpack.c.b16 %v433, %v432
        %v446 = vpack.c.b16 %v435, %v434
        %v447 = vpack.c.b16 %v437, %v436
        %v448 = vpack.c.b16 %v439, %v438
        %v449 = vpack.c.b16 %v441, %v440
        %v474 = vunpack.c.l.b16 %v394
        %v475 = vunpack.c.l.b16 %v395
        %v476 = vunpack.c.l.b16 %v396
        %v477 = vunpack.c.l.b16 %v397
        %v478 = vunpack.c.l.b16 %v398
        %v479 = vunpack.c.l.b16 %v399
        %v480 = vunpack.c.l.b16 %v400
        %v481 = vunpack.c.l.b16 %v401
        %v482 = vunpack.c.l.b16 %v402
        %v483 = vunpack.c.l.b16 %v403
        %v484 = vunpack.c.l.b16 %v404
        %v485 = vunpack.c.l.b16 %v405
        %v486 = vunpack.c.l.b16 %v406
        %v487 = vunpack.c.l.b16 %v407
        %v488 = vunpack.c.l.b16 %v408
        %v489 = vunpack.c.l.b16 %v409
        %v490 = vpack.c.b16 %v475, %v474
        %v491 = vpack.c.b16 %v477, %v476
        %v492 = vpack.c.b16 %v479, %v478
        %v493 = vpack.c.b16 %v481, %v480
        %v494 = vpack.c.b16 %v483, %v482
        %v495 = vpack.c.b16 %v485, %v484
        %v496 = vpack.c.b16 %v487, %v486
        %v497 = vpack.c.b16 %v489, %v488
        %506 = vmatprep.subr.bf16.mxu0 0
        %507 = vmatpush1.bf16.msra.mxu0 %v490
        %508 = vmatprep.subr.bf16.mxu0 0
        %509 = vmatpush1.bf16.msra.mxu0 %v491
        %510 = vmatprep.subr.bf16.mxu0 0
        %511 = vmatpush1.bf16.msra.mxu0 %v492
        %512 = vmatprep.subr.bf16.mxu0 0
        %513 = vmatpush1.bf16.msra.mxu0 %v493
        %514 = vmatprep.subr.bf16.mxu0 0
        %515 = vmatpush1.bf16.msra.mxu0 %v494
        %516 = vmatprep.subr.bf16.mxu0 0
        %517 = vmatpush1.bf16.msra.mxu0 %v495
        %518 = vmatprep.subr.bf16.mxu0 0
        %519 = vmatpush1.bf16.msra.mxu0 %v496
        %520 = vmatprep.subr.bf16.mxu0 0
        %521 = vmatpush1.bf16.msra.mxu0 %v497
        %522 = vmatprep.subr.bf16.mxu0 0
        %523 = vmatpush1.bf16.msra.mxu0 0
        %524 = vmatprep.subr.bf16.mxu0 0
        %525 = vmatpush1.bf16.msra.mxu0 0
        %526 = vmatprep.subr.bf16.mxu0 0
        %527 = vmatpush1.bf16.msra.mxu0 0
        %528 = vmatprep.subr.bf16.mxu0 0
        %529 = vmatpush1.bf16.msra.mxu0 0
        %530 = vmatprep.subr.bf16.mxu0 0
        %531 = vmatpush1.bf16.msra.mxu0 0
        %532 = vmatprep.subr.bf16.mxu0 0
        %533 = vmatpush1.bf16.msra.mxu0 0
        %534 = vmatprep.subr.bf16.mxu0 0
        %535 = vmatpush1.bf16.msra.mxu0 0
        %536 = vmatprep.subr.bf16.mxu0 0
        %537 = vmatpush1.bf16.msra.mxu0 0
        %538 = vmatprep.mubr.bf16.mxu0 0
        %539 = vmatmul.mubr.bf16.gmra.mrb[0].mxu0 %v442
        %v540 = vpop.f32.mrb[0].mxu0
        %v541 = vadd.f32 0.0, %v540
        %v542 = vpop.f32.mrb[0].mxu0
        %v543 = vpop.f32.mrb[0].mxu0
        %v544 = vadd.f32 0.0, %v543
        %v545 = vpop.f32.mrb[0].mxu0
        %546 = vmatprep.mubr.bf16.mxu0 0
        %547 = vmatmul.mubr.bf16.gmra.mrb[0].mxu0 %v443
        %v548 = vpop.f32.mrb[0].mxu0
        %v549 = vadd.f32 0.0, %v548
        %v550 = vpop.f32.mrb[0].mxu0
        %v551 = vpop.f32.mrb[0].mxu0
        %v552 = vadd.f32 0.0, %v551
        %v553 = vpop.f32.mrb[0].mxu0
        %554 = vmatprep.mubr.bf16.mxu0 0
        %555 = vmatmul.mubr.bf16.gmra.mrb[0].mxu0 %v444
        %v556 = vpop.f32.mrb[0].mxu0
        %v557 = vadd.f32 0.0, %v556
        %v558 = vpop.f32.mrb[0].mxu0
        %v559 = vpop.f32.mrb[0].mxu0
        %v560 = vadd.f32 0.0, %v559
        %v561 = vpop.f32.mrb[0].mxu0
        %562 = vmatprep.mubr.bf16.mxu0 0
        %563 = vmatmul.mubr.bf16.gmra.mrb[0].mxu0 %v445
        %v564 = vpop.f32.mrb[0].mxu0
        %v565 = vadd.f32 0.0, %v564
        %v566 = vpop.f32.mrb[0].mxu0
        %v567 = vpop.f32.mrb[0].mxu0
        %v568 = vadd.f32 0.0, %v567
        %v569 = vpop.f32.mrb[0].mxu0
        %570 = vmatprep.mubr.bf16.mxu0 0
        %571 = vmatmul.mubr.bf16.gmra.mrb[0].mxu0 %v446
        %v572 = vpop.f32.mrb[0].mxu0
        %v573 = vadd.f32 0.0, %v572
        %v574 = vpop.f32.mrb[0].mxu0
        %v575 = vpop.f32.mrb[0].mxu0
        %v576 = vadd.f32 0.0, %v575
        %v577 = vpop.f32.mrb[0].mxu0
        %578 = vmatprep.mubr.bf16.mxu0 0
        %579 = vmatmul.mubr.bf16.gmra.mrb[0].mxu0 %v447
        %v580 = vpop.f32.mrb[0].mxu0
        %v581 = vadd.f32 0.0, %v580
        %v582 = vpop.f32.mrb[0].mxu0
        %v583 = vpop.f32.mrb[0].mxu0
        %v584 = vadd.f32 0.0, %v583
        %v585 = vpop.f32.mrb[0].mxu0
        %586 = vmatprep.mubr.bf16.mxu0 0
        %587 = vmatmul.mubr.bf16.gmra.mrb[0].mxu0 %v448
        %v588 = vpop.f32.mrb[0].mxu0
        %v589 = vadd.f32 0.0, %v588
        %v590 = vpop.f32.mrb[0].mxu0
        %v591 = vpop.f32.mrb[0].mxu0
        %v592 = vadd.f32 0.0, %v591
        %v593 = vpop.f32.mrb[0].mxu0
        %594 = vmatprep.mubr.bf16.mxu0 0
        %595 = vmatmul.mubr.bf16.gmra.mrb[0].mxu0 %v449
        %v596 = vpop.f32.mrb[0].mxu0
        %v597 = vadd.f32 0.0, %v596
        %v598 = vpop.f32.mrb[0].mxu0
        %v599 = vpop.f32.mrb[0].mxu0
        %v600 = vadd.f32 0.0, %v599
        %v601 = vpop.f32.mrb[0].mxu0
        %602 = vdwg.mxu0
        %v603 = vadd.f32 %v362, %v541
        %v604 = vadd.f32 %v363, %v544
        %v605 = vadd.f32 %v364, %v549
        %v606 = vadd.f32 %v365, %v552
        %v607 = vadd.f32 %v366, %v557
        %v608 = vadd.f32 %v367, %v560
        %v609 = vadd.f32 %v368, %v565
        %v610 = vadd.f32 %v369, %v568
        %v611 = vadd.f32 %v370, %v573
        %v612 = vadd.f32 %v371, %v576
        %v613 = vadd.f32 %v372, %v581
        %v614 = vadd.f32 %v373, %v584
        %v615 = vadd.f32 %v374, %v589
        %v616 = vadd.f32 %v375, %v592
        %v617 = vadd.f32 %v376, %v597
        %v618 = vadd.f32 %v377, %v600
        %619 = vst [vmem:[#allocation2] sm:$0xff] %v603
        %620 = vst [vmem:[#allocation2 + $0x8] sm:$0xff] %v604
        %621 = vst [vmem:[#allocation2 + $0x10] sm:$0xff] %v605
        %622 = vst [vmem:[#allocation2 + $0x18] sm:$0xff] %v606
        %623 = vst [vmem:[#allocation2 + $0x20] sm:$0xff] %v607
        %624 = vst [vmem:[#allocation2 + $0x28] sm:$0xff] %v608
        %625 = vst [vmem:[#allocation2 + $0x30] sm:$0xff] %v609
        %626 = vst [vmem:[#allocation2 + $0x38] sm:$0xff] %v610
        %627 = vst [vmem:[#allocation2 + $0x40] sm:$0xff] %v611
        %628 = vst [vmem:[#allocation2 + $0x48] sm:$0xff] %v612
        %629 = vst [vmem:[#allocation2 + $0x50] sm:$0xff] %v613
        %630 = vst [vmem:[#allocation2 + $0x58] sm:$0xff] %v614
        %631 = vst [vmem:[#allocation2 + $0x60] sm:$0xff] %v615
        %632 = vst [vmem:[#allocation2 + $0x68] sm:$0xff] %v616
        %633 = vst [vmem:[#allocation2 + $0x70] sm:$0xff] %v617
        %634 = vst [vmem:[#allocation2 + $0x78] sm:$0xff] %v618
        // Predicated region
        $region78: #{run.12} parent=68 // pred_check
          %p635 = pneg %p342
        $region79: #{run.12} parent=68 // pred_check_branch
          %637 = sbr.rel (%p635) target = $region81
        $region80: #{run.12} parent=68 // pred_region
          %v638 = vld [vmem:[#allocation2] sm:$0xff]
          %v639 = vld [vmem:[#allocation2 + $0x8] sm:$0xff]
          %v640 = vld [vmem:[#allocation2 + $0x10] sm:$0xff]
          %v641 = vld [vmem:[#allocation2 + $0x18] sm:$0xff]
          %v642 = vld [vmem:[#allocation2 + $0x20] sm:$0xff]
          %v643 = vld [vmem:[#allocation2 + $0x28] sm:$0xff]
          %v644 = vld [vmem:[#allocation2 + $0x30] sm:$0xff]
          %v645 = vld [vmem:[#allocation2 + $0x38] sm:$0xff]
          %v646 = vld [vmem:[#allocation2 + $0x40] sm:$0xff]
          %v647 = vld [vmem:[#allocation2 + $0x48] sm:$0xff]
          %v648 = vld [vmem:[#allocation2 + $0x50] sm:$0xff]
          %v649 = vld [vmem:[#allocation2 + $0x58] sm:$0xff]
          %v650 = vld [vmem:[#allocation2 + $0x60] sm:$0xff]
          %v651 = vld [vmem:[#allocation2 + $0x68] sm:$0xff]
          %v652 = vld [vmem:[#allocation2 + $0x70] sm:$0xff]
          %v653 = vld [vmem:[#allocation2 + $0x78] sm:$0xff]
          %v654 = vld [vmem:[%s339] sm:$0x1]
          %v656 = vlaneseq
          %v657 = vshrl.u32 %v656, 7
          %v658 = vsub.s32 0, %v657
          %v659 = vrot.slane %v654, %v658
          %v661 = vadd.f32 %v638, %v659
          %v662 = vadd.f32 %v639, %v659
          %v663 = vadd.f32 %v640, %v659
          %v664 = vadd.f32 %v641, %v659
          %v665 = vadd.f32 %v642, %v659
          %v666 = vadd.f32 %v643, %v659
          %v667 = vadd.f32 %v644, %v659
          %v668 = vadd.f32 %v645, %v659
          %v669 = vadd.f32 %v646, %v659
          %v670 = vadd.f32 %v647, %v659
          %v671 = vadd.f32 %v648, %v659
          %v672 = vadd.f32 %v649, %v659
          %v673 = vadd.f32 %v650, %v659
          %v674 = vadd.f32 %v651, %v659
          %v675 = vadd.f32 %v652, %v659
          %v676 = vadd.f32 %v653, %v659
          %v677 = vpack.c.bf16 %v662, %v661
          %v678 = vpack.c.bf16 %v664, %v663
          %v679 = vpack.c.bf16 %v666, %v665
          %v680 = vpack.c.bf16 %v668, %v667
          %v681 = vpack.c.bf16 %v670, %v669
          %v682 = vpack.c.bf16 %v672, %v671
          %v683 = vpack.c.bf16 %v674, %v673
          %v684 = vpack.c.bf16 %v676, %v675
          %v693 = vunpack.c.l.b16 %v677
          %v694 = vunpack.c.h.b16 %v677
          %v695 = vunpack.c.l.b16 %v678
          %v696 = vunpack.c.h.b16 %v678
          %v697 = vunpack.c.l.b16 %v679
          %v698 = vunpack.c.h.b16 %v679
          %v699 = vunpack.c.l.b16 %v680
          %v700 = vunpack.c.h.b16 %v680
          %v701 = vunpack.c.l.b16 %v681
          %v702 = vunpack.c.h.b16 %v681
          %v703 = vunpack.c.l.b16 %v682
          %v704 = vunpack.c.h.b16 %v682
          %v705 = vunpack.c.l.b16 %v683
          %v706 = vunpack.c.h.b16 %v683
          %v707 = vunpack.c.l.b16 %v684
          %v708 = vunpack.c.h.b16 %v684
          %v709 = vpack.c.b16 %v693, %v693
          %v710 = vpack.c.b16 %v694, %v694
          %v711 = vpack.c.b16 %v695, %v695
          %v712 = vpack.c.b16 %v696, %v696
          %v713 = vpack.c.b16 %v697, %v697
          %v714 = vpack.c.b16 %v698, %v698
          %v715 = vpack.c.b16 %v699, %v699
          %v716 = vpack.c.b16 %v700, %v700
          %v717 = vpack.c.b16 %v701, %v701
          %v718 = vpack.c.b16 %v702, %v702
          %v719 = vpack.c.b16 %v703, %v703
          %v720 = vpack.c.b16 %v704, %v704
          %v721 = vpack.c.b16 %v705, %v705
          %v722 = vpack.c.b16 %v706, %v706
          %v723 = vpack.c.b16 %v707, %v707
          %v724 = vpack.c.b16 %v708, %v708
          %741 = vst [vmem:[%s326] sm:$0xf] %v709
          %742 = vst [vmem:[%s326 + $0x4] sm:$0xf] %v710
          %743 = vst [vmem:[%s326 + $0x8] sm:$0xf] %v711
          %744 = vst [vmem:[%s326 + $0xc] sm:$0xf] %v712
          %745 = vst [vmem:[%s326 + $0x10] sm:$0xf] %v713
          %746 = vst [vmem:[%s326 + $0x14] sm:$0xf] %v714
          %747 = vst [vmem:[%s326 + $0x18] sm:$0xf] %v715
          %748 = vst [vmem:[%s326 + $0x1c] sm:$0xf] %v716
          %749 = vst [vmem:[%s326 + $0x20] sm:$0xf] %v717
          %750 = vst [vmem:[%s326 + $0x24] sm:$0xf] %v718
          %751 = vst [vmem:[%s326 + $0x28] sm:$0xf] %v719
          %752 = vst [vmem:[%s326 + $0x2c] sm:$0xf] %v720
          %753 = vst [vmem:[%s326 + $0x30] sm:$0xf] %v721
          %754 = vst [vmem:[%s326 + $0x34] sm:$0xf] %v722
          %755 = vst [vmem:[%s326 + $0x38] sm:$0xf] %v723
          %756 = vst [vmem:[%s326 + $0x3c] sm:$0xf] %v724
        $region81: #{run.12} parent=68 // pred_fallthru
          _
        %s757 = sand.u32 %s125, 1
        %s758 = sand.u32 %s125, 1
        %s759 = smul.addr %s758, 64
        %s760 = scalar_lea.vmem [#allocation4], %s759
        // Predicated region
        $region82: #{run.12} parent=68 // pred_check
          %p761 = pneg %p135
        $region83: #{run.12} parent=68 // pred_check_branch
          %763 = sbr.rel (%p761) target = $region85
        $region84: #{run.12} parent=68 // pred_region
          %s764 = smul.u32 16, %s19
          %s765 = smul.addr %s764, 3
          %s766 = sadd.s32 %s20, %s765
          %s767 = smul.addr %s766, 4
          %s768 = scalar_lea.vmem %s3, %s767
          // Predicated region
          $region86: #{run.12} parent=84 // pred_check
            _
          $region87: #{run.12} parent=84 // pred_check_branch
            %770 = sbr.rel (0) target = $region89
          $region88: #{run.12} parent=84 // pred_region
            // Predicated region
            $region90: #{run.12} parent=88 // pred_check
              _
            $region91: #{run.12} parent=88 // pred_check_branch
              %772 = sbr.rel target = $region93
            $region92: #{run.12} parent=88 // pred_region
              // Predicated region
              $region105: #{run.12} parent=92 // pred_check
                _
              $region106: #{run.12} parent=92 // pred_check_branch
                %817 = sbr.rel (0) target = $region108
              $region107: #{run.12} parent=92 // pred_region
                loop: start=0, step=1, limit=1
                $region109: #{run.12} parent=107 // loop_pre_header
                  _
                $region110: #{run.12} parent=107 // loop_header
                  %s819 = sphi 0, %s823
                  %p820 = scmp.ge.s32.totalorder %s819, 1
                  %s824 = sphi %s760, %s760
                  %s825 = sphi %s768, %s768
                $region111: #{run.12} parent=107 // loop_header_branch
                  %822 = sbr.rel (%p820) target = $region115
                $region112: #{run.12} parent=107 // loop_body
                  _
                $region113: #{run.12} parent=107 // loop_footer
                  %s823 = sadd.s32 1, %s819
                $region114: #{run.12} parent=107 // loop_footer_branch
                  %818 = sbr.rel target = $region110
                $region115: #{run.12} parent=107 // loop_exit
                  _
                loop: start=0, step=1, limit=1
                $region116: #{run.12} parent=107 // loop_pre_header
                  _
                $region117: #{run.12} parent=107 // loop_header
                  %s828 = sphi 0, %s832
                  %p829 = scmp.ge.s32.totalorder %s828, 1
                  %s833 = sphi %s760, %s760
                  %s834 = sphi %s768, %s768
                $region118: #{run.12} parent=107 // loop_header_branch
                  %831 = sbr.rel (%p829) target = $region122
                $region119: #{run.12} parent=107 // loop_body
                  %v835 = vld [vmem:[%s833] sm:$0xf]
                  %836 = vst [vmem:[%s834] sm:$0xf] %v835
                  %v837 = vld [vmem:[%s833 + $0x4] sm:$0xf]
                  %838 = vst [vmem:[%s834 + $0xc] sm:$0xf] %v837
                  %v839 = vld [vmem:[%s833 + $0x8] sm:$0xf]
                  %840 = vst [vmem:[%s834 + $0x18] sm:$0xf] %v839
                  %v841 = vld [vmem:[%s833 + $0xc] sm:$0xf]
                  %842 = vst [vmem:[%s834 + $0x24] sm:$0xf] %v841
                  %v843 = vld [vmem:[%s833 + $0x10] sm:$0xf]
                  %844 = vst [vmem:[%s834 + $0x30] sm:$0xf] %v843
                  %v845 = vld [vmem:[%s833 + $0x14] sm:$0xf]
                  %846 = vst [vmem:[%s834 + $0x3c] sm:$0xf] %v845
                  %v847 = vld [vmem:[%s833 + $0x18] sm:$0xf]
                  %848 = vst [vmem:[%s834 + $0x48] sm:$0xf] %v847
                  %v849 = vld [vmem:[%s833 + $0x1c] sm:$0xf]
                  %850 = vst [vmem:[%s834 + $0x54] sm:$0xf] %v849
                  %v851 = vld [vmem:[%s833 + $0x20] sm:$0xf]
                  %852 = vst [vmem:[%s834 + $0x60] sm:$0xf] %v851
                  %v853 = vld [vmem:[%s833 + $0x24] sm:$0xf]
                  %854 = vst [vmem:[%s834 + $0x6c] sm:$0xf] %v853
                  %v855 = vld [vmem:[%s833 + $0x28] sm:$0xf]
                  %856 = vst [vmem:[%s834 + $0x78] sm:$0xf] %v855
                  %v857 = vld [vmem:[%s833 + $0x2c] sm:$0xf]
                  %858 = vst [vmem:[%s834 + $0x84] sm:$0xf] %v857
                  %v859 = vld [vmem:[%s833 + $0x30] sm:$0xf]
                  %860 = vst [vmem:[%s834 + $0x90] sm:$0xf] %v859
                  %v861 = vld [vmem:[%s833 + $0x34] sm:$0xf]
                  %862 = vst [vmem:[%s834 + $0x9c] sm:$0xf] %v861
                  %v863 = vld [vmem:[%s833 + $0x38] sm:$0xf]
                  %864 = vst [vmem:[%s834 + $0xa8] sm:$0xf] %v863
                  %v865 = vld [vmem:[%s833 + $0x3c] sm:$0xf]
                  %866 = vst [vmem:[%s834 + $0xb4] sm:$0xf] %v865
                $region120: #{run.12} parent=107 // loop_footer
                  %s832 = sadd.s32 1, %s828
                $region121: #{run.12} parent=107 // loop_footer_branch
                  %827 = sbr.rel target = $region117
                $region122: #{run.12} parent=107 // loop_exit
                  _
              $region108: #{run.12} parent=92 // pred_fallthru
                _
            $region93: #{run.12} parent=88 // pred_fallthru
              _
            // Predicated region
            $region94: #{run.12} parent=88 // pred_check
              _
            $region95: #{run.12} parent=88 // pred_check_branch
              %774 = sbr.rel (0) target = $region97
            $region96: #{run.12} parent=88 // pred_region
              loop: start=0, step=1, limit=1
              $region98: #{run.12} parent=96 // loop_pre_header
                _
              $region99: #{run.12} parent=96 // loop_header
                %s777 = sphi 0, %s781
                %p778 = scmp.ge.s32.totalorder %s777, 1
                %s782 = sphi %s760, %s760
                %s783 = sphi %s768, %s768
              $region100: #{run.12} parent=96 // loop_header_branch
                %780 = sbr.rel (%p778) target = $region104
              $region101: #{run.12} parent=96 // loop_body
                %v784 = vld [vmem:[%s782] sm:$0xf]
                %785 = vst [vmem:[%s783] sm:$0xf] %v784
                %v786 = vld [vmem:[%s782 + $0x4] sm:$0xf]
                %787 = vst [vmem:[%s783 + $0xc] sm:$0xf] %v786
                %v788 = vld [vmem:[%s782 + $0x8] sm:$0xf]
                %789 = vst [vmem:[%s783 + $0x18] sm:$0xf] %v788
                %v790 = vld [vmem:[%s782 + $0xc] sm:$0xf]
                %791 = vst [vmem:[%s783 + $0x24] sm:$0xf] %v790
                %v792 = vld [vmem:[%s782 + $0x10] sm:$0xf]
                %793 = vst [vmem:[%s783 + $0x30] sm:$0xf] %v792
                %v794 = vld [vmem:[%s782 + $0x14] sm:$0xf]
                %795 = vst [vmem:[%s783 + $0x3c] sm:$0xf] %v794
                %v796 = vld [vmem:[%s782 + $0x18] sm:$0xf]
                %797 = vst [vmem:[%s783 + $0x48] sm:$0xf] %v796
                %v798 = vld [vmem:[%s782 + $0x1c] sm:$0xf]
                %799 = vst [vmem:[%s783 + $0x54] sm:$0xf] %v798
                %v800 = vld [vmem:[%s782 + $0x20] sm:$0xf]
                %801 = vst [vmem:[%s783 + $0x60] sm:$0xf] %v800
                %v802 = vld [vmem:[%s782 + $0x24] sm:$0xf]
                %803 = vst [vmem:[%s783 + $0x6c] sm:$0xf] %v802
                %v804 = vld [vmem:[%s782 + $0x28] sm:$0xf]
                %805 = vst [vmem:[%s783 + $0x78] sm:$0xf] %v804
                %v806 = vld [vmem:[%s782 + $0x2c] sm:$0xf]
                %807 = vst [vmem:[%s783 + $0x84] sm:$0xf] %v806
                %v808 = vld [vmem:[%s782 + $0x30] sm:$0xf]
                %809 = vst [vmem:[%s783 + $0x90] sm:$0xf] %v808
                %v810 = vld [vmem:[%s782 + $0x34] sm:$0xf]
                %811 = vst [vmem:[%s783 + $0x9c] sm:$0xf] %v810
                %v812 = vld [vmem:[%s782 + $0x38] sm:$0xf]
                %813 = vst [vmem:[%s783 + $0xa8] sm:$0xf] %v812
                %v814 = vld [vmem:[%s782 + $0x3c] sm:$0xf]
                %815 = vst [vmem:[%s783 + $0xb4] sm:$0xf] %v814
              $region102: #{run.12} parent=96 // loop_footer
                %s781 = sadd.s32 1, %s777
              $region103: #{run.12} parent=96 // loop_footer_branch
                %776 = sbr.rel target = $region99
              $region104: #{run.12} parent=96 // loop_exit
                _
            $region97: #{run.12} parent=88 // pred_fallthru
              _
          $region89: #{run.12} parent=84 // pred_fallthru
            _
          %867 = vnop
        $region85: #{run.12} parent=68 // pred_fallthru
          _
      $region69: #{run.12} parent=5 // pred_fallthru
        _
      %p868 = scmp.le.s32.totalorder 2, %s9
      // Predicated region
      $region123: #{run.12} parent=5 // pred_check
        %p869 = pneg %p868
      $region124: #{run.12} parent=5 // pred_check_branch
        %871 = sbr.rel (%p869) target = $region126
      $region125: #{run.12} parent=5 // pred_region
        %s872 = ssub.s32 %s9, 2
        // Predicated region
        $region127: #{run.12} parent=125 // pred_check
          %p873 = pneg %p141
        $region128: #{run.12} parent=125 // pred_check_branch
          %875 = sbr.rel (%p873) target = $region130
        $region129: #{run.12} parent=125 // pred_region
          %s876 = sand.u32 %s126, 1
          %s877 = sand.u32 %s126, 1
          %s878 = smul.addr %s877, 64
          %s879 = scalar_lea.vmem [#allocation4], %s878
        $region130: #{run.12} parent=125 // pred_fallthru
          _
      $region126: #{run.12} parent=5 // pred_fallthru
        _
    $region6: #{run.12} parent=1 // loop_footer
      %s13 = sadd.s32 1, %s9
    $region7: #{run.12} parent=1 // loop_footer_branch
      %8 = sbr.rel target = $region3
    $region8: #{run.12} parent=1 // loop_exit
      _

// kernel: run.13
$region0: #{run.13}
  #allocation0 [shape = 'u32[]', space=smem, size = 0x4, offset = 0x4, fixed_abs, tag = 'smem constant byte address 0x4 - core index']
  #allocation1 [shape = 'u32[144,128]{1,0:T(1,128)}', space=vmem, size = 0x12000, scoped, tag = 'internal scratch']
  %s0 = inlined_call_operand.vmem [shape: bf16[2,128,384], index: 0, kind: input, shape index: {}, may-alias: {0,1,2}]
  %s1 = inlined_call_operand.vmem [shape: bf16[2,128,384], index: 1, kind: input, shape index: {}, may-alias: {0,1,2}]
  %s2 = inlined_call_operand.vmem [shape: bf16[2,128,384], index: 2, kind: input, shape index: {}, may-alias: {0,1,2}]
  %s3 = inlined_call_operand.vmem [shape: f32[2,1,128], index: 3, kind: input, shape index: {}]
  %s4 = inlined_call_operand.vmem [shape: bf16[2,128,128], index: 4, kind: output, shape index: {}]
  %s5 = sld [smem:[#allocation0]]
  $region172: #{run.13} parent=0
    _
  %s7 = ssub.s32 1, %s5
  %s8 = scalar_select 0, %s7, %s5
  $region1: #{run.13} parent=0
    #allocation2 [shape = 'u8[65536]{0}', space=vmem, size = 0x10000, scoped, tag = 'input window, operand 0']
    #allocation3 [shape = 'u8[65536]{0}', space=vmem, size = 0x10000, scoped, tag = 'input window, operand 1']
    #allocation4 [shape = 'u8[65536]{0}', space=vmem, size = 0x10000, scoped, tag = 'input window, operand 2']
    loop: start=0, step=1, limit=4
    $region2: #{run.13} parent=1 // loop_pre_header
      _
    $region3: #{run.13} parent=1 // loop_header
      %s10 = sphi 0, %s14
      %p11 = scmp.ge.s32.totalorder %s10, 4
      %s17 = sphi 0, %s29
      %s18 = sphi 0, %s25
      %s19 = sphi 0, %s17
      %s20 = sphi 0, %s18
      %s21 = sphi 0, %s19
      %s22 = sphi 0, %s20
      %s34 = sphi 0, %s36
      %s37 = sphi 0, %s34
      %s38 = sphi 0, %s37
      %s54 = sphi 0, %s38
      %s64 = sphi 0, %s66
      %s67 = sphi 0, %s64
      %s68 = sphi 0, %s67
      %s84 = sphi 0, %s68
      %s94 = sphi 0, %s96
      %s97 = sphi 0, %s94
      %s98 = sphi 0, %s97
      %s114 = sphi 0, %s98
      %s120 = sphi 0, %s122
      %s123 = sphi 0, %s120
      %s124 = sphi 0, %s123
      %s140 = sphi 0, %s124
      %s148 = sphi 0, %s150
      %s151 = sphi 0, %s148
      %s152 = sphi 0, %s151
      %s168 = sphi 0, %s152
    $region4: #{run.13} parent=1 // loop_header_branch
      %13 = sbr.rel (%p11) target = $region8
    $region5: #{run.13} parent=1 // loop_body
      %s15 = ssub.s32 %s10, 1
      %s16 = ssub.s32 %s10, 2
      %s23 = sadd.s32 1, %s18
      %p24 = scmp.ge.s32.totalorder %s23, 1
      %s25 = scalar_select %p24, 0, %s23
      %s26 = sadd.s32 1, %s17
      %s27 = scalar_select %p24, %s26, %s17
      %p28 = scmp.ge.s32.totalorder %s27, 2
      %s29 = scalar_select %p28, 0, %s27
      %s30 = ssub.s32 %s17, %s29
      %s31 = ssub.s32 %s18, %s25
      %s32 = sor.u32 %s30, %s31
      %p33 = scmp.eq.s32.totalorder %s32, 0
      %s35 = sadd.s32 %s34, 1
      %s36 = scalar_select %p33, %s34, %s35
      %p39 = pneg %p33
      %p40 = scmp.eq.s32.totalorder %s10, 1
      %p41 = por %p39, %p40
      %p42 = scmp.ne.s32.totalorder %s34, %s37
      %p43 = scmp.eq.s32.totalorder %s10, 0
      %p44 = por %p42, %p43
      %p45 = scmp.ne.s32.totalorder %s34, %s37
      %p46 = scmp.eq.s32.totalorder %s15, 1
      %p47 = por %p45, %p46
      %p48 = scmp.ne.s32.totalorder %s37, %s38
      %p49 = scmp.eq.s32.totalorder %s15, 0
      %p50 = por %p48, %p49
      %p51 = scmp.ne.s32.totalorder %s37, %s38
      %p52 = scmp.eq.s32.totalorder %s16, 1
      %p53 = por %p51, %p52
      %p55 = scmp.ne.s32.totalorder %s38, %s54
      %p56 = scmp.eq.s32.totalorder %s16, 0
      %p57 = por %p55, %p56
      %s58 = sadd.s32 %s18, 1
      %s59 = sadd.s32 %s25, 1
      %s60 = ssub.s32 %s17, %s29
      %s61 = ssub.s32 %s58, %s59
      %s62 = sor.u32 %s60, %s61
      %p63 = scmp.eq.s32.totalorder %s62, 0
      %s65 = sadd.s32 %s64, 1
      %s66 = scalar_select %p63, %s64, %s65
      %p69 = pneg %p63
      %p70 = scmp.eq.s32.totalorder %s10, 1
      %p71 = por %p69, %p70
      %p72 = scmp.ne.s32.totalorder %s64, %s67
      %p73 = scmp.eq.s32.totalorder %s10, 0
      %p74 = por %p72, %p73
      %p75 = scmp.ne.s32.totalorder %s64, %s67
      %p76 = scmp.eq.s32.totalorder %s15, 1
      %p77 = por %p75, %p76
      %p78 = scmp.ne.s32.totalorder %s67, %s68
      %p79 = scmp.eq.s32.totalorder %s15, 0
      %p80 = por %p78, %p79
      %p81 = scmp.ne.s32.totalorder %s67, %s68
      %p82 = scmp.eq.s32.totalorder %s16, 1
      %p83 = por %p81, %p82
      %p85 = scmp.ne.s32.totalorder %s68, %s84
      %p86 = scmp.eq.s32.totalorder %s16, 0
      %p87 = por %p85, %p86
      %s88 = sadd.s32 %s18, 2
      %s89 = sadd.s32 %s25, 2
      %s90 = ssub.s32 %s17, %s29
      %s91 = ssub.s32 %s88, %s89
      %s92 = sor.u32 %s90, %s91
      %p93 = scmp.eq.s32.totalorder %s92, 0
      %s95 = sadd.s32 %s94, 1
      %s96 = scalar_select %p93, %s94, %s95
      %p99 = pneg %p93
      %p100 = scmp.eq.s32.totalorder %s10, 1
      %p101 = por %p99, %p100
      %p102 = scmp.ne.s32.totalorder %s94, %s97
      %p103 = scmp.eq.s32.totalorder %s10, 0
      %p104 = por %p102, %p103
      %p105 = scmp.ne.s32.totalorder %s94, %s97
      %p106 = scmp.eq.s32.totalorder %s15, 1
      %p107 = por %p105, %p106
      %p108 = scmp.ne.s32.totalorder %s97, %s98
      %p109 = scmp.eq.s32.totalorder %s15, 0
      %p110 = por %p108, %p109
      %p111 = scmp.ne.s32.totalorder %s97, %s98
      %p112 = scmp.eq.s32.totalorder %s16, 1
      %p113 = por %p111, %p112
      %p115 = scmp.ne.s32.totalorder %s98, %s114
      %p116 = scmp.eq.s32.totalorder %s16, 0
      %p117 = por %p115, %p116
      %s118 = ssub.s32 %s17, %s29
      %p119 = scmp.eq.s32.totalorder %s118, 0
      %s121 = sadd.s32 %s120, 1
      %s122 = scalar_select %p119, %s120, %s121
      %p125 = pneg %p119
      %p126 = scmp.eq.s32.totalorder %s10, 1
      %p127 = por %p125, %p126
      %p128 = scmp.ne.s32.totalorder %s120, %s123
      %p129 = scmp.eq.s32.totalorder %s10, 0
      %p130 = por %p128, %p129
      %p131 = scmp.ne.s32.totalorder %s120, %s123
      %p132 = scmp.eq.s32.totalorder %s15, 1
      %p133 = por %p131, %p132
      %p134 = scmp.ne.s32.totalorder %s123, %s124
      %p135 = scmp.eq.s32.totalorder %s15, 0
      %p136 = por %p134, %p135
      %p137 = scmp.ne.s32.totalorder %s123, %s124
      %p138 = scmp.eq.s32.totalorder %s16, 1
      %p139 = por %p137, %p138
      %p141 = scmp.ne.s32.totalorder %s124, %s140
      %p142 = scmp.eq.s32.totalorder %s16, 0
      %p143 = por %p141, %p142
      %s144 = ssub.s32 %s17, %s29
      %s145 = ssub.s32 %s18, %s25
      %s146 = sor.u32 %s144, %s145
      %p147 = scmp.eq.s32.totalorder %s146, 0
      %s149 = sadd.s32 %s148, 1
      %s150 = scalar_select %p147, %s148, %s149
      %p153 = pneg %p147
      %p154 = scmp.eq.s32.totalorder %s10, 1
      %p155 = por %p153, %p154
      %p156 = scmp.ne.s32.totalorder %s148, %s151
      %p157 = scmp.eq.s32.totalorder %s10, 0
      %p158 = por %p156, %p157
      %p159 = scmp.ne.s32.totalorder %s148, %s151
      %p160 = scmp.eq.s32.totalorder %s15, 1
      %p161 = por %p159, %p160
      %p162 = scmp.ne.s32.totalorder %s151, %s152
      %p163 = scmp.eq.s32.totalorder %s15, 0
      %p164 = por %p162, %p163
      %p165 = scmp.ne.s32.totalorder %s151, %s152
      %p166 = scmp.eq.s32.totalorder %s16, 1
      %p167 = por %p165, %p166
      %p169 = scmp.ne.s32.totalorder %s152, %s168
      %p170 = scmp.eq.s32.totalorder %s16, 0
      %p171 = por %p169, %p170
      %p172 = scmp.le.s32.totalorder 1, %s10
      %p173 = scmp.lt.s32.totalorder %s10, 3
      %p174 = pnand %p172, %p173
      %p175 = pneg %p174
      // Predicated region
      $region9: #{run.13} parent=5 // pred_check
        _
      $region10: #{run.13} parent=5 // pred_check_branch
        %177 = sbr.rel (%p174) target = $region12
      $region11: #{run.13} parent=5 // pred_region
        %s178 = ssub.s32 %s10, 1
      $region12: #{run.13} parent=5 // pred_fallthru
        _
      %p179 = scmp.lt.s32.totalorder %s10, 2
      // Predicated region
      $region13: #{run.13} parent=5 // pred_check
        %p180 = pneg %p179
      $region14: #{run.13} parent=5 // pred_check_branch
        %182 = sbr.rel (%p180) target = $region16
      $region15: #{run.13} parent=5 // pred_region
        // Predicated region
        $region17: #{run.13} parent=15 // pred_check
          %p183 = pneg %p44
        $region18: #{run.13} parent=15 // pred_check_branch
          %185 = sbr.rel (%p183) target = $region20
        $region19: #{run.13} parent=15 // pred_region
          %s186 = sand.u32 %s34, 1
          %s187 = sand.u32 %s34, 1
          %s188 = smul.addr %s187, 64
          %s189 = scalar_lea.vmem [#allocation2], %s188
          %s190 = smul.addr %s17, 48
          %s191 = sadd.s32 %s18, %s190
          %s192 = smul.addr %s191, 4
          %s193 = scalar_lea.vmem %s0, %s192
          // Predicated region
          $region21: #{run.13} parent=19 // pred_check
            _
          $region22: #{run.13} parent=19 // pred_check_branch
            %195 = sbr.rel (0) target = $region24
          $region23: #{run.13} parent=19 // pred_region
            // Predicated region
            $region25: #{run.13} parent=23 // pred_check
              _
            $region26: #{run.13} parent=23 // pred_check_branch
              %197 = sbr.rel target = $region28
            $region27: #{run.13} parent=23 // pred_region
              // Predicated region
              $region40: #{run.13} parent=27 // pred_check
                _
              $region41: #{run.13} parent=27 // pred_check_branch
                %242 = sbr.rel (0) target = $region43
              $region42: #{run.13} parent=27 // pred_region
                loop: start=0, step=1, limit=1
                $region44: #{run.13} parent=42 // loop_pre_header
                  _
                $region45: #{run.13} parent=42 // loop_header
                  %s244 = sphi 0, %s248
                  %p245 = scmp.ge.s32.totalorder %s244, 1
                  %s249 = sphi %s193, %s193
                  %s250 = sphi %s189, %s189
                $region46: #{run.13} parent=42 // loop_header_branch
                  %247 = sbr.rel (%p245) target = $region50
                $region47: #{run.13} parent=42 // loop_body
                  _
                $region48: #{run.13} parent=42 // loop_footer
                  %s248 = sadd.s32 1, %s244
                $region49: #{run.13} parent=42 // loop_footer_branch
                  %243 = sbr.rel target = $region45
                $region50: #{run.13} parent=42 // loop_exit
                  _
                loop: start=0, step=1, limit=1
                $region51: #{run.13} parent=42 // loop_pre_header
                  _
                $region52: #{run.13} parent=42 // loop_header
                  %s253 = sphi 0, %s257
                  %p254 = scmp.ge.s32.totalorder %s253, 1
                  %s258 = sphi %s193, %s193
                  %s259 = sphi %s189, %s189
                $region53: #{run.13} parent=42 // loop_header_branch
                  %256 = sbr.rel (%p254) target = $region57
                $region54: #{run.13} parent=42 // loop_body
                  %v260 = vld [vmem:[%s258] sm:$0xf]
                  %261 = vst [vmem:[%s259] sm:$0xf] %v260
                  %v262 = vld [vmem:[%s258 + $0xc] sm:$0xf]
                  %263 = vst [vmem:[%s259 + $0x4] sm:$0xf] %v262
                  %v264 = vld [vmem:[%s258 + $0x18] sm:$0xf]
                  %265 = vst [vmem:[%s259 + $0x8] sm:$0xf] %v264
                  %v266 = vld [vmem:[%s258 + $0x24] sm:$0xf]
                  %267 = vst [vmem:[%s259 + $0xc] sm:$0xf] %v266
                  %v268 = vld [vmem:[%s258 + $0x30] sm:$0xf]
                  %269 = vst [vmem:[%s259 + $0x10] sm:$0xf] %v268
                  %v270 = vld [vmem:[%s258 + $0x3c] sm:$0xf]
                  %271 = vst [vmem:[%s259 + $0x14] sm:$0xf] %v270
                  %v272 = vld [vmem:[%s258 + $0x48] sm:$0xf]
                  %273 = vst [vmem:[%s259 + $0x18] sm:$0xf] %v272
                  %v274 = vld [vmem:[%s258 + $0x54] sm:$0xf]
                  %275 = vst [vmem:[%s259 + $0x1c] sm:$0xf] %v274
                  %v276 = vld [vmem:[%s258 + $0x60] sm:$0xf]
                  %277 = vst [vmem:[%s259 + $0x20] sm:$0xf] %v276
                  %v278 = vld [vmem:[%s258 + $0x6c] sm:$0xf]
                  %279 = vst [vmem:[%s259 + $0x24] sm:$0xf] %v278
                  %v280 = vld [vmem:[%s258 + $0x78] sm:$0xf]
                  %281 = vst [vmem:[%s259 + $0x28] sm:$0xf] %v280
                  %v282 = vld [vmem:[%s258 + $0x84] sm:$0xf]
                  %283 = vst [vmem:[%s259 + $0x2c] sm:$0xf] %v282
                  %v284 = vld [vmem:[%s258 + $0x90] sm:$0xf]
                  %285 = vst [vmem:[%s259 + $0x30] sm:$0xf] %v284
                  %v286 = vld [vmem:[%s258 + $0x9c] sm:$0xf]
                  %287 = vst [vmem:[%s259 + $0x34] sm:$0xf] %v286
                  %v288 = vld [vmem:[%s258 + $0xa8] sm:$0xf]
                  %289 = vst [vmem:[%s259 + $0x38] sm:$0xf] %v288
                  %v290 = vld [vmem:[%s258 + $0xb4] sm:$0xf]
                  %291 = vst [vmem:[%s259 + $0x3c] sm:$0xf] %v290
                $region55: #{run.13} parent=42 // loop_footer
                  %s257 = sadd.s32 1, %s253
                $region56: #{run.13} parent=42 // loop_footer_branch
                  %252 = sbr.rel target = $region52
                $region57: #{run.13} parent=42 // loop_exit
                  _
              $region43: #{run.13} parent=27 // pred_fallthru
                _
            $region28: #{run.13} parent=23 // pred_fallthru
              _
            // Predicated region
            $region29: #{run.13} parent=23 // pred_check
              _
            $region30: #{run.13} parent=23 // pred_check_branch
              %199 = sbr.rel (0) target = $region32
            $region31: #{run.13} parent=23 // pred_region
              loop: start=0, step=1, limit=1
              $region33: #{run.13} parent=31 // loop_pre_header
                _
              $region34: #{run.13} parent=31 // loop_header
                %s202 = sphi 0, %s206
                %p203 = scmp.ge.s32.totalorder %s202, 1
                %s207 = sphi %s193, %s193
                %s208 = sphi %s189, %s189
              $region35: #{run.13} parent=31 // loop_header_branch
                %205 = sbr.rel (%p203) target = $region39
              $region36: #{run.13} parent=31 // loop_body
                %v209 = vld [vmem:[%s207] sm:$0xf]
                %210 = vst [vmem:[%s208] sm:$0xf] %v209
                %v211 = vld [vmem:[%s207 + $0xc] sm:$0xf]
                %212 = vst [vmem:[%s208 + $0x4] sm:$0xf] %v211
                %v213 = vld [vmem:[%s207 + $0x18] sm:$0xf]
                %214 = vst [vmem:[%s208 + $0x8] sm:$0xf] %v213
                %v215 = vld [vmem:[%s207 + $0x24] sm:$0xf]
                %216 = vst [vmem:[%s208 + $0xc] sm:$0xf] %v215
                %v217 = vld [vmem:[%s207 + $0x30] sm:$0xf]
                %218 = vst [vmem:[%s208 + $0x10] sm:$0xf] %v217
                %v219 = vld [vmem:[%s207 + $0x3c] sm:$0xf]
                %220 = vst [vmem:[%s208 + $0x14] sm:$0xf] %v219
                %v221 = vld [vmem:[%s207 + $0x48] sm:$0xf]
                %222 = vst [vmem:[%s208 + $0x18] sm:$0xf] %v221
                %v223 = vld [vmem:[%s207 + $0x54] sm:$0xf]
                %224 = vst [vmem:[%s208 + $0x1c] sm:$0xf] %v223
                %v225 = vld [vmem:[%s207 + $0x60] sm:$0xf]
                %226 = vst [vmem:[%s208 + $0x20] sm:$0xf] %v225
                %v227 = vld [vmem:[%s207 + $0x6c] sm:$0xf]
                %228 = vst [vmem:[%s208 + $0x24] sm:$0xf] %v227
                %v229 = vld [vmem:[%s207 + $0x78] sm:$0xf]
                %230 = vst [vmem:[%s208 + $0x28] sm:$0xf] %v229
                %v231 = vld [vmem:[%s207 + $0x84] sm:$0xf]
                %232 = vst [vmem:[%s208 + $0x2c] sm:$0xf] %v231
                %v233 = vld [vmem:[%s207 + $0x90] sm:$0xf]
                %234 = vst [vmem:[%s208 + $0x30] sm:$0xf] %v233
                %v235 = vld [vmem:[%s207 + $0x9c] sm:$0xf]
                %236 = vst [vmem:[%s208 + $0x34] sm:$0xf] %v235
                %v237 = vld [vmem:[%s207 + $0xa8] sm:$0xf]
                %238 = vst [vmem:[%s208 + $0x38] sm:$0xf] %v237
                %v239 = vld [vmem:[%s207 + $0xb4] sm:$0xf]
                %240 = vst [vmem:[%s208 + $0x3c] sm:$0xf] %v239
              $region37: #{run.13} parent=31 // loop_footer
                %s206 = sadd.s32 1, %s202
              $region38: #{run.13} parent=31 // loop_footer_branch
                %201 = sbr.rel target = $region34
              $region39: #{run.13} parent=31 // loop_exit
                _
            $region32: #{run.13} parent=23 // pred_fallthru
              _
          $region24: #{run.13} parent=19 // pred_fallthru
            _
          %292 = vnop
        $region20: #{run.13} parent=15 // pred_fallthru
          _
        // Predicated region
        $region58: #{run.13} parent=15 // pred_check
          %p293 = pneg %p74
        $region59: #{run.13} parent=15 // pred_check_branch
          %295 = sbr.rel (%p293) target = $region61
        $region60: #{run.13} parent=15 // pred_region
          %s296 = sand.u32 %s64, 1
          %s297 = sand.u32 %s64, 1
          %s298 = smul.addr %s297, 64
          %s299 = scalar_lea.vmem [#allocation3], %s298
          %s300 = sadd.s32 %s18, 1
          %s301 = smul.addr %s17, 48
          %s302 = sadd.s32 %s300, %s301
          %s303 = smul.addr %s302, 4
          %s304 = scalar_lea.vmem %s1, %s303
          // Predicated region
          $region62: #{run.13} parent=60 // pred_check
            _
          $region63: #{run.13} parent=60 // pred_check_branch
            %306 = sbr.rel (0) target = $region65
          $region64: #{run.13} parent=60 // pred_region
            // Predicated region
            $region66: #{run.13} parent=64 // pred_check
              _
            $region67: #{run.13} parent=64 // pred_check_branch
              %308 = sbr.rel target = $region69
            $region68: #{run.13} parent=64 // pred_region
              // Predicated region
              $region81: #{run.13} parent=68 // pred_check
                _
              $region82: #{run.13} parent=68 // pred_check_branch
                %353 = sbr.rel (0) target = $region84
              $region83: #{run.13} parent=68 // pred_region
                loop: start=0, step=1, limit=1
                $region85: #{run.13} parent=83 // loop_pre_header
                  _
                $region86: #{run.13} parent=83 // loop_header
                  %s355 = sphi 0, %s359
                  %p356 = scmp.ge.s32.totalorder %s355, 1
                  %s360 = sphi %s304, %s304
                  %s361 = sphi %s299, %s299
                $region87: #{run.13} parent=83 // loop_header_branch
                  %358 = sbr.rel (%p356) target = $region91
                $region88: #{run.13} parent=83 // loop_body
                  _
                $region89: #{run.13} parent=83 // loop_footer
                  %s359 = sadd.s32 1, %s355
                $region90: #{run.13} parent=83 // loop_footer_branch
                  %354 = sbr.rel target = $region86
                $region91: #{run.13} parent=83 // loop_exit
                  _
                loop: start=0, step=1, limit=1
                $region92: #{run.13} parent=83 // loop_pre_header
                  _
                $region93: #{run.13} parent=83 // loop_header
                  %s364 = sphi 0, %s368
                  %p365 = scmp.ge.s32.totalorder %s364, 1
                  %s369 = sphi %s304, %s304
                  %s370 = sphi %s299, %s299
                $region94: #{run.13} parent=83 // loop_header_branch
                  %367 = sbr.rel (%p365) target = $region98
                $region95: #{run.13} parent=83 // loop_body
                  %v371 = vld [vmem:[%s369] sm:$0xf]
                  %372 = vst [vmem:[%s370] sm:$0xf] %v371
                  %v373 = vld [vmem:[%s369 + $0xc] sm:$0xf]
                  %374 = vst [vmem:[%s370 + $0x4] sm:$0xf] %v373
                  %v375 = vld [vmem:[%s369 + $0x18] sm:$0xf]
                  %376 = vst [vmem:[%s370 + $0x8] sm:$0xf] %v375
                  %v377 = vld [vmem:[%s369 + $0x24] sm:$0xf]
                  %378 = vst [vmem:[%s370 + $0xc] sm:$0xf] %v377
                  %v379 = vld [vmem:[%s369 + $0x30] sm:$0xf]
                  %380 = vst [vmem:[%s370 + $0x10] sm:$0xf] %v379
                  %v381 = vld [vmem:[%s369 + $0x3c] sm:$0xf]
                  %382 = vst [vmem:[%s370 + $0x14] sm:$0xf] %v381
                  %v383 = vld [vmem:[%s369 + $0x48] sm:$0xf]
                  %384 = vst [vmem:[%s370 + $0x18] sm:$0xf] %v383
                  %v385 = vld [vmem:[%s369 + $0x54] sm:$0xf]
                  %386 = vst [vmem:[%s370 + $0x1c] sm:$0xf] %v385
                  %v387 = vld [vmem:[%s369 + $0x60] sm:$0xf]
                  %388 = vst [vmem:[%s370 + $0x20] sm:$0xf] %v387
                  %v389 = vld [vmem:[%s369 + $0x6c] sm:$0xf]
                  %390 = vst [vmem:[%s370 + $0x24] sm:$0xf] %v389
                  %v391 = vld [vmem:[%s369 + $0x78] sm:$0xf]
                  %392 = vst [vmem:[%s370 + $0x28] sm:$0xf] %v391
                  %v393 = vld [vmem:[%s369 + $0x84] sm:$0xf]
                  %394 = vst [vmem:[%s370 + $0x2c] sm:$0xf] %v393
                  %v395 = vld [vmem:[%s369 + $0x90] sm:$0xf]
                  %396 = vst [vmem:[%s370 + $0x30] sm:$0xf] %v395
                  %v397 = vld [vmem:[%s369 + $0x9c] sm:$0xf]
                  %398 = vst [vmem:[%s370 + $0x34] sm:$0xf] %v397
                  %v399 = vld [vmem:[%s369 + $0xa8] sm:$0xf]
                  %400 = vst [vmem:[%s370 + $0x38] sm:$0xf] %v399
                  %v401 = vld [vmem:[%s369 + $0xb4] sm:$0xf]
                  %402 = vst [vmem:[%s370 + $0x3c] sm:$0xf] %v401
                $region96: #{run.13} parent=83 // loop_footer
                  %s368 = sadd.s32 1, %s364
                $region97: #{run.13} parent=83 // loop_footer_branch
                  %363 = sbr.rel target = $region93
                $region98: #{run.13} parent=83 // loop_exit
                  _
              $region84: #{run.13} parent=68 // pred_fallthru
                _
            $region69: #{run.13} parent=64 // pred_fallthru
              _
            // Predicated region
            $region70: #{run.13} parent=64 // pred_check
              _
            $region71: #{run.13} parent=64 // pred_check_branch
              %310 = sbr.rel (0) target = $region73
            $region72: #{run.13} parent=64 // pred_region
              loop: start=0, step=1, limit=1
              $region74: #{run.13} parent=72 // loop_pre_header
                _
              $region75: #{run.13} parent=72 // loop_header
                %s313 = sphi 0, %s317
                %p314 = scmp.ge.s32.totalorder %s313, 1
                %s318 = sphi %s304, %s304
                %s319 = sphi %s299, %s299
              $region76: #{run.13} parent=72 // loop_header_branch
                %316 = sbr.rel (%p314) target = $region80
              $region77: #{run.13} parent=72 // loop_body
                %v320 = vld [vmem:[%s318] sm:$0xf]
                %321 = vst [vmem:[%s319] sm:$0xf] %v320
                %v322 = vld [vmem:[%s318 + $0xc] sm:$0xf]
                %323 = vst [vmem:[%s319 + $0x4] sm:$0xf] %v322
                %v324 = vld [vmem:[%s318 + $0x18] sm:$0xf]
                %325 = vst [vmem:[%s319 + $0x8] sm:$0xf] %v324
                %v326 = vld [vmem:[%s318 + $0x24] sm:$0xf]
                %327 = vst [vmem:[%s319 + $0xc] sm:$0xf] %v326
                %v328 = vld [vmem:[%s318 + $0x30] sm:$0xf]
                %329 = vst [vmem:[%s319 + $0x10] sm:$0xf] %v328
                %v330 = vld [vmem:[%s318 + $0x3c] sm:$0xf]
                %331 = vst [vmem:[%s319 + $0x14] sm:$0xf] %v330
                %v332 = vld [vmem:[%s318 + $0x48] sm:$0xf]
                %333 = vst [vmem:[%s319 + $0x18] sm:$0xf] %v332
                %v334 = vld [vmem:[%s318 + $0x54] sm:$0xf]
                %335 = vst [vmem:[%s319 + $0x1c] sm:$0xf] %v334
                %v336 = vld [vmem:[%s318 + $0x60] sm:$0xf]
                %337 = vst [vmem:[%s319 + $0x20] sm:$0xf] %v336
                %v338 = vld [vmem:[%s318 + $0x6c] sm:$0xf]
                %339 = vst [vmem:[%s319 + $0x24] sm:$0xf] %v338
                %v340 = vld [vmem:[%s318 + $0x78] sm:$0xf]
                %341 = vst [vmem:[%s319 + $0x28] sm:$0xf] %v340
                %v342 = vld [vmem:[%s318 + $0x84] sm:$0xf]
                %343 = vst [vmem:[%s319 + $0x2c] sm:$0xf] %v342
                %v344 = vld [vmem:[%s318 + $0x90] sm:$0xf]
                %345 = vst [vmem:[%s319 + $0x30] sm:$0xf] %v344
                %v346 = vld [vmem:[%s318 + $0x9c] sm:$0xf]
                %347 = vst [vmem:[%s319 + $0x34] sm:$0xf] %v346
                %v348 = vld [vmem:[%s318 + $0xa8] sm:$0xf]
                %349 = vst [vmem:[%s319 + $0x38] sm:$0xf] %v348
                %v350 = vld [vmem:[%s318 + $0xb4] sm:$0xf]
                %351 = vst [vmem:[%s319 + $0x3c] sm:$0xf] %v350
              $region78: #{run.13} parent=72 // loop_footer
                %s317 = sadd.s32 1, %s313
              $region79: #{run.13} parent=72 // loop_footer_branch
                %312 = sbr.rel target = $region75
              $region80: #{run.13} parent=72 // loop_exit
                _
            $region73: #{run.13} parent=64 // pred_fallthru
              _
          $region65: #{run.13} parent=60 // pred_fallthru
            _
          %403 = vnop
        $region61: #{run.13} parent=15 // pred_fallthru
          _
        // Predicated region
        $region99: #{run.13} parent=15 // pred_check
          %p404 = pneg %p104
        $region100: #{run.13} parent=15 // pred_check_branch
          %406 = sbr.rel (%p404) target = $region102
        $region101: #{run.13} parent=15 // pred_region
          %s407 = sand.u32 %s94, 1
          %s408 = sand.u32 %s94, 1
          %s409 = smul.addr %s408, 64
          %s410 = scalar_lea.vmem [#allocation4], %s409
          %s411 = sadd.s32 %s18, 2
          %s412 = smul.addr %s17, 48
          %s413 = sadd.s32 %s411, %s412
          %s414 = smul.addr %s413, 4
          %s415 = scalar_lea.vmem %s2, %s414
          // Predicated region
          $region103: #{run.13} parent=101 // pred_check
            _
          $region104: #{run.13} parent=101 // pred_check_branch
            %417 = sbr.rel (0) target = $region106
          $region105: #{run.13} parent=101 // pred_region
            // Predicated region
            $region107: #{run.13} parent=105 // pred_check
              _
            $region108: #{run.13} parent=105 // pred_check_branch
              %419 = sbr.rel target = $region110
            $region109: #{run.13} parent=105 // pred_region
              // Predicated region
              $region122: #{run.13} parent=109 // pred_check
                _
              $region123: #{run.13} parent=109 // pred_check_branch
                %464 = sbr.rel (0) target = $region125
              $region124: #{run.13} parent=109 // pred_region
                loop: start=0, step=1, limit=1
                $region126: #{run.13} parent=124 // loop_pre_header
                  _
                $region127: #{run.13} parent=124 // loop_header
                  %s466 = sphi 0, %s470
                  %p467 = scmp.ge.s32.totalorder %s466, 1
                  %s471 = sphi %s415, %s415
                  %s472 = sphi %s410, %s410
                $region128: #{run.13} parent=124 // loop_header_branch
                  %469 = sbr.rel (%p467) target = $region132
                $region129: #{run.13} parent=124 // loop_body
                  _
                $region130: #{run.13} parent=124 // loop_footer
                  %s470 = sadd.s32 1, %s466
                $region131: #{run.13} parent=124 // loop_footer_branch
                  %465 = sbr.rel target = $region127
                $region132: #{run.13} parent=124 // loop_exit
                  _
                loop: start=0, step=1, limit=1
                $region133: #{run.13} parent=124 // loop_pre_header
                  _
                $region134: #{run.13} parent=124 // loop_header
                  %s475 = sphi 0, %s479
                  %p476 = scmp.ge.s32.totalorder %s475, 1
                  %s480 = sphi %s415, %s415
                  %s481 = sphi %s410, %s410
                $region135: #{run.13} parent=124 // loop_header_branch
                  %478 = sbr.rel (%p476) target = $region139
                $region136: #{run.13} parent=124 // loop_body
                  %v482 = vld [vmem:[%s480] sm:$0xf]
                  %483 = vst [vmem:[%s481] sm:$0xf] %v482
                  %v484 = vld [vmem:[%s480 + $0xc] sm:$0xf]
                  %485 = vst [vmem:[%s481 + $0x4] sm:$0xf] %v484
                  %v486 = vld [vmem:[%s480 + $0x18] sm:$0xf]
                  %487 = vst [vmem:[%s481 + $0x8] sm:$0xf] %v486
                  %v488 = vld [vmem:[%s480 + $0x24] sm:$0xf]
                  %489 = vst [vmem:[%s481 + $0xc] sm:$0xf] %v488
                  %v490 = vld [vmem:[%s480 + $0x30] sm:$0xf]
                  %491 = vst [vmem:[%s481 + $0x10] sm:$0xf] %v490
                  %v492 = vld [vmem:[%s480 + $0x3c] sm:$0xf]
                  %493 = vst [vmem:[%s481 + $0x14] sm:$0xf] %v492
                  %v494 = vld [vmem:[%s480 + $0x48] sm:$0xf]
                  %495 = vst [vmem:[%s481 + $0x18] sm:$0xf] %v494
                  %v496 = vld [vmem:[%s480 + $0x54] sm:$0xf]
                  %497 = vst [vmem:[%s481 + $0x1c] sm:$0xf] %v496
                  %v498 = vld [vmem:[%s480 + $0x60] sm:$0xf]
                  %499 = vst [vmem:[%s481 + $0x20] sm:$0xf] %v498
                  %v500 = vld [vmem:[%s480 + $0x6c] sm:$0xf]
                  %501 = vst [vmem:[%s481 + $0x24] sm:$0xf] %v500
                  %v502 = vld [vmem:[%s480 + $0x78] sm:$0xf]
                  %503 = vst [vmem:[%s481 + $0x28] sm:$0xf] %v502
                  %v504 = vld [vmem:[%s480 + $0x84] sm:$0xf]
                  %505 = vst [vmem:[%s481 + $0x2c] sm:$0xf] %v504
                  %v506 = vld [vmem:[%s480 + $0x90] sm:$0xf]
                  %507 = vst [vmem:[%s481 + $0x30] sm:$0xf] %v506
                  %v508 = vld [vmem:[%s480 + $0x9c] sm:$0xf]
                  %509 = vst [vmem:[%s481 + $0x34] sm:$0xf] %v508
                  %v510 = vld [vmem:[%s480 + $0xa8] sm:$0xf]
                  %511 = vst [vmem:[%s481 + $0x38] sm:$0xf] %v510
                  %v512 = vld [vmem:[%s480 + $0xb4] sm:$0xf]
                  %513 = vst [vmem:[%s481 + $0x3c] sm:$0xf] %v512
                $region137: #{run.13} parent=124 // loop_footer
                  %s479 = sadd.s32 1, %s475
                $region138: #{run.13} parent=124 // loop_footer_branch
                  %474 = sbr.rel target = $region134
                $region139: #{run.13} parent=124 // loop_exit
                  _
              $region125: #{run.13} parent=109 // pred_fallthru
                _
            $region110: #{run.13} parent=105 // pred_fallthru
              _
            // Predicated region
            $region111: #{run.13} parent=105 // pred_check
              _
            $region112: #{run.13} parent=105 // pred_check_branch
              %421 = sbr.rel (0) target = $region114
            $region113: #{run.13} parent=105 // pred_region
              loop: start=0, step=1, limit=1
              $region115: #{run.13} parent=113 // loop_pre_header
                _
              $region116: #{run.13} parent=113 // loop_header
                %s424 = sphi 0, %s428
                %p425 = scmp.ge.s32.totalorder %s424, 1
                %s429 = sphi %s415, %s415
                %s430 = sphi %s410, %s410
              $region117: #{run.13} parent=113 // loop_header_branch
                %427 = sbr.rel (%p425) target = $region121
              $region118: #{run.13} parent=113 // loop_body
                %v431 = vld [vmem:[%s429] sm:$0xf]
                %432 = vst [vmem:[%s430] sm:$0xf] %v431
                %v433 = vld [vmem:[%s429 + $0xc] sm:$0xf]
                %434 = vst [vmem:[%s430 + $0x4] sm:$0xf] %v433
                %v435 = vld [vmem:[%s429 + $0x18] sm:$0xf]
                %436 = vst [vmem:[%s430 + $0x8] sm:$0xf] %v435
                %v437 = vld [vmem:[%s429 + $0x24] sm:$0xf]
                %438 = vst [vmem:[%s430 + $0xc] sm:$0xf] %v437
                %v439 = vld [vmem:[%s429 + $0x30] sm:$0xf]
                %440 = vst [vmem:[%s430 + $0x10] sm:$0xf] %v439
                %v441 = vld [vmem:[%s429 + $0x3c] sm:$0xf]
                %442 = vst [vmem:[%s430 + $0x14] sm:$0xf] %v441
                %v443 = vld [vmem:[%s429 + $0x48] sm:$0xf]
                %444 = vst [vmem:[%s430 + $0x18] sm:$0xf] %v443
                %v445 = vld [vmem:[%s429 + $0x54] sm:$0xf]
                %446 = vst [vmem:[%s430 + $0x1c] sm:$0xf] %v445
                %v447 = vld [vmem:[%s429 + $0x60] sm:$0xf]
                %448 = vst [vmem:[%s430 + $0x20] sm:$0xf] %v447
                %v449 = vld [vmem:[%s429 + $0x6c] sm:$0xf]
                %450 = vst [vmem:[%s430 + $0x24] sm:$0xf] %v449
                %v451 = vld [vmem:[%s429 + $0x78] sm:$0xf]
                %452 = vst [vmem:[%s430 + $0x28] sm:$0xf] %v451
                %v453 = vld [vmem:[%s429 + $0x84] sm:$0xf]
                %454 = vst [vmem:[%s430 + $0x2c] sm:$0xf] %v453
                %v455 = vld [vmem:[%s429 + $0x90] sm:$0xf]
                %456 = vst [vmem:[%s430 + $0x30] sm:$0xf] %v455
                %v457 = vld [vmem:[%s429 + $0x9c] sm:$0xf]
                %458 = vst [vmem:[%s430 + $0x34] sm:$0xf] %v457
                %v459 = vld [vmem:[%s429 + $0xa8] sm:$0xf]
                %460 = vst [vmem:[%s430 + $0x38] sm:$0xf] %v459
                %v461 = vld [vmem:[%s429 + $0xb4] sm:$0xf]
                %462 = vst [vmem:[%s430 + $0x3c] sm:$0xf] %v461
              $region119: #{run.13} parent=113 // loop_footer
                %s428 = sadd.s32 1, %s424
              $region120: #{run.13} parent=113 // loop_footer_branch
                %423 = sbr.rel target = $region116
              $region121: #{run.13} parent=113 // loop_exit
                _
            $region114: #{run.13} parent=105 // pred_fallthru
              _
          $region106: #{run.13} parent=101 // pred_fallthru
            _
          %514 = vnop
        $region102: #{run.13} parent=15 // pred_fallthru
          _
        // Predicated region
        $region140: #{run.13} parent=15 // pred_check
          %p515 = pneg %p130
        $region141: #{run.13} parent=15 // pred_check_branch
          %517 = sbr.rel (%p515) target = $region143
        $region142: #{run.13} parent=15 // pred_region
          %p518 = scmp.lt.s32.totalorder %s17, 1
          %s519 = scalar_select %p518, %s17, 1
          %s520 = scalar_lea.vmem %s3, %s519
        $region143: #{run.13} parent=15 // pred_fallthru
          _
      $region16: #{run.13} parent=5 // pred_fallthru
        _
      %p521 = scmp.le.s32.totalorder 1, %s10
      %p522 = scmp.lt.s32.totalorder %s10, 3
      %p523 = pnand %p521, %p522
      %p524 = pneg %p523
      // Predicated region
      $region144: #{run.13} parent=5 // pred_check
        _
      $region145: #{run.13} parent=5 // pred_check_branch
        %526 = sbr.rel (%p523) target = $region147
      $region146: #{run.13} parent=5 // pred_region
        %s527 = ssub.s32 %s10, 1
        %s528 = sand.u32 %s37, 1
        %s529 = sand.u32 %s37, 1
        %s530 = smul.addr %s529, 64
        %s531 = scalar_lea.vmem [#allocation2], %s530
        // Predicated region
        $region148: #{run.13} parent=146 // pred_check
          %p532 = pneg %p50
        $region149: #{run.13} parent=146 // pred_check_branch
          %534 = sbr.rel (%p532) target = $region151
        $region150: #{run.13} parent=146 // pred_region
          _
        $region151: #{run.13} parent=146 // pred_fallthru
          _
        %s535 = sand.u32 %s67, 1
        %s536 = sand.u32 %s67, 1
        %s537 = smul.addr %s536, 64
        %s538 = scalar_lea.vmem [#allocation3], %s537
        // Predicated region
        $region152: #{run.13} parent=146 // pred_check
          %p539 = pneg %p80
        $region153: #{run.13} parent=146 // pred_check_branch
          %541 = sbr.rel (%p539) target = $region155
        $region154: #{run.13} parent=146 // pred_region
          _
        $region155: #{run.13} parent=146 // pred_fallthru
          _
        %s542 = sand.u32 %s97, 1
        %s543 = sand.u32 %s97, 1
        %s544 = smul.addr %s543, 64
        %s545 = scalar_lea.vmem [#allocation4], %s544
        // Predicated region
        $region156: #{run.13} parent=146 // pred_check
          %p546 = pneg %p110
        $region157: #{run.13} parent=146 // pred_check_branch
          %548 = sbr.rel (%p546) target = $region159
        $region158: #{run.13} parent=146 // pred_region
          _
        $region159: #{run.13} parent=146 // pred_fallthru
          _
        %s549 = sand.u32 %s37, 1
        %s550 = sand.u32 %s37, 1
        %s551 = smul.addr %s550, 64
        %s552 = scalar_lea.vmem [#allocation2], %s551
        %p553 = pneg %p50
        %p554 = pneg %p47
        %s555 = sand.u32 %s67, 1
        %s556 = sand.u32 %s67, 1
        %s557 = smul.addr %s556, 64
        %s558 = scalar_lea.vmem [#allocation3], %s557
        %p559 = pneg %p80
        %p560 = pneg %p77
        %s561 = sand.u32 %s97, 1
        %s562 = sand.u32 %s97, 1
        %s563 = smul.addr %s562, 64
        %s564 = scalar_lea.vmem [#allocation4], %s563
        %p565 = pneg %p110
        %p566 = pneg %p107
        %p567 = scmp.lt.s32.totalorder %s19, 1
        %s568 = scalar_select %p567, %s19, 1
        %s569 = scalar_lea.vmem %s3, %s568
        %p570 = pneg %p136
        %p571 = pneg %p133
        %p572 = pneg %p164
        %p573 = pneg %p161
        %p574 = scmp.lt.s32.totalorder %s19, 1
        %s575 = scalar_select %p574, %s19, 1
        %p576 = scmp.lt.s32.totalorder %s20, 0
        %s577 = scalar_select %p576, %s20, 0
        %s578 = smul.addr %s575, 16
        %s579 = sadd.s32 %s577, %s578
        %s580 = smul.addr %s579, 4
        %s581 = scalar_lea.vmem %s4, %s580
        %s582 = sadd.s32 %s20, 1
        %s583 = sadd.s32 %s20, 2
        %p584 = scmp.lt.s32.totalorder %s19, 1
        %s585 = scalar_select %p584, %s19, 1
        %s586 = scalar_lea.vmem %s3, %s585
        %p587 = scmp.lt.s32.totalorder %s19, 1
        %s588 = scalar_select %p587, %s19, 1
        %p589 = scmp.lt.s32.totalorder %s20, 0
        %s590 = scalar_select %p589, %s20, 0
        %s591 = smul.addr %s588, 16
        %s592 = sadd.s32 %s590, %s591
        %s593 = smul.addr %s592, 4
        %s594 = scalar_lea.vmem %s4, %s593
        %v596 = vld [vmem:[%s531] sm:$0xf]
        %v597 = vld [vmem:[%s531 + $0x4] sm:$0xf]
        %v598 = vld [vmem:[%s531 + $0x8] sm:$0xf]
        %v599 = vld [vmem:[%s531 + $0xc] sm:$0xf]
        %v600 = vld [vmem:[%s531 + $0x10] sm:$0xf]
        %v601 = vld [vmem:[%s531 + $0x14] sm:$0xf]
        %v602 = vld [vmem:[%s531 + $0x18] sm:$0xf]
        %v603 = vld [vmem:[%s531 + $0x1c] sm:$0xf]
        %v604 = vld [vmem:[%s531 + $0x20] sm:$0xf]
        %v605 = vld [vmem:[%s531 + $0x24] sm:$0xf]
        %v606 = vld [vmem:[%s531 + $0x28] sm:$0xf]
        %v607 = vld [vmem:[%s531 + $0x2c] sm:$0xf]
        %v608 = vld [vmem:[%s531 + $0x30] sm:$0xf]
        %v609 = vld [vmem:[%s531 + $0x34] sm:$0xf]
        %v610 = vld [vmem:[%s531 + $0x38] sm:$0xf]
        %v611 = vld [vmem:[%s531 + $0x3c] sm:$0xf]
        %v612 = vld [vmem:[%s538] sm:$0xf]
        %v613 = vld [vmem:[%s538 + $0x4] sm:$0xf]
        %v614 = vld [vmem:[%s538 + $0x8] sm:$0xf]
        %v615 = vld [vmem:[%s538 + $0xc] sm:$0xf]
        %v616 = vld [vmem:[%s538 + $0x10] sm:$0xf]
        %v617 = vld [vmem:[%s538 + $0x14] sm:$0xf]
        %v618 = vld [vmem:[%s538 + $0x18] sm:$0xf]
        %v619 = vld [vmem:[%s538 + $0x1c] sm:$0xf]
        %v620 = vld [vmem:[%s538 + $0x20] sm:$0xf]
        %v621 = vld [vmem:[%s538 + $0x24] sm:$0xf]
        %v622 = vld [vmem:[%s538 + $0x28] sm:$0xf]
        %v623 = vld [vmem:[%s538 + $0x2c] sm:$0xf]
        %v624 = vld [vmem:[%s538 + $0x30] sm:$0xf]
        %v625 = vld [vmem:[%s538 + $0x34] sm:$0xf]
        %v626 = vld [vmem:[%s538 + $0x38] sm:$0xf]
        %v627 = vld [vmem:[%s538 + $0x3c] sm:$0xf]
        %v628 = vld [vmem:[%s545] sm:$0xf]
        %v629 = vld [vmem:[%s545 + $0x4] sm:$0xf]
        %v630 = vld [vmem:[%s545 + $0x8] sm:$0xf]
        %v631 = vld [vmem:[%s545 + $0xc] sm:$0xf]
        %v632 = vld [vmem:[%s545 + $0x10] sm:$0xf]
        %v633 = vld [vmem:[%s545 + $0x14] sm:$0xf]
        %v634 = vld [vmem:[%s545 + $0x18] sm:$0xf]
        %v635 = vld [vmem:[%s545 + $0x1c] sm:$0xf]
        %v636 = vld [vmem:[%s545 + $0x20] sm:$0xf]
        %v637 = vld [vmem:[%s545 + $0x24] sm:$0xf]
        %v638 = vld [vmem:[%s545 + $0x28] sm:$0xf]
        %v639 = vld [vmem:[%s545 + $0x2c] sm:$0xf]
        %v640 = vld [vmem:[%s545 + $0x30] sm:$0xf]
        %v641 = vld [vmem:[%s545 + $0x34] sm:$0xf]
        %v642 = vld [vmem:[%s545 + $0x38] sm:$0xf]
        %v643 = vld [vmem:[%s545 + $0x3c] sm:$0xf]
        %v644 = vld [vmem:[%s586] sm:$0x1]
        %v661 = vunpack.c.l.b16 %v596
        %v662 = vunpack.c.l.b16 %v597
        %v663 = vunpack.c.l.b16 %v598
        %v664 = vunpack.c.l.b16 %v599
        %v665 = vunpack.c.l.b16 %v600
        %v666 = vunpack.c.l.b16 %v601
        %v667 = vunpack.c.l.b16 %v602
        %v668 = vunpack.c.l.b16 %v603
        %v669 = vunpack.c.l.b16 %v604
        %v670 = vunpack.c.l.b16 %v605
        %v671 = vunpack.c.l.b16 %v606
        %v672 = vunpack.c.l.b16 %v607
        %v673 = vunpack.c.l.b16 %v608
        %v674 = vunpack.c.l.b16 %v609
        %v675 = vunpack.c.l.b16 %v610
        %v676 = vunpack.c.l.b16 %v611
        %v677 = vpack.c.b16 %v662, %v661
        %v678 = vpack.c.b16 %v664, %v663
        %v679 = vpack.c.b16 %v666, %v665
        %v680 = vpack.c.b16 %v668, %v667
        %v681 = vpack.c.b16 %v670, %v669
        %v682 = vpack.c.b16 %v672, %v671
        %v683 = vpack.c.b16 %v674, %v673
        %v684 = vpack.c.b16 %v676, %v675
        %v701 = vunpack.c.l.b16 %v612
        %v702 = vunpack.c.l.b16 %v613
        %v703 = vunpack.c.l.b16 %v614
        %v704 = vunpack.c.l.b16 %v615
        %v705 = vunpack.c.l.b16 %v616
        %v706 = vunpack.c.l.b16 %v617
        %v707 = vunpack.c.l.b16 %v618
        %v708 = vunpack.c.l.b16 %v619
        %v709 = vunpack.c.l.b16 %v620
        %v710 = vunpack.c.l.b16 %v621
        %v711 = vunpack.c.l.b16 %v622
        %v712 = vunpack.c.l.b16 %v623
        %v713 = vunpack.c.l.b16 %v624
        %v714 = vunpack.c.l.b16 %v625
        %v715 = vunpack.c.l.b16 %v626
        %v716 = vunpack.c.l.b16 %v627
        %v717 = vpack.c.b16 %v702, %v701
        %v718 = vpack.c.b16 %v704, %v703
        %v719 = vpack.c.b16 %v706, %v705
        %v720 = vpack.c.b16 %v708, %v707
        %v721 = vpack.c.b16 %v710, %v709
        %v722 = vpack.c.b16 %v712, %v711
        %v723 = vpack.c.b16 %v714, %v713
        %v724 = vpack.c.b16 %v716, %v715
        %vm725 = vcmask 523264
        %v727 = vsel %vm725, %v677, 0
        %v730 = vsel %vm725, %v678, 0
        %v733 = vsel %vm725, %v679, 0
        %v736 = vsel %vm725, %v680, 0
        %v739 = vsel %vm725, %v681, 0
        %v742 = vsel %vm725, %v682, 0
        %v745 = vsel %vm725, %v683, 0
        %v748 = vsel %vm725, %v684, 0
        %v751 = vsel %vm725, %v717, 0
        %v754 = vsel %vm725, %v718, 0
        %v757 = vsel %vm725, %v719, 0
        %v760 = vsel %vm725, %v720, 0
        %v763 = vsel %vm725, %v721, 0
        %v766 = vsel %vm725, %v722, 0
        %v769 = vsel %vm725, %v723, 0
        %v772 = vsel %vm725, %v724, 0
        %774 = vmatprep.subr.bf16.mxu0 0
        %775 = vmatpush1.bf16.xpose.msra.mxu0 %v751
        %776 = vmatprep.subr.bf16.mxu0 0
        %777 = vmatpush1.bf16.xpose.msra.mxu0 %v754
        %778 = vmatprep.subr.bf16.mxu0 0
        %779 = vmatpush1.bf16.xpose.msra.mxu0 %v757
        %780 = vmatprep.subr.bf16.mxu0 0
        %781 = vmatpush1.bf16.xpose.msra.mxu0 %v760
        %782 = vmatprep.subr.bf16.mxu0 0
        %783 = vmatpush1.bf16.xpose.msra.mxu0 %v763
        %784 = vmatprep.subr.bf16.mxu0 0
        %785 = vmatpush1.bf16.xpose.msra.mxu0 %v766
        %786 = vmatprep.subr.bf16.mxu0 0
        %787 = vmatpush1.bf16.xpose.msra.mxu0 %v769
        %788 = vmatprep.subr.bf16.mxu0 0
        %789 = vmatpush1.bf16.xpose.msra.mxu0 %v772
        %790 = vmatprep.subr.bf16.mxu0 0
        %791 = vmatpush1.bf16.xpose.msra.mxu0 0
        %792 = vmatprep.subr.bf16.mxu0 0
        %793 = vmatpush1.bf16.xpose.msra.mxu0 0
        %794 = vmatprep.subr.bf16.mxu0 0
        %795 = vmatpush1.bf16.xpose.msra.mxu0 0
        %796 = vmatprep.subr.bf16.mxu0 0
        %797 = vmatpush1.bf16.xpose.msra.mxu0 0
        %798 = vmatprep.subr.bf16.mxu0 0
        %799 = vmatpush1.bf16.xpose.msra.mxu0 0
        %800 = vmatprep.subr.bf16.mxu0 0
        %801 = vmatpush1.bf16.xpose.msra.mxu0 0
        %802 = vmatprep.subr.bf16.mxu0 0
        %803 = vmatpush1.bf16.xpose.msra.mxu0 0
        %804 = vmatprep.subr.bf16.mxu0 0
        %805 = vmatpush1.bf16.xpose.msra.mxu0 0
        %806 = vmatprep.mubr.bf16.mxu0 0
        %807 = vmatmul.mubr.bf16.gmra.mrb[0].mxu0 %v727
        %v808 = vpop.f32.mrb[0].mxu0
        %v809 = vadd.f32 0.0, %v808
        %v810 = vpop.f32.mrb[0].mxu0
        %v811 = vpop.f32.mrb[0].mxu0
        %v812 = vadd.f32 0.0, %v811
        %v813 = vpop.f32.mrb[0].mxu0
        %814 = vmatprep.mubr.bf16.mxu0 0
        %815 = vmatmul.mubr.bf16.gmra.mrb[0].mxu0 %v730
        %v816 = vpop.f32.mrb[0].mxu0
        %v817 = vadd.f32 0.0, %v816
        %v818 = vpop.f32.mrb[0].mxu0
        %v819 = vpop.f32.mrb[0].mxu0
        %v820 = vadd.f32 0.0, %v819
        %v821 = vpop.f32.mrb[0].mxu0
        %822 = vmatprep.mubr.bf16.mxu0 0
        %823 = vmatmul.mubr.bf16.gmra.mrb[0].mxu0 %v733
        %v824 = vpop.f32.mrb[0].mxu0
        %v825 = vadd.f32 0.0, %v824
        %v826 = vpop.f32.mrb[0].mxu0
        %v827 = vpop.f32.mrb[0].mxu0
        %v828 = vadd.f32 0.0, %v827
        %v829 = vpop.f32.mrb[0].mxu0
        %830 = vmatprep.mubr.bf16.mxu0 0
        %831 = vmatmul.mubr.bf16.gmra.mrb[0].mxu0 %v736
        %v832 = vpop.f32.mrb[0].mxu0
        %v833 = vadd.f32 0.0, %v832
        %v834 = vpop.f32.mrb[0].mxu0
        %v835 = vpop.f32.mrb[0].mxu0
        %v836 = vadd.f32 0.0, %v835
        %v837 = vpop.f32.mrb[0].mxu0
        %838 = vmatprep.mubr.bf16.mxu0 0
        %839 = vmatmul.mubr.bf16.gmra.mrb[0].mxu0 %v739
        %v840 = vpop.f32.mrb[0].mxu0
        %v841 = vadd.f32 0.0, %v840
        %v842 = vpop.f32.mrb[0].mxu0
        %v843 = vpop.f32.mrb[0].mxu0
        %v844 = vadd.f32 0.0, %v843
        %v845 = vpop.f32.mrb[0].mxu0
        %846 = vmatprep.mubr.bf16.mxu0 0
        %847 = vmatmul.mubr.bf16.gmra.mrb[0].mxu0 %v742
        %v848 = vpop.f32.mrb[0].mxu0
        %v849 = vadd.f32 0.0, %v848
        %v850 = vpop.f32.mrb[0].mxu0
        %v851 = vpop.f32.mrb[0].mxu0
        %v852 = vadd.f32 0.0, %v851
        %v853 = vpop.f32.mrb[0].mxu0
        %854 = vmatprep.mubr.bf16.mxu0 0
        %855 = vmatmul.mubr.bf16.gmra.mrb[0].mxu0 %v745
        %v856 = vpop.f32.mrb[0].mxu0
        %v857 = vadd.f32 0.0, %v856
        %v858 = vpop.f32.mrb[0].mxu0
        %v859 = vpop.f32.mrb[0].mxu0
        %v860 = vadd.f32 0.0, %v859
        %v861 = vpop.f32.mrb[0].mxu0
        %862 = vmatprep.mubr.bf16.mxu0 0
        %863 = vmatmul.mubr.bf16.gmra.mrb[0].mxu0 %v748
        %v864 = vpop.f32.mrb[0].mxu0
        %v865 = vadd.f32 0.0, %v864
        %v866 = vpop.f32.mrb[0].mxu0
        %v867 = vpop.f32.mrb[0].mxu0
        %v868 = vadd.f32 0.0, %v867
        %v869 = vpop.f32.mrb[0].mxu0
        %870 = vdwg.mxu0
        %v871 = vmul.f32 %v809, 0.125
        %v872 = vmul.f32 %v812, 0.125
        %v873 = vmul.f32 %v817, 0.125
        %v874 = vmul.f32 %v820, 0.125
        %v875 = vmul.f32 %v825, 0.125
        %v876 = vmul.f32 %v828, 0.125
        %v877 = vmul.f32 %v833, 0.125
        %v878 = vmul.f32 %v836, 0.125
        %v879 = vmul.f32 %v841, 0.125
        %v880 = vmul.f32 %v844, 0.125
        %v881 = vmul.f32 %v849, 0.125
        %v882 = vmul.f32 %v852, 0.125
        %v883 = vmul.f32 %v857, 0.125
        %v884 = vmul.f32 %v860, 0.125
        %v885 = vmul.f32 %v865, 0.125
        %v886 = vmul.f32 %v868, 0.125
        %v888 = vlaneseq
        %v889 = vshrl.u32 %v888, 7
        %v890 = vsub.s32 0, %v889
        %v891 = vrot.slane %v644, %v890
        %v893 = vadd.f32 %v871, %v891
        %v894 = vadd.f32 %v872, %v891
        %v895 = vadd.f32 %v873, %v891
        %v896 = vadd.f32 %v874, %v891
        %v897 = vadd.f32 %v875, %v891
        %v898 = vadd.f32 %v876, %v891
        %v899 = vadd.f32 %v877, %v891
        %v900 = vadd.f32 %v878, %v891
        %v901 = vadd.f32 %v879, %v891
        %v902 = vadd.f32 %v880, %v891
        %v903 = vadd.f32 %v881, %v891
        %v904 = vadd.f32 %v882, %v891
        %v905 = vadd.f32 %v883, %v891
        %v906 = vadd.f32 %v884, %v891
        %v907 = vadd.f32 %v885, %v891
        %v908 = vadd.f32 %v886, %v891
        %909 = vmax.xlane.f32.xlu0 %v893
        %v910 = vpop.xlane.xlu0 %909
        %911 = vmax.xlane.f32.xlu0 %v894
        %v912 = vpop.xlane.xlu0 %911
        %913 = vmax.xlane.f32.xlu0 %v895
        %v914 = vpop.xlane.xlu0 %913
        %915 = vmax.xlane.f32.xlu0 %v896
        %v916 = vpop.xlane.xlu0 %915
        %917 = vmax.xlane.f32.xlu0 %v897
        %v918 = vpop.xlane.xlu0 %917
        %919 = vmax.xlane.f32.xlu0 %v898
        %v920 = vpop.xlane.xlu0 %919
        %921 = vmax.xlane.f32.xlu0 %v899
        %v922 = vpop.xlane.xlu0 %921
        %923 = vmax.xlane.f32.xlu0 %v900
        %v924 = vpop.xlane.xlu0 %923
        %925 = vmax.xlane.f32.xlu0 %v901
        %v926 = vpop.xlane.xlu0 %925
        %927 = vmax.xlane.f32.xlu0 %v902
        %v928 = vpop.xlane.xlu0 %927
        %929 = vmax.xlane.f32.xlu0 %v903
        %v930 = vpop.xlane.xlu0 %929
        %931 = vmax.xlane.f32.xlu0 %v904
        %v932 = vpop.xlane.xlu0 %931
        %933 = vmax.xlane.f32.xlu0 %v905
        %v934 = vpop.xlane.xlu0 %933
        %935 = vmax.xlane.f32.xlu0 %v906
        %v936 = vpop.xlane.xlu0 %935
        %937 = vmax.xlane.f32.xlu0 %v907
        %v938 = vpop.xlane.xlu0 %937
        %939 = vmax.xlane.f32.xlu0 %v908
        %v940 = vpop.xlane.xlu0 %939
        %v941 = vsub.f32 %v893, %v910
        %v942 = vsub.f32 %v894, %v912
        %v943 = vsub.f32 %v895, %v914
        %v944 = vsub.f32 %v896, %v916
        %v945 = vsub.f32 %v897, %v918
        %v946 = vsub.f32 %v898, %v920
        %v947 = vsub.f32 %v899, %v922
        %v948 = vsub.f32 %v900, %v924
        %v949 = vsub.f32 %v901, %v926
        %v950 = vsub.f32 %v902, %v928
        %v951 = vsub.f32 %v903, %v930
        %v952 = vsub.f32 %v904, %v932
        %v953 = vsub.f32 %v905, %v934
        %v954 = vsub.f32 %v906, %v936
        %v955 = vsub.f32 %v907, %v938
        %v956 = vsub.f32 %v908, %v940
        %v957 = vmul.f32 %v941, 1.442695
        %v958 = vpow.pop %v957
        %v959 = vmul.f32 %v942, 1.442695
        %v960 = vpow.pop %v959
        %v961 = vmul.f32 %v943, 1.442695
        %v962 = vpow.pop %v961
        %v963 = vmul.f32 %v944, 1.442695
        %v964 = vpow.pop %v963
        %v965 = vmul.f32 %v945, 1.442695
        %v966 = vpow.pop %v965
        %v967 = vmul.f32 %v946, 1.442695
        %v968 = vpow.pop %v967
        %v969 = vmul.f32 %v947, 1.442695
        %v970 = vpow.pop %v969
        %v971 = vmul.f32 %v948, 1.442695
        %v972 = vpow.pop %v971
        %v973 = vmul.f32 %v949, 1.442695
        %v974 = vpow.pop %v973
        %v975 = vmul.f32 %v950, 1.442695
        %v976 = vpow.pop %v975
        %v977 = vmul.f32 %v951, 1.442695
        %v978 = vpow.pop %v977
        %v979 = vmul.f32 %v952, 1.442695
        %v980 = vpow.pop %v979
        %v981 = vmul.f32 %v953, 1.442695
        %v982 = vpow.pop %v981
        %v983 = vmul.f32 %v954, 1.442695
        %v984 = vpow.pop %v983
        %v985 = vmul.f32 %v955, 1.442695
        %v986 = vpow.pop %v985
        %v987 = vmul.f32 %v956, 1.442695
        %v988 = vpow.pop %v987
        %989 = vadd.xlane.f32.xlu0 %v958
        %v990 = vpop.xlane.xlu0 %989
        %991 = vadd.xlane.f32.xlu0 %v960
        %v992 = vpop.xlane.xlu0 %991
        %993 = vadd.xlane.f32.xlu0 %v962
        %v994 = vpop.xlane.xlu0 %993
        %995 = vadd.xlane.f32.xlu0 %v964
        %v996 = vpop.xlane.xlu0 %995
        %997 = vadd.xlane.f32.xlu0 %v966
        %v998 = vpop.xlane.xlu0 %997
        %999 = vadd.xlane.f32.xlu0 %v968
        %v1000 = vpop.xlane.xlu0 %999
        %1001 = vadd.xlane.f32.xlu0 %v970
        %v1002 = vpop.xlane.xlu0 %1001
        %1003 = vadd.xlane.f32.xlu0 %v972
        %v1004 = vpop.xlane.xlu0 %1003
        %1005 = vadd.xlane.f32.xlu0 %v974
        %v1006 = vpop.xlane.xlu0 %1005
        %1007 = vadd.xlane.f32.xlu0 %v976
        %v1008 = vpop.xlane.xlu0 %1007
        %1009 = vadd.xlane.f32.xlu0 %v978
        %v1010 = vpop.xlane.xlu0 %1009
        %1011 = vadd.xlane.f32.xlu0 %v980
        %v1012 = vpop.xlane.xlu0 %1011
        %1013 = vadd.xlane.f32.xlu0 %v982
        %v1014 = vpop.xlane.xlu0 %1013
        %1015 = vadd.xlane.f32.xlu0 %v984
        %v1016 = vpop.xlane.xlu0 %1015
        %1017 = vadd.xlane.f32.xlu0 %v986
        %v1018 = vpop.xlane.xlu0 %1017
        %1019 = vadd.xlane.f32.xlu0 %v988
        %v1020 = vpop.xlane.xlu0 %1019
        %v1021 = vpack.c.bf16 %v960, %v958
        %v1022 = vpack.c.bf16 %v964, %v962
        %v1023 = vpack.c.bf16 %v968, %v966
        %v1024 = vpack.c.bf16 %v972, %v970
        %v1025 = vpack.c.bf16 %v976, %v974
        %v1026 = vpack.c.bf16 %v980, %v978
        %v1027 = vpack.c.bf16 %v984, %v982
        %v1028 = vpack.c.bf16 %v988, %v986
        %v1045 = vunpack.c.l.b16 %v628
        %v1046 = vunpack.c.l.b16 %v629
        %v1047 = vunpack.c.l.b16 %v630
        %v1048 = vunpack.c.l.b16 %v631
        %v1049 = vunpack.c.l.b16 %v632
        %v1050 = vunpack.c.l.b16 %v633
        %v1051 = vunpack.c.l.b16 %v634
        %v1052 = vunpack.c.l.b16 %v635
        %v1053 = vunpack.c.l.b16 %v636
        %v1054 = vunpack.c.l.b16 %v637
        %v1055 = vunpack.c.l.b16 %v638
        %v1056 = vunpack.c.l.b16 %v639
        %v1057 = vunpack.c.l.b16 %v640
        %v1058 = vunpack.c.l.b16 %v641
        %v1059 = vunpack.c.l.b16 %v642
        %v1060 = vunpack.c.l.b16 %v643
        %v1061 = vpack.c.b16 %v1046, %v1045
        %v1062 = vpack.c.b16 %v1048, %v1047
        %v1063 = vpack.c.b16 %v1050, %v1049
        %v1064 = vpack.c.b16 %v1052, %v1051
        %v1065 = vpack.c.b16 %v1054, %v1053
        %v1066 = vpack.c.b16 %v1056, %v1055
        %v1067 = vpack.c.b16 %v1058, %v1057
        %v1068 = vpack.c.b16 %v1060, %v1059
        %1077 = vmatprep.subr.bf16.mxu0 0
        %1078 = vmatpush1.bf16.msra.mxu0 %v1061
        %1079 = vmatprep.subr.bf16.mxu0 0
        %1080 = vmatpush1.bf16.msra.mxu0 %v1062
        %1081 = vmatprep.subr.bf16.mxu0 0
        %1082 = vmatpush1.bf16.msra.mxu0 %v1063
        %1083 = vmatprep.subr.bf16.mxu0 0
        %1084 = vmatpush1.bf16.msra.mxu0 %v1064
        %1085 = vmatprep.subr.bf16.mxu0 0
        %1086 = vmatpush1.bf16.msra.mxu0 %v1065
        %1087 = vmatprep.subr.bf16.mxu0 0
        %1088 = vmatpush1.bf16.msra.mxu0 %v1066
        %1089 = vmatprep.subr.bf16.mxu0 0
        %1090 = vmatpush1.bf16.msra.mxu0 %v1067
        %1091 = vmatprep.subr.bf16.mxu0 0
        %1092 = vmatpush1.bf16.msra.mxu0 %v1068
        %1093 = vmatprep.subr.bf16.mxu0 0
        %1094 = vmatpush1.bf16.msra.mxu0 0
        %1095 = vmatprep.subr.bf16.mxu0 0
        %1096 = vmatpush1.bf16.msra.mxu0 0
        %1097 = vmatprep.subr.bf16.mxu0 0
        %1098 = vmatpush1.bf16.msra.mxu0 0
        %1099 = vmatprep.subr.bf16.mxu0 0
        %1100 = vmatpush1.bf16.msra.mxu0 0
        %1101 = vmatprep.subr.bf16.mxu0 0
        %1102 = vmatpush1.bf16.msra.mxu0 0
        %1103 = vmatprep.subr.bf16.mxu0 0
        %1104 = vmatpush1.bf16.msra.mxu0 0
        %1105 = vmatprep.subr.bf16.mxu0 0
        %1106 = vmatpush1.bf16.msra.mxu0 0
        %1107 = vmatprep.subr.bf16.mxu0 0
        %1108 = vmatpush1.bf16.msra.mxu0 0
        %1109 = vmatprep.mubr.bf16.mxu0 0
        %1110 = vmatmul.mubr.bf16.gmra.mrb[0].mxu0 %v1021
        %v1111 = vpop.f32.mrb[0].mxu0
        %v1112 = vadd.f32 0.0, %v1111
        %v1113 = vpop.f32.mrb[0].mxu0
        %v1114 = vpop.f32.mrb[0].mxu0
        %v1115 = vadd.f32 0.0, %v1114
        %v1116 = vpop.f32.mrb[0].mxu0
        %1117 = vmatprep.mubr.bf16.mxu0 0
        %1118 = vmatmul.mubr.bf16.gmra.mrb[0].mxu0 %v1022
        %v1119 = vpop.f32.mrb[0].mxu0
        %v1120 = vadd.f32 0.0, %v1119
        %v1121 = vpop.f32.mrb[0].mxu0
        %v1122 = vpop.f32.mrb[0].mxu0
        %v1123 = vadd.f32 0.0, %v1122
        %v1124 = vpop.f32.mrb[0].mxu0
        %1125 = vmatprep.mubr.bf16.mxu0 0
        %1126 = vmatmul.mubr.bf16.gmra.mrb[0].mxu0 %v1023
        %v1127 = vpop.f32.mrb[0].mxu0
        %v1128 = vadd.f32 0.0, %v1127
        %v1129 = vpop.f32.mrb[0].mxu0
        %v1130 = vpop.f32.mrb[0].mxu0
        %v1131 = vadd.f32 0.0, %v1130
        %v1132 = vpop.f32.mrb[0].mxu0
        %1133 = vmatprep.mubr.bf16.mxu0 0
        %1134 = vmatmul.mubr.bf16.gmra.mrb[0].mxu0 %v1024
        %v1135 = vpop.f32.mrb[0].mxu0
        %v1136 = vadd.f32 0.0, %v1135
        %v1137 = vpop.f32.mrb[0].mxu0
        %v1138 = vpop.f32.mrb[0].mxu0
        %v1139 = vadd.f32 0.0, %v1138
        %v1140 = vpop.f32.mrb[0].mxu0
        %1141 = vmatprep.mubr.bf16.mxu0 0
        %1142 = vmatmul.mubr.bf16.gmra.mrb[0].mxu0 %v1025
        %v1143 = vpop.f32.mrb[0].mxu0
        %v1144 = vadd.f32 0.0, %v1143
        %v1145 = vpop.f32.mrb[0].mxu0
        %v1146 = vpop.f32.mrb[0].mxu0
        %v1147 = vadd.f32 0.0, %v1146
        %v1148 = vpop.f32.mrb[0].mxu0
        %1149 = vmatprep.mubr.bf16.mxu0 0
        %1150 = vmatmul.mubr.bf16.gmra.mrb[0].mxu0 %v1026
        %v1151 = vpop.f32.mrb[0].mxu0
        %v1152 = vadd.f32 0.0, %v1151
        %v1153 = vpop.f32.mrb[0].mxu0
        %v1154 = vpop.f32.mrb[0].mxu0
        %v1155 = vadd.f32 0.0, %v1154
        %v1156 = vpop.f32.mrb[0].mxu0
        %1157 = vmatprep.mubr.bf16.mxu0 0
        %1158 = vmatmul.mubr.bf16.gmra.mrb[0].mxu0 %v1027
        %v1159 = vpop.f32.mrb[0].mxu0
        %v1160 = vadd.f32 0.0, %v1159
        %v1161 = vpop.f32.mrb[0].mxu0
        %v1162 = vpop.f32.mrb[0].mxu0
        %v1163 = vadd.f32 0.0, %v1162
        %v1164 = vpop.f32.mrb[0].mxu0
        %1165 = vmatprep.mubr.bf16.mxu0 0
        %1166 = vmatmul.mubr.bf16.gmra.mrb[0].mxu0 %v1028
        %v1167 = vpop.f32.mrb[0].mxu0
        %v1168 = vadd.f32 0.0, %v1167
        %v1169 = vpop.f32.mrb[0].mxu0
        %v1170 = vpop.f32.mrb[0].mxu0
        %v1171 = vadd.f32 0.0, %v1170
        %v1172 = vpop.f32.mrb[0].mxu0
        %1173 = vdwg.mxu0
        %v1174 = vrcp.pop %v990
        %v1175 = vrcp.pop %v992
        %v1176 = vrcp.pop %v994
        %v1177 = vrcp.pop %v996
        %v1178 = vrcp.pop %v998
        %v1179 = vrcp.pop %v1000
        %v1180 = vrcp.pop %v1002
        %v1181 = vrcp.pop %v1004
        %v1182 = vrcp.pop %v1006
        %v1183 = vrcp.pop %v1008
        %v1184 = vrcp.pop %v1010
        %v1185 = vrcp.pop %v1012
        %v1186 = vrcp.pop %v1014
        %v1187 = vrcp.pop %v1016
        %v1188 = vrcp.pop %v1018
        %v1189 = vrcp.pop %v1020
        %v1190 = vmul.f32 %v1112, %v1174
        %v1191 = vmul.f32 %v1115, %v1175
        %v1192 = vmul.f32 %v1120, %v1176
        %v1193 = vmul.f32 %v1123, %v1177
        %v1194 = vmul.f32 %v1128, %v1178
        %v1195 = vmul.f32 %v1131, %v1179
        %v1196 = vmul.f32 %v1136, %v1180
        %v1197 = vmul.f32 %v1139, %v1181
        %v1198 = vmul.f32 %v1144, %v1182
        %v1199 = vmul.f32 %v1147, %v1183
        %v1200 = vmul.f32 %v1152, %v1184
        %v1201 = vmul.f32 %v1155, %v1185
        %v1202 = vmul.f32 %v1160, %v1186
        %v1203 = vmul.f32 %v1163, %v1187
        %v1204 = vmul.f32 %v1168, %v1188
        %v1205 = vmul.f32 %v1171, %v1189
        %1206 = vrot.lane.b32.xlu0 %v677, 64
        %v1207 = vpop.permute.xlu0 %1206
        %1208 = vrot.lane.b32.xlu0 %v678, 64
        %v1209 = vpop.permute.xlu0 %1208
        %1210 = vrot.lane.b32.xlu0 %v679, 64
        %v1211 = vpop.permute.xlu0 %1210
        %1212 = vrot.lane.b32.xlu0 %v680, 64
        %v1213 = vpop.permute.xlu0 %1212
        %1214 = vrot.lane.b32.xlu0 %v681, 64
        %v1215 = vpop.permute.xlu0 %1214
        %1216 = vrot.lane.b32.xlu0 %v682, 64
        %v1217 = vpop.permute.xlu0 %1216
        %1218 = vrot.lane.b32.xlu0 %v683, 64
        %v1219 = vpop.permute.xlu0 %1218
        %1220 = vrot.lane.b32.xlu0 %v684, 64
        %v1221 = vpop.permute.xlu0 %1220
        %1222 = vrot.lane.b32.xlu0 %v717, 64
        %v1223 = vpop.permute.xlu0 %1222
        %1224 = vrot.lane.b32.xlu0 %v718, 64
        %v1225 = vpop.permute.xlu0 %1224
        %1226 = vrot.lane.b32.xlu0 %v719, 64
        %v1227 = vpop.permute.xlu0 %1226
        %1228 = vrot.lane.b32.xlu0 %v720, 64
        %v1229 = vpop.permute.xlu0 %1228
        %1230 = vrot.lane.b32.xlu0 %v721, 64
        %v1231 = vpop.permute.xlu0 %1230
        %1232 = vrot.lane.b32.xlu0 %v722, 64
        %v1233 = vpop.permute.xlu0 %1232
        %1234 = vrot.lane.b32.xlu0 %v723, 64
        %v1235 = vpop.permute.xlu0 %1234
        %1236 = vrot.lane.b32.xlu0 %v724, 64
        %v1237 = vpop.permute.xlu0 %1236
        %v1239 = vsel %vm725, %v1207, 0
        %v1242 = vsel %vm725, %v1209, 0
        %v1245 = vsel %vm725, %v1211, 0
        %v1248 = vsel %vm725, %v1213, 0
        %v1251 = vsel %vm725, %v1215, 0
        %v1254 = vsel %vm725, %v1217, 0
        %v1257 = vsel %vm725, %v1219, 0
        %v1260 = vsel %vm725, %v1221, 0
        %v1263 = vsel %vm725, %v1223, 0
        %v1266 = vsel %vm725, %v1225, 0
        %v1269 = vsel %vm725, %v1227, 0
        %v1272 = vsel %vm725, %v1229, 0
        %v1275 = vsel %vm725, %v1231, 0
        %v1278 = vsel %vm725, %v1233, 0
        %v1281 = vsel %vm725, %v1235, 0
        %v1284 = vsel %vm725, %v1237, 0
        %1286 = vmatprep.subr.bf16.mxu0 0
        %1287 = vmatpush1.bf16.xpose.msra.mxu0 %v1263
        %1288 = vmatprep.subr.bf16.mxu0 0
        %1289 = vmatpush1.bf16.xpose.msra.mxu0 %v1266
        %1290 = vmatprep.subr.bf16.mxu0 0
        %1291 = vmatpush1.bf16.xpose.msra.mxu0 %v1269
        %1292 = vmatprep.subr.bf16.mxu0 0
        %1293 = vmatpush1.bf16.xpose.msra.mxu0 %v1272
        %1294 = vmatprep.subr.bf16.mxu0 0
        %1295 = vmatpush1.bf16.xpose.msra.mxu0 %v1275
        %1296 = vmatprep.subr.bf16.mxu0 0
        %1297 = vmatpush1.bf16.xpose.msra.mxu0 %v1278
        %1298 = vmatprep.subr.bf16.mxu0 0
        %1299 = vmatpush1.bf16.xpose.msra.mxu0 %v1281
        %1300 = vmatprep.subr.bf16.mxu0 0
        %1301 = vmatpush1.bf16.xpose.msra.mxu0 %v1284
        %1302 = vmatprep.subr.bf16.mxu0 0
        %1303 = vmatpush1.bf16.xpose.msra.mxu0 0
        %1304 = vmatprep.subr.bf16.mxu0 0
        %1305 = vmatpush1.bf16.xpose.msra.mxu0 0
        %1306 = vmatprep.subr.bf16.mxu0 0
        %1307 = vmatpush1.bf16.xpose.msra.mxu0 0
        %1308 = vmatprep.subr.bf16.mxu0 0
        %1309 = vmatpush1.bf16.xpose.msra.mxu0 0
        %1310 = vmatprep.subr.bf16.mxu0 0
        %1311 = vmatpush1.bf16.xpose.msra.mxu0 0
        %1312 = vmatprep.subr.bf16.mxu0 0
        %1313 = vmatpush1.bf16.xpose.msra.mxu0 0
        %1314 = vmatprep.subr.bf16.mxu0 0
        %1315 = vmatpush1.bf16.xpose.msra.mxu0 0
        %1316 = vmatprep.subr.bf16.mxu0 0
        %1317 = vmatpush1.bf16.xpose.msra.mxu0 0
        %1318 = vmatprep.mubr.bf16.mxu0 0
        %1319 = vmatmul.mubr.bf16.gmra.mrb[0].mxu0 %v1239
        %v1320 = vpop.f32.mrb[0].mxu0
        %v1321 = vadd.f32 0.0, %v1320
        %v1322 = vpop.f32.mrb[0].mxu0
        %v1323 = vpop.f32.mrb[0].mxu0
        %v1324 = vadd.f32 0.0, %v1323
        %v1325 = vpop.f32.mrb[0].mxu0
        %1326 = vmatprep.mubr.bf16.mxu0 0
        %1327 = vmatmul.mubr.bf16.gmra.mrb[0].mxu0 %v1242
        %v1328 = vpop.f32.mrb[0].mxu0
        %v1329 = vadd.f32 0.0, %v1328
        %v1330 = vpop.f32.mrb[0].mxu0
        %v1331 = vpop.f32.mrb[0].mxu0
        %v1332 = vadd.f32 0.0, %v1331
        %v1333 = vpop.f32.mrb[0].mxu0
        %1334 = vmatprep.mubr.bf16.mxu0 0
        %1335 = vmatmul.mubr.bf16.gmra.mrb[0].mxu0 %v1245
        %v1336 = vpop.f32.mrb[0].mxu0
        %v1337 = vadd.f32 0.0, %v1336
        %v1338 = vpop.f32.mrb[0].mxu0
        %v1339 = vpop.f32.mrb[0].mxu0
        %v1340 = vadd.f32 0.0, %v1339
        %v1341 = vpop.f32.mrb[0].mxu0
        %1342 = vmatprep.mubr.bf16.mxu0 0
        %1343 = vmatmul.mubr.bf16.gmra.mrb[0].mxu0 %v1248
        %v1344 = vpop.f32.mrb[0].mxu0
        %v1345 = vadd.f32 0.0, %v1344
        %v1346 = vpop.f32.mrb[0].mxu0
        %v1347 = vpop.f32.mrb[0].mxu0
        %v1348 = vadd.f32 0.0, %v1347
        %v1349 = vpop.f32.mrb[0].mxu0
        %1350 = vmatprep.mubr.bf16.mxu0 0
        %1351 = vmatmul.mubr.bf16.gmra.mrb[0].mxu0 %v1251
        %v1352 = vpop.f32.mrb[0].mxu0
        %v1353 = vadd.f32 0.0, %v1352
        %v1354 = vpop.f32.mrb[0].mxu0
        %v1355 = vpop.f32.mrb[0].mxu0
        %v1356 = vadd.f32 0.0, %v1355
        %v1357 = vpop.f32.mrb[0].mxu0
        %1358 = vmatprep.mubr.bf16.mxu0 0
        %1359 = vmatmul.mubr.bf16.gmra.mrb[0].mxu0 %v1254
        %v1360 = vpop.f32.mrb[0].mxu0
        %v1361 = vadd.f32 0.0, %v1360
        %v1362 = vpop.f32.mrb[0].mxu0
        %v1363 = vpop.f32.mrb[0].mxu0
        %v1364 = vadd.f32 0.0, %v1363
        %v1365 = vpop.f32.mrb[0].mxu0
        %1366 = vmatprep.mubr.bf16.mxu0 0
        %1367 = vmatmul.mubr.bf16.gmra.mrb[0].mxu0 %v1257
        %v1368 = vpop.f32.mrb[0].mxu0
        %v1369 = vadd.f32 0.0, %v1368
        %v1370 = vpop.f32.mrb[0].mxu0
        %v1371 = vpop.f32.mrb[0].mxu0
        %v1372 = vadd.f32 0.0, %v1371
        %v1373 = vpop.f32.mrb[0].mxu0
        %1374 = vmatprep.mubr.bf16.mxu0 0
        %1375 = vmatmul.mubr.bf16.gmra.mrb[0].mxu0 %v1260
        %v1376 = vpop.f32.mrb[0].mxu0
        %v1377 = vadd.f32 0.0, %v1376
        %v1378 = vpop.f32.mrb[0].mxu0
        %v1379 = vpop.f32.mrb[0].mxu0
        %v1380 = vadd.f32 0.0, %v1379
        %v1381 = vpop.f32.mrb[0].mxu0
        %1382 = vdwg.mxu0
        %v1383 = vmul.f32 %v1321, 0.125
        %v1384 = vmul.f32 %v1324, 0.125
        %v1385 = vmul.f32 %v1329, 0.125
        %v1386 = vmul.f32 %v1332, 0.125
        %v1387 = vmul.f32 %v1337, 0.125
        %v1388 = vmul.f32 %v1340, 0.125
        %v1389 = vmul.f32 %v1345, 0.125
        %v1390 = vmul.f32 %v1348, 0.125
        %v1391 = vmul.f32 %v1353, 0.125
        %v1392 = vmul.f32 %v1356, 0.125
        %v1393 = vmul.f32 %v1361, 0.125
        %v1394 = vmul.f32 %v1364, 0.125
        %v1395 = vmul.f32 %v1369, 0.125
        %v1396 = vmul.f32 %v1372, 0.125
        %v1397 = vmul.f32 %v1377, 0.125
        %v1398 = vmul.f32 %v1380, 0.125
        %v1399 = vadd.f32 %v1383, %v891
        %v1400 = vadd.f32 %v1384, %v891
        %v1401 = vadd.f32 %v1385, %v891
        %v1402 = vadd.f32 %v1386, %v891
        %v1403 = vadd.f32 %v1387, %v891
        %v1404 = vadd.f32 %v1388, %v891
        %v1405 = vadd.f32 %v1389, %v891
        %v1406 = vadd.f32 %v1390, %v891
        %v1407 = vadd.f32 %v1391, %v891
        %v1408 = vadd.f32 %v1392, %v891
        %v1409 = vadd.f32 %v1393, %v891
        %v1410 = vadd.f32 %v1394, %v891
        %v1411 = vadd.f32 %v1395, %v891
        %v1412 = vadd.f32 %v1396, %v891
        %v1413 = vadd.f32 %v1397, %v891
        %v1414 = vadd.f32 %v1398, %v891
        %1415 = vmax.xlane.f32.xlu0 %v1399
        %v1416 = vpop.xlane.xlu0 %1415
        %1417 = vmax.xlane.f32.xlu0 %v1400
        %v1418 = vpop.xlane.xlu0 %1417
        %1419 = vmax.xlane.f32.xlu0 %v1401
        %v1420 = vpop.xlane.xlu0 %1419
        %1421 = vmax.xlane.f32.xlu0 %v1402
        %v1422 = vpop.xlane.xlu0 %1421
        %1423 = vmax.xlane.f32.xlu0 %v1403
        %v1424 = vpop.xlane.xlu0 %1423
        %1425 = vmax.xlane.f32.xlu0 %v1404
        %v1426 = vpop.xlane.xlu0 %1425
        %1427 = vmax.xlane.f32.xlu0 %v1405
        %v1428 = vpop.xlane.xlu0 %1427
        %1429 = vmax.xlane.f32.xlu0 %v1406
        %v1430 = vpop.xlane.xlu0 %1429
        %1431 = vmax.xlane.f32.xlu0 %v1407
        %v1432 = vpop.xlane.xlu0 %1431
        %1433 = vmax.xlane.f32.xlu0 %v1408
        %v1434 = vpop.xlane.xlu0 %1433
        %1435 = vmax.xlane.f32.xlu0 %v1409
        %v1436 = vpop.xlane.xlu0 %1435
        %1437 = vmax.xlane.f32.xlu0 %v1410
        %v1438 = vpop.xlane.xlu0 %1437
        %1439 = vmax.xlane.f32.xlu0 %v1411
        %v1440 = vpop.xlane.xlu0 %1439
        %1441 = vmax.xlane.f32.xlu0 %v1412
        %v1442 = vpop.xlane.xlu0 %1441
        %1443 = vmax.xlane.f32.xlu0 %v1413
        %v1444 = vpop.xlane.xlu0 %1443
        %1445 = vmax.xlane.f32.xlu0 %v1414
        %v1446 = vpop.xlane.xlu0 %1445
        %v1447 = vsub.f32 %v1399, %v1416
        %v1448 = vsub.f32 %v1400, %v1418
        %v1449 = vsub.f32 %v1401, %v1420
        %v1450 = vsub.f32 %v1402, %v1422
        %v1451 = vsub.f32 %v1403, %v1424
        %v1452 = vsub.f32 %v1404, %v1426
        %v1453 = vsub.f32 %v1405, %v1428
        %v1454 = vsub.f32 %v1406, %v1430
        %v1455 = vsub.f32 %v1407, %v1432
        %v1456 = vsub.f32 %v1408, %v1434
        %v1457 = vsub.f32 %v1409, %v1436
        %v1458 = vsub.f32 %v1410, %v1438
        %v1459 = vsub.f32 %v1411, %v1440
        %v1460 = vsub.f32 %v1412, %v1442
        %v1461 = vsub.f32 %v1413, %v1444
        %v1462 = vsub.f32 %v1414, %v1446
        %v1463 = vmul.f32 %v1447, 1.442695
        %v1464 = vpow.pop %v1463
        %v1465 = vmul.f32 %v1448, 1.442695
        %v1466 = vpow.pop %v1465
        %v1467 = vmul.f32 %v1449, 1.442695
        %v1468 = vpow.pop %v1467
        %v1469 = vmul.f32 %v1450, 1.442695
        %v1470 = vpow.pop %v1469
        %v1471 = vmul.f32 %v1451, 1.442695
        %v1472 = vpow.pop %v1471
        %v1473 = vmul.f32 %v1452, 1.442695
        %v1474 = vpow.pop %v1473
        %v1475 = vmul.f32 %v1453, 1.442695
        %v1476 = vpow.pop %v1475
        %v1477 = vmul.f32 %v1454, 1.442695
        %v1478 = vpow.pop %v1477
        %v1479 = vmul.f32 %v1455, 1.442695
        %v1480 = vpow.pop %v1479
        %v1481 = vmul.f32 %v1456, 1.442695
        %v1482 = vpow.pop %v1481
        %v1483 = vmul.f32 %v1457, 1.442695
        %v1484 = vpow.pop %v1483
        %v1485 = vmul.f32 %v1458, 1.442695
        %v1486 = vpow.pop %v1485
        %v1487 = vmul.f32 %v1459, 1.442695
        %v1488 = vpow.pop %v1487
        %v1489 = vmul.f32 %v1460, 1.442695
        %v1490 = vpow.pop %v1489
        %v1491 = vmul.f32 %v1461, 1.442695
        %v1492 = vpow.pop %v1491
        %v1493 = vmul.f32 %v1462, 1.442695
        %v1494 = vpow.pop %v1493
        %1495 = vadd.xlane.f32.xlu0 %v1464
        %v1496 = vpop.xlane.xlu0 %1495
        %1497 = vadd.xlane.f32.xlu0 %v1466
        %v1498 = vpop.xlane.xlu0 %1497
        %1499 = vadd.xlane.f32.xlu0 %v1468
        %v1500 = vpop.xlane.xlu0 %1499
        %1501 = vadd.xlane.f32.xlu0 %v1470
        %v1502 = vpop.xlane.xlu0 %1501
        %1503 = vadd.xlane.f32.xlu0 %v1472
        %v1504 = vpop.xlane.xlu0 %1503
        %1505 = vadd.xlane.f32.xlu0 %v1474
        %v1506 = vpop.xlane.xlu0 %1505
        %1507 = vadd.xlane.f32.xlu0 %v1476
        %v1508 = vpop.xlane.xlu0 %1507
        %1509 = vadd.xlane.f32.xlu0 %v1478
        %v1510 = vpop.xlane.xlu0 %1509
        %1511 = vadd.xlane.f32.xlu0 %v1480
        %v1512 = vpop.xlane.xlu0 %1511
        %1513 = vadd.xlane.f32.xlu0 %v1482
        %v1514 = vpop.xlane.xlu0 %1513
        %1515 = vadd.xlane.f32.xlu0 %v1484
        %v1516 = vpop.xlane.xlu0 %1515
        %1517 = vadd.xlane.f32.xlu0 %v1486
        %v1518 = vpop.xlane.xlu0 %1517
        %1519 = vadd.xlane.f32.xlu0 %v1488
        %v1520 = vpop.xlane.xlu0 %1519
        %1521 = vadd.xlane.f32.xlu0 %v1490
        %v1522 = vpop.xlane.xlu0 %1521
        %1523 = vadd.xlane.f32.xlu0 %v1492
        %v1524 = vpop.xlane.xlu0 %1523
        %1525 = vadd.xlane.f32.xlu0 %v1494
        %v1526 = vpop.xlane.xlu0 %1525
        %v1527 = vpack.c.bf16 %v1466, %v1464
        %v1528 = vpack.c.bf16 %v1470, %v1468
        %v1529 = vpack.c.bf16 %v1474, %v1472
        %v1530 = vpack.c.bf16 %v1478, %v1476
        %v1531 = vpack.c.bf16 %v1482, %v1480
        %v1532 = vpack.c.bf16 %v1486, %v1484
        %v1533 = vpack.c.bf16 %v1490, %v1488
        %v1534 = vpack.c.bf16 %v1494, %v1492
        %1535 = vrot.lane.b32.xlu0 %v1061, 64
        %v1536 = vpop.permute.xlu0 %1535
        %1537 = vrot.lane.b32.xlu0 %v1062, 64
        %v1538 = vpop.permute.xlu0 %1537
        %1539 = vrot.lane.b32.xlu0 %v1063, 64
        %v1540 = vpop.permute.xlu0 %1539
        %1541 = vrot.lane.b32.xlu0 %v1064, 64
        %v1542 = vpop.permute.xlu0 %1541
        %1543 = vrot.lane.b32.xlu0 %v1065, 64
        %v1544 = vpop.permute.xlu0 %1543
        %1545 = vrot.lane.b32.xlu0 %v1066, 64
        %v1546 = vpop.permute.xlu0 %1545
        %1547 = vrot.lane.b32.xlu0 %v1067, 64
        %v1548 = vpop.permute.xlu0 %1547
        %1549 = vrot.lane.b32.xlu0 %v1068, 64
        %v1550 = vpop.permute.xlu0 %1549
        %1559 = vmatprep.subr.bf16.mxu0 0
        %1560 = vmatpush1.bf16.msra.mxu0 %v1536
        %1561 = vmatprep.subr.bf16.mxu0 0
        %1562 = vmatpush1.bf16.msra.mxu0 %v1538
        %1563 = vmatprep.subr.bf16.mxu0 0
        %1564 = vmatpush1.bf16.msra.mxu0 %v1540
        %1565 = vmatprep.subr.bf16.mxu0 0
        %1566 = vmatpush1.bf16.msra.mxu0 %v1542
        %1567 = vmatprep.subr.bf16.mxu0 0
        %1568 = vmatpush1.bf16.msra.mxu0 %v1544
        %1569 = vmatprep.subr.bf16.mxu0 0
        %1570 = vmatpush1.bf16.msra.mxu0 %v1546
        %1571 = vmatprep.subr.bf16.mxu0 0
        %1572 = vmatpush1.bf16.msra.mxu0 %v1548
        %1573 = vmatprep.subr.bf16.mxu0 0
        %1574 = vmatpush1.bf16.msra.mxu0 %v1550
        %1575 = vmatprep.subr.bf16.mxu0 0
        %1576 = vmatpush1.bf16.msra.mxu0 0
        %1577 = vmatprep.subr.bf16.mxu0 0
        %1578 = vmatpush1.bf16.msra.mxu0 0
        %1579 = vmatprep.subr.bf16.mxu0 0
        %1580 = vmatpush1.bf16.msra.mxu0 0
        %1581 = vmatprep.subr.bf16.mxu0 0
        %1582 = vmatpush1.bf16.msra.mxu0 0
        %1583 = vmatprep.subr.bf16.mxu0 0
        %1584 = vmatpush1.bf16.msra.mxu0 0
        %1585 = vmatprep.subr.bf16.mxu0 0
        %1586 = vmatpush1.bf16.msra.mxu0 0
        %1587 = vmatprep.subr.bf16.mxu0 0
        %1588 = vmatpush1.bf16.msra.mxu0 0
        %1589 = vmatprep.subr.bf16.mxu0 0
        %1590 = vmatpush1.bf16.msra.mxu0 0
        %1591 = vmatprep.mubr.bf16.mxu0 0
        %1592 = vmatmul.mubr.bf16.gmra.mrb[0].mxu0 %v1527
        %v1593 = vpop.f32.mrb[0].mxu0
        %v1594 = vadd.f32 0.0, %v1593
        %v1595 = vpop.f32.mrb[0].mxu0
        %v1596 = vpop.f32.mrb[0].mxu0
        %v1597 = vadd.f32 0.0, %v1596
        %v1598 = vpop.f32.mrb[0].mxu0
        %1599 = vmatprep.mubr.bf16.mxu0 0
        %1600 = vmatmul.mubr.bf16.gmra.mrb[0].mxu0 %v1528
        %v1601 = vpop.f32.mrb[0].mxu0
        %v1602 = vadd.f32 0.0, %v1601
        %v1603 = vpop.f32.mrb[0].mxu0
        %v1604 = vpop.f32.mrb[0].mxu0
        %v1605 = vadd.f32 0.0, %v1604
        %v1606 = vpop.f32.mrb[0].mxu0
        %1607 = vmatprep.mubr.bf16.mxu0 0
        %1608 = vmatmul.mubr.bf16.gmra.mrb[0].mxu0 %v1529
        %v1609 = vpop.f32.mrb[0].mxu0
        %v1610 = vadd.f32 0.0, %v1609
        %v1611 = vpop.f32.mrb[0].mxu0
        %v1612 = vpop.f32.mrb[0].mxu0
        %v1613 = vadd.f32 0.0, %v1612
        %v1614 = vpop.f32.mrb[0].mxu0
        %1615 = vmatprep.mubr.bf16.mxu0 0
        %1616 = vmatmul.mubr.bf16.gmra.mrb[0].mxu0 %v1530
        %v1617 = vpop.f32.mrb[0].mxu0
        %v1618 = vadd.f32 0.0, %v1617
        %v1619 = vpop.f32.mrb[0].mxu0
        %v1620 = vpop.f32.mrb[0].mxu0
        %v1621 = vadd.f32 0.0, %v1620
        %v1622 = vpop.f32.mrb[0].mxu0
        %1623 = vmatprep.mubr.bf16.mxu0 0
        %1624 = vmatmul.mubr.bf16.gmra.mrb[0].mxu0 %v1531
        %v1625 = vpop.f32.mrb[0].mxu0
        %v1626 = vadd.f32 0.0, %v1625
        %v1627 = vpop.f32.mrb[0].mxu0
        %v1628 = vpop.f32.mrb[0].mxu0
        %v1629 = vadd.f32 0.0, %v1628
        %v1630 = vpop.f32.mrb[0].mxu0
        %1631 = vmatprep.mubr.bf16.mxu0 0
        %1632 = vmatmul.mubr.bf16.gmra.mrb[0].mxu0 %v1532
        %v1633 = vpop.f32.mrb[0].mxu0
        %v1634 = vadd.f32 0.0, %v1633
        %v1635 = vpop.f32.mrb[0].mxu0
        %v1636 = vpop.f32.mrb[0].mxu0
        %v1637 = vadd.f32 0.0, %v1636
        %v1638 = vpop.f32.mrb[0].mxu0
        %1639 = vmatprep.mubr.bf16.mxu0 0
        %1640 = vmatmul.mubr.bf16.gmra.mrb[0].mxu0 %v1533
        %v1641 = vpop.f32.mrb[0].mxu0
        %v1642 = vadd.f32 0.0, %v1641
        %v1643 = vpop.f32.mrb[0].mxu0
        %v1644 = vpop.f32.mrb[0].mxu0
        %v1645 = vadd.f32 0.0, %v1644
        %v1646 = vpop.f32.mrb[0].mxu0
        %1647 = vmatprep.mubr.bf16.mxu0 0
        %1648 = vmatmul.mubr.bf16.gmra.mrb[0].mxu0 %v1534
        %v1649 = vpop.f32.mrb[0].mxu0
        %v1650 = vadd.f32 0.0, %v1649
        %v1651 = vpop.f32.mrb[0].mxu0
        %v1652 = vpop.f32.mrb[0].mxu0
        %v1653 = vadd.f32 0.0, %v1652
        %v1654 = vpop.f32.mrb[0].mxu0
        %1655 = vdwg.mxu0
        %v1656 = vrcp.pop %v1496
        %v1657 = vrcp.pop %v1498
        %v1658 = vrcp.pop %v1500
        %v1659 = vrcp.pop %v1502
        %v1660 = vrcp.pop %v1504
        %v1661 = vrcp.pop %v1506
        %v1662 = vrcp.pop %v1508
        %v1663 = vrcp.pop %v1510
        %v1664 = vrcp.pop %v1512
        %v1665 = vrcp.pop %v1514
        %v1666 = vrcp.pop %v1516
        %v1667 = vrcp.pop %v1518
        %v1668 = vrcp.pop %v1520
        %v1669 = vrcp.pop %v1522
        %v1670 = vrcp.pop %v1524
        %v1671 = vrcp.pop %v1526
        %v1672 = vmul.f32 %v1594, %v1656
        %v1673 = vmul.f32 %v1597, %v1657
        %v1674 = vmul.f32 %v1602, %v1658
        %v1675 = vmul.f32 %v1605, %v1659
        %v1676 = vmul.f32 %v1610, %v1660
        %v1677 = vmul.f32 %v1613, %v1661
        %v1678 = vmul.f32 %v1618, %v1662
        %v1679 = vmul.f32 %v1621, %v1663
        %v1680 = vmul.f32 %v1626, %v1664
        %v1681 = vmul.f32 %v1629, %v1665
        %v1682 = vmul.f32 %v1634, %v1666
        %v1683 = vmul.f32 %v1637, %v1667
        %v1684 = vmul.f32 %v1642, %v1668
        %v1685 = vmul.f32 %v1645, %v1669
        %v1686 = vmul.f32 %v1650, %v1670
        %v1687 = vmul.f32 %v1653, %v1671
        %1704 = vrot.lane.b32.xlu0 %v1672, 64
        %v1705 = vpop.permute.xlu0 %1704
        %1706 = vrot.lane.b32.xlu0 %v1673, 64
        %v1707 = vpop.permute.xlu0 %1706
        %1708 = vrot.lane.b32.xlu0 %v1674, 64
        %v1709 = vpop.permute.xlu0 %1708
        %1710 = vrot.lane.b32.xlu0 %v1675, 64
        %v1711 = vpop.permute.xlu0 %1710
        %1712 = vrot.lane.b32.xlu0 %v1676, 64
        %v1713 = vpop.permute.xlu0 %1712
        %1714 = vrot.lane.b32.xlu0 %v1677, 64
        %v1715 = vpop.permute.xlu0 %1714
        %1716 = vrot.lane.b32.xlu0 %v1678, 64
        %v1717 = vpop.permute.xlu0 %1716
        %1718 = vrot.lane.b32.xlu0 %v1679, 64
        %v1719 = vpop.permute.xlu0 %1718
        %1720 = vrot.lane.b32.xlu0 %v1680, 64
        %v1721 = vpop.permute.xlu0 %1720
        %1722 = vrot.lane.b32.xlu0 %v1681, 64
        %v1723 = vpop.permute.xlu0 %1722
        %1724 = vrot.lane.b32.xlu0 %v1682, 64
        %v1725 = vpop.permute.xlu0 %1724
        %1726 = vrot.lane.b32.xlu0 %v1683, 64
        %v1727 = vpop.permute.xlu0 %1726
        %1728 = vrot.lane.b32.xlu0 %v1684, 64
        %v1729 = vpop.permute.xlu0 %1728
        %1730 = vrot.lane.b32.xlu0 %v1685, 64
        %v1731 = vpop.permute.xlu0 %1730
        %1732 = vrot.lane.b32.xlu0 %v1686, 64
        %v1733 = vpop.permute.xlu0 %1732
        %1734 = vrot.lane.b32.xlu0 %v1687, 64
        %v1735 = vpop.permute.xlu0 %1734
        %v1752 = vsel %vm725, %v1190, %v1705
        %v1753 = vsel %vm725, %v1191, %v1707
        %v1754 = vsel %vm725, %v1192, %v1709
        %v1755 = vsel %vm725, %v1193, %v1711
        %v1756 = vsel %vm725, %v1194, %v1713
        %v1757 = vsel %vm725, %v1195, %v1715
        %v1758 = vsel %vm725, %v1196, %v1717
        %v1759 = vsel %vm725, %v1197, %v1719
        %v1760 = vsel %vm725, %v1198, %v1721
        %v1761 = vsel %vm725, %v1199, %v1723
        %v1762 = vsel %vm725, %v1200, %v1725
        %v1763 = vsel %vm725, %v1201, %v1727
        %v1764 = vsel %vm725, %v1202, %v1729
        %v1765 = vsel %vm725, %v1203, %v1731
        %v1766 = vsel %vm725, %v1204, %v1733
        %v1767 = vsel %vm725, %v1205, %v1735
        %v1768 = vpack.c.bf16 %v1753, %v1752
        %v1769 = vpack.c.bf16 %v1755, %v1754
        %v1770 = vpack.c.bf16 %v1757, %v1756
        %v1771 = vpack.c.bf16 %v1759, %v1758
        %v1772 = vpack.c.bf16 %v1761, %v1760
        %v1773 = vpack.c.bf16 %v1763, %v1762
        %v1774 = vpack.c.bf16 %v1765, %v1764
        %v1775 = vpack.c.bf16 %v1767, %v1766
        %v1784 = vunpack.c.l.b16 %v1768
        %v1785 = vunpack.c.h.b16 %v1768
        %v1786 = vunpack.c.l.b16 %v1769
        %v1787 = vunpack.c.h.b16 %v1769
        %v1788 = vunpack.c.l.b16 %v1770
        %v1789 = vunpack.c.h.b16 %v1770
        %v1790 = vunpack.c.l.b16 %v1771
        %v1791 = vunpack.c.h.b16 %v1771
        %v1792 = vunpack.c.l.b16 %v1772
        %v1793 = vunpack.c.h.b16 %v1772
        %v1794 = vunpack.c.l.b16 %v1773
        %v1795 = vunpack.c.h.b16 %v1773
        %v1796 = vunpack.c.l.b16 %v1774
        %v1797 = vunpack.c.h.b16 %v1774
        %v1798 = vunpack.c.l.b16 %v1775
        %v1799 = vunpack.c.h.b16 %v1775
        %v1800 = vpack.c.b16 %v1784, %v1784
        %v1801 = vpack.c.b16 %v1785, %v1785
        %v1802 = vpack.c.b16 %v1786, %v1786
        %v1803 = vpack.c.b16 %v1787, %v1787
        %v1804 = vpack.c.b16 %v1788, %v1788
        %v1805 = vpack.c.b16 %v1789, %v1789
        %v1806 = vpack.c.b16 %v1790, %v1790
        %v1807 = vpack.c.b16 %v1791, %v1791
        %v1808 = vpack.c.b16 %v1792, %v1792
        %v1809 = vpack.c.b16 %v1793, %v1793
        %v1810 = vpack.c.b16 %v1794, %v1794
        %v1811 = vpack.c.b16 %v1795, %v1795
        %v1812 = vpack.c.b16 %v1796, %v1796
        %v1813 = vpack.c.b16 %v1797, %v1797
        %v1814 = vpack.c.b16 %v1798, %v1798
        %v1815 = vpack.c.b16 %v1799, %v1799
        %1832 = vst [vmem:[%s594] sm:$0xf] %v1800
        %1833 = vst [vmem:[%s594 + $0x4] sm:$0xf] %v1801
        %1834 = vst [vmem:[%s594 + $0x8] sm:$0xf] %v1802
        %1835 = vst [vmem:[%s594 + $0xc] sm:$0xf] %v1803
        %1836 = vst [vmem:[%s594 + $0x10] sm:$0xf] %v1804
        %1837 = vst [vmem:[%s594 + $0x14] sm:$0xf] %v1805
        %1838 = vst [vmem:[%s594 + $0x18] sm:$0xf] %v1806
        %1839 = vst [vmem:[%s594 + $0x1c] sm:$0xf] %v1807
        %1840 = vst [vmem:[%s594 + $0x20] sm:$0xf] %v1808
        %1841 = vst [vmem:[%s594 + $0x24] sm:$0xf] %v1809
        %1842 = vst [vmem:[%s594 + $0x28] sm:$0xf] %v1810
        %1843 = vst [vmem:[%s594 + $0x2c] sm:$0xf] %v1811
        %1844 = vst [vmem:[%s594 + $0x30] sm:$0xf] %v1812
        %1845 = vst [vmem:[%s594 + $0x34] sm:$0xf] %v1813
        %1846 = vst [vmem:[%s594 + $0x38] sm:$0xf] %v1814
        %1847 = vst [vmem:[%s594 + $0x3c] sm:$0xf] %v1815
        %p1848 = scmp.lt.s32.totalorder %s19, 1
        %s1849 = scalar_select %p1848, %s19, 1
        %p1850 = scmp.lt.s32.totalorder %s20, 0
        %s1851 = scalar_select %p1850, %s20, 0
        %s1852 = smul.addr %s1849, 16
        %s1853 = sadd.s32 %s1851, %s1852
        %s1854 = smul.addr %s1853, 4
        %s1855 = scalar_lea.vmem %s4, %s1854
        // Predicated region
        $region160: #{run.13} parent=146 // pred_check
          %p1856 = pneg %p161
        $region161: #{run.13} parent=146 // pred_check_branch
          %1858 = sbr.rel (%p1856) target = $region163
        $region162: #{run.13} parent=146 // pred_region
          _
        $region163: #{run.13} parent=146 // pred_fallthru
          _
      $region147: #{run.13} parent=5 // pred_fallthru
        _
      %p1859 = scmp.le.s32.totalorder 2, %s10
      // Predicated region
      $region164: #{run.13} parent=5 // pred_check
        %p1860 = pneg %p1859
      $region165: #{run.13} parent=5 // pred_check_branch
        %1862 = sbr.rel (%p1860) target = $region167
      $region166: #{run.13} parent=5 // pred_region
        %s1863 = ssub.s32 %s10, 2
        // Predicated region
        $region168: #{run.13} parent=166 // pred_check
          %p1864 = pneg %p167
        $region169: #{run.13} parent=166 // pred_check_branch
          %1866 = sbr.rel (%p1864) target = $region171
        $region170: #{run.13} parent=166 // pred_region
          %p1867 = scmp.lt.s32.totalorder %s21, 1
          %s1868 = scalar_select %p1867, %s21, 1
          %p1869 = scmp.lt.s32.totalorder %s22, 0
          %s1870 = scalar_select %p1869, %s22, 0
          %s1871 = smul.addr %s1868, 16
          %s1872 = sadd.s32 %s1870, %s1871
          %s1873 = smul.addr %s1872, 4
          %s1874 = scalar_lea.vmem %s4, %s1873
        $region171: #{run.13} parent=166 // pred_fallthru
          _
      $region167: #{run.13} parent=5 // pred_fallthru
        _
    $region6: #{run.13} parent=1 // loop_footer
      %s14 = sadd.s32 1, %s10
    $region7: #{run.13} parent=1 // loop_footer_branch
      %9 = sbr.rel target = $region3
    $region8: #{run.13} parent=1 // loop_exit
      _

// kernel: run.14
$region0: #{run.14}
  #allocation0 [shape = 'u32[]', space=smem, size = 0x4, offset = 0x4, fixed_abs, tag = 'smem constant byte address 0x4 - core index']
  #allocation1 [shape = 'u32[144,128]{1,0:T(1,128)}', space=vmem, size = 0x12000, scoped, tag = 'internal scratch']
  #allocation2 [shape = 'f32[128,128]{1,0:T(8,128)}', space=vmem, size = 0x10000, scoped, tag = 'scratch operand']
  %s0 = inlined_call_operand.vmem [shape: bf16[256,128], index: 0, kind: input, shape index: {}]
  %s1 = inlined_call_operand.vmem [shape: bf16[128,128], index: 1, kind: input, shape index: {}]
  %s2 = inlined_call_operand.vmem [shape: f32[1,128], index: 2, kind: input, shape index: {}]
  %s3 = inlined_call_operand.vmem [shape: bf16[256,128], index: 3, kind: input, shape index: {}]
  %s4 = inlined_call_operand.vmem [shape: f32[1,128], index: 4, kind: input, shape index: {}]
  %s5 = inlined_call_operand.vmem [shape: f32[1,128], index: 5, kind: input, shape index: {}]
  %s6 = inlined_call_operand.vmem [shape: bf16[256,128], index: 6, kind: output, shape index: {}]
  %s7 = sld [smem:[#allocation0]]
  $region65: #{run.14} parent=0
    _
  %s9 = ssub.s32 1, %s7
  %s10 = scalar_select 0, %s9, %s7
  loop: start=0, step=1, limit=4
  $region2: #{run.14} parent=0 // loop_pre_header
    _
  $region3: #{run.14} parent=0 // loop_header
    %s12 = sphi 0, %s16
    %p13 = scmp.ge.s32.totalorder %s12, 4
    %s19 = sphi 0, %s31
    %s20 = sphi 0, %s27
    %s21 = sphi 0, %s19
    %s22 = sphi 0, %s20
    %s23 = sphi 0, %s21
    %s24 = sphi 0, %s22
    %s36 = sphi 0, %s38
    %s39 = sphi 0, %s36
    %s40 = sphi 0, %s39
    %s56 = sphi 0, %s40
    %s62 = sphi 0, %s64
    %s65 = sphi 0, %s62
    %s66 = sphi 0, %s65
    %s82 = sphi 0, %s66
    %s86 = sphi 0, %s86
    %s88 = sphi 0, %s86
    %s89 = sphi 0, %s88
    %s103 = sphi 0, %s89
    %s109 = sphi 0, %s111
    %s112 = sphi 0, %s109
    %s113 = sphi 0, %s112
    %s129 = sphi 0, %s113
    %s133 = sphi 0, %s133
    %s135 = sphi 0, %s133
    %s136 = sphi 0, %s135
    %s150 = sphi 0, %s136
    %s154 = sphi 0, %s154
    %s156 = sphi 0, %s154
    %s157 = sphi 0, %s156
    %s171 = sphi 0, %s157
    %s177 = sphi 0, %s179
    %s180 = sphi 0, %s177
    %s181 = sphi 0, %s180
    %s197 = sphi 0, %s181
  $region4: #{run.14} parent=0 // loop_header_branch
    %15 = sbr.rel (%p13) target = $region8
  $region5: #{run.14} parent=0 // loop_body
    %s17 = ssub.s32 %s12, 1
    %s18 = ssub.s32 %s12, 2
    %s25 = sadd.s32 1, %s20
    %p26 = scmp.ge.s32.totalorder %s25, 1
    %s27 = scalar_select %p26, 0, %s25
    %s28 = sadd.s32 1, %s19
    %s29 = scalar_select %p26, %s28, %s19
    %p30 = scmp.ge.s32.totalorder %s29, 2
    %s31 = scalar_select %p30, 0, %s29
    %s32 = ssub.s32 %s19, %s31
    %s33 = ssub.s32 %s20, %s27
    %s34 = sor.u32 %s32, %s33
    %p35 = scmp.eq.s32.totalorder %s34, 0
    %s37 = sadd.s32 %s36, 1
    %s38 = scalar_select %p35, %s36, %s37
    %p41 = pneg %p35
    %p42 = scmp.eq.s32.totalorder %s12, 1
    %p43 = por %p41, %p42
    %p44 = scmp.ne.s32.totalorder %s36, %s39
    %p45 = scmp.eq.s32.totalorder %s12, 0
    %p46 = por %p44, %p45
    %p47 = scmp.ne.s32.totalorder %s36, %s39
    %p48 = scmp.eq.s32.totalorder %s17, 1
    %p49 = por %p47, %p48
    %p50 = scmp.ne.s32.totalorder %s39, %s40
    %p51 = scmp.eq.s32.totalorder %s17, 0
    %p52 = por %p50, %p51
    %p53 = scmp.ne.s32.totalorder %s39, %s40
    %p54 = scmp.eq.s32.totalorder %s18, 1
    %p55 = por %p53, %p54
    %p57 = scmp.ne.s32.totalorder %s40, %s56
    %p58 = scmp.eq.s32.totalorder %s18, 0
    %p59 = por %p57, %p58
    %s60 = ssub.s32 %s20, %s27
    %p61 = scmp.eq.s32.totalorder %s60, 0
    %s63 = sadd.s32 %s62, 1
    %s64 = scalar_select %p61, %s62, %s63
    %p67 = pneg %p61
    %p68 = scmp.eq.s32.totalorder %s12, 1
    %p69 = por %p67, %p68
    %p70 = scmp.ne.s32.totalorder %s62, %s65
    %p71 = scmp.eq.s32.totalorder %s12, 0
    %p72 = por %p70, %p71
    %p73 = scmp.ne.s32.totalorder %s62, %s65
    %p74 = scmp.eq.s32.totalorder %s17, 1
    %p75 = por %p73, %p74
    %p76 = scmp.ne.s32.totalorder %s65, %s66
    %p77 = scmp.eq.s32.totalorder %s17, 0
    %p78 = por %p76, %p77
    %p79 = scmp.ne.s32.totalorder %s65, %s66
    %p80 = scmp.eq.s32.totalorder %s18, 1
    %p81 = por %p79, %p80
    %p83 = scmp.ne.s32.totalorder %s66, %s82
    %p84 = scmp.eq.s32.totalorder %s18, 0
    %p85 = por %p83, %p84
    %s87 = sadd.s32 %s86, 1
    %p90 = scmp.eq.s32.totalorder %s12, 1
    %p91 = scmp.ne.s32.totalorder %s86, %s88
    %p92 = scmp.eq.s32.totalorder %s12, 0
    %p93 = por %p91, %p92
    %p94 = scmp.ne.s32.totalorder %s86, %s88
    %p95 = scmp.eq.s32.totalorder %s17, 1
    %p96 = por %p94, %p95
    %p97 = scmp.ne.s32.totalorder %s88, %s89
    %p98 = scmp.eq.s32.totalorder %s17, 0
    %p99 = por %p97, %p98
    %p100 = scmp.ne.s32.totalorder %s88, %s89
    %p101 = scmp.eq.s32.totalorder %s18, 1
    %p102 = por %p100, %p101
    %p104 = scmp.ne.s32.totalorder %s89, %s103
    %p105 = scmp.eq.s32.totalorder %s18, 0
    %p106 = por %p104, %p105
    %s107 = ssub.s32 %s19, %s31
    %p108 = scmp.eq.s32.totalorder %s107, 0
    %s110 = sadd.s32 %s109, 1
    %s111 = scalar_select %p108, %s109, %s110
    %p114 = pneg %p108
    %p115 = scmp.eq.s32.totalorder %s12, 1
    %p116 = por %p114, %p115
    %p117 = scmp.ne.s32.totalorder %s109, %s112
    %p118 = scmp.eq.s32.totalorder %s12, 0
    %p119 = por %p117, %p118
    %p120 = scmp.ne.s32.totalorder %s109, %s112
    %p121 = scmp.eq.s32.totalorder %s17, 1
    %p122 = por %p120, %p121
    %p123 = scmp.ne.s32.totalorder %s112, %s113
    %p124 = scmp.eq.s32.totalorder %s17, 0
    %p125 = por %p123, %p124
    %p126 = scmp.ne.s32.totalorder %s112, %s113
    %p127 = scmp.eq.s32.totalorder %s18, 1
    %p128 = por %p126, %p127
    %p130 = scmp.ne.s32.totalorder %s113, %s129
    %p131 = scmp.eq.s32.totalorder %s18, 0
    %p132 = por %p130, %p131
    %s134 = sadd.s32 %s133, 1
    %p137 = scmp.eq.s32.totalorder %s12, 1
    %p138 = scmp.ne.s32.totalorder %s133, %s135
    %p139 = scmp.eq.s32.totalorder %s12, 0
    %p140 = por %p138, %p139
    %p141 = scmp.ne.s32.totalorder %s133, %s135
    %p142 = scmp.eq.s32.totalorder %s17, 1
    %p143 = por %p141, %p142
    %p144 = scmp.ne.s32.totalorder %s135, %s136
    %p145 = scmp.eq.s32.totalorder %s17, 0
    %p146 = por %p144, %p145
    %p147 = scmp.ne.s32.totalorder %s135, %s136
    %p148 = scmp.eq.s32.totalorder %s18, 1
    %p149 = por %p147, %p148
    %p151 = scmp.ne.s32.totalorder %s136, %s150
    %p152 = scmp.eq.s32.totalorder %s18, 0
    %p153 = por %p151, %p152
    %s155 = sadd.s32 %s154, 1
    %p158 = scmp.eq.s32.totalorder %s12, 1
    %p159 = scmp.ne.s32.totalorder %s154, %s156
    %p160 = scmp.eq.s32.totalorder %s12, 0
    %p161 = por %p159, %p160
    %p162 = scmp.ne.s32.totalorder %s154, %s156
    %p163 = scmp.eq.s32.totalorder %s17, 1
    %p164 = por %p162, %p163
    %p165 = scmp.ne.s32.totalorder %s156, %s157
    %p166 = scmp.eq.s32.totalorder %s17, 0
    %p167 = por %p165, %p166
    %p168 = scmp.ne.s32.totalorder %s156, %s157
    %p169 = scmp.eq.s32.totalorder %s18, 1
    %p170 = por %p168, %p169
    %p172 = scmp.ne.s32.totalorder %s157, %s171
    %p173 = scmp.eq.s32.totalorder %s18, 0
    %p174 = por %p172, %p173
    %s175 = ssub.s32 %s19, %s31
    %p176 = scmp.eq.s32.totalorder %s175, 0
    %s178 = sadd.s32 %s177, 1
    %s179 = scalar_select %p176, %s177, %s178
    %p182 = pneg %p176
    %p183 = scmp.eq.s32.totalorder %s12, 1
    %p184 = por %p182, %p183
    %p185 = scmp.ne.s32.totalorder %s177, %s180
    %p186 = scmp.eq.s32.totalorder %s12, 0
    %p187 = por %p185, %p186
    %p188 = scmp.ne.s32.totalorder %s177, %s180
    %p189 = scmp.eq.s32.totalorder %s17, 1
    %p190 = por %p188, %p189
    %p191 = scmp.ne.s32.totalorder %s180, %s181
    %p192 = scmp.eq.s32.totalorder %s17, 0
    %p193 = por %p191, %p192
    %p194 = scmp.ne.s32.totalorder %s180, %s181
    %p195 = scmp.eq.s32.totalorder %s18, 1
    %p196 = por %p194, %p195
    %p198 = scmp.ne.s32.totalorder %s181, %s197
    %p199 = scmp.eq.s32.totalorder %s18, 0
    %p200 = por %p198, %p199
    %p201 = scmp.le.s32.totalorder 1, %s12
    %p202 = scmp.lt.s32.totalorder %s12, 3
    %p203 = pnand %p201, %p202
    %p204 = pneg %p203
    // Predicated region
    $region9: #{run.14} parent=5 // pred_check
      _
    $region10: #{run.14} parent=5 // pred_check_branch
      %206 = sbr.rel (%p203) target = $region12
    $region11: #{run.14} parent=5 // pred_region
      %s207 = ssub.s32 %s12, 1
      // Predicated region
      $region13: #{run.14} parent=11 // pred_check
        %p208 = pneg %p78
      $region14: #{run.14} parent=11 // pred_check_branch
        %210 = sbr.rel (%p208) target = $region16
      $region15: #{run.14} parent=11 // pred_region
        %s211 = smul.u32 16, %s22
        %p212 = scmp.lt.s32.totalorder %s211, 15
        %s213 = scalar_select %p212, %s211, 15
        %s214 = smul.addr %s213, 4
        %s215 = scalar_lea.vmem %s1, %s214
        %s216 = smul.u32 16, %s22
      $region16: #{run.14} parent=11 // pred_fallthru
        _
      // Predicated region
      $region17: #{run.14} parent=11 // pred_check
        %p217 = pneg %p99
      $region18: #{run.14} parent=11 // pred_check_branch
        %219 = sbr.rel (%p217) target = $region20
      $region19: #{run.14} parent=11 // pred_region
        _
      $region20: #{run.14} parent=11 // pred_fallthru
        _
      // Predicated region
      $region21: #{run.14} parent=11 // pred_check
        %p220 = pneg %p146
      $region22: #{run.14} parent=11 // pred_check_branch
        %222 = sbr.rel (%p220) target = $region24
      $region23: #{run.14} parent=11 // pred_region
        _
      $region24: #{run.14} parent=11 // pred_fallthru
        _
      // Predicated region
      $region25: #{run.14} parent=11 // pred_check
        %p223 = pneg %p167
      $region26: #{run.14} parent=11 // pred_check_branch
        %225 = sbr.rel (%p223) target = $region28
      $region27: #{run.14} parent=11 // pred_region
        _
      $region28: #{run.14} parent=11 // pred_fallthru
        _
    $region12: #{run.14} parent=5 // pred_fallthru
      _
    %p226 = scmp.lt.s32.totalorder %s12, 2
    // Predicated region
    $region29: #{run.14} parent=5 // pred_check
      %p227 = pneg %p226
    $region30: #{run.14} parent=5 // pred_check_branch
      %229 = sbr.rel (%p227) target = $region32
    $region31: #{run.14} parent=5 // pred_region
      // Predicated region
      $region33: #{run.14} parent=31 // pred_check
        %p230 = pneg %p46
      $region34: #{run.14} parent=31 // pred_check_branch
        %232 = sbr.rel (%p230) target = $region36
      $region35: #{run.14} parent=31 // pred_region
        %s233 = smul.u32 16, %s19
        %p234 = scmp.lt.s32.totalorder %s233, 31
        %s235 = scalar_select %p234, %s233, 31
        %p236 = scmp.lt.s32.totalorder %s20, 0
        %s237 = scalar_select %p236, %s20, 0
        %s238 = sadd.s32 %s237, %s235
        %s239 = smul.addr %s238, 4
        %s240 = scalar_lea.vmem %s0, %s239
        %s241 = smul.u32 16, %s19
      $region36: #{run.14} parent=31 // pred_fallthru
        _
      // Predicated region
      $region37: #{run.14} parent=31 // pred_check
        %p242 = pneg %p119
      $region38: #{run.14} parent=31 // pred_check_branch
        %244 = sbr.rel (%p242) target = $region40
      $region39: #{run.14} parent=31 // pred_region
        %s245 = smul.u32 16, %s19
        %p246 = scmp.lt.s32.totalorder %s245, 31
        %s247 = scalar_select %p246, %s245, 31
        %s248 = smul.addr %s247, 4
        %s249 = scalar_lea.vmem %s3, %s248
        %s250 = smul.u32 16, %s19
      $region40: #{run.14} parent=31 // pred_fallthru
        _
    $region32: #{run.14} parent=5 // pred_fallthru
      _
    %p251 = scmp.le.s32.totalorder 1, %s12
    %p252 = scmp.lt.s32.totalorder %s12, 3
    %p253 = pnand %p251, %p252
    %p254 = pneg %p253
    // Predicated region
    $region41: #{run.14} parent=5 // pred_check
      _
    $region42: #{run.14} parent=5 // pred_check_branch
      %256 = sbr.rel (%p253) target = $region44
    $region43: #{run.14} parent=5 // pred_region
      %s257 = ssub.s32 %s12, 1
      %s258 = smul.u32 16, %s21
      %p259 = scmp.lt.s32.totalorder %s258, 31
      %s260 = scalar_select %p259, %s258, 31
      %p261 = scmp.lt.s32.totalorder %s22, 0
      %s262 = scalar_select %p261, %s22, 0
      %s263 = sadd.s32 %s262, %s260
      %s264 = smul.addr %s263, 4
      %s265 = scalar_lea.vmem %s0, %s264
      %p266 = pneg %p52
      %p267 = pneg %p49
      %s268 = smul.u32 16, %s22
      %p269 = scmp.lt.s32.totalorder %s268, 15
      %s270 = scalar_select %p269, %s268, 15
      %s271 = smul.addr %s270, 4
      %s272 = scalar_lea.vmem %s1, %s271
      %p273 = pneg %p78
      %p274 = pneg %p75
      %p275 = pneg %p99
      %p276 = pneg %p96
      %s277 = smul.u32 16, %s21
      %p278 = scmp.lt.s32.totalorder %s277, 31
      %s279 = scalar_select %p278, %s277, 31
      %s280 = smul.addr %s279, 4
      %s281 = scalar_lea.vmem %s3, %s280
      %p282 = pneg %p125
      %p283 = pneg %p122
      %p284 = pneg %p146
      %p285 = pneg %p143
      %p286 = pneg %p167
      %p287 = pneg %p164
      %p288 = pneg %p193
      %p289 = pneg %p190
      %s290 = smul.u32 16, %s21
      %p291 = scmp.lt.s32.totalorder %s290, 31
      %s292 = scalar_select %p291, %s290, 31
      %s293 = smul.addr %s292, 4
      %s294 = scalar_lea.vmem %s6, %s293
      %s295 = smul.u32 16, %s21
      %p296 = scmp.lt.s32.totalorder %s295, 31
      %s297 = scalar_select %p296, %s295, 31
      %p298 = scmp.lt.s32.totalorder %s22, 0
      %s299 = scalar_select %p298, %s22, 0
      %s300 = sadd.s32 %s299, %s297
      %s301 = smul.addr %s300, 4
      %s302 = scalar_lea.vmem %s0, %s301
      %s303 = smul.u32 16, %s21
      %s304 = smul.u32 16, %s22
      %p305 = scmp.lt.s32.totalorder %s304, 15
      %s306 = scalar_select %p305, %s304, 15
      %s307 = smul.addr %s306, 4
      %s308 = scalar_lea.vmem %s1, %s307
      %s309 = smul.u32 16, %s22
      %s310 = smul.u32 16, %s21
      %p311 = scmp.lt.s32.totalorder %s310, 31
      %s312 = scalar_select %p311, %s310, 31
      %s313 = smul.addr %s312, 4
      %s314 = scalar_lea.vmem %s3, %s313
      %s315 = smul.u32 16, %s21
      %s316 = smul.u32 16, %s21
      %p317 = scmp.lt.s32.totalorder %s316, 31
      %s318 = scalar_select %p317, %s316, 31
      %s319 = smul.addr %s318, 4
      %s320 = scalar_lea.vmem %s6, %s319
      %s321 = smul.u32 16, %s21
      %p323 = scmp.eq.s32.totalorder %s22, 0
      // Predicated region
      $region45: #{run.14} parent=43 // pred_check
        %p324 = pneg %p323
      $region46: #{run.14} parent=43 // pred_check_branch
        %326 = sbr.rel (%p324) target = $region48
      $region47: #{run.14} parent=43 // pred_region
        %327 = vst [vmem:[#allocation2] sm:$0xff] 0.0
        %328 = vst [vmem:[#allocation2 + $0x8] sm:$0xff] 0.0
        %329 = vst [vmem:[#allocation2 + $0x10] sm:$0xff] 0.0
        %330 = vst [vmem:[#allocation2 + $0x18] sm:$0xff] 0.0
        %331 = vst [vmem:[#allocation2 + $0x20] sm:$0xff] 0.0
        %332 = vst [vmem:[#allocation2 + $0x28] sm:$0xff] 0.0
        %333 = vst [vmem:[#allocation2 + $0x30] sm:$0xff] 0.0
        %334 = vst [vmem:[#allocation2 + $0x38] sm:$0xff] 0.0
        %335 = vst [vmem:[#allocation2 + $0x40] sm:$0xff] 0.0
        %336 = vst [vmem:[#allocation2 + $0x48] sm:$0xff] 0.0
        %337 = vst [vmem:[#allocation2 + $0x50] sm:$0xff] 0.0
        %338 = vst [vmem:[#allocation2 + $0x58] sm:$0xff] 0.0
        %339 = vst [vmem:[#allocation2 + $0x60] sm:$0xff] 0.0
        %340 = vst [vmem:[#allocation2 + $0x68] sm:$0xff] 0.0
        %341 = vst [vmem:[#allocation2 + $0x70] sm:$0xff] 0.0
        %342 = vst [vmem:[#allocation2 + $0x78] sm:$0xff] 0.0
      $region48: #{run.14} parent=43 // pred_fallthru
        _
      %v343 = vld [vmem:[#allocation2] sm:$0xff]
      %v344 = vld [vmem:[#allocation2 + $0x8] sm:$0xff]
      %v345 = vld [vmem:[#allocation2 + $0x10] sm:$0xff]
      %v346 = vld [vmem:[#allocation2 + $0x18] sm:$0xff]
      %v347 = vld [vmem:[#allocation2 + $0x20] sm:$0xff]
      %v348 = vld [vmem:[#allocation2 + $0x28] sm:$0xff]
      %v349 = vld [vmem:[#allocation2 + $0x30] sm:$0xff]
      %v350 = vld [vmem:[#allocation2 + $0x38] sm:$0xff]
      %v351 = vld [vmem:[#allocation2 + $0x40] sm:$0xff]
      %v352 = vld [vmem:[#allocation2 + $0x48] sm:$0xff]
      %v353 = vld [vmem:[#allocation2 + $0x50] sm:$0xff]
      %v354 = vld [vmem:[#allocation2 + $0x58] sm:$0xff]
      %v355 = vld [vmem:[#allocation2 + $0x60] sm:$0xff]
      %v356 = vld [vmem:[#allocation2 + $0x68] sm:$0xff]
      %v357 = vld [vmem:[#allocation2 + $0x70] sm:$0xff]
      %v358 = vld [vmem:[#allocation2 + $0x78] sm:$0xff]
      %v359 = vld [vmem:[%s302] sm:$0xf]
      %v360 = vld [vmem:[%s302 + $0x4] sm:$0xf]
      %v361 = vld [vmem:[%s302 + $0x8] sm:$0xf]
      %v362 = vld [vmem:[%s302 + $0xc] sm:$0xf]
      %v363 = vld [vmem:[%s302 + $0x10] sm:$0xf]
      %v364 = vld [vmem:[%s302 + $0x14] sm:$0xf]
      %v365 = vld [vmem:[%s302 + $0x18] sm:$0xf]
      %v366 = vld [vmem:[%s302 + $0x1c] sm:$0xf]
      %v367 = vld [vmem:[%s302 + $0x20] sm:$0xf]
      %v368 = vld [vmem:[%s302 + $0x24] sm:$0xf]
      %v369 = vld [vmem:[%s302 + $0x28] sm:$0xf]
      %v370 = vld [vmem:[%s302 + $0x2c] sm:$0xf]
      %v371 = vld [vmem:[%s302 + $0x30] sm:$0xf]
      %v372 = vld [vmem:[%s302 + $0x34] sm:$0xf]
      %v373 = vld [vmem:[%s302 + $0x38] sm:$0xf]
      %v374 = vld [vmem:[%s302 + $0x3c] sm:$0xf]
      %v375 = vld [vmem:[%s308] sm:$0xf]
      %v376 = vld [vmem:[%s308 + $0x4] sm:$0xf]
      %v377 = vld [vmem:[%s308 + $0x8] sm:$0xf]
      %v378 = vld [vmem:[%s308 + $0xc] sm:$0xf]
      %v379 = vld [vmem:[%s308 + $0x10] sm:$0xf]
      %v380 = vld [vmem:[%s308 + $0x14] sm:$0xf]
      %v381 = vld [vmem:[%s308 + $0x18] sm:$0xf]
      %v382 = vld [vmem:[%s308 + $0x1c] sm:$0xf]
      %v383 = vld [vmem:[%s308 + $0x20] sm:$0xf]
      %v384 = vld [vmem:[%s308 + $0x24] sm:$0xf]
      %v385 = vld [vmem:[%s308 + $0x28] sm:$0xf]
      %v386 = vld [vmem:[%s308 + $0x2c] sm:$0xf]
      %v387 = vld [vmem:[%s308 + $0x30] sm:$0xf]
      %v388 = vld [vmem:[%s308 + $0x34] sm:$0xf]
      %v389 = vld [vmem:[%s308 + $0x38] sm:$0xf]
      %v390 = vld [vmem:[%s308 + $0x3c] sm:$0xf]
      %v407 = vunpack.c.l.b16 %v359
      %v408 = vunpack.c.l.b16 %v360
      %v409 = vunpack.c.l.b16 %v361
      %v410 = vunpack.c.l.b16 %v362
      %v411 = vunpack.c.l.b16 %v363
      %v412 = vunpack.c.l.b16 %v364
      %v413 = vunpack.c.l.b16 %v365
      %v414 = vunpack.c.l.b16 %v366
      %v415 = vunpack.c.l.b16 %v367
      %v416 = vunpack.c.l.b16 %v368
      %v417 = vunpack.c.l.b16 %v369
      %v418 = vunpack.c.l.b16 %v370
      %v419 = vunpack.c.l.b16 %v371
      %v420 = vunpack.c.l.b16 %v372
      %v421 = vunpack.c.l.b16 %v373
      %v422 = vunpack.c.l.b16 %v374
      %v423 = vpack.c.b16 %v408, %v407
      %v424 = vpack.c.b16 %v410, %v409
      %v425 = vpack.c.b16 %v412, %v411
      %v426 = vpack.c.b16 %v414, %v413
      %v427 = vpack.c.b16 %v416, %v415
      %v428 = vpack.c.b16 %v418, %v417
      %v429 = vpack.c.b16 %v420, %v419
      %v430 = vpack.c.b16 %v422, %v421
      %v455 = vunpack.c.l.b16 %v375
      %v456 = vunpack.c.l.b16 %v376
      %v457 = vunpack.c.l.b16 %v377
      %v458 = vunpack.c.l.b16 %v378
      %v459 = vunpack.c.l.b16 %v379
      %v460 = vunpack.c.l.b16 %v380
      %v461 = vunpack.c.l.b16 %v381
      %v462 = vunpack.c.l.b16 %v382
      %v463 = vunpack.c.l.b16 %v383
      %v464 = vunpack.c.l.b16 %v384
      %v465 = vunpack.c.l.b16 %v385
      %v466 = vunpack.c.l.b16 %v386
      %v467 = vunpack.c.l.b16 %v387
      %v468 = vunpack.c.l.b16 %v388
      %v469 = vunpack.c.l.b16 %v389
      %v470 = vunpack.c.l.b16 %v390
      %v471 = vpack.c.b16 %v456, %v455
      %v472 = vpack.c.b16 %v458, %v457
      %v473 = vpack.c.b16 %v460, %v459
      %v474 = vpack.c.b16 %v462, %v461
      %v475 = vpack.c.b16 %v464, %v463
      %v476 = vpack.c.b16 %v466, %v465
      %v477 = vpack.c.b16 %v468, %v467
      %v478 = vpack.c.b16 %v470, %v469
      %487 = vmatprep.subr.bf16.mxu0 0
      %488 = vmatpush1.bf16.msra.mxu0 %v471
      %489 = vmatprep.subr.bf16.mxu0 0
      %490 = vmatpush1.bf16.msra.mxu0 %v472
      %491 = vmatprep.subr.bf16.mxu0 0
      %492 = vmatpush1.bf16.msra.mxu0 %v473
      %493 = vmatprep.subr.bf16.mxu0 0
      %494 = vmatpush1.bf16.msra.mxu0 %v474
      %495 = vmatprep.subr.bf16.mxu0 0
      %496 = vmatpush1.bf16.msra.mxu0 %v475
      %497 = vmatprep.subr.bf16.mxu0 0
      %498 = vmatpush1.bf16.msra.mxu0 %v476
      %499 = vmatprep.subr.bf16.mxu0 0
      %500 = vmatpush1.bf16.msra.mxu0 %v477
      %501 = vmatprep.subr.bf16.mxu0 0
      %502 = vmatpush1.bf16.msra.mxu0 %v478
      %503 = vmatprep.subr.bf16.mxu0 0
      %504 = vmatpush1.bf16.msra.mxu0 0
      %505 = vmatprep.subr.bf16.mxu0 0
      %506 = vmatpush1.bf16.msra.mxu0 0
      %507 = vmatprep.subr.bf16.mxu0 0
      %508 = vmatpush1.bf16.msra.mxu0 0
      %509 = vmatprep.subr.bf16.mxu0 0
      %510 = vmatpush1.bf16.msra.mxu0 0
      %511 = vmatprep.subr.bf16.mxu0 0
      %512 = vmatpush1.bf16.msra.mxu0 0
      %513 = vmatprep.subr.bf16.mxu0 0
      %514 = vmatpush1.bf16.msra.mxu0 0
      %515 = vmatprep.subr.bf16.mxu0 0
      %516 = vmatpush1.bf16.msra.mxu0 0
      %517 = vmatprep.subr.bf16.mxu0 0
      %518 = vmatpush1.bf16.msra.mxu0 0
      %519 = vmatprep.mubr.bf16.mxu0 0
      %520 = vmatmul.mubr.bf16.gmra.mrb[0].mxu0 %v423
      %v521 = vpop.f32.mrb[0].mxu0
      %v522 = vadd.f32 0.0, %v521
      %v523 = vpop.f32.mrb[0].mxu0
      %v524 = vpop.f32.mrb[0].mxu0
      %v525 = vadd.f32 0.0, %v524
      %v526 = vpop.f32.mrb[0].mxu0
      %527 = vmatprep.mubr.bf16.mxu0 0
      %528 = vmatmul.mubr.bf16.gmra.mrb[0].mxu0 %v424
      %v529 = vpop.f32.mrb[0].mxu0
      %v530 = vadd.f32 0.0, %v529
      %v531 = vpop.f32.mrb[0].mxu0
      %v532 = vpop.f32.mrb[0].mxu0
      %v533 = vadd.f32 0.0, %v532
      %v534 = vpop.f32.mrb[0].mxu0
      %535 = vmatprep.mubr.bf16.mxu0 0
      %536 = vmatmul.mubr.bf16.gmra.mrb[0].mxu0 %v425
      %v537 = vpop.f32.mrb[0].mxu0
      %v538 = vadd.f32 0.0, %v537
      %v539 = vpop.f32.mrb[0].mxu0
      %v540 = vpop.f32.mrb[0].mxu0
      %v541 = vadd.f32 0.0, %v540
      %v542 = vpop.f32.mrb[0].mxu0
      %543 = vmatprep.mubr.bf16.mxu0 0
      %544 = vmatmul.mubr.bf16.gmra.mrb[0].mxu0 %v426
      %v545 = vpop.f32.mrb[0].mxu0
      %v546 = vadd.f32 0.0, %v545
      %v547 = vpop.f32.mrb[0].mxu0
      %v548 = vpop.f32.mrb[0].mxu0
      %v549 = vadd.f32 0.0, %v548
      %v550 = vpop.f32.mrb[0].mxu0
      %551 = vmatprep.mubr.bf16.mxu0 0
      %552 = vmatmul.mubr.bf16.gmra.mrb[0].mxu0 %v427
      %v553 = vpop.f32.mrb[0].mxu0
      %v554 = vadd.f32 0.0, %v553
      %v555 = vpop.f32.mrb[0].mxu0
      %v556 = vpop.f32.mrb[0].mxu0
      %v557 = vadd.f32 0.0, %v556
      %v558 = vpop.f32.mrb[0].mxu0
      %559 = vmatprep.mubr.bf16.mxu0 0
      %560 = vmatmul.mubr.bf16.gmra.mrb[0].mxu0 %v428
      %v561 = vpop.f32.mrb[0].mxu0
      %v562 = vadd.f32 0.0, %v561
      %v563 = vpop.f32.mrb[0].mxu0
      %v564 = vpop.f32.mrb[0].mxu0
      %v565 = vadd.f32 0.0, %v564
      %v566 = vpop.f32.mrb[0].mxu0
      %567 = vmatprep.mubr.bf16.mxu0 0
      %568 = vmatmul.mubr.bf16.gmra.mrb[0].mxu0 %v429
      %v569 = vpop.f32.mrb[0].mxu0
      %v570 = vadd.f32 0.0, %v569
      %v571 = vpop.f32.mrb[0].mxu0
      %v572 = vpop.f32.mrb[0].mxu0
      %v573 = vadd.f32 0.0, %v572
      %v574 = vpop.f32.mrb[0].mxu0
      %575 = vmatprep.mubr.bf16.mxu0 0
      %576 = vmatmul.mubr.bf16.gmra.mrb[0].mxu0 %v430
      %v577 = vpop.f32.mrb[0].mxu0
      %v578 = vadd.f32 0.0, %v577
      %v579 = vpop.f32.mrb[0].mxu0
      %v580 = vpop.f32.mrb[0].mxu0
      %v581 = vadd.f32 0.0, %v580
      %v582 = vpop.f32.mrb[0].mxu0
      %583 = vdwg.mxu0
      %v584 = vadd.f32 %v343, %v522
      %v585 = vadd.f32 %v344, %v525
      %v586 = vadd.f32 %v345, %v530
      %v587 = vadd.f32 %v346, %v533
      %v588 = vadd.f32 %v347, %v538
      %v589 = vadd.f32 %v348, %v541
      %v590 = vadd.f32 %v349, %v546
      %v591 = vadd.f32 %v350, %v549
      %v592 = vadd.f32 %v351, %v554
      %v593 = vadd.f32 %v352, %v557
      %v594 = vadd.f32 %v353, %v562
      %v595 = vadd.f32 %v354, %v565
      %v596 = vadd.f32 %v355, %v570
      %v597 = vadd.f32 %v356, %v573
      %v598 = vadd.f32 %v357, %v578
      %v599 = vadd.f32 %v358, %v581
      %600 = vst [vmem:[#allocation2] sm:$0xff] %v584
      %601 = vst [vmem:[#allocation2 + $0x8] sm:$0xff] %v585
      %602 = vst [vmem:[#allocation2 + $0x10] sm:$0xff] %v586
      %603 = vst [vmem:[#allocation2 + $0x18] sm:$0xff] %v587
      %604 = vst [vmem:[#allocation2 + $0x20] sm:$0xff] %v588
      %605 = vst [vmem:[#allocation2 + $0x28] sm:$0xff] %v589
      %606 = vst [vmem:[#allocation2 + $0x30] sm:$0xff] %v590
      %607 = vst [vmem:[#allocation2 + $0x38] sm:$0xff] %v591
      %608 = vst [vmem:[#allocation2 + $0x40] sm:$0xff] %v592
      %609 = vst [vmem:[#allocation2 + $0x48] sm:$0xff] %v593
      %610 = vst [vmem:[#allocation2 + $0x50] sm:$0xff] %v594
      %611 = vst [vmem:[#allocation2 + $0x58] sm:$0xff] %v595
      %612 = vst [vmem:[#allocation2 + $0x60] sm:$0xff] %v596
      %613 = vst [vmem:[#allocation2 + $0x68] sm:$0xff] %v597
      %614 = vst [vmem:[#allocation2 + $0x70] sm:$0xff] %v598
      %615 = vst [vmem:[#allocation2 + $0x78] sm:$0xff] %v599
      // Predicated region
      $region49: #{run.14} parent=43 // pred_check
        %p616 = pneg %p323
      $region50: #{run.14} parent=43 // pred_check_branch
        %618 = sbr.rel (%p616) target = $region52
      $region51: #{run.14} parent=43 // pred_region
        %v619 = vld [vmem:[#allocation2] sm:$0xff]
        %v620 = vld [vmem:[#allocation2 + $0x8] sm:$0xff]
        %v621 = vld [vmem:[#allocation2 + $0x10] sm:$0xff]
        %v622 = vld [vmem:[#allocation2 + $0x18] sm:$0xff]
        %v623 = vld [vmem:[#allocation2 + $0x20] sm:$0xff]
        %v624 = vld [vmem:[#allocation2 + $0x28] sm:$0xff]
        %v625 = vld [vmem:[#allocation2 + $0x30] sm:$0xff]
        %v626 = vld [vmem:[#allocation2 + $0x38] sm:$0xff]
        %v627 = vld [vmem:[#allocation2 + $0x40] sm:$0xff]
        %v628 = vld [vmem:[#allocation2 + $0x48] sm:$0xff]
        %v629 = vld [vmem:[#allocation2 + $0x50] sm:$0xff]
        %v630 = vld [vmem:[#allocation2 + $0x58] sm:$0xff]
        %v631 = vld [vmem:[#allocation2 + $0x60] sm:$0xff]
        %v632 = vld [vmem:[#allocation2 + $0x68] sm:$0xff]
        %v633 = vld [vmem:[#allocation2 + $0x70] sm:$0xff]
        %v634 = vld [vmem:[#allocation2 + $0x78] sm:$0xff]
        %v635 = vld [vmem:[%s2] sm:$0x1]
        %v637 = vlaneseq
        %v638 = vshrl.u32 %v637, 7
        %v639 = vsub.s32 0, %v638
        %v640 = vrot.slane %v635, %v639
        %v642 = vadd.f32 %v619, %v640
        %v643 = vadd.f32 %v620, %v640
        %v644 = vadd.f32 %v621, %v640
        %v645 = vadd.f32 %v622, %v640
        %v646 = vadd.f32 %v623, %v640
        %v647 = vadd.f32 %v624, %v640
        %v648 = vadd.f32 %v625, %v640
        %v649 = vadd.f32 %v626, %v640
        %v650 = vadd.f32 %v627, %v640
        %v651 = vadd.f32 %v628, %v640
        %v652 = vadd.f32 %v629, %v640
        %v653 = vadd.f32 %v630, %v640
        %v654 = vadd.f32 %v631, %v640
        %v655 = vadd.f32 %v632, %v640
        %v656 = vadd.f32 %v633, %v640
        %v657 = vadd.f32 %v634, %v640
        %v658 = vld [vmem:[%s314] sm:$0xf]
        %v659 = vld [vmem:[%s314 + $0x4] sm:$0xf]
        %v660 = vld [vmem:[%s314 + $0x8] sm:$0xf]
        %v661 = vld [vmem:[%s314 + $0xc] sm:$0xf]
        %v662 = vld [vmem:[%s314 + $0x10] sm:$0xf]
        %v663 = vld [vmem:[%s314 + $0x14] sm:$0xf]
        %v664 = vld [vmem:[%s314 + $0x18] sm:$0xf]
        %v665 = vld [vmem:[%s314 + $0x1c] sm:$0xf]
        %v666 = vld [vmem:[%s314 + $0x20] sm:$0xf]
        %v667 = vld [vmem:[%s314 + $0x24] sm:$0xf]
        %v668 = vld [vmem:[%s314 + $0x28] sm:$0xf]
        %v669 = vld [vmem:[%s314 + $0x2c] sm:$0xf]
        %v670 = vld [vmem:[%s314 + $0x30] sm:$0xf]
        %v671 = vld [vmem:[%s314 + $0x34] sm:$0xf]
        %v672 = vld [vmem:[%s314 + $0x38] sm:$0xf]
        %v673 = vld [vmem:[%s314 + $0x3c] sm:$0xf]
        %v674 = vunpack.c.l.bf16 %v658
        %v675 = vunpack.c.l.bf16 %v659
        %v676 = vunpack.c.l.bf16 %v660
        %v677 = vunpack.c.l.bf16 %v661
        %v678 = vunpack.c.l.bf16 %v662
        %v679 = vunpack.c.l.bf16 %v663
        %v680 = vunpack.c.l.bf16 %v664
        %v681 = vunpack.c.l.bf16 %v665
        %v682 = vunpack.c.l.bf16 %v666
        %v683 = vunpack.c.l.bf16 %v667
        %v684 = vunpack.c.l.bf16 %v668
        %v685 = vunpack.c.l.bf16 %v669
        %v686 = vunpack.c.l.bf16 %v670
        %v687 = vunpack.c.l.bf16 %v671
        %v688 = vunpack.c.l.bf16 %v672
        %v689 = vunpack.c.l.bf16 %v673
        %v690 = vadd.f32 %v642, %v674
        %v691 = vadd.f32 %v643, %v675
        %v692 = vadd.f32 %v644, %v676
        %v693 = vadd.f32 %v645, %v677
        %v694 = vadd.f32 %v646, %v678
        %v695 = vadd.f32 %v647, %v679
        %v696 = vadd.f32 %v648, %v680
        %v697 = vadd.f32 %v649, %v681
        %v698 = vadd.f32 %v650, %v682
        %v699 = vadd.f32 %v651, %v683
        %v700 = vadd.f32 %v652, %v684
        %v701 = vadd.f32 %v653, %v685
        %v702 = vadd.f32 %v654, %v686
        %v703 = vadd.f32 %v655, %v687
        %v704 = vadd.f32 %v656, %v688
        %v705 = vadd.f32 %v657, %v689
        %706 = vadd.xlane.f32.xlu0 %v690
        %v707 = vpop.xlane.xlu0 %706
        %708 = vadd.xlane.f32.xlu0 %v691
        %v709 = vpop.xlane.xlu0 %708
        %710 = vadd.xlane.f32.xlu0 %v692
        %v711 = vpop.xlane.xlu0 %710
        %712 = vadd.xlane.f32.xlu0 %v693
        %v713 = vpop.xlane.xlu0 %712
        %714 = vadd.xlane.f32.xlu0 %v694
        %v715 = vpop.xlane.xlu0 %714
        %716 = vadd.xlane.f32.xlu0 %v695
        %v717 = vpop.xlane.xlu0 %716
        %718 = vadd.xlane.f32.xlu0 %v696
        %v719 = vpop.xlane.xlu0 %718
        %720 = vadd.xlane.f32.xlu0 %v697
        %v721 = vpop.xlane.xlu0 %720
        %722 = vadd.xlane.f32.xlu0 %v698
        %v723 = vpop.xlane.xlu0 %722
        %724 = vadd.xlane.f32.xlu0 %v699
        %v725 = vpop.xlane.xlu0 %724
        %726 = vadd.xlane.f32.xlu0 %v700
        %v727 = vpop.xlane.xlu0 %726
        %728 = vadd.xlane.f32.xlu0 %v701
        %v729 = vpop.xlane.xlu0 %728
        %730 = vadd.xlane.f32.xlu0 %v702
        %v731 = vpop.xlane.xlu0 %730
        %732 = vadd.xlane.f32.xlu0 %v703
        %v733 = vpop.xlane.xlu0 %732
        %734 = vadd.xlane.f32.xlu0 %v704
        %v735 = vpop.xlane.xlu0 %734
        %736 = vadd.xlane.f32.xlu0 %v705
        %v737 = vpop.xlane.xlu0 %736
        %v738 = vrcp.pop 128.0
        %v739 = vmul.f32 %v707, %v738
        %v740 = vmul.f32 %v709, %v738
        %v741 = vmul.f32 %v711, %v738
        %v742 = vmul.f32 %v713, %v738
        %v743 = vmul.f32 %v715, %v738
        %v744 = vmul.f32 %v717, %v738
        %v745 = vmul.f32 %v719, %v738
        %v746 = vmul.f32 %v721, %v738
        %v747 = vmul.f32 %v723, %v738
        %v748 = vmul.f32 %v725, %v738
        %v749 = vmul.f32 %v727, %v738
        %v750 = vmul.f32 %v729, %v738
        %v751 = vmul.f32 %v731, %v738
        %v752 = vmul.f32 %v733, %v738
        %v753 = vmul.f32 %v735, %v738
        %v754 = vmul.f32 %v737, %v738
        %v755 = vsub.f32 %v690, %v739
        %v756 = vsub.f32 %v691, %v740
        %v757 = vsub.f32 %v692, %v741
        %v758 = vsub.f32 %v693, %v742
        %v759 = vsub.f32 %v694, %v743
        %v760 = vsub.f32 %v695, %v744
        %v761 = vsub.f32 %v696, %v745
        %v762 = vsub.f32 %v697, %v746
        %v763 = vsub.f32 %v698, %v747
        %v764 = vsub.f32 %v699, %v748
        %v765 = vsub.f32 %v700, %v749
        %v766 = vsub.f32 %v701, %v750
        %v767 = vsub.f32 %v702, %v751
        %v768 = vsub.f32 %v703, %v752
        %v769 = vsub.f32 %v704, %v753
        %v770 = vsub.f32 %v705, %v754
        %v771 = vmul.f32 %v755, %v755
        %v772 = vmul.f32 %v756, %v756
        %v773 = vmul.f32 %v757, %v757
        %v774 = vmul.f32 %v758, %v758
        %v775 = vmul.f32 %v759, %v759
        %v776 = vmul.f32 %v760, %v760
        %v777 = vmul.f32 %v761, %v761
        %v778 = vmul.f32 %v762, %v762
        %v779 = vmul.f32 %v763, %v763
        %v780 = vmul.f32 %v764, %v764
        %v781 = vmul.f32 %v765, %v765
        %v782 = vmul.f32 %v766, %v766
        %v783 = vmul.f32 %v767, %v767
        %v784 = vmul.f32 %v768, %v768
        %v785 = vmul.f32 %v769, %v769
        %v786 = vmul.f32 %v770, %v770
        %787 = vadd.xlane.f32.xlu0 %v771
        %v788 = vpop.xlane.xlu0 %787
        %789 = vadd.xlane.f32.xlu0 %v772
        %v790 = vpop.xlane.xlu0 %789
        %791 = vadd.xlane.f32.xlu0 %v773
        %v792 = vpop.xlane.xlu0 %791
        %793 = vadd.xlane.f32.xlu0 %v774
        %v794 = vpop.xlane.xlu0 %793
        %795 = vadd.xlane.f32.xlu0 %v775
        %v796 = vpop.xlane.xlu0 %795
        %797 = vadd.xlane.f32.xlu0 %v776
        %v798 = vpop.xlane.xlu0 %797
        %799 = vadd.xlane.f32.xlu0 %v777
        %v800 = vpop.xlane.xlu0 %799
        %801 = vadd.xlane.f32.xlu0 %v778
        %v802 = vpop.xlane.xlu0 %801
        %803 = vadd.xlane.f32.xlu0 %v779
        %v804 = vpop.xlane.xlu0 %803
        %805 = vadd.xlane.f32.xlu0 %v780
        %v806 = vpop.xlane.xlu0 %805
        %807 = vadd.xlane.f32.xlu0 %v781
        %v808 = vpop.xlane.xlu0 %807
        %809 = vadd.xlane.f32.xlu0 %v782
        %v810 = vpop.xlane.xlu0 %809
        %811 = vadd.xlane.f32.xlu0 %v783
        %v812 = vpop.xlane.xlu0 %811
        %813 = vadd.xlane.f32.xlu0 %v784
        %v814 = vpop.xlane.xlu0 %813
        %815 = vadd.xlane.f32.xlu0 %v785
        %v816 = vpop.xlane.xlu0 %815
        %817 = vadd.xlane.f32.xlu0 %v786
        %v818 = vpop.xlane.xlu0 %817
        %v819 = vmul.f32 %v788, %v738
        %v820 = vmul.f32 %v790, %v738
        %v821 = vmul.f32 %v792, %v738
        %v822 = vmul.f32 %v794, %v738
        %v823 = vmul.f32 %v796, %v738
        %v824 = vmul.f32 %v798, %v738
        %v825 = vmul.f32 %v800, %v738
        %v826 = vmul.f32 %v802, %v738
        %v827 = vmul.f32 %v804, %v738
        %v828 = vmul.f32 %v806, %v738
        %v829 = vmul.f32 %v808, %v738
        %v830 = vmul.f32 %v810, %v738
        %v831 = vmul.f32 %v812, %v738
        %v832 = vmul.f32 %v814, %v738
        %v833 = vmul.f32 %v816, %v738
        %v834 = vmul.f32 %v818, %v738
        %v835 = vadd.f32 %v819, 1e-12
        %v836 = vadd.f32 %v820, 1e-12
        %v837 = vadd.f32 %v821, 1e-12
        %v838 = vadd.f32 %v822, 1e-12
        %v839 = vadd.f32 %v823, 1e-12
        %v840 = vadd.f32 %v824, 1e-12
        %v841 = vadd.f32 %v825, 1e-12
        %v842 = vadd.f32 %v826, 1e-12
        %v843 = vadd.f32 %v827, 1e-12
        %v844 = vadd.f32 %v828, 1e-12
        %v845 = vadd.f32 %v829, 1e-12
        %v846 = vadd.f32 %v830, 1e-12
        %v847 = vadd.f32 %v831, 1e-12
        %v848 = vadd.f32 %v832, 1e-12
        %v849 = vadd.f32 %v833, 1e-12
        %v850 = vadd.f32 %v834, 1e-12
        %v851 = vrsqrt.pop %v835
        %v852 = vrsqrt.pop %v836
        %v853 = vrsqrt.pop %v837
        %v854 = vrsqrt.pop %v838
        %v855 = vrsqrt.pop %v839
        %v856 = vrsqrt.pop %v840
        %v857 = vrsqrt.pop %v841
        %v858 = vrsqrt.pop %v842
        %v859 = vrsqrt.pop %v843
        %v860 = vrsqrt.pop %v844
        %v861 = vrsqrt.pop %v845
        %v862 = vrsqrt.pop %v846
        %v863 = vrsqrt.pop %v847
        %v864 = vrsqrt.pop %v848
        %v865 = vrsqrt.pop %v849
        %v866 = vrsqrt.pop %v850
        %v867 = vmul.f32 %v755, %v851
        %v868 = vmul.f32 %v756, %v852
        %v869 = vmul.f32 %v757, %v853
        %v870 = vmul.f32 %v758, %v854
        %v871 = vmul.f32 %v759, %v855
        %v872 = vmul.f32 %v760, %v856
        %v873 = vmul.f32 %v761, %v857
        %v874 = vmul.f32 %v762, %v858
        %v875 = vmul.f32 %v763, %v859
        %v876 = vmul.f32 %v764, %v860
        %v877 = vmul.f32 %v765, %v861
        %v878 = vmul.f32 %v766, %v862
        %v879 = vmul.f32 %v767, %v863
        %v880 = vmul.f32 %v768, %v864
        %v881 = vmul.f32 %v769, %v865
        %v882 = vmul.f32 %v770, %v866
        %v883 = vld [vmem:[%s4] sm:$0x1]
        %v885 = vlaneseq
        %v886 = vshrl.u32 %v885, 7
        %v887 = vsub.s32 0, %v886
        %v888 = vrot.slane %v883, %v887
        %v890 = vmul.f32 %v867, %v888
        %v891 = vmul.f32 %v868, %v888
        %v892 = vmul.f32 %v869, %v888
        %v893 = vmul.f32 %v870, %v888
        %v894 = vmul.f32 %v871, %v888
        %v895 = vmul.f32 %v872, %v888
        %v896 = vmul.f32 %v873, %v888
        %v897 = vmul.f32 %v874, %v888
        %v898 = vmul.f32 %v875, %v888
        %v899 = vmul.f32 %v876, %v888
        %v900 = vmul.f32 %v877, %v888
        %v901 = vmul.f32 %v878, %v888
        %v902 = vmul.f32 %v879, %v888
        %v903 = vmul.f32 %v880, %v888
        %v904 = vmul.f32 %v881, %v888
        %v905 = vmul.f32 %v882, %v888
        %v906 = vld [vmem:[%s5] sm:$0x1]
        %v908 = vlaneseq
        %v909 = vshrl.u32 %v908, 7
        %v910 = vsub.s32 0, %v909
        %v911 = vrot.slane %v906, %v910
        %v913 = vadd.f32 %v890, %v911
        %v914 = vadd.f32 %v891, %v911
        %v915 = vadd.f32 %v892, %v911
        %v916 = vadd.f32 %v893, %v911
        %v917 = vadd.f32 %v894, %v911
        %v918 = vadd.f32 %v895, %v911
        %v919 = vadd.f32 %v896, %v911
        %v920 = vadd.f32 %v897, %v911
        %v921 = vadd.f32 %v898, %v911
        %v922 = vadd.f32 %v899, %v911
        %v923 = vadd.f32 %v900, %v911
        %v924 = vadd.f32 %v901, %v911
        %v925 = vadd.f32 %v902, %v911
        %v926 = vadd.f32 %v903, %v911
        %v927 = vadd.f32 %v904, %v911
        %v928 = vadd.f32 %v905, %v911
        %v929 = vpack.c.bf16 %v914, %v913
        %v930 = vpack.c.bf16 %v916, %v915
        %v931 = vpack.c.bf16 %v918, %v917
        %v932 = vpack.c.bf16 %v920, %v919
        %v933 = vpack.c.bf16 %v922, %v921
        %v934 = vpack.c.bf16 %v924, %v923
        %v935 = vpack.c.bf16 %v926, %v925
        %v936 = vpack.c.bf16 %v928, %v927
        %v945 = vunpack.c.l.b16 %v929
        %v946 = vunpack.c.h.b16 %v929
        %v947 = vunpack.c.l.b16 %v930
        %v948 = vunpack.c.h.b16 %v930
        %v949 = vunpack.c.l.b16 %v931
        %v950 = vunpack.c.h.b16 %v931
        %v951 = vunpack.c.l.b16 %v932
        %v952 = vunpack.c.h.b16 %v932
        %v953 = vunpack.c.l.b16 %v933
        %v954 = vunpack.c.h.b16 %v933
        %v955 = vunpack.c.l.b16 %v934
        %v956 = vunpack.c.h.b16 %v934
        %v957 = vunpack.c.l.b16 %v935
        %v958 = vunpack.c.h.b16 %v935
        %v959 = vunpack.c.l.b16 %v936
        %v960 = vunpack.c.h.b16 %v936
        %v961 = vpack.c.b16 %v945, %v945
        %v962 = vpack.c.b16 %v946, %v946
        %v963 = vpack.c.b16 %v947, %v947
        %v964 = vpack.c.b16 %v948, %v948
        %v965 = vpack.c.b16 %v949, %v949
        %v966 = vpack.c.b16 %v950, %v950
        %v967 = vpack.c.b16 %v951, %v951
        %v968 = vpack.c.b16 %v952, %v952
        %v969 = vpack.c.b16 %v953, %v953
        %v970 = vpack.c.b16 %v954, %v954
        %v971 = vpack.c.b16 %v955, %v955
        %v972 = vpack.c.b16 %v956, %v956
        %v973 = vpack.c.b16 %v957, %v957
        %v974 = vpack.c.b16 %v958, %v958
        %v975 = vpack.c.b16 %v959, %v959
        %v976 = vpack.c.b16 %v960, %v960
        %993 = vst [vmem:[%s320] sm:$0xf] %v961
        %994 = vst [vmem:[%s320 + $0x4] sm:$0xf] %v962
        %995 = vst [vmem:[%s320 + $0x8] sm:$0xf] %v963
        %996 = vst [vmem:[%s320 + $0xc] sm:$0xf] %v964
        %997 = vst [vmem:[%s320 + $0x10] sm:$0xf] %v965
        %998 = vst [vmem:[%s320 + $0x14] sm:$0xf] %v966
        %999 = vst [vmem:[%s320 + $0x18] sm:$0xf] %v967
        %1000 = vst [vmem:[%s320 + $0x1c] sm:$0xf] %v968
        %1001 = vst [vmem:[%s320 + $0x20] sm:$0xf] %v969
        %1002 = vst [vmem:[%s320 + $0x24] sm:$0xf] %v970
        %1003 = vst [vmem:[%s320 + $0x28] sm:$0xf] %v971
        %1004 = vst [vmem:[%s320 + $0x2c] sm:$0xf] %v972
        %1005 = vst [vmem:[%s320 + $0x30] sm:$0xf] %v973
        %1006 = vst [vmem:[%s320 + $0x34] sm:$0xf] %v974
        %1007 = vst [vmem:[%s320 + $0x38] sm:$0xf] %v975
        %1008 = vst [vmem:[%s320 + $0x3c] sm:$0xf] %v976
      $region52: #{run.14} parent=43 // pred_fallthru
        _
      %s1009 = smul.u32 16, %s21
      %p1010 = scmp.lt.s32.totalorder %s1009, 31
      %s1011 = scalar_select %p1010, %s1009, 31
      %s1012 = smul.addr %s1011, 4
      %s1013 = scalar_lea.vmem %s6, %s1012
      // Predicated region
      $region53: #{run.14} parent=43 // pred_check
        %p1014 = pneg %p190
      $region54: #{run.14} parent=43 // pred_check_branch
        %1016 = sbr.rel (%p1014) target = $region56
      $region55: #{run.14} parent=43 // pred_region
        %s1017 = smul.u32 16, %s21
      $region56: #{run.14} parent=43 // pred_fallthru
        _
    $region44: #{run.14} parent=5 // pred_fallthru
      _
    %p1018 = scmp.le.s32.totalorder 2, %s12
    // Predicated region
    $region57: #{run.14} parent=5 // pred_check
      %p1019 = pneg %p1018
    $region58: #{run.14} parent=5 // pred_check_branch
      %1021 = sbr.rel (%p1019) target = $region60
    $region59: #{run.14} parent=5 // pred_region
      %s1022 = ssub.s32 %s12, 2
      // Predicated region
      $region61: #{run.14} parent=59 // pred_check
        %p1023 = pneg %p196
      $region62: #{run.14} parent=59 // pred_check_branch
        %1025 = sbr.rel (%p1023) target = $region64
      $region63: #{run.14} parent=59 // pred_region
        %s1026 = smul.u32 16, %s23
        %p1027 = scmp.lt.s32.totalorder %s1026, 31
        %s1028 = scalar_select %p1027, %s1026, 31
        %s1029 = smul.addr %s1028, 4
        %s1030 = scalar_lea.vmem %s6, %s1029
      $region64: #{run.14} parent=59 // pred_fallthru
        _
    $region60: #{run.14} parent=5 // pred_fallthru
      _
  $region6: #{run.14} parent=0 // loop_footer
    %s16 = sadd.s32 1, %s12
  $region7: #{run.14} parent=0 // loop_footer_branch
    %11 = sbr.rel target = $region3
  $region8: #{run.14} parent=0 // loop_exit
    _

// kernel: run.15
$region0: #{run.15}
  #allocation0 [shape = 'u32[]', space=smem, size = 0x4, offset = 0x4, fixed_abs, tag = 'smem constant byte address 0x4 - core index']
  #allocation1 [shape = 'u32[144,128]{1,0:T(1,128)}', space=vmem, size = 0x12000, scoped, tag = 'internal scratch']
  #allocation2 [shape = 'f32[128,256]{1,0:T(8,128)}', space=vmem, size = 0x20000, scoped, tag = 'scratch operand']
  %s0 = inlined_call_operand.vmem [shape: bf16[256,128], index: 0, kind: input, shape index: {}]
  %s1 = inlined_call_operand.vmem [shape: bf16[128,512], index: 1, kind: input, shape index: {}]
  %s2 = inlined_call_operand.vmem [shape: f32[1,512], index: 2, kind: input, shape index: {}]
  %s3 = inlined_call_operand.vmem [shape: bf16[256,512], index: 3, kind: output, shape index: {}]
  %s4 = sld [smem:[#allocation0]]
  $region125: #{run.15} parent=0
    _
  %s6 = ssub.s32 1, %s4
  %s7 = scalar_select 0, %s6, %s4
  $region1: #{run.15} parent=0
    #allocation3 [shape = 'u8[131072]{0}', space=vmem, size = 0x20000, scoped, tag = 'input window, operand 1']
    #allocation4 [shape = 'u8[131072]{0}', space=vmem, size = 0x20000, scoped, tag = 'output window, operand 0']
    loop: start=0, step=1, limit=6
    $region2: #{run.15} parent=1 // loop_pre_header
      _
    $region3: #{run.15} parent=1 // loop_header
      %s9 = sphi 0, %s13
      %p10 = scmp.ge.s32.totalorder %s9, 6
      %s16 = sphi 0, %s35
      %s17 = sphi 0, %s31
      %s18 = sphi 0, %s27
      %s19 = sphi 0, %s16
      %s20 = sphi 0, %s17
      %s21 = sphi 0, %s18
      %s22 = sphi 0, %s19
      %s23 = sphi 0, %s20
      %s24 = sphi 0, %s21
      %s40 = sphi 0, %s42
      %s43 = sphi 0, %s40
      %s44 = sphi 0, %s43
      %s60 = sphi 0, %s44
      %s68 = sphi 0, %s70
      %s71 = sphi 0, %s68
      %s72 = sphi 0, %s71
      %s88 = sphi 0, %s72
      %s94 = sphi 0, %s96
      %s97 = sphi 0, %s94
      %s98 = sphi 0, %s97
      %s114 = sphi 0, %s98
      %s122 = sphi 0, %s124
      %s125 = sphi 0, %s122
      %s126 = sphi 0, %s125
      %s142 = sphi 0, %s126
    $region4: #{run.15} parent=1 // loop_header_branch
      %12 = sbr.rel (%p10) target = $region8
    $region5: #{run.15} parent=1 // loop_body
      %s14 = ssub.s32 %s9, 1
      %s15 = ssub.s32 %s9, 2
      %s25 = sadd.s32 1, %s18
      %p26 = scmp.ge.s32.totalorder %s25, 1
      %s27 = scalar_select %p26, 0, %s25
      %s28 = sadd.s32 1, %s17
      %s29 = scalar_select %p26, %s28, %s17
      %p30 = scmp.ge.s32.totalorder %s29, 2
      %s31 = scalar_select %p30, 0, %s29
      %s32 = sadd.s32 1, %s16
      %s33 = scalar_select %p30, %s32, %s16
      %p34 = scmp.ge.s32.totalorder %s33, 2
      %s35 = scalar_select %p34, 0, %s33
      %s36 = ssub.s32 %s16, %s35
      %s37 = ssub.s32 %s18, %s27
      %s38 = sor.u32 %s36, %s37
      %p39 = scmp.eq.s32.totalorder %s38, 0
      %s41 = sadd.s32 %s40, 1
      %s42 = scalar_select %p39, %s40, %s41
      %p45 = pneg %p39
      %p46 = scmp.eq.s32.totalorder %s9, 3
      %p47 = por %p45, %p46
      %p48 = scmp.ne.s32.totalorder %s40, %s43
      %p49 = scmp.eq.s32.totalorder %s9, 0
      %p50 = por %p48, %p49
      %p51 = scmp.ne.s32.totalorder %s40, %s43
      %p52 = scmp.eq.s32.totalorder %s14, 3
      %p53 = por %p51, %p52
      %p54 = scmp.ne.s32.totalorder %s43, %s44
      %p55 = scmp.eq.s32.totalorder %s14, 0
      %p56 = por %p54, %p55
      %p57 = scmp.ne.s32.totalorder %s43, %s44
      %p58 = scmp.eq.s32.totalorder %s15, 3
      %p59 = por %p57, %p58
      %p61 = scmp.ne.s32.totalorder %s44, %s60
      %p62 = scmp.eq.s32.totalorder %s15, 0
      %p63 = por %p61, %p62
      %s64 = ssub.s32 %s18, %s27
      %s65 = ssub.s32 %s17, %s31
      %s66 = sor.u32 %s64, %s65
      %p67 = scmp.eq.s32.totalorder %s66, 0
      %s69 = sadd.s32 %s68, 1
      %s70 = scalar_select %p67, %s68, %s69
      %p73 = pneg %p67
      %p74 = scmp.eq.s32.totalorder %s9, 3
      %p75 = por %p73, %p74
      %p76 = scmp.ne.s32.totalorder %s68, %s71
      %p77 = scmp.eq.s32.totalorder %s9, 0
      %p78 = por %p76, %p77
      %p79 = scmp.ne.s32.totalorder %s68, %s71
      %p80 = scmp.eq.s32.totalorder %s14, 3
      %p81 = por %p79, %p80
      %p82 = scmp.ne.s32.totalorder %s71, %s72
      %p83 = scmp.eq.s32.totalorder %s14, 0
      %p84 = por %p82, %p83
      %p85 = scmp.ne.s32.totalorder %s71, %s72
      %p86 = scmp.eq.s32.totalorder %s15, 3
      %p87 = por %p85, %p86
      %p89 = scmp.ne.s32.totalorder %s72, %s88
      %p90 = scmp.eq.s32.totalorder %s15, 0
      %p91 = por %p89, %p90
      %s92 = ssub.s32 %s17, %s31
      %p93 = scmp.eq.s32.totalorder %s92, 0
      %s95 = sadd.s32 %s94, 1
      %s96 = scalar_select %p93, %s94, %s95
      %p99 = pneg %p93
      %p100 = scmp.eq.s32.totalorder %s9, 3
      %p101 = por %p99, %p100
      %p102 = scmp.ne.s32.totalorder %s94, %s97
      %p103 = scmp.eq.s32.totalorder %s9, 0
      %p104 = por %p102, %p103
      %p105 = scmp.ne.s32.totalorder %s94, %s97
      %p106 = scmp.eq.s32.totalorder %s14, 3
      %p107 = por %p105, %p106
      %p108 = scmp.ne.s32.totalorder %s97, %s98
      %p109 = scmp.eq.s32.totalorder %s14, 0
      %p110 = por %p108, %p109
      %p111 = scmp.ne.s32.totalorder %s97, %s98
      %p112 = scmp.eq.s32.totalorder %s15, 3
      %p113 = por %p111, %p112
      %p115 = scmp.ne.s32.totalorder %s98, %s114
      %p116 = scmp.eq.s32.totalorder %s15, 0
      %p117 = por %p115, %p116
      %s118 = ssub.s32 %s16, %s35
      %s119 = ssub.s32 %s17, %s31
      %s120 = sor.u32 %s118, %s119
      %p121 = scmp.eq.s32.totalorder %s120, 0
      %s123 = sadd.s32 %s122, 1
      %s124 = scalar_select %p121, %s122, %s123
      %p127 = pneg %p121
      %p128 = scmp.eq.s32.totalorder %s9, 3
      %p129 = por %p127, %p128
      %p130 = scmp.ne.s32.totalorder %s122, %s125
      %p131 = scmp.eq.s32.totalorder %s9, 0
      %p132 = por %p130, %p131
      %p133 = scmp.ne.s32.totalorder %s122, %s125
      %p134 = scmp.eq.s32.totalorder %s14, 3
      %p135 = por %p133, %p134
      %p136 = scmp.ne.s32.totalorder %s125, %s126
      %p137 = scmp.eq.s32.totalorder %s14, 0
      %p138 = por %p136, %p137
      %p139 = scmp.ne.s32.totalorder %s125, %s126
      %p140 = scmp.eq.s32.totalorder %s15, 3
      %p141 = por %p139, %p140
      %p143 = scmp.ne.s32.totalorder %s126, %s142
      %p144 = scmp.eq.s32.totalorder %s15, 0
      %p145 = por %p143, %p144
      %p146 = scmp.le.s32.totalorder 1, %s9
      %p147 = scmp.lt.s32.totalorder %s9, 5
      %p148 = pnand %p146, %p147
      %p149 = pneg %p148
      // Predicated region
      $region9: #{run.15} parent=5 // pred_check
        _
      $region10: #{run.15} parent=5 // pred_check_branch
        %151 = sbr.rel (%p148) target = $region12
      $region11: #{run.15} parent=5 // pred_region
        %s152 = ssub.s32 %s9, 1
      $region12: #{run.15} parent=5 // pred_fallthru
        _
      %p153 = scmp.lt.s32.totalorder %s9, 4
      // Predicated region
      $region13: #{run.15} parent=5 // pred_check
        %p154 = pneg %p153
      $region14: #{run.15} parent=5 // pred_check_branch
        %156 = sbr.rel (%p154) target = $region16
      $region15: #{run.15} parent=5 // pred_region
        // Predicated region
        $region17: #{run.15} parent=15 // pred_check
          %p157 = pneg %p50
        $region18: #{run.15} parent=15 // pred_check_branch
          %159 = sbr.rel (%p157) target = $region20
        $region19: #{run.15} parent=15 // pred_region
          %s160 = smul.u32 16, %s16
          %p161 = scmp.lt.s32.totalorder %s160, 31
          %s162 = scalar_select %p161, %s160, 31
          %p163 = scmp.lt.s32.totalorder %s18, 0
          %s164 = scalar_select %p163, %s18, 0
          %s165 = sadd.s32 %s164, %s162
          %s166 = smul.addr %s165, 4
          %s167 = scalar_lea.vmem %s0, %s166
          %s168 = smul.u32 16, %s16
        $region20: #{run.15} parent=15 // pred_fallthru
          _
        // Predicated region
        $region21: #{run.15} parent=15 // pred_check
          %p169 = pneg %p78
        $region22: #{run.15} parent=15 // pred_check_branch
          %171 = sbr.rel (%p169) target = $region24
        $region23: #{run.15} parent=15 // pred_region
          %s172 = sand.u32 %s68, 1
          %s173 = sand.u32 %s68, 1
          %s174 = smul.addr %s173, 128
          %s175 = scalar_lea.vmem [#allocation3], %s174
          %s176 = smul.u32 16, %s18
          %s177 = smul.u32 2, %s17
          %s178 = smul.addr %s176, 4
          %s179 = sadd.s32 %s177, %s178
          %s180 = smul.addr %s179, 4
          %s181 = scalar_lea.vmem %s1, %s180
          // Predicated region
          $region25: #{run.15} parent=23 // pred_check
            _
          $region26: #{run.15} parent=23 // pred_check_branch
            %183 = sbr.rel (0) target = $region28
          $region27: #{run.15} parent=23 // pred_region
            // Predicated region
            $region29: #{run.15} parent=27 // pred_check
              _
            $region30: #{run.15} parent=27 // pred_check_branch
              %185 = sbr.rel (0) target = $region32
            $region31: #{run.15} parent=27 // pred_region
              // Predicated region
              $region44: #{run.15} parent=31 // pred_check
                _
              $region45: #{run.15} parent=31 // pred_check_branch
                %230 = sbr.rel (0) target = $region47
              $region46: #{run.15} parent=31 // pred_region
                loop: start=0, step=1, limit=1
                $region48: #{run.15} parent=46 // loop_pre_header
                  _
                $region49: #{run.15} parent=46 // loop_header
                  %s232 = sphi 0, %s236
                  %p233 = scmp.ge.s32.totalorder %s232, 1
                  %s237 = sphi %s181, %s181
                  %s238 = sphi %s175, %s175
                $region50: #{run.15} parent=46 // loop_header_branch
                  %235 = sbr.rel (%p233) target = $region54
                $region51: #{run.15} parent=46 // loop_body
                  %v239 = vld [vmem:[%s237] sm:$0xff]
                  %240 = vst [vmem:[%s238] sm:$0xff] %v239
                  %v241 = vld [vmem:[%s237 + $0x10] sm:$0xff]
                  %242 = vst [vmem:[%s238 + $0x8] sm:$0xff] %v241
                  %v243 = vld [vmem:[%s237 + $0x20] sm:$0xff]
                  %244 = vst [vmem:[%s238 + $0x10] sm:$0xff] %v243
                  %v245 = vld [vmem:[%s237 + $0x30] sm:$0xff]
                  %246 = vst [vmem:[%s238 + $0x18] sm:$0xff] %v245
                  %v247 = vld [vmem:[%s237 + $0x40] sm:$0xff]
                  %248 = vst [vmem:[%s238 + $0x20] sm:$0xff] %v247
                  %v249 = vld [vmem:[%s237 + $0x50] sm:$0xff]
                  %250 = vst [vmem:[%s238 + $0x28] sm:$0xff] %v249
                  %v251 = vld [vmem:[%s237 + $0x60] sm:$0xff]
                  %252 = vst [vmem:[%s238 + $0x30] sm:$0xff] %v251
                  %v253 = vld [vmem:[%s237 + $0x70] sm:$0xff]
                  %254 = vst [vmem:[%s238 + $0x38] sm:$0xff] %v253
                  %v255 = vld [vmem:[%s237 + $0x80] sm:$0xff]
                  %256 = vst [vmem:[%s238 + $0x40] sm:$0xff] %v255
                  %v257 = vld [vmem:[%s237 + $0x90] sm:$0xff]
                  %258 = vst [vmem:[%s238 + $0x48] sm:$0xff] %v257
                  %v259 = vld [vmem:[%s237 + $0xa0] sm:$0xff]
                  %260 = vst [vmem:[%s238 + $0x50] sm:$0xff] %v259
                  %v261 = vld [vmem:[%s237 + $0xb0] sm:$0xff]
                  %262 = vst [vmem:[%s238 + $0x58] sm:$0xff] %v261
                  %v263 = vld [vmem:[%s237 + $0xc0] sm:$0xff]
                  %264 = vst [vmem:[%s238 + $0x60] sm:$0xff] %v263
                  %v265 = vld [vmem:[%s237 + $0xd0] sm:$0xff]
                  %266 = vst [vmem:[%s238 + $0x68] sm:$0xff] %v265
                  %v267 = vld [vmem:[%s237 + $0xe0] sm:$0xff]
                  %268 = vst [vmem:[%s238 + $0x70] sm:$0xff] %v267
                  %v269 = vld [vmem:[%s237 + $0xf0] sm:$0xff]
                  %270 = vst [vmem:[%s238 + $0x78] sm:$0xff] %v269
                $region52: #{run.15} parent=46 // loop_footer
                  %s236 = sadd.s32 1, %s232
                $region53: #{run.15} parent=46 // loop_footer_branch
                  %231 = sbr.rel target = $region49
                $region54: #{run.15} parent=46 // loop_exit
                  _
              $region47: #{run.15} parent=31 // pred_fallthru
                _
              // Predicated region
              $region55: #{run.15} parent=31 // pred_check
                _
              $region56: #{run.15} parent=31 // pred_check_branch
                %272 = sbr.rel target = $region58
              $region57: #{run.15} parent=31 // pred_region
                _
              $region58: #{run.15} parent=31 // pred_fallthru
                _
            $region32: #{run.15} parent=27 // pred_fallthru
              _
            // Predicated region
            $region33: #{run.15} parent=27 // pred_check
              _
            $region34: #{run.15} parent=27 // pred_check_branch
              %187 = sbr.rel target = $region36
            $region35: #{run.15} parent=27 // pred_region
              loop: start=0, step=1, limit=1
              $region37: #{run.15} parent=35 // loop_pre_header
                _
              $region38: #{run.15} parent=35 // loop_header
                %s190 = sphi 0, %s194
                %p191 = scmp.ge.s32.totalorder %s190, 1
                %s195 = sphi %s181, %s181
                %s196 = sphi %s175, %s175
              $region39: #{run.15} parent=35 // loop_header_branch
                %193 = sbr.rel (%p191) target = $region43
              $region40: #{run.15} parent=35 // loop_body
                %v197 = vld [vmem:[%s195] sm:$0xff]
                %198 = vst [vmem:[%s196] sm:$0xff] %v197
                %v199 = vld [vmem:[%s195 + $0x10] sm:$0xff]
                %200 = vst [vmem:[%s196 + $0x8] sm:$0xff] %v199
                %v201 = vld [vmem:[%s195 + $0x20] sm:$0xff]
                %202 = vst [vmem:[%s196 + $0x10] sm:$0xff] %v201
                %v203 = vld [vmem:[%s195 + $0x30] sm:$0xff]
                %204 = vst [vmem:[%s196 + $0x18] sm:$0xff] %v203
                %v205 = vld [vmem:[%s195 + $0x40] sm:$0xff]
                %206 = vst [vmem:[%s196 + $0x20] sm:$0xff] %v205
                %v207 = vld [vmem:[%s195 + $0x50] sm:$0xff]
                %208 = vst [vmem:[%s196 + $0x28] sm:$0xff] %v207
                %v209 = vld [vmem:[%s195 + $0x60] sm:$0xff]
                %210 = vst [vmem:[%s196 + $0x30] sm:$0xff] %v209
                %v211 = vld [vmem:[%s195 + $0x70] sm:$0xff]
                %212 = vst [vmem:[%s196 + $0x38] sm:$0xff] %v211
                %v213 = vld [vmem:[%s195 + $0x80] sm:$0xff]
                %214 = vst [vmem:[%s196 + $0x40] sm:$0xff] %v213
                %v215 = vld [vmem:[%s195 + $0x90] sm:$0xff]
                %216 = vst [vmem:[%s196 + $0x48] sm:$0xff] %v215
                %v217 = vld [vmem:[%s195 + $0xa0] sm:$0xff]
                %218 = vst [vmem:[%s196 + $0x50] sm:$0xff] %v217
                %v219 = vld [vmem:[%s195 + $0xb0] sm:$0xff]
                %220 = vst [vmem:[%s196 + $0x58] sm:$0xff] %v219
                %v221 = vld [vmem:[%s195 + $0xc0] sm:$0xff]
                %222 = vst [vmem:[%s196 + $0x60] sm:$0xff] %v221
                %v223 = vld [vmem:[%s195 + $0xd0] sm:$0xff]
                %224 = vst [vmem:[%s196 + $0x68] sm:$0xff] %v223
                %v225 = vld [vmem:[%s195 + $0xe0] sm:$0xff]
                %226 = vst [vmem:[%s196 + $0x70] sm:$0xff] %v225
                %v227 = vld [vmem:[%s195 + $0xf0] sm:$0xff]
                %228 = vst [vmem:[%s196 + $0x78] sm:$0xff] %v227
              $region41: #{run.15} parent=35 // loop_footer
                %s194 = sadd.s32 1, %s190
              $region42: #{run.15} parent=35 // loop_footer_branch
                %189 = sbr.rel target = $region38
              $region43: #{run.15} parent=35 // loop_exit
                _
            $region36: #{run.15} parent=27 // pred_fallthru
              _
          $region28: #{run.15} parent=23 // pred_fallthru
            _
          %273 = vnop
        $region24: #{run.15} parent=15 // pred_fallthru
          _
        // Predicated region
        $region59: #{run.15} parent=15 // pred_check
          %p274 = pneg %p104
        $region60: #{run.15} parent=15 // pred_check_branch
          %276 = sbr.rel (%p274) target = $region62
        $region61: #{run.15} parent=15 // pred_region
          %s277 = smul.u32 2, %s17
          %p278 = scmp.lt.s32.totalorder %s277, 3
          %s279 = scalar_select %p278, %s277, 3
          %s280 = scalar_lea.vmem %s2, %s279
          %s281 = smul.u32 2, %s17
        $region62: #{run.15} parent=15 // pred_fallthru
          _
      $region16: #{run.15} parent=5 // pred_fallthru
        _
      %p282 = scmp.le.s32.totalorder 1, %s9
      %p283 = scmp.lt.s32.totalorder %s9, 5
      %p284 = pnand %p282, %p283
      %p285 = pneg %p284
      // Predicated region
      $region63: #{run.15} parent=5 // pred_check
        _
      $region64: #{run.15} parent=5 // pred_check_branch
        %287 = sbr.rel (%p284) target = $region66
      $region65: #{run.15} parent=5 // pred_region
        %s288 = ssub.s32 %s9, 1
        %s289 = sand.u32 %s71, 1
        %s290 = sand.u32 %s71, 1
        %s291 = smul.addr %s290, 128
        %s292 = scalar_lea.vmem [#allocation3], %s291
        // Predicated region
        $region67: #{run.15} parent=65 // pred_check
          %p293 = pneg %p84
        $region68: #{run.15} parent=65 // pred_check_branch
          %295 = sbr.rel (%p293) target = $region70
        $region69: #{run.15} parent=65 // pred_region
          _
        $region70: #{run.15} parent=65 // pred_fallthru
          _
        %s296 = smul.u32 16, %s19
        %p297 = scmp.lt.s32.totalorder %s296, 31
        %s298 = scalar_select %p297, %s296, 31
        %p299 = scmp.lt.s32.totalorder %s21, 0
        %s300 = scalar_select %p299, %s21, 0
        %s301 = sadd.s32 %s300, %s298
        %s302 = smul.addr %s301, 4
        %s303 = scalar_lea.vmem %s0, %s302
        %p304 = pneg %p56
        %p305 = pneg %p53
        %s306 = sand.u32 %s71, 1
        %s307 = sand.u32 %s71, 1
        %s308 = smul.addr %s307, 128
        %s309 = scalar_lea.vmem [#allocation3], %s308
        %p310 = pneg %p84
        %p311 = pneg %p81
        %s312 = smul.u32 2, %s20
        %p313 = scmp.lt.s32.totalorder %s312, 3
        %s314 = scalar_select %p313, %s312, 3
        %s315 = scalar_lea.vmem %s2, %s314
        %p316 = pneg %p110
        %p317 = pneg %p107
        %p318 = pneg %p138
        %p319 = pneg %p135
        %s320 = sand.u32 %s125, 1
        %s321 = sand.u32 %s125, 1
        %s322 = smul.addr %s321, 128
        %s323 = scalar_lea.vmem [#allocation4], %s322
        %s324 = smul.u32 16, %s19
        %p325 = scmp.lt.s32.totalorder %s324, 31
        %s326 = scalar_select %p325, %s324, 31
        %p327 = scmp.lt.s32.totalorder %s21, 0
        %s328 = scalar_select %p327, %s21, 0
        %s329 = sadd.s32 %s328, %s326
        %s330 = smul.addr %s329, 4
        %s331 = scalar_lea.vmem %s0, %s330
        %s332 = smul.u32 16, %s19
        %s333 = smul.u32 16, %s21
        %s334 = smul.u32 2, %s20
        %s335 = smul.u32 2, %s20
        %p336 = scmp.lt.s32.totalorder %s335, 3
        %s337 = scalar_select %p336, %s335, 3
        %s338 = scalar_lea.vmem %s2, %s337
        %s339 = smul.u32 2, %s20
        %s340 = smul.u32 16, %s19
        %s341 = smul.u32 2, %s20
        %p343 = scmp.eq.s32.totalorder %s21, 0
        // Predicated region
        $region71: #{run.15} parent=65 // pred_check
          %p344 = pneg %p343
        $region72: #{run.15} parent=65 // pred_check_branch
          %346 = sbr.rel (%p344) target = $region74
        $region73: #{run.15} parent=65 // pred_region
          %347 = vst [vmem:[#allocation2] sm:$0xff] 0.0
          %348 = vst [vmem:[#allocation2 + $0x8] sm:$0xff] 0.0
          %349 = vst [vmem:[#allocation2 + $0x10] sm:$0xff] 0.0
          %350 = vst [vmem:[#allocation2 + $0x18] sm:$0xff] 0.0
          %351 = vst [vmem:[#allocation2 + $0x20] sm:$0xff] 0.0
          %352 = vst [vmem:[#allocation2 + $0x28] sm:$0xff] 0.0
          %353 = vst [vmem:[#allocation2 + $0x30] sm:$0xff] 0.0
          %354 = vst [vmem:[#allocation2 + $0x38] sm:$0xff] 0.0
          %355 = vst [vmem:[#allocation2 + $0x40] sm:$0xff] 0.0
          %356 = vst [vmem:[#allocation2 + $0x48] sm:$0xff] 0.0
          %357 = vst [vmem:[#allocation2 + $0x50] sm:$0xff] 0.0
          %358 = vst [vmem:[#allocation2 + $0x58] sm:$0xff] 0.0
          %359 = vst [vmem:[#allocation2 + $0x60] sm:$0xff] 0.0
          %360 = vst [vmem:[#allocation2 + $0x68] sm:$0xff] 0.0
          %361 = vst [vmem:[#allocation2 + $0x70] sm:$0xff] 0.0
          %362 = vst [vmem:[#allocation2 + $0x78] sm:$0xff] 0.0
          %363 = vst [vmem:[#allocation2 + $0x80] sm:$0xff] 0.0
          %364 = vst [vmem:[#allocation2 + $0x88] sm:$0xff] 0.0
          %365 = vst [vmem:[#allocation2 + $0x90] sm:$0xff] 0.0
          %366 = vst [vmem:[#allocation2 + $0x98] sm:$0xff] 0.0
          %367 = vst [vmem:[#allocation2 + $0xa0] sm:$0xff] 0.0
          %368 = vst [vmem:[#allocation2 + $0xa8] sm:$0xff] 0.0
          %369 = vst [vmem:[#allocation2 + $0xb0] sm:$0xff] 0.0
          %370 = vst [vmem:[#allocation2 + $0xb8] sm:$0xff] 0.0
          %371 = vst [vmem:[#allocation2 + $0xc0] sm:$0xff] 0.0
          %372 = vst [vmem:[#allocation2 + $0xc8] sm:$0xff] 0.0
          %373 = vst [vmem:[#allocation2 + $0xd0] sm:$0xff] 0.0
          %374 = vst [vmem:[#allocation2 + $0xd8] sm:$0xff] 0.0
          %375 = vst [vmem:[#allocation2 + $0xe0] sm:$0xff] 0.0
          %376 = vst [vmem:[#allocation2 + $0xe8] sm:$0xff] 0.0
          %377 = vst [vmem:[#allocation2 + $0xf0] sm:$0xff] 0.0
          %378 = vst [vmem:[#allocation2 + $0xf8] sm:$0xff] 0.0
        $region74: #{run.15} parent=65 // pred_fallthru
          _
        %v379 = vld [vmem:[#allocation2] sm:$0xff]
        %v380 = vld [vmem:[#allocation2 + $0x8] sm:$0xff]
        %v381 = vld [vmem:[#allocation2 + $0x10] sm:$0xff]
        %v382 = vld [vmem:[#allocation2 + $0x18] sm:$0xff]
        %v383 = vld [vmem:[#allocation2 + $0x20] sm:$0xff]
        %v384 = vld [vmem:[#allocation2 + $0x28] sm:$0xff]
        %v385 = vld [vmem:[#allocation2 + $0x30] sm:$0xff]
        %v386 = vld [vmem:[#allocation2 + $0x38] sm:$0xff]
        %v387 = vld [vmem:[#allocation2 + $0x40] sm:$0xff]
        %v388 = vld [vmem:[#allocation2 + $0x48] sm:$0xff]
        %v389 = vld [vmem:[#allocation2 + $0x50] sm:$0xff]
        %v390 = vld [vmem:[#allocation2 + $0x58] sm:$0xff]
        %v391 = vld [vmem:[#allocation2 + $0x60] sm:$0xff]
        %v392 = vld [vmem:[#allocation2 + $0x68] sm:$0xff]
        %v393 = vld [vmem:[#allocation2 + $0x70] sm:$0xff]
        %v394 = vld [vmem:[#allocation2 + $0x78] sm:$0xff]
        %v395 = vld [vmem:[#allocation2 + $0x80] sm:$0xff]
        %v396 = vld [vmem:[#allocation2 + $0x88] sm:$0xff]
        %v397 = vld [vmem:[#allocation2 + $0x90] sm:$0xff]
        %v398 = vld [vmem:[#allocation2 + $0x98] sm:$0xff]
        %v399 = vld [vmem:[#allocation2 + $0xa0] sm:$0xff]
        %v400 = vld [vmem:[#allocation2 + $0xa8] sm:$0xff]
        %v401 = vld [vmem:[#allocation2 + $0xb0] sm:$0xff]
        %v402 = vld [vmem:[#allocation2 + $0xb8] sm:$0xff]
        %v403 = vld [vmem:[#allocation2 + $0xc0] sm:$0xff]
        %v404 = vld [vmem:[#allocation2 + $0xc8] sm:$0xff]
        %v405 = vld [vmem:[#allocation2 + $0xd0] sm:$0xff]
        %v406 = vld [vmem:[#allocation2 + $0xd8] sm:$0xff]
        %v407 = vld [vmem:[#allocation2 + $0xe0] sm:$0xff]
        %v408 = vld [vmem:[#allocation2 + $0xe8] sm:$0xff]
        %v409 = vld [vmem:[#allocation2 + $0xf0] sm:$0xff]
        %v410 = vld [vmem:[#allocation2 + $0xf8] sm:$0xff]
        %v411 = vld [vmem:[%s331] sm:$0xf]
        %v412 = vld [vmem:[%s331 + $0x4] sm:$0xf]
        %v413 = vld [vmem:[%s331 + $0x8] sm:$0xf]
        %v414 = vld [vmem:[%s331 + $0xc] sm:$0xf]
        %v415 = vld [vmem:[%s331 + $0x10] sm:$0xf]
        %v416 = vld [vmem:[%s331 + $0x14] sm:$0xf]
        %v417 = vld [vmem:[%s331 + $0x18] sm:$0xf]
        %v418 = vld [vmem:[%s331 + $0x1c] sm:$0xf]
        %v419 = vld [vmem:[%s331 + $0x20] sm:$0xf]
        %v420 = vld [vmem:[%s331 + $0x24] sm:$0xf]
        %v421 = vld [vmem:[%s331 + $0x28] sm:$0xf]
        %v422 = vld [vmem:[%s331 + $0x2c] sm:$0xf]
        %v423 = vld [vmem:[%s331 + $0x30] sm:$0xf]
        %v424 = vld [vmem:[%s331 + $0x34] sm:$0xf]
        %v425 = vld [vmem:[%s331 + $0x38] sm:$0xf]
        %v426 = vld [vmem:[%s331 + $0x3c] sm:$0xf]
        %v427 = vld [vmem:[%s292] sm:$0xff]
        %v428 = vld [vmem:[%s292 + $0x8] sm:$0xff]
        %v429 = vld [vmem:[%s292 + $0x10] sm:$0xff]
        %v430 = vld [vmem:[%s292 + $0x18] sm:$0xff]
        %v431 = vld [vmem:[%s292 + $0x20] sm:$0xff]
        %v432 = vld [vmem:[%s292 + $0x28] sm:$0xff]
        %v433 = vld [vmem:[%s292 + $0x30] sm:$0xff]
        %v434 = vld [vmem:[%s292 + $0x38] sm:$0xff]
        %v435 = vld [vmem:[%s292 + $0x40] sm:$0xff]
        %v436 = vld [vmem:[%s292 + $0x48] sm:$0xff]
        %v437 = vld [vmem:[%s292 + $0x50] sm:$0xff]
        %v438 = vld [vmem:[%s292 + $0x58] sm:$0xff]
        %v439 = vld [vmem:[%s292 + $0x60] sm:$0xff]
        %v440 = vld [vmem:[%s292 + $0x68] sm:$0xff]
        %v441 = vld [vmem:[%s292 + $0x70] sm:$0xff]
        %v442 = vld [vmem:[%s292 + $0x78] sm:$0xff]
        %v459 = vunpack.c.l.b16 %v411
        %v460 = vunpack.c.l.b16 %v412
        %v461 = vunpack.c.l.b16 %v413
        %v462 = vunpack.c.l.b16 %v414
        %v463 = vunpack.c.l.b16 %v415
        %v464 = vunpack.c.l.b16 %v416
        %v465 = vunpack.c.l.b16 %v417
        %v466 = vunpack.c.l.b16 %v418
        %v467 = vunpack.c.l.b16 %v419
        %v468 = vunpack.c.l.b16 %v420
        %v469 = vunpack.c.l.b16 %v421
        %v470 = vunpack.c.l.b16 %v422
        %v471 = vunpack.c.l.b16 %v423
        %v472 = vunpack.c.l.b16 %v424
        %v473 = vunpack.c.l.b16 %v425
        %v474 = vunpack.c.l.b16 %v426
        %v475 = vpack.c.b16 %v460, %v459
        %v476 = vpack.c.b16 %v462, %v461
        %v477 = vpack.c.b16 %v464, %v463
        %v478 = vpack.c.b16 %v466, %v465
        %v479 = vpack.c.b16 %v468, %v467
        %v480 = vpack.c.b16 %v470, %v469
        %v481 = vpack.c.b16 %v472, %v471
        %v482 = vpack.c.b16 %v474, %v473
        %v507 = vunpack.c.l.b16 %v427
        %v508 = vunpack.c.h.b16 %v427
        %v509 = vunpack.c.l.b16 %v428
        %v510 = vunpack.c.h.b16 %v428
        %v511 = vunpack.c.l.b16 %v429
        %v512 = vunpack.c.h.b16 %v429
        %v513 = vunpack.c.l.b16 %v430
        %v514 = vunpack.c.h.b16 %v430
        %v515 = vunpack.c.l.b16 %v431
        %v516 = vunpack.c.h.b16 %v431
        %v517 = vunpack.c.l.b16 %v432
        %v518 = vunpack.c.h.b16 %v432
        %v519 = vunpack.c.l.b16 %v433
        %v520 = vunpack.c.h.b16 %v433
        %v521 = vunpack.c.l.b16 %v434
        %v522 = vunpack.c.h.b16 %v434
        %v523 = vunpack.c.l.b16 %v435
        %v524 = vunpack.c.h.b16 %v435
        %v525 = vunpack.c.l.b16 %v436
        %v526 = vunpack.c.h.b16 %v436
        %v527 = vunpack.c.l.b16 %v437
        %v528 = vunpack.c.h.b16 %v437
        %v529 = vunpack.c.l.b16 %v438
        %v530 = vunpack.c.h.b16 %v438
        %v531 = vunpack.c.l.b16 %v439
        %v532 = vunpack.c.h.b16 %v439
        %v533 = vunpack.c.l.b16 %v440
        %v534 = vunpack.c.h.b16 %v440
        %v535 = vunpack.c.l.b16 %v441
        %v536 = vunpack.c.h.b16 %v441
        %v537 = vunpack.c.l.b16 %v442
        %v538 = vunpack.c.h.b16 %v442
        %v539 = vpack.c.b16 %v509, %v507
        %v540 = vpack.c.b16 %v510, %v508
        %v541 = vpack.c.b16 %v513, %v511
        %v542 = vpack.c.b16 %v514, %v512
        %v543 = vpack.c.b16 %v517, %v515
        %v544 = vpack.c.b16 %v518, %v516
        %v545 = vpack.c.b16 %v521, %v519
        %v546 = vpack.c.b16 %v522, %v520
        %v547 = vpack.c.b16 %v525, %v523
        %v548 = vpack.c.b16 %v526, %v524
        %v549 = vpack.c.b16 %v529, %v527
        %v550 = vpack.c.b16 %v530, %v528
        %v551 = vpack.c.b16 %v533, %v531
        %v552 = vpack.c.b16 %v534, %v532
        %v553 = vpack.c.b16 %v537, %v535
        %v554 = vpack.c.b16 %v538, %v536
        %571 = vmatprep.subr.bf16.mxu0 %v540
        %572 = vmatpush1.bf16.msra.mxu0 %v539
        %573 = vmatprep.subr.bf16.mxu0 %v542
        %574 = vmatpush1.bf16.msra.mxu0 %v541
        %575 = vmatprep.subr.bf16.mxu0 %v544
        %576 = vmatpush1.bf16.msra.mxu0 %v543
        %577 = vmatprep.subr.bf16.mxu0 %v546
        %578 = vmatpush1.bf16.msra.mxu0 %v545
        %579 = vmatprep.subr.bf16.mxu0 %v548
        %580 = vmatpush1.bf16.msra.mxu0 %v547
        %581 = vmatprep.subr.bf16.mxu0 %v550
        %582 = vmatpush1.bf16.msra.mxu0 %v549
        %583 = vmatprep.subr.bf16.mxu0 %v552
        %584 = vmatpush1.bf16.msra.mxu0 %v551
        %585 = vmatprep.subr.bf16.mxu0 %v554
        %586 = vmatpush1.bf16.msra.mxu0 %v553
        %587 = vmatprep.subr.bf16.mxu0 0
        %588 = vmatpush1.bf16.msra.mxu0 0
        %589 = vmatprep.subr.bf16.mxu0 0
        %590 = vmatpush1.bf16.msra.mxu0 0
        %591 = vmatprep.subr.bf16.mxu0 0
        %592 = vmatpush1.bf16.msra.mxu0 0
        %593 = vmatprep.subr.bf16.mxu0 0
        %594 = vmatpush1.bf16.msra.mxu0 0
        %595 = vmatprep.subr.bf16.mxu0 0
        %596 = vmatpush1.bf16.msra.mxu0 0
        %597 = vmatprep.subr.bf16.mxu0 0
        %598 = vmatpush1.bf16.msra.mxu0 0
        %599 = vmatprep.subr.bf16.mxu0 0
        %600 = vmatpush1.bf16.msra.mxu0 0
        %601 = vmatprep.subr.bf16.mxu0 0
        %602 = vmatpush1.bf16.msra.mxu0 0
        %603 = vmatprep.mubr.bf16.mxu0 0
        %604 = vmatmul.mubr.bf16.gmra.mrb[0].mxu0 %v475
        %v605 = vpop.f32.mrb[0].mxu0
        %v606 = vadd.f32 0.0, %v605
        %v607 = vpop.f32.mrb[0].mxu0
        %v608 = vadd.f32 0.0, %v607
        %v609 = vpop.f32.mrb[0].mxu0
        %v610 = vadd.f32 0.0, %v609
        %v611 = vpop.f32.mrb[0].mxu0
        %v612 = vadd.f32 0.0, %v611
        %613 = vmatprep.mubr.bf16.mxu0 0
        %614 = vmatmul.mubr.bf16.gmra.mrb[0].mxu0 %v476
        %v615 = vpop.f32.mrb[0].mxu0
        %v616 = vadd.f32 0.0, %v615
        %v617 = vpop.f32.mrb[0].mxu0
        %v618 = vadd.f32 0.0, %v617
        %v619 = vpop.f32.mrb[0].mxu0
        %v620 = vadd.f32 0.0, %v619
        %v621 = vpop.f32.mrb[0].mxu0
        %v622 = vadd.f32 0.0, %v621
        %623 = vmatprep.mubr.bf16.mxu0 0
        %624 = vmatmul.mubr.bf16.gmra.mrb[0].mxu0 %v477
        %v625 = vpop.f32.mrb[0].mxu0
        %v626 = vadd.f32 0.0, %v625
        %v627 = vpop.f32.mrb[0].mxu0
        %v628 = vadd.f32 0.0, %v627
        %v629 = vpop.f32.mrb[0].mxu0
        %v630 = vadd.f32 0.0, %v629
        %v631 = vpop.f32.mrb[0].mxu0
        %v632 = vadd.f32 0.0, %v631
        %633 = vmatprep.mubr.bf16.mxu0 0
        %634 = vmatmul.mubr.bf16.gmra.mrb[0].mxu0 %v478
        %v635 = vpop.f32.mrb[0].mxu0
        %v636 = vadd.f32 0.0, %v635
        %v637 = vpop.f32.mrb[0].mxu0
        %v638 = vadd.f32 0.0, %v637
        %v639 = vpop.f32.mrb[0].mxu0
        %v640 = vadd.f32 0.0, %v639
        %v641 = vpop.f32.mrb[0].mxu0
        %v642 = vadd.f32 0.0, %v641
        %643 = vmatprep.mubr.bf16.mxu0 0
        %644 = vmatmul.mubr.bf16.gmra.mrb[0].mxu0 %v479
        %v645 = vpop.f32.mrb[0].mxu0
        %v646 = vadd.f32 0.0, %v645
        %v647 = vpop.f32.mrb[0].mxu0
        %v648 = vadd.f32 0.0, %v647
        %v649 = vpop.f32.mrb[0].mxu0
        %v650 = vadd.f32 0.0, %v649
        %v651 = vpop.f32.mrb[0].mxu0
        %v652 = vadd.f32 0.0, %v651
        %653 = vmatprep.mubr.bf16.mxu0 0
        %654 = vmatmul.mubr.bf16.gmra.mrb[0].mxu0 %v480
        %v655 = vpop.f32.mrb[0].mxu0
        %v656 = vadd.f32 0.0, %v655
        %v657 = vpop.f32.mrb[0].mxu0
        %v658 = vadd.f32 0.0, %v657
        %v659 = vpop.f32.mrb[0].mxu0
        %v660 = vadd.f32 0.0, %v659
        %v661 = vpop.f32.mrb[0].mxu0
        %v662 = vadd.f32 0.0, %v661
        %663 = vmatprep.mubr.bf16.mxu0 0
        %664 = vmatmul.mubr.bf16.gmra.mrb[0].mxu0 %v481
        %v665 = vpop.f32.mrb[0].mxu0
        %v666 = vadd.f32 0.0, %v665
        %v667 = vpop.f32.mrb[0].mxu0
        %v668 = vadd.f32 0.0, %v667
        %v669 = vpop.f32.mrb[0].mxu0
        %v670 = vadd.f32 0.0, %v669
        %v671 = vpop.f32.mrb[0].mxu0
        %v672 = vadd.f32 0.0, %v671
        %673 = vmatprep.mubr.bf16.mxu0 0
        %674 = vmatmul.mubr.bf16.gmra.mrb[0].mxu0 %v482
        %v675 = vpop.f32.mrb[0].mxu0
        %v676 = vadd.f32 0.0, %v675
        %v677 = vpop.f32.mrb[0].mxu0
        %v678 = vadd.f32 0.0, %v677
        %v679 = vpop.f32.mrb[0].mxu0
        %v680 = vadd.f32 0.0, %v679
        %v681 = vpop.f32.mrb[0].mxu0
        %v682 = vadd.f32 0.0, %v681
        %683 = vdwg.mxu0
        %v684 = vadd.f32 %v379, %v606
        %v685 = vadd.f32 %v380, %v608
        %v686 = vadd.f32 %v381, %v610
        %v687 = vadd.f32 %v382, %v612
        %v688 = vadd.f32 %v383, %v616
        %v689 = vadd.f32 %v384, %v618
        %v690 = vadd.f32 %v385, %v620
        %v691 = vadd.f32 %v386, %v622
        %v692 = vadd.f32 %v387, %v626
        %v693 = vadd.f32 %v388, %v628
        %v694 = vadd.f32 %v389, %v630
        %v695 = vadd.f32 %v390, %v632
        %v696 = vadd.f32 %v391, %v636
        %v697 = vadd.f32 %v392, %v638
        %v698 = vadd.f32 %v393, %v640
        %v699 = vadd.f32 %v394, %v642
        %v700 = vadd.f32 %v395, %v646
        %v701 = vadd.f32 %v396, %v648
        %v702 = vadd.f32 %v397, %v650
        %v703 = vadd.f32 %v398, %v652
        %v704 = vadd.f32 %v399, %v656
        %v705 = vadd.f32 %v400, %v658
        %v706 = vadd.f32 %v401, %v660
        %v707 = vadd.f32 %v402, %v662
        %v708 = vadd.f32 %v403, %v666
        %v709 = vadd.f32 %v404, %v668
        %v710 = vadd.f32 %v405, %v670
        %v711 = vadd.f32 %v406, %v672
        %v712 = vadd.f32 %v407, %v676
        %v713 = vadd.f32 %v408, %v678
        %v714 = vadd.f32 %v409, %v680
        %v715 = vadd.f32 %v410, %v682
        %716 = vst [vmem:[#allocation2] sm:$0xff] %v684
        %717 = vst [vmem:[#allocation2 + $0x8] sm:$0xff] %v685
        %718 = vst [vmem:[#allocation2 + $0x10] sm:$0xff] %v686
        %719 = vst [vmem:[#allocation2 + $0x18] sm:$0xff] %v687
        %720 = vst [vmem:[#allocation2 + $0x20] sm:$0xff] %v688
        %721 = vst [vmem:[#allocation2 + $0x28] sm:$0xff] %v689
        %722 = vst [vmem:[#allocation2 + $0x30] sm:$0xff] %v690
        %723 = vst [vmem:[#allocation2 + $0x38] sm:$0xff] %v691
        %724 = vst [vmem:[#allocation2 + $0x40] sm:$0xff] %v692
        %725 = vst [vmem:[#allocation2 + $0x48] sm:$0xff] %v693
        %726 = vst [vmem:[#allocation2 + $0x50] sm:$0xff] %v694
        %727 = vst [vmem:[#allocation2 + $0x58] sm:$0xff] %v695
        %728 = vst [vmem:[#allocation2 + $0x60] sm:$0xff] %v696
        %729 = vst [vmem:[#allocation2 + $0x68] sm:$0xff] %v697
        %730 = vst [vmem:[#allocation2 + $0x70] sm:$0xff] %v698
        %731 = vst [vmem:[#allocation2 + $0x78] sm:$0xff] %v699
        %732 = vst [vmem:[#allocation2 + $0x80] sm:$0xff] %v700
        %733 = vst [vmem:[#allocation2 + $0x88] sm:$0xff] %v701
        %734 = vst [vmem:[#allocation2 + $0x90] sm:$0xff] %v702
        %735 = vst [vmem:[#allocation2 + $0x98] sm:$0xff] %v703
        %736 = vst [vmem:[#allocation2 + $0xa0] sm:$0xff] %v704
        %737 = vst [vmem:[#allocation2 + $0xa8] sm:$0xff] %v705
        %738 = vst [vmem:[#allocation2 + $0xb0] sm:$0xff] %v706
        %739 = vst [vmem:[#allocation2 + $0xb8] sm:$0xff] %v707
        %740 = vst [vmem:[#allocation2 + $0xc0] sm:$0xff] %v708
        %741 = vst [vmem:[#allocation2 + $0xc8] sm:$0xff] %v709
        %742 = vst [vmem:[#allocation2 + $0xd0] sm:$0xff] %v710
        %743 = vst [vmem:[#allocation2 + $0xd8] sm:$0xff] %v711
        %744 = vst [vmem:[#allocation2 + $0xe0] sm:$0xff] %v712
        %745 = vst [vmem:[#allocation2 + $0xe8] sm:$0xff] %v713
        %746 = vst [vmem:[#allocation2 + $0xf0] sm:$0xff] %v714
        %747 = vst [vmem:[#allocation2 + $0xf8] sm:$0xff] %v715
        // Predicated region
        $region75: #{run.15} parent=65 // pred_check
          %p748 = pneg %p343
        $region76: #{run.15} parent=65 // pred_check_branch
          %750 = sbr.rel (%p748) target = $region78
        $region77: #{run.15} parent=65 // pred_region
          %v751 = vld [vmem:[#allocation2] sm:$0xff]
          %v752 = vld [vmem:[#allocation2 + $0x8] sm:$0xff]
          %v753 = vld [vmem:[#allocation2 + $0x10] sm:$0xff]
          %v754 = vld [vmem:[#allocation2 + $0x18] sm:$0xff]
          %v755 = vld [vmem:[#allocation2 + $0x20] sm:$0xff]
          %v756 = vld [vmem:[#allocation2 + $0x28] sm:$0xff]
          %v757 = vld [vmem:[#allocation2 + $0x30] sm:$0xff]
          %v758 = vld [vmem:[#allocation2 + $0x38] sm:$0xff]
          %v759 = vld [vmem:[#allocation2 + $0x40] sm:$0xff]
          %v760 = vld [vmem:[#allocation2 + $0x48] sm:$0xff]
          %v761 = vld [vmem:[#allocation2 + $0x50] sm:$0xff]
          %v762 = vld [vmem:[#allocation2 + $0x58] sm:$0xff]
          %v763 = vld [vmem:[#allocation2 + $0x60] sm:$0xff]
          %v764 = vld [vmem:[#allocation2 + $0x68] sm:$0xff]
          %v765 = vld [vmem:[#allocation2 + $0x70] sm:$0xff]
          %v766 = vld [vmem:[#allocation2 + $0x78] sm:$0xff]
          %v767 = vld [vmem:[#allocation2 + $0x80] sm:$0xff]
          %v768 = vld [vmem:[#allocation2 + $0x88] sm:$0xff]
          %v769 = vld [vmem:[#allocation2 + $0x90] sm:$0xff]
          %v770 = vld [vmem:[#allocation2 + $0x98] sm:$0xff]
          %v771 = vld [vmem:[#allocation2 + $0xa0] sm:$0xff]
          %v772 = vld [vmem:[#allocation2 + $0xa8] sm:$0xff]
          %v773 = vld [vmem:[#allocation2 + $0xb0] sm:$0xff]
          %v774 = vld [vmem:[#allocation2 + $0xb8] sm:$0xff]
          %v775 = vld [vmem:[#allocation2 + $0xc0] sm:$0xff]
          %v776 = vld [vmem:[#allocation2 + $0xc8] sm:$0xff]
          %v777 = vld [vmem:[#allocation2 + $0xd0] sm:$0xff]
          %v778 = vld [vmem:[#allocation2 + $0xd8] sm:$0xff]
          %v779 = vld [vmem:[#allocation2 + $0xe0] sm:$0xff]
          %v780 = vld [vmem:[#allocation2 + $0xe8] sm:$0xff]
          %v781 = vld [vmem:[#allocation2 + $0xf0] sm:$0xff]
          %v782 = vld [vmem:[#allocation2 + $0xf8] sm:$0xff]
          %v783 = vld [vmem:[%s338] sm:$0x3]
          %v785 = vlaneseq
          %v786 = vshrl.u32 %v785, 7
          %v787 = vsub.s32 0, %v786
          %v788 = vrot.slane %v783, %v787
          %v789 = vlaneseq
          %v790 = vshrl.u32 %v789, 7
          %v791 = vsub.s32 1, %v790
          %v792 = vrot.slane %v783, %v791
          %v795 = vadd.f32 %v751, %v788
          %v796 = vadd.f32 %v752, %v792
          %v797 = vadd.f32 %v753, %v788
          %v798 = vadd.f32 %v754, %v792
          %v799 = vadd.f32 %v755, %v788
          %v800 = vadd.f32 %v756, %v792
          %v801 = vadd.f32 %v757, %v788
          %v802 = vadd.f32 %v758, %v792
          %v803 = vadd.f32 %v759, %v788
          %v804 = vadd.f32 %v760, %v792
          %v805 = vadd.f32 %v761, %v788
          %v806 = vadd.f32 %v762, %v792
          %v807 = vadd.f32 %v763, %v788
          %v808 = vadd.f32 %v764, %v792
          %v809 = vadd.f32 %v765, %v788
          %v810 = vadd.f32 %v766, %v792
          %v811 = vadd.f32 %v767, %v788
          %v812 = vadd.f32 %v768, %v792
          %v813 = vadd.f32 %v769, %v788
          %v814 = vadd.f32 %v770, %v792
          %v815 = vadd.f32 %v771, %v788
          %v816 = vadd.f32 %v772, %v792
          %v817 = vadd.f32 %v773, %v788
          %v818 = vadd.f32 %v774, %v792
          %v819 = vadd.f32 %v775, %v788
          %v820 = vadd.f32 %v776, %v792
          %v821 = vadd.f32 %v777, %v788
          %v822 = vadd.f32 %v778, %v792
          %v823 = vadd.f32 %v779, %v788
          %v824 = vadd.f32 %v780, %v792
          %v825 = vadd.f32 %v781, %v788
          %v826 = vadd.f32 %v782, %v792
          %v827 = vmul.f32 %v795, 0.5
          %v828 = vmul.f32 %v796, 0.5
          %v829 = vmul.f32 %v797, 0.5
          %v830 = vmul.f32 %v798, 0.5
          %v831 = vmul.f32 %v799, 0.5
          %v832 = vmul.f32 %v800, 0.5
          %v833 = vmul.f32 %v801, 0.5
          %v834 = vmul.f32 %v802, 0.5
          %v835 = vmul.f32 %v803, 0.5
          %v836 = vmul.f32 %v804, 0.5
          %v837 = vmul.f32 %v805, 0.5
          %v838 = vmul.f32 %v806, 0.5
          %v839 = vmul.f32 %v807, 0.5
          %v840 = vmul.f32 %v808, 0.5
          %v841 = vmul.f32 %v809, 0.5
          %v842 = vmul.f32 %v810, 0.5
          %v843 = vmul.f32 %v811, 0.5
          %v844 = vmul.f32 %v812, 0.5
          %v845 = vmul.f32 %v813, 0.5
          %v846 = vmul.f32 %v814, 0.5
          %v847 = vmul.f32 %v815, 0.5
          %v848 = vmul.f32 %v816, 0.5
          %v849 = vmul.f32 %v817, 0.5
          %v850 = vmul.f32 %v818, 0.5
          %v851 = vmul.f32 %v819, 0.5
          %v852 = vmul.f32 %v820, 0.5
          %v853 = vmul.f32 %v821, 0.5
          %v854 = vmul.f32 %v822, 0.5
          %v855 = vmul.f32 %v823, 0.5
          %v856 = vmul.f32 %v824, 0.5
          %v857 = vmul.f32 %v825, 0.5
          %v858 = vmul.f32 %v826, 0.5
          %v859 = vmul.f32 %v795, 0.044715
          %v860 = vmul.f32 %v796, 0.044715
          %v861 = vmul.f32 %v797, 0.044715
          %v862 = vmul.f32 %v798, 0.044715
          %v863 = vmul.f32 %v799, 0.044715
          %v864 = vmul.f32 %v800, 0.044715
          %v865 = vmul.f32 %v801, 0.044715
          %v866 = vmul.f32 %v802, 0.044715
          %v867 = vmul.f32 %v803, 0.044715
          %v868 = vmul.f32 %v804, 0.044715
          %v869 = vmul.f32 %v805, 0.044715
          %v870 = vmul.f32 %v806, 0.044715
          %v871 = vmul.f32 %v807, 0.044715
          %v872 = vmul.f32 %v808, 0.044715
          %v873 = vmul.f32 %v809, 0.044715
          %v874 = vmul.f32 %v810, 0.044715
          %v875 = vmul.f32 %v811, 0.044715
          %v876 = vmul.f32 %v812, 0.044715
          %v877 = vmul.f32 %v813, 0.044715
          %v878 = vmul.f32 %v814, 0.044715
          %v879 = vmul.f32 %v815, 0.044715
          %v880 = vmul.f32 %v816, 0.044715
          %v881 = vmul.f32 %v817, 0.044715
          %v882 = vmul.f32 %v818, 0.044715
          %v883 = vmul.f32 %v819, 0.044715
          %v884 = vmul.f32 %v820, 0.044715
          %v885 = vmul.f32 %v821, 0.044715
          %v886 = vmul.f32 %v822, 0.044715
          %v887 = vmul.f32 %v823, 0.044715
          %v888 = vmul.f32 %v824, 0.044715
          %v889 = vmul.f32 %v825, 0.044715
          %v890 = vmul.f32 %v826, 0.044715
          %v891 = vmul.f32 %v859, %v795
          %v892 = vmul.f32 %v860, %v796
          %v893 = vmul.f32 %v861, %v797
          %v894 = vmul.f32 %v862, %v798
          %v895 = vmul.f32 %v863, %v799
          %v896 = vmul.f32 %v864, %v800
          %v897 = vmul.f32 %v865, %v801
          %v898 = vmul.f32 %v866, %v802
          %v899 = vmul.f32 %v867, %v803
          %v900 = vmul.f32 %v868, %v804
          %v901 = vmul.f32 %v869, %v805
          %v902 = vmul.f32 %v870, %v806
          %v903 = vmul.f32 %v871, %v807
          %v904 = vmul.f32 %v872, %v808
          %v905 = vmul.f32 %v873, %v809
          %v906 = vmul.f32 %v874, %v810
          %v907 = vmul.f32 %v875, %v811
          %v908 = vmul.f32 %v876, %v812
          %v909 = vmul.f32 %v877, %v813
          %v910 = vmul.f32 %v878, %v814
          %v911 = vmul.f32 %v879, %v815
          %v912 = vmul.f32 %v880, %v816
          %v913 = vmul.f32 %v881, %v817
          %v914 = vmul.f32 %v882, %v818
          %v915 = vmul.f32 %v883, %v819
          %v916 = vmul.f32 %v884, %v820
          %v917 = vmul.f32 %v885, %v821
          %v918 = vmul.f32 %v886, %v822
          %v919 = vmul.f32 %v887, %v823
          %v920 = vmul.f32 %v888, %v824
          %v921 = vmul.f32 %v889, %v825
          %v922 = vmul.f32 %v890, %v826
          %v923 = vmul.f32 %v891, %v795
          %v924 = vmul.f32 %v892, %v796
          %v925 = vmul.f32 %v893, %v797
          %v926 = vmul.f32 %v894, %v798
          %v927 = vmul.f32 %v895, %v799
          %v928 = vmul.f32 %v896, %v800
          %v929 = vmul.f32 %v897, %v801
          %v930 = vmul.f32 %v898, %v802
          %v931 = vmul.f32 %v899, %v803
          %v932 = vmul.f32 %v900, %v804
          %v933 = vmul.f32 %v901, %v805
          %v934 = vmul.f32 %v902, %v806
          %v935 = vmul.f32 %v903, %v807
          %v936 = vmul.f32 %v904, %v808
          %v937 = vmul.f32 %v905, %v809
          %v938 = vmul.f32 %v906, %v810
          %v939 = vmul.f32 %v907, %v811
          %v940 = vmul.f32 %v908, %v812
          %v941 = vmul.f32 %v909, %v813
          %v942 = vmul.f32 %v910, %v814
          %v943 = vmul.f32 %v911, %v815
          %v944 = vmul.f32 %v912, %v816
          %v945 = vmul.f32 %v913, %v817
          %v946 = vmul.f32 %v914, %v818
          %v947 = vmul.f32 %v915, %v819
          %v948 = vmul.f32 %v916, %v820
          %v949 = vmul.f32 %v917, %v821
          %v950 = vmul.f32 %v918, %v822
          %v951 = vmul.f32 %v919, %v823
          %v952 = vmul.f32 %v920, %v824
          %v953 = vmul.f32 %v921, %v825
          %v954 = vmul.f32 %v922, %v826
          %v955 = vadd.f32 %v795, %v923
          %v956 = vadd.f32 %v796, %v924
          %v957 = vadd.f32 %v797, %v925
          %v958 = vadd.f32 %v798, %v926
          %v959 = vadd.f32 %v799, %v927
          %v960 = vadd.f32 %v800, %v928
          %v961 = vadd.f32 %v801, %v929
          %v962 = vadd.f32 %v802, %v930
          %v963 = vadd.f32 %v803, %v931
          %v964 = vadd.f32 %v804, %v932
          %v965 = vadd.f32 %v805, %v933
          %v966 = vadd.f32 %v806, %v934
          %v967 = vadd.f32 %v807, %v935
          %v968 = vadd.f32 %v808, %v936
          %v969 = vadd.f32 %v809, %v937
          %v970 = vadd.f32 %v810, %v938
          %v971 = vadd.f32 %v811, %v939
          %v972 = vadd.f32 %v812, %v940
          %v973 = vadd.f32 %v813, %v941
          %v974 = vadd.f32 %v814, %v942
          %v975 = vadd.f32 %v815, %v943
          %v976 = vadd.f32 %v816, %v944
          %v977 = vadd.f32 %v817, %v945
          %v978 = vadd.f32 %v818, %v946
          %v979 = vadd.f32 %v819, %v947
          %v980 = vadd.f32 %v820, %v948
          %v981 = vadd.f32 %v821, %v949
          %v982 = vadd.f32 %v822, %v950
          %v983 = vadd.f32 %v823, %v951
          %v984 = vadd.f32 %v824, %v952
          %v985 = vadd.f32 %v825, %v953
          %v986 = vadd.f32 %v826, %v954
          %v987 = vmul.f32 %v955, 0.7978846
          %v988 = vmul.f32 %v956, 0.7978846
          %v989 = vmul.f32 %v957, 0.7978846
          %v990 = vmul.f32 %v958, 0.7978846
          %v991 = vmul.f32 %v959, 0.7978846
          %v992 = vmul.f32 %v960, 0.7978846
          %v993 = vmul.f32 %v961, 0.7978846
          %v994 = vmul.f32 %v962, 0.7978846
          %v995 = vmul.f32 %v963, 0.7978846
          %v996 = vmul.f32 %v964, 0.7978846
          %v997 = vmul.f32 %v965, 0.7978846
          %v998 = vmul.f32 %v966, 0.7978846
          %v999 = vmul.f32 %v967, 0.7978846
          %v1000 = vmul.f32 %v968, 0.7978846
          %v1001 = vmul.f32 %v969, 0.7978846
          %v1002 = vmul.f32 %v970, 0.7978846
          %v1003 = vmul.f32 %v971, 0.7978846
          %v1004 = vmul.f32 %v972, 0.7978846
          %v1005 = vmul.f32 %v973, 0.7978846
          %v1006 = vmul.f32 %v974, 0.7978846
          %v1007 = vmul.f32 %v975, 0.7978846
          %v1008 = vmul.f32 %v976, 0.7978846
          %v1009 = vmul.f32 %v977, 0.7978846
          %v1010 = vmul.f32 %v978, 0.7978846
          %v1011 = vmul.f32 %v979, 0.7978846
          %v1012 = vmul.f32 %v980, 0.7978846
          %v1013 = vmul.f32 %v981, 0.7978846
          %v1014 = vmul.f32 %v982, 0.7978846
          %v1015 = vmul.f32 %v983, 0.7978846
          %v1016 = vmul.f32 %v984, 0.7978846
          %v1017 = vmul.f32 %v985, 0.7978846
          %v1018 = vmul.f32 %v986, 0.7978846
          %v1019 = vtanh.pop %v987
          %v1020 = vtanh.pop %v988
          %v1021 = vtanh.pop %v989
          %v1022 = vtanh.pop %v990
          %v1023 = vtanh.pop %v991
          %v1024 = vtanh.pop %v992
          %v1025 = vtanh.pop %v993
          %v1026 = vtanh.pop %v994
          %v1027 = vtanh.pop %v995
          %v1028 = vtanh.pop %v996
          %v1029 = vtanh.pop %v997
          %v1030 = vtanh.pop %v998
          %v1031 = vtanh.pop %v999
          %v1032 = vtanh.pop %v1000
          %v1033 = vtanh.pop %v1001
          %v1034 = vtanh.pop %v1002
          %v1035 = vtanh.pop %v1003
          %v1036 = vtanh.pop %v1004
          %v1037 = vtanh.pop %v1005
          %v1038 = vtanh.pop %v1006
          %v1039 = vtanh.pop %v1007
          %v1040 = vtanh.pop %v1008
          %v1041 = vtanh.pop %v1009
          %v1042 = vtanh.pop %v1010
          %v1043 = vtanh.pop %v1011
          %v1044 = vtanh.pop %v1012
          %v1045 = vtanh.pop %v1013
          %v1046 = vtanh.pop %v1014
          %v1047 = vtanh.pop %v1015
          %v1048 = vtanh.pop %v1016
          %v1049 = vtanh.pop %v1017
          %v1050 = vtanh.pop %v1018
          %v1051 = vadd.f32 %v1019, 1.0
          %v1052 = vadd.f32 %v1020, 1.0
          %v1053 = vadd.f32 %v1021, 1.0
          %v1054 = vadd.f32 %v1022, 1.0
          %v1055 = vadd.f32 %v1023, 1.0
          %v1056 = vadd.f32 %v1024, 1.0
          %v1057 = vadd.f32 %v1025, 1.0
          %v1058 = vadd.f32 %v1026, 1.0
          %v1059 = vadd.f32 %v1027, 1.0
          %v1060 = vadd.f32 %v1028, 1.0
          %v1061 = vadd.f32 %v1029, 1.0
          %v1062 = vadd.f32 %v1030, 1.0
          %v1063 = vadd.f32 %v1031, 1.0
          %v1064 = vadd.f32 %v1032, 1.0
          %v1065 = vadd.f32 %v1033, 1.0
          %v1066 = vadd.f32 %v1034, 1.0
          %v1067 = vadd.f32 %v1035, 1.0
          %v1068 = vadd.f32 %v1036, 1.0
          %v1069 = vadd.f32 %v1037, 1.0
          %v1070 = vadd.f32 %v1038, 1.0
          %v1071 = vadd.f32 %v1039, 1.0
          %v1072 = vadd.f32 %v1040, 1.0
          %v1073 = vadd.f32 %v1041, 1.0
          %v1074 = vadd.f32 %v1042, 1.0
          %v1075 = vadd.f32 %v1043, 1.0
          %v1076 = vadd.f32 %v1044, 1.0
          %v1077 = vadd.f32 %v1045, 1.0
          %v1078 = vadd.f32 %v1046, 1.0
          %v1079 = vadd.f32 %v1047, 1.0
          %v1080 = vadd.f32 %v1048, 1.0
          %v1081 = vadd.f32 %v1049, 1.0
          %v1082 = vadd.f32 %v1050, 1.0
          %v1083 = vmul.f32 %v827, %v1051
          %v1084 = vmul.f32 %v828, %v1052
          %v1085 = vmul.f32 %v829, %v1053
          %v1086 = vmul.f32 %v830, %v1054
          %v1087 = vmul.f32 %v831, %v1055
          %v1088 = vmul.f32 %v832, %v1056
          %v1089 = vmul.f32 %v833, %v1057
          %v1090 = vmul.f32 %v834, %v1058
          %v1091 = vmul.f32 %v835, %v1059
          %v1092 = vmul.f32 %v836, %v1060
          %v1093 = vmul.f32 %v837, %v1061
          %v1094 = vmul.f32 %v838, %v1062
          %v1095 = vmul.f32 %v839, %v1063
          %v1096 = vmul.f32 %v840, %v1064
          %v1097 = vmul.f32 %v841, %v1065
          %v1098 = vmul.f32 %v842, %v1066
          %v1099 = vmul.f32 %v843, %v1067
          %v1100 = vmul.f32 %v844, %v1068
          %v1101 = vmul.f32 %v845, %v1069
          %v1102 = vmul.f32 %v846, %v1070
          %v1103 = vmul.f32 %v847, %v1071
          %v1104 = vmul.f32 %v848, %v1072
          %v1105 = vmul.f32 %v849, %v1073
          %v1106 = vmul.f32 %v850, %v1074
          %v1107 = vmul.f32 %v851, %v1075
          %v1108 = vmul.f32 %v852, %v1076
          %v1109 = vmul.f32 %v853, %v1077
          %v1110 = vmul.f32 %v854, %v1078
          %v1111 = vmul.f32 %v855, %v1079
          %v1112 = vmul.f32 %v856, %v1080
          %v1113 = vmul.f32 %v857, %v1081
          %v1114 = vmul.f32 %v858, %v1082
          %v1115 = vpack.c.bf16 %v1085, %v1083
          %v1116 = vpack.c.bf16 %v1086, %v1084
          %v1117 = vpack.c.bf16 %v1089, %v1087
          %v1118 = vpack.c.bf16 %v1090, %v1088
          %v1119 = vpack.c.bf16 %v1093, %v1091
          %v1120 = vpack.c.bf16 %v1094, %v1092
          %v1121 = vpack.c.bf16 %v1097, %v1095
          %v1122 = vpack.c.bf16 %v1098, %v1096
          %v1123 = vpack.c.bf16 %v1101, %v1099
          %v1124 = vpack.c.bf16 %v1102, %v1100
          %v1125 = vpack.c.bf16 %v1105, %v1103
          %v1126 = vpack.c.bf16 %v1106, %v1104
          %v1127 = vpack.c.bf16 %v1109, %v1107
          %v1128 = vpack.c.bf16 %v1110, %v1108
          %v1129 = vpack.c.bf16 %v1113, %v1111
          %v1130 = vpack.c.bf16 %v1114, %v1112
          %v1147 = vunpack.c.l.b16 %v1115
          %v1148 = vunpack.c.l.b16 %v1116
          %v1149 = vunpack.c.h.b16 %v1115
          %v1150 = vunpack.c.h.b16 %v1116
          %v1151 = vunpack.c.l.b16 %v1117
          %v1152 = vunpack.c.l.b16 %v1118
          %v1153 = vunpack.c.h.b16 %v1117
          %v1154 = vunpack.c.h.b16 %v1118
          %v1155 = vunpack.c.l.b16 %v1119
          %v1156 = vunpack.c.l.b16 %v1120
          %v1157 = vunpack.c.h.b16 %v1119
          %v1158 = vunpack.c.h.b16 %v1120
          %v1159 = vunpack.c.l.b16 %v1121
          %v1160 = vunpack.c.l.b16 %v1122
          %v1161 = vunpack.c.h.b16 %v1121
          %v1162 = vunpack.c.h.b16 %v1122
          %v1163 = vunpack.c.l.b16 %v1123
          %v1164 = vunpack.c.l.b16 %v1124
          %v1165 = vunpack.c.h.b16 %v1123
          %v1166 = vunpack.c.h.b16 %v1124
          %v1167 = vunpack.c.l.b16 %v1125
          %v1168 = vunpack.c.l.b16 %v1126
          %v1169 = vunpack.c.h.b16 %v1125
          %v1170 = vunpack.c.h.b16 %v1126
          %v1171 = vunpack.c.l.b16 %v1127
          %v1172 = vunpack.c.l.b16 %v1128
          %v1173 = vunpack.c.h.b16 %v1127
          %v1174 = vunpack.c.h.b16 %v1128
          %v1175 = vunpack.c.l.b16 %v1129
          %v1176 = vunpack.c.l.b16 %v1130
          %v1177 = vunpack.c.h.b16 %v1129
          %v1178 = vunpack.c.h.b16 %v1130
          %v1179 = vpack.c.b16 %v1148, %v1147
          %v1180 = vpack.c.b16 %v1150, %v1149
          %v1181 = vpack.c.b16 %v1152, %v1151
          %v1182 = vpack.c.b16 %v1154, %v1153
          %v1183 = vpack.c.b16 %v1156, %v1155
          %v1184 = vpack.c.b16 %v1158, %v1157
          %v1185 = vpack.c.b16 %v1160, %v1159
          %v1186 = vpack.c.b16 %v1162, %v1161
          %v1187 = vpack.c.b16 %v1164, %v1163
          %v1188 = vpack.c.b16 %v1166, %v1165
          %v1189 = vpack.c.b16 %v1168, %v1167
          %v1190 = vpack.c.b16 %v1170, %v1169
          %v1191 = vpack.c.b16 %v1172, %v1171
          %v1192 = vpack.c.b16 %v1174, %v1173
          %v1193 = vpack.c.b16 %v1176, %v1175
          %v1194 = vpack.c.b16 %v1178, %v1177
          %1211 = vst [vmem:[%s323] sm:$0xff] %v1179
          %1212 = vst [vmem:[%s323 + $0x8] sm:$0xff] %v1180
          %1213 = vst [vmem:[%s323 + $0x10] sm:$0xff] %v1181
          %1214 = vst [vmem:[%s323 + $0x18] sm:$0xff] %v1182
          %1215 = vst [vmem:[%s323 + $0x20] sm:$0xff] %v1183
          %1216 = vst [vmem:[%s323 + $0x28] sm:$0xff] %v1184
          %1217 = vst [vmem:[%s323 + $0x30] sm:$0xff] %v1185
          %1218 = vst [vmem:[%s323 + $0x38] sm:$0xff] %v1186
          %1219 = vst [vmem:[%s323 + $0x40] sm:$0xff] %v1187
          %1220 = vst [vmem:[%s323 + $0x48] sm:$0xff] %v1188
          %1221 = vst [vmem:[%s323 + $0x50] sm:$0xff] %v1189
          %1222 = vst [vmem:[%s323 + $0x58] sm:$0xff] %v1190
          %1223 = vst [vmem:[%s323 + $0x60] sm:$0xff] %v1191
          %1224 = vst [vmem:[%s323 + $0x68] sm:$0xff] %v1192
          %1225 = vst [vmem:[%s323 + $0x70] sm:$0xff] %v1193
          %1226 = vst [vmem:[%s323 + $0x78] sm:$0xff] %v1194
        $region78: #{run.15} parent=65 // pred_fallthru
          _
        %s1227 = sand.u32 %s125, 1
        %s1228 = sand.u32 %s125, 1
        %s1229 = smul.addr %s1228, 128
        %s1230 = scalar_lea.vmem [#allocation4], %s1229
        // Predicated region
        $region79: #{run.15} parent=65 // pred_check
          %p1231 = pneg %p135
        $region80: #{run.15} parent=65 // pred_check_branch
          %1233 = sbr.rel (%p1231) target = $region82
        $region81: #{run.15} parent=65 // pred_region
          %s1234 = smul.u32 16, %s19
          %s1235 = smul.u32 2, %s20
          %s1236 = smul.addr %s1234, 4
          %s1237 = sadd.s32 %s1235, %s1236
          %s1238 = smul.addr %s1237, 4
          %s1239 = scalar_lea.vmem %s3, %s1238
          // Predicated region
          $region83: #{run.15} parent=81 // pred_check
            _
          $region84: #{run.15} parent=81 // pred_check_branch
            %1241 = sbr.rel (0) target = $region86
          $region85: #{run.15} parent=81 // pred_region
            // Predicated region
            $region87: #{run.15} parent=85 // pred_check
              _
            $region88: #{run.15} parent=85 // pred_check_branch
              %1243 = sbr.rel (0) target = $region90
            $region89: #{run.15} parent=85 // pred_region
              // Predicated region
              $region102: #{run.15} parent=89 // pred_check
                _
              $region103: #{run.15} parent=89 // pred_check_branch
                %1288 = sbr.rel (0) target = $region105
              $region104: #{run.15} parent=89 // pred_region
                loop: start=0, step=1, limit=1
                $region106: #{run.15} parent=104 // loop_pre_header
                  _
                $region107: #{run.15} parent=104 // loop_header
                  %s1290 = sphi 0, %s1294
                  %p1291 = scmp.ge.s32.totalorder %s1290, 1
                  %s1295 = sphi %s1230, %s1230
                  %s1296 = sphi %s1239, %s1239
                $region108: #{run.15} parent=104 // loop_header_branch
                  %1293 = sbr.rel (%p1291) target = $region112
                $region109: #{run.15} parent=104 // loop_body
                  %v1297 = vld [vmem:[%s1295] sm:$0xff]
                  %1298 = vst [vmem:[%s1296] sm:$0xff] %v1297
                  %v1299 = vld [vmem:[%s1295 + $0x8] sm:$0xff]
                  %1300 = vst [vmem:[%s1296 + $0x10] sm:$0xff] %v1299
                  %v1301 = vld [vmem:[%s1295 + $0x10] sm:$0xff]
                  %1302 = vst [vmem:[%s1296 + $0x20] sm:$0xff] %v1301
                  %v1303 = vld [vmem:[%s1295 + $0x18] sm:$0xff]
                  %1304 = vst [vmem:[%s1296 + $0x30] sm:$0xff] %v1303
                  %v1305 = vld [vmem:[%s1295 + $0x20] sm:$0xff]
                  %1306 = vst [vmem:[%s1296 + $0x40] sm:$0xff] %v1305
                  %v1307 = vld [vmem:[%s1295 + $0x28] sm:$0xff]
                  %1308 = vst [vmem:[%s1296 + $0x50] sm:$0xff] %v1307
                  %v1309 = vld [vmem:[%s1295 + $0x30] sm:$0xff]
                  %1310 = vst [vmem:[%s1296 + $0x60] sm:$0xff] %v1309
                  %v1311 = vld [vmem:[%s1295 + $0x38] sm:$0xff]
                  %1312 = vst [vmem:[%s1296 + $0x70] sm:$0xff] %v1311
                  %v1313 = vld [vmem:[%s1295 + $0x40] sm:$0xff]
                  %1314 = vst [vmem:[%s1296 + $0x80] sm:$0xff] %v1313
                  %v1315 = vld [vmem:[%s1295 + $0x48] sm:$0xff]
                  %1316 = vst [vmem:[%s1296 + $0x90] sm:$0xff] %v1315
                  %v1317 = vld [vmem:[%s1295 + $0x50] sm:$0xff]
                  %1318 = vst [vmem:[%s1296 + $0xa0] sm:$0xff] %v1317
                  %v1319 = vld [vmem:[%s1295 + $0x58] sm:$0xff]
                  %1320 = vst [vmem:[%s1296 + $0xb0] sm:$0xff] %v1319
                  %v1321 = vld [vmem:[%s1295 + $0x60] sm:$0xff]
                  %1322 = vst [vmem:[%s1296 + $0xc0] sm:$0xff] %v1321
                  %v1323 = vld [vmem:[%s1295 + $0x68] sm:$0xff]
                  %1324 = vst [vmem:[%s1296 + $0xd0] sm:$0xff] %v1323
                  %v1325 = vld [vmem:[%s1295 + $0x70] sm:$0xff]
                  %1326 = vst [vmem:[%s1296 + $0xe0] sm:$0xff] %v1325
                  %v1327 = vld [vmem:[%s1295 + $0x78] sm:$0xff]
                  %1328 = vst [vmem:[%s1296 + $0xf0] sm:$0xff] %v1327
                $region110: #{run.15} parent=104 // loop_footer
                  %s1294 = sadd.s32 1, %s1290
                $region111: #{run.15} parent=104 // loop_footer_branch
                  %1289 = sbr.rel target = $region107
                $region112: #{run.15} parent=104 // loop_exit
                  _
              $region105: #{run.15} parent=89 // pred_fallthru
                _
              // Predicated region
              $region113: #{run.15} parent=89 // pred_check
                _
              $region114: #{run.15} parent=89 // pred_check_branch
                %1330 = sbr.rel target = $region116
              $region115: #{run.15} parent=89 // pred_region
                _
              $region116: #{run.15} parent=89 // pred_fallthru
                _
            $region90: #{run.15} parent=85 // pred_fallthru
              _
            // Predicated region
            $region91: #{run.15} parent=85 // pred_check
              _
            $region92: #{run.15} parent=85 // pred_check_branch
              %1245 = sbr.rel target = $region94
            $region93: #{run.15} parent=85 // pred_region
              loop: start=0, step=1, limit=1
              $region95: #{run.15} parent=93 // loop_pre_header
                _
              $region96: #{run.15} parent=93 // loop_header
                %s1248 = sphi 0, %s1252
                %p1249 = scmp.ge.s32.totalorder %s1248, 1
                %s1253 = sphi %s1230, %s1230
                %s1254 = sphi %s1239, %s1239
              $region97: #{run.15} parent=93 // loop_header_branch
                %1251 = sbr.rel (%p1249) target = $region101
              $region98: #{run.15} parent=93 // loop_body
                %v1255 = vld [vmem:[%s1253] sm:$0xff]
                %1256 = vst [vmem:[%s1254] sm:$0xff] %v1255
                %v1257 = vld [vmem:[%s1253 + $0x8] sm:$0xff]
                %1258 = vst [vmem:[%s1254 + $0x10] sm:$0xff] %v1257
                %v1259 = vld [vmem:[%s1253 + $0x10] sm:$0xff]
                %1260 = vst [vmem:[%s1254 + $0x20] sm:$0xff] %v1259
                %v1261 = vld [vmem:[%s1253 + $0x18] sm:$0xff]
                %1262 = vst [vmem:[%s1254 + $0x30] sm:$0xff] %v1261
                %v1263 = vld [vmem:[%s1253 + $0x20] sm:$0xff]
                %1264 = vst [vmem:[%s1254 + $0x40] sm:$0xff] %v1263
                %v1265 = vld [vmem:[%s1253 + $0x28] sm:$0xff]
                %1266 = vst [vmem:[%s1254 + $0x50] sm:$0xff] %v1265
                %v1267 = vld [vmem:[%s1253 + $0x30] sm:$0xff]
                %1268 = vst [vmem:[%s1254 + $0x60] sm:$0xff] %v1267
                %v1269 = vld [vmem:[%s1253 + $0x38] sm:$0xff]
                %1270 = vst [vmem:[%s1254 + $0x70] sm:$0xff] %v1269
                %v1271 = vld [vmem:[%s1253 + $0x40] sm:$0xff]
                %1272 = vst [vmem:[%s1254 + $0x80] sm:$0xff] %v1271
                %v1273 = vld [vmem:[%s1253 + $0x48] sm:$0xff]
                %1274 = vst [vmem:[%s1254 + $0x90] sm:$0xff] %v1273
                %v1275 = vld [vmem:[%s1253 + $0x50] sm:$0xff]
                %1276 = vst [vmem:[%s1254 + $0xa0] sm:$0xff] %v1275
                %v1277 = vld [vmem:[%s1253 + $0x58] sm:$0xff]
                %1278 = vst [vmem:[%s1254 + $0xb0] sm:$0xff] %v1277
                %v1279 = vld [vmem:[%s1253 + $0x60] sm:$0xff]
                %1280 = vst [vmem:[%s1254 + $0xc0] sm:$0xff] %v1279
                %v1281 = vld [vmem:[%s1253 + $0x68] sm:$0xff]
                %1282 = vst [vmem:[%s1254 + $0xd0] sm:$0xff] %v1281
                %v1283 = vld [vmem:[%s1253 + $0x70] sm:$0xff]
                %1284 = vst [vmem:[%s1254 + $0xe0] sm:$0xff] %v1283
                %v1285 = vld [vmem:[%s1253 + $0x78] sm:$0xff]
                %1286 = vst [vmem:[%s1254 + $0xf0] sm:$0xff] %v1285
              $region99: #{run.15} parent=93 // loop_footer
                %s1252 = sadd.s32 1, %s1248
              $region100: #{run.15} parent=93 // loop_footer_branch
                %1247 = sbr.rel target = $region96
              $region101: #{run.15} parent=93 // loop_exit
                _
            $region94: #{run.15} parent=85 // pred_fallthru
              _
          $region86: #{run.15} parent=81 // pred_fallthru
            _
          %1331 = vnop
        $region82: #{run.15} parent=65 // pred_fallthru
          _
      $region66: #{run.15} parent=5 // pred_fallthru
        _
      %p1332 = scmp.le.s32.totalorder 2, %s9
      // Predicated region
      $region117: #{run.15} parent=5 // pred_check
        %p1333 = pneg %p1332
      $region118: #{run.15} parent=5 // pred_check_branch
        %1335 = sbr.rel (%p1333) target = $region120
      $region119: #{run.15} parent=5 // pred_region
        %s1336 = ssub.s32 %s9, 2
        // Predicated region
        $region121: #{run.15} parent=119 // pred_check
          %p1337 = pneg %p141
        $region122: #{run.15} parent=119 // pred_check_branch
          %1339 = sbr.rel (%p1337) target = $region124
        $region123: #{run.15} parent=119 // pred_region
          %s1340 = sand.u32 %s126, 1
          %s1341 = sand.u32 %s126, 1
          %s1342 = smul.addr %s1341, 128
          %s1343 = scalar_lea.vmem [#allocation4], %s1342
        $region124: #{run.15} parent=119 // pred_fallthru
          _
      $region120: #{run.15} parent=5 // pred_fallthru
        _
    $region6: #{run.15} parent=1 // loop_footer
      %s13 = sadd.s32 1, %s9
    $region7: #{run.15} parent=1 // loop_footer_branch
      %8 = sbr.rel target = $region3
    $region8: #{run.15} parent=1 // loop_exit
      _

// kernel: run.16
$region0: #{run.16}
  #allocation0 [shape = 'u32[]', space=smem, size = 0x4, offset = 0x4, fixed_abs, tag = 'smem constant byte address 0x4 - core index']
  #allocation1 [shape = 'u32[144,128]{1,0:T(1,128)}', space=vmem, size = 0x12000, scoped, tag = 'internal scratch']
  #allocation2 [shape = 'f32[128,128]{1,0:T(8,128)}', space=vmem, size = 0x10000, scoped, tag = 'scratch operand']
  %s0 = inlined_call_operand.vmem [shape: bf16[256,512], index: 0, kind: input, shape index: {}]
  %s1 = inlined_call_operand.vmem [shape: bf16[512,128], index: 1, kind: input, shape index: {}]
  %s2 = inlined_call_operand.vmem [shape: f32[1,128], index: 2, kind: input, shape index: {}]
  %s3 = inlined_call_operand.vmem [shape: bf16[256,128], index: 3, kind: input, shape index: {}]
  %s4 = inlined_call_operand.vmem [shape: f32[1,128], index: 4, kind: input, shape index: {}]
  %s5 = inlined_call_operand.vmem [shape: f32[1,128], index: 5, kind: input, shape index: {}]
  %s6 = inlined_call_operand.vmem [shape: bf16[256,128], index: 6, kind: output, shape index: {}]
  %s7 = sld [smem:[#allocation0]]
  $region65: #{run.16} parent=0
    _
  %s9 = ssub.s32 1, %s7
  %s10 = scalar_select 0, %s9, %s7
  loop: start=0, step=1, limit=4
  $region2: #{run.16} parent=0 // loop_pre_header
    _
  $region3: #{run.16} parent=0 // loop_header
    %s12 = sphi 0, %s16
    %p13 = scmp.ge.s32.totalorder %s12, 4
    %s19 = sphi 0, %s31
    %s20 = sphi 0, %s27
    %s21 = sphi 0, %s19
    %s22 = sphi 0, %s20
    %s23 = sphi 0, %s21
    %s24 = sphi 0, %s22
    %s36 = sphi 0, %s38
    %s39 = sphi 0, %s36
    %s40 = sphi 0, %s39
    %s56 = sphi 0, %s40
    %s62 = sphi 0, %s64
    %s65 = sphi 0, %s62
    %s66 = sphi 0, %s65
    %s82 = sphi 0, %s66
    %s86 = sphi 0, %s86
    %s88 = sphi 0, %s86
    %s89 = sphi 0, %s88
    %s103 = sphi 0, %s89
    %s109 = sphi 0, %s111
    %s112 = sphi 0, %s109
    %s113 = sphi 0, %s112
    %s129 = sphi 0, %s113
    %s133 = sphi 0, %s133
    %s135 = sphi 0, %s133
    %s136 = sphi 0, %s135
    %s150 = sphi 0, %s136
    %s154 = sphi 0, %s154
    %s156 = sphi 0, %s154
    %s157 = sphi 0, %s156
    %s171 = sphi 0, %s157
    %s177 = sphi 0, %s179
    %s180 = sphi 0, %s177
    %s181 = sphi 0, %s180
    %s197 = sphi 0, %s181
  $region4: #{run.16} parent=0 // loop_header_branch
    %15 = sbr.rel (%p13) target = $region8
  $region5: #{run.16} parent=0 // loop_body
    %s17 = ssub.s32 %s12, 1
    %s18 = ssub.s32 %s12, 2
    %s25 = sadd.s32 1, %s20
    %p26 = scmp.ge.s32.totalorder %s25, 1
    %s27 = scalar_select %p26, 0, %s25
    %s28 = sadd.s32 1, %s19
    %s29 = scalar_select %p26, %s28, %s19
    %p30 = scmp.ge.s32.totalorder %s29, 2
    %s31 = scalar_select %p30, 0, %s29
    %s32 = ssub.s32 %s19, %s31
    %s33 = ssub.s32 %s20, %s27
    %s34 = sor.u32 %s32, %s33
    %p35 = scmp.eq.s32.totalorder %s34, 0
    %s37 = sadd.s32 %s36, 1
    %s38 = scalar_select %p35, %s36, %s37
    %p41 = pneg %p35
    %p42 = scmp.eq.s32.totalorder %s12, 1
    %p43 = por %p41, %p42
    %p44 = scmp.ne.s32.totalorder %s36, %s39
    %p45 = scmp.eq.s32.totalorder %s12, 0
    %p46 = por %p44, %p45
    %p47 = scmp.ne.s32.totalorder %s36, %s39
    %p48 = scmp.eq.s32.totalorder %s17, 1
    %p49 = por %p47, %p48
    %p50 = scmp.ne.s32.totalorder %s39, %s40
    %p51 = scmp.eq.s32.totalorder %s17, 0
    %p52 = por %p50, %p51
    %p53 = scmp.ne.s32.totalorder %s39, %s40
    %p54 = scmp.eq.s32.totalorder %s18, 1
    %p55 = por %p53, %p54
    %p57 = scmp.ne.s32.totalorder %s40, %s56
    %p58 = scmp.eq.s32.totalorder %s18, 0
    %p59 = por %p57, %p58
    %s60 = ssub.s32 %s20, %s27
    %p61 = scmp.eq.s32.totalorder %s60, 0
    %s63 = sadd.s32 %s62, 1
    %s64 = scalar_select %p61, %s62, %s63
    %p67 = pneg %p61
    %p68 = scmp.eq.s32.totalorder %s12, 1
    %p69 = por %p67, %p68
    %p70 = scmp.ne.s32.totalorder %s62, %s65
    %p71 = scmp.eq.s32.totalorder %s12, 0
    %p72 = por %p70, %p71
    %p73 = scmp.ne.s32.totalorder %s62, %s65
    %p74 = scmp.eq.s32.totalorder %s17, 1
    %p75 = por %p73, %p74
    %p76 = scmp.ne.s32.totalorder %s65, %s66
    %p77 = scmp.eq.s32.totalorder %s17, 0
    %p78 = por %p76, %p77
    %p79 = scmp.ne.s32.totalorder %s65, %s66
    %p80 = scmp.eq.s32.totalorder %s18, 1
    %p81 = por %p79, %p80
    %p83 = scmp.ne.s32.totalorder %s66, %s82
    %p84 = scmp.eq.s32.totalorder %s18, 0
    %p85 = por %p83, %p84
    %s87 = sadd.s32 %s86, 1
    %p90 = scmp.eq.s32.totalorder %s12, 1
    %p91 = scmp.ne.s32.totalorder %s86, %s88
    %p92 = scmp.eq.s32.totalorder %s12, 0
    %p93 = por %p91, %p92
    %p94 = scmp.ne.s32.totalorder %s86, %s88
    %p95 = scmp.eq.s32.totalorder %s17, 1
    %p96 = por %p94, %p95
    %p97 = scmp.ne.s32.totalorder %s88, %s89
    %p98 = scmp.eq.s32.totalorder %s17, 0
    %p99 = por %p97, %p98
    %p100 = scmp.ne.s32.totalorder %s88, %s89
    %p101 = scmp.eq.s32.totalorder %s18, 1
    %p102 = por %p100, %p101
    %p104 = scmp.ne.s32.totalorder %s89, %s103
    %p105 = scmp.eq.s32.totalorder %s18, 0
    %p106 = por %p104, %p105
    %s107 = ssub.s32 %s19, %s31
    %p108 = scmp.eq.s32.totalorder %s107, 0
    %s110 = sadd.s32 %s109, 1
    %s111 = scalar_select %p108, %s109, %s110
    %p114 = pneg %p108
    %p115 = scmp.eq.s32.totalorder %s12, 1
    %p116 = por %p114, %p115
    %p117 = scmp.ne.s32.totalorder %s109, %s112
    %p118 = scmp.eq.s32.totalorder %s12, 0
    %p119 = por %p117, %p118
    %p120 = scmp.ne.s32.totalorder %s109, %s112
    %p121 = scmp.eq.s32.totalorder %s17, 1
    %p122 = por %p120, %p121
    %p123 = scmp.ne.s32.totalorder %s112, %s113
    %p124 = scmp.eq.s32.totalorder %s17, 0
    %p125 = por %p123, %p124
    %p126 = scmp.ne.s32.totalorder %s112, %s113
    %p127 = scmp.eq.s32.totalorder %s18, 1
    %p128 = por %p126, %p127
    %p130 = scmp.ne.s32.totalorder %s113, %s129
    %p131 = scmp.eq.s32.totalorder %s18, 0
    %p132 = por %p130, %p131
    %s134 = sadd.s32 %s133, 1
    %p137 = scmp.eq.s32.totalorder %s12, 1
    %p138 = scmp.ne.s32.totalorder %s133, %s135
    %p139 = scmp.eq.s32.totalorder %s12, 0
    %p140 = por %p138, %p139
    %p141 = scmp.ne.s32.totalorder %s133, %s135
    %p142 = scmp.eq.s32.totalorder %s17, 1
    %p143 = por %p141, %p142
    %p144 = scmp.ne.s32.totalorder %s135, %s136
    %p145 = scmp.eq.s32.totalorder %s17, 0
    %p146 = por %p144, %p145
    %p147 = scmp.ne.s32.totalorder %s135, %s136
    %p148 = scmp.eq.s32.totalorder %s18, 1
    %p149 = por %p147, %p148
    %p151 = scmp.ne.s32.totalorder %s136, %s150
    %p152 = scmp.eq.s32.totalorder %s18, 0
    %p153 = por %p151, %p152
    %s155 = sadd.s32 %s154, 1
    %p158 = scmp.eq.s32.totalorder %s12, 1
    %p159 = scmp.ne.s32.totalorder %s154, %s156
    %p160 = scmp.eq.s32.totalorder %s12, 0
    %p161 = por %p159, %p160
    %p162 = scmp.ne.s32.totalorder %s154, %s156
    %p163 = scmp.eq.s32.totalorder %s17, 1
    %p164 = por %p162, %p163
    %p165 = scmp.ne.s32.totalorder %s156, %s157
    %p166 = scmp.eq.s32.totalorder %s17, 0
    %p167 = por %p165, %p166
    %p168 = scmp.ne.s32.totalorder %s156, %s157
    %p169 = scmp.eq.s32.totalorder %s18, 1
    %p170 = por %p168, %p169
    %p172 = scmp.ne.s32.totalorder %s157, %s171
    %p173 = scmp.eq.s32.totalorder %s18, 0
    %p174 = por %p172, %p173
    %s175 = ssub.s32 %s19, %s31
    %p176 = scmp.eq.s32.totalorder %s175, 0
    %s178 = sadd.s32 %s177, 1
    %s179 = scalar_select %p176, %s177, %s178
    %p182 = pneg %p176
    %p183 = scmp.eq.s32.totalorder %s12, 1
    %p184 = por %p182, %p183
    %p185 = scmp.ne.s32.totalorder %s177, %s180
    %p186 = scmp.eq.s32.totalorder %s12, 0
    %p187 = por %p185, %p186
    %p188 = scmp.ne.s32.totalorder %s177, %s180
    %p189 = scmp.eq.s32.totalorder %s17, 1
    %p190 = por %p188, %p189
    %p191 = scmp.ne.s32.totalorder %s180, %s181
    %p192 = scmp.eq.s32.totalorder %s17, 0
    %p193 = por %p191, %p192
    %p194 = scmp.ne.s32.totalorder %s180, %s181
    %p195 = scmp.eq.s32.totalorder %s18, 1
    %p196 = por %p194, %p195
    %p198 = scmp.ne.s32.totalorder %s181, %s197
    %p199 = scmp.eq.s32.totalorder %s18, 0
    %p200 = por %p198, %p199
    %p201 = scmp.le.s32.totalorder 1, %s12
    %p202 = scmp.lt.s32.totalorder %s12, 3
    %p203 = pnand %p201, %p202
    %p204 = pneg %p203
    // Predicated region
    $region9: #{run.16} parent=5 // pred_check
      _
    $region10: #{run.16} parent=5 // pred_check_branch
      %206 = sbr.rel (%p203) target = $region12
    $region11: #{run.16} parent=5 // pred_region
      %s207 = ssub.s32 %s12, 1
      // Predicated region
      $region13: #{run.16} parent=11 // pred_check
        %p208 = pneg %p78
      $region14: #{run.16} parent=11 // pred_check_branch
        %210 = sbr.rel (%p208) target = $region16
      $region15: #{run.16} parent=11 // pred_region
        %s211 = smul.u32 64, %s22
        %p212 = scmp.lt.s32.totalorder %s211, 63
        %s213 = scalar_select %p212, %s211, 63
        %s214 = smul.addr %s213, 4
        %s215 = scalar_lea.vmem %s1, %s214
        %s216 = smul.u32 64, %s22
      $region16: #{run.16} parent=11 // pred_fallthru
        _
      // Predicated region
      $region17: #{run.16} parent=11 // pred_check
        %p217 = pneg %p99
      $region18: #{run.16} parent=11 // pred_check_branch
        %219 = sbr.rel (%p217) target = $region20
      $region19: #{run.16} parent=11 // pred_region
        _
      $region20: #{run.16} parent=11 // pred_fallthru
        _
      // Predicated region
      $region21: #{run.16} parent=11 // pred_check
        %p220 = pneg %p146
      $region22: #{run.16} parent=11 // pred_check_branch
        %222 = sbr.rel (%p220) target = $region24
      $region23: #{run.16} parent=11 // pred_region
        _
      $region24: #{run.16} parent=11 // pred_fallthru
        _
      // Predicated region
      $region25: #{run.16} parent=11 // pred_check
        %p223 = pneg %p167
      $region26: #{run.16} parent=11 // pred_check_branch
        %225 = sbr.rel (%p223) target = $region28
      $region27: #{run.16} parent=11 // pred_region
        _
      $region28: #{run.16} parent=11 // pred_fallthru
        _
    $region12: #{run.16} parent=5 // pred_fallthru
      _
    %p226 = scmp.lt.s32.totalorder %s12, 2
    // Predicated region
    $region29: #{run.16} parent=5 // pred_check
      %p227 = pneg %p226
    $region30: #{run.16} parent=5 // pred_check_branch
      %229 = sbr.rel (%p227) target = $region32
    $region31: #{run.16} parent=5 // pred_region
      // Predicated region
      $region33: #{run.16} parent=31 // pred_check
        %p230 = pneg %p46
      $region34: #{run.16} parent=31 // pred_check_branch
        %232 = sbr.rel (%p230) target = $region36
      $region35: #{run.16} parent=31 // pred_region
        %s233 = smul.u32 16, %s19
        %s234 = smul.u32 4, %s20
        %p235 = scmp.lt.s32.totalorder %s233, 31
        %s236 = scalar_select %p235, %s233, 31
        %p237 = scmp.lt.s32.totalorder %s234, 3
        %s238 = scalar_select %p237, %s234, 3
        %s239 = smul.addr %s236, 4
        %s240 = sadd.s32 %s238, %s239
        %s241 = smul.addr %s240, 4
        %s242 = scalar_lea.vmem %s0, %s241
        %s243 = smul.u32 16, %s19
        %s244 = smul.u32 4, %s20
      $region36: #{run.16} parent=31 // pred_fallthru
        _
      // Predicated region
      $region37: #{run.16} parent=31 // pred_check
        %p245 = pneg %p119
      $region38: #{run.16} parent=31 // pred_check_branch
        %247 = sbr.rel (%p245) target = $region40
      $region39: #{run.16} parent=31 // pred_region
        %s248 = smul.u32 16, %s19
        %p249 = scmp.lt.s32.totalorder %s248, 31
        %s250 = scalar_select %p249, %s248, 31
        %s251 = smul.addr %s250, 4
        %s252 = scalar_lea.vmem %s3, %s251
        %s253 = smul.u32 16, %s19
      $region40: #{run.16} parent=31 // pred_fallthru
        _
    $region32: #{run.16} parent=5 // pred_fallthru
      _
    %p254 = scmp.le.s32.totalorder 1, %s12
    %p255 = scmp.lt.s32.totalorder %s12, 3
    %p256 = pnand %p254, %p255
    %p257 = pneg %p256
    // Predicated region
    $region41: #{run.16} parent=5 // pred_check
      _
    $region42: #{run.16} parent=5 // pred_check_branch
      %259 = sbr.rel (%p256) target = $region44
    $region43: #{run.16} parent=5 // pred_region
      %s260 = ssub.s32 %s12, 1
      %s261 = smul.u32 16, %s21
      %s262 = smul.u32 4, %s22
      %p263 = scmp.lt.s32.totalorder %s261, 31
      %s264 = scalar_select %p263, %s261, 31
      %p265 = scmp.lt.s32.totalorder %s262, 3
      %s266 = scalar_select %p265, %s262, 3
      %s267 = smul.addr %s264, 4
      %s268 = sadd.s32 %s266, %s267
      %s269 = smul.addr %s268, 4
      %s270 = scalar_lea.vmem %s0, %s269
      %p271 = pneg %p52
      %p272 = pneg %p49
      %s273 = smul.u32 64, %s22
      %p274 = scmp.lt.s32.totalorder %s273, 63
      %s275 = scalar_select %p274, %s273, 63
      %s276 = smul.addr %s275, 4
      %s277 = scalar_lea.vmem %s1, %s276
      %p278 = pneg %p78
      %p279 = pneg %p75
      %p280 = pneg %p99
      %p281 = pneg %p96
      %s282 = smul.u32 16, %s21
      %p283 = scmp.lt.s32.totalorder %s282, 31
      %s284 = scalar_select %p283, %s282, 31
      %s285 = smul.addr %s284, 4
      %s286 = scalar_lea.vmem %s3, %s285
      %p287 = pneg %p125
      %p288 = pneg %p122
      %p289 = pneg %p146
      %p290 = pneg %p143
      %p291 = pneg %p167
      %p292 = pneg %p164
      %p293 = pneg %p193
      %p294 = pneg %p190
      %s295 = smul.u32 16, %s21
      %p296 = scmp.lt.s32.totalorder %s295, 31
      %s297 = scalar_select %p296, %s295, 31
      %s298 = smul.addr %s297, 4
      %s299 = scalar_lea.vmem %s6, %s298
      %s300 = smul.u32 16, %s21
      %s301 = smul.u32 4, %s22
      %p302 = scmp.lt.s32.totalorder %s300, 31
      %s303 = scalar_select %p302, %s300, 31
      %p304 = scmp.lt.s32.totalorder %s301, 3
      %s305 = scalar_select %p304, %s301, 3
      %s306 = smul.addr %s303, 4
      %s307 = sadd.s32 %s305, %s306
      %s308 = smul.addr %s307, 4
      %s309 = scalar_lea.vmem %s0, %s308
      %s310 = smul.u32 16, %s21
      %s311 = smul.u32 4, %s22
      %s312 = smul.u32 64, %s22
      %p313 = scmp.lt.s32.totalorder %s312, 63
      %s314 = scalar_select %p313, %s312, 63
      %s315 = smul.addr %s314, 4
      %s316 = scalar_lea.vmem %s1, %s315
      %s317 = smul.u32 64, %s22
      %s318 = smul.u32 16, %s21
      %p319 = scmp.lt.s32.totalorder %s318, 31
      %s320 = scalar_select %p319, %s318, 31
      %s321 = smul.addr %s320, 4
      %s322 = scalar_lea.vmem %s3, %s321
      %s323 = smul.u32 16, %s21
      %s324 = smul.u32 16, %s21
      %p325 = scmp.lt.s32.totalorder %s324, 31
      %s326 = scalar_select %p325, %s324, 31
      %s327 = smul.addr %s326, 4
      %s328 = scalar_lea.vmem %s6, %s327
      %s329 = smul.u32 16, %s21
      %p331 = scmp.eq.s32.totalorder %s22, 0
      // Predicated region
      $region45: #{run.16} parent=43 // pred_check
        %p332 = pneg %p331
      $region46: #{run.16} parent=43 // pred_check_branch
        %334 = sbr.rel (%p332) target = $region48
      $region47: #{run.16} parent=43 // pred_region
        %335 = vst [vmem:[#allocation2] sm:$0xff] 0.0
        %336 = vst [vmem:[#allocation2 + $0x8] sm:$0xff] 0.0
        %337 = vst [vmem:[#allocation2 + $0x10] sm:$0xff] 0.0
        %338 = vst [vmem:[#allocation2 + $0x18] sm:$0xff] 0.0
        %339 = vst [vmem:[#allocation2 + $0x20] sm:$0xff] 0.0
        %340 = vst [vmem:[#allocation2 + $0x28] sm:$0xff] 0.0
        %341 = vst [vmem:[#allocation2 + $0x30] sm:$0xff] 0.0
        %342 = vst [vmem:[#allocation2 + $0x38] sm:$0xff] 0.0
        %343 = vst [vmem:[#allocation2 + $0x40] sm:$0xff] 0.0
        %344 = vst [vmem:[#allocation2 + $0x48] sm:$0xff] 0.0
        %345 = vst [vmem:[#allocation2 + $0x50] sm:$0xff] 0.0
        %346 = vst [vmem:[#allocation2 + $0x58] sm:$0xff] 0.0
        %347 = vst [vmem:[#allocation2 + $0x60] sm:$0xff] 0.0
        %348 = vst [vmem:[#allocation2 + $0x68] sm:$0xff] 0.0
        %349 = vst [vmem:[#allocation2 + $0x70] sm:$0xff] 0.0
        %350 = vst [vmem:[#allocation2 + $0x78] sm:$0xff] 0.0
      $region48: #{run.16} parent=43 // pred_fallthru
        _
      %v351 = vld [vmem:[#allocation2] sm:$0xff]
      %v352 = vld [vmem:[#allocation2 + $0x8] sm:$0xff]
      %v353 = vld [vmem:[#allocation2 + $0x10] sm:$0xff]
      %v354 = vld [vmem:[#allocation2 + $0x18] sm:$0xff]
      %v355 = vld [vmem:[#allocation2 + $0x20] sm:$0xff]
      %v356 = vld [vmem:[#allocation2 + $0x28] sm:$0xff]
      %v357 = vld [vmem:[#allocation2 + $0x30] sm:$0xff]
      %v358 = vld [vmem:[#allocation2 + $0x38] sm:$0xff]
      %v359 = vld [vmem:[#allocation2 + $0x40] sm:$0xff]
      %v360 = vld [vmem:[#allocation2 + $0x48] sm:$0xff]
      %v361 = vld [vmem:[#allocation2 + $0x50] sm:$0xff]
      %v362 = vld [vmem:[#allocation2 + $0x58] sm:$0xff]
      %v363 = vld [vmem:[#allocation2 + $0x60] sm:$0xff]
      %v364 = vld [vmem:[#allocation2 + $0x68] sm:$0xff]
      %v365 = vld [vmem:[#allocation2 + $0x70] sm:$0xff]
      %v366 = vld [vmem:[#allocation2 + $0x78] sm:$0xff]
      %v367 = vld [vmem:[%s309] sm:$0xff]
      %v368 = vld [vmem:[%s309 + $0x8] sm:$0xff]
      %v369 = vld [vmem:[%s309 + $0x10] sm:$0xff]
      %v370 = vld [vmem:[%s309 + $0x18] sm:$0xff]
      %v371 = vld [vmem:[%s309 + $0x20] sm:$0xff]
      %v372 = vld [vmem:[%s309 + $0x28] sm:$0xff]
      %v373 = vld [vmem:[%s309 + $0x30] sm:$0xff]
      %v374 = vld [vmem:[%s309 + $0x38] sm:$0xff]
      %v375 = vld [vmem:[%s309 + $0x40] sm:$0xff]
      %v376 = vld [vmem:[%s309 + $0x48] sm:$0xff]
      %v377 = vld [vmem:[%s309 + $0x50] sm:$0xff]
      %v378 = vld [vmem:[%s309 + $0x58] sm:$0xff]
      %v379 = vld [vmem:[%s309 + $0x60] sm:$0xff]
      %v380 = vld [vmem:[%s309 + $0x68] sm:$0xff]
      %v381 = vld [vmem:[%s309 + $0x70] sm:$0xff]
      %v382 = vld [vmem:[%s309 + $0x78] sm:$0xff]
      %v383 = vld [vmem:[%s309 + $0x80] sm:$0xff]
      %v384 = vld [vmem:[%s309 + $0x88] sm:$0xff]
      %v385 = vld [vmem:[%s309 + $0x90] sm:$0xff]
      %v386 = vld [vmem:[%s309 + $0x98] sm:$0xff]
      %v387 = vld [vmem:[%s309 + $0xa0] sm:$0xff]
      %v388 = vld [vmem:[%s309 + $0xa8] sm:$0xff]
      %v389 = vld [vmem:[%s309 + $0xb0] sm:$0xff]
      %v390 = vld [vmem:[%s309 + $0xb8] sm:$0xff]
      %v391 = vld [vmem:[%s309 + $0xc0] sm:$0xff]
      %v392 = vld [vmem:[%s309 + $0xc8] sm:$0xff]
      %v393 = vld [vmem:[%s309 + $0xd0] sm:$0xff]
      %v394 = vld [vmem:[%s309 + $0xd8] sm:$0xff]
      %v395 = vld [vmem:[%s309 + $0xe0] sm:$0xff]
      %v396 = vld [vmem:[%s309 + $0xe8] sm:$0xff]
      %v397 = vld [vmem:[%s309 + $0xf0] sm:$0xff]
      %v398 = vld [vmem:[%s309 + $0xf8] sm:$0xff]
      %v399 = vld [vmem:[%s316] sm:$0xf]
      %v400 = vld [vmem:[%s316 + $0x4] sm:$0xf]
      %v401 = vld [vmem:[%s316 + $0x8] sm:$0xf]
      %v402 = vld [vmem:[%s316 + $0xc] sm:$0xf]
      %v403 = vld [vmem:[%s316 + $0x10] sm:$0xf]
      %v404 = vld [vmem:[%s316 + $0x14] sm:$0xf]
      %v405 = vld [vmem:[%s316 + $0x18] sm:$0xf]
      %v406 = vld [vmem:[%s316 + $0x1c] sm:$0xf]
      %v407 = vld [vmem:[%s316 + $0x20] sm:$0xf]
      %v408 = vld [vmem:[%s316 + $0x24] sm:$0xf]
      %v409 = vld [vmem:[%s316 + $0x28] sm:$0xf]
      %v410 = vld [vmem:[%s316 + $0x2c] sm:$0xf]
      %v411 = vld [vmem:[%s316 + $0x30] sm:$0xf]
      %v412 = vld [vmem:[%s316 + $0x34] sm:$0xf]
      %v413 = vld [vmem:[%s316 + $0x38] sm:$0xf]
      %v414 = vld [vmem:[%s316 + $0x3c] sm:$0xf]
      %v415 = vld [vmem:[%s316 + $0x40] sm:$0xf]
      %v416 = vld [vmem:[%s316 + $0x44] sm:$0xf]
      %v417 = vld [vmem:[%s316 + $0x48] sm:$0xf]
      %v418 = vld [vmem:[%s316 + $0x4c] sm:$0xf]
      %v419 = vld [vmem:[%s316 + $0x50] sm:$0xf]
      %v420 = vld [vmem:[%s316 + $0x54] sm:$0xf]
      %v421 = vld [vmem:[%s316 + $0x58] sm:$0xf]
      %v422 = vld [vmem:[%s316 + $0x5c] sm:$0xf]
      %v423 = vld [vmem:[%s316 + $0x60] sm:$0xf]
      %v424 = vld [vmem:[%s316 + $0x64] sm:$0xf]
      %v425 = vld [vmem:[%s316 + $0x68] sm:$0xf]
      %v426 = vld [vmem:[%s316 + $0x6c] sm:$0xf]
      %v427 = vld [vmem:[%s316 + $0x70] sm:$0xf]
      %v428 = vld [vmem:[%s316 + $0x74] sm:$0xf]
      %v429 = vld [vmem:[%s316 + $0x78] sm:$0xf]
      %v430 = vld [vmem:[%s316 + $0x7c] sm:$0xf]
      %v431 = vld [vmem:[%s316 + $0x80] sm:$0xf]
      %v432 = vld [vmem:[%s316 + $0x84] sm:$0xf]
      %v433 = vld [vmem:[%s316 + $0x88] sm:$0xf]
      %v434 = vld [vmem:[%s316 + $0x8c] sm:$0xf]
      %v435 = vld [vmem:[%s316 + $0x90] sm:$0xf]
      %v436 = vld [vmem:[%s316 + $0x94] sm:$0xf]
      %v437 = vld [vmem:[%s316 + $0x98] sm:$0xf]
      %v438 = vld [vmem:[%s316 + $0x9c] sm:$0xf]
      %v439 = vld [vmem:[%s316 + $0xa0] sm:$0xf]
      %v440 = vld [vmem:[%s316 + $0xa4] sm:$0xf]
      %v441 = vld [vmem:[%s316 + $0xa8] sm:$0xf]
      %v442 = vld [vmem:[%s316 + $0xac] sm:$0xf]
      %v443 = vld [vmem:[%s316 + $0xb0] sm:$0xf]
      %v444 = vld [vmem:[%s316 + $0xb4] sm:$0xf]
      %v445 = vld [vmem:[%s316 + $0xb8] sm:$0xf]
      %v446 = vld [vmem:[%s316 + $0xbc] sm:$0xf]
      %v447 = vld [vmem:[%s316 + $0xc0] sm:$0xf]
      %v448 = vld [vmem:[%s316 + $0xc4] sm:$0xf]
      %v449 = vld [vmem:[%s316 + $0xc8] sm:$0xf]
      %v450 = vld [vmem:[%s316 + $0xcc] sm:$0xf]
      %v451 = vld [vmem:[%s316 + $0xd0] sm:$0xf]
      %v452 = vld [vmem:[%s316 + $0xd4] sm:$0xf]
      %v453 = vld [vmem:[%s316 + $0xd8] sm:$0xf]
      %v454 = vld [vmem:[%s316 + $0xdc] sm:$0xf]
      %v455 = vld [vmem:[%s316 + $0xe0] sm:$0xf]
      %v456 = vld [vmem:[%s316 + $0xe4] sm:$0xf]
      %v457 = vld [vmem:[%s316 + $0xe8] sm:$0xf]
      %v458 = vld [vmem:[%s316 + $0xec] sm:$0xf]
      %v459 = vld [vmem:[%s316 + $0xf0] sm:$0xf]
      %v460 = vld [vmem:[%s316 + $0xf4] sm:$0xf]
      %v461 = vld [vmem:[%s316 + $0xf8] sm:$0xf]
      %v462 = vld [vmem:[%s316 + $0xfc] sm:$0xf]
      %v495 = vunpack.c.l.b16 %v367
      %v496 = vunpack.c.h.b16 %v367
      %v497 = vunpack.c.l.b16 %v368
      %v498 = vunpack.c.h.b16 %v368
      %v499 = vunpack.c.l.b16 %v369
      %v500 = vunpack.c.h.b16 %v369
      %v501 = vunpack.c.l.b16 %v370
      %v502 = vunpack.c.h.b16 %v370
      %v503 = vunpack.c.l.b16 %v371
      %v504 = vunpack.c.h.b16 %v371
      %v505 = vunpack.c.l.b16 %v372
      %v506 = vunpack.c.h.b16 %v372
      %v507 = vunpack.c.l.b16 %v373
      %v508 = vunpack.c.h.b16 %v373
      %v509 = vunpack.c.l.b16 %v374
      %v510 = vunpack.c.h.b16 %v374
      %v511 = vunpack.c.l.b16 %v375
      %v512 = vunpack.c.h.b16 %v375
      %v513 = vunpack.c.l.b16 %v376
      %v514 = vunpack.c.h.b16 %v376
      %v515 = vunpack.c.l.b16 %v377
      %v516 = vunpack.c.h.b16 %v377
      %v517 = vunpack.c.l.b16 %v378
      %v518 = vunpack.c.h.b16 %v378
      %v519 = vunpack.c.l.b16 %v379
      %v520 = vunpack.c.h.b16 %v379
      %v521 = vunpack.c.l.b16 %v380
      %v522 = vunpack.c.h.b16 %v380
      %v523 = vunpack.c.l.b16 %v381
      %v524 = vunpack.c.h.b16 %v381
      %v525 = vunpack.c.l.b16 %v382
      %v526 = vunpack.c.h.b16 %v382
      %v527 = vunpack.c.l.b16 %v383
      %v528 = vunpack.c.h.b16 %v383
      %v529 = vunpack.c.l.b16 %v384
      %v530 = vunpack.c.h.b16 %v384
      %v531 = vunpack.c.l.b16 %v385
      %v532 = vunpack.c.h.b16 %v385
      %v533 = vunpack.c.l.b16 %v386
      %v534 = vunpack.c.h.b16 %v386
      %v535 = vunpack.c.l.b16 %v387
      %v536 = vunpack.c.h.b16 %v387
      %v537 = vunpack.c.l.b16 %v388
      %v538 = vunpack.c.h.b16 %v388
      %v539 = vunpack.c.l.b16 %v389
      %v540 = vunpack.c.h.b16 %v389
      %v541 = vunpack.c.l.b16 %v390
      %v542 = vunpack.c.h.b16 %v390
      %v543 = vunpack.c.l.b16 %v391
      %v544 = vunpack.c.h.b16 %v391
      %v545 = vunpack.c.l.b16 %v392
      %v546 = vunpack.c.h.b16 %v392
      %v547 = vunpack.c.l.b16 %v393
      %v548 = vunpack.c.h.b16 %v393
      %v549 = vunpack.c.l.b16 %v394
      %v550 = vunpack.c.h.b16 %v394
      %v551 = vunpack.c.l.b16 %v395
      %v552 = vunpack.c.h.b16 %v395
      %v553 = vunpack.c.l.b16 %v396
      %v554 = vunpack.c.h.b16 %v396
      %v555 = vunpack.c.l.b16 %v397
      %v556 = vunpack.c.h.b16 %v397
      %v557 = vunpack.c.l.b16 %v398
      %v558 = vunpack.c.h.b16 %v398
      %v559 = vpack.c.b16 %v499, %v495
      %v560 = vpack.c.b16 %v500, %v496
      %v561 = vpack.c.b16 %v501, %v497
      %v562 = vpack.c.b16 %v502, %v498
      %v563 = vpack.c.b16 %v507, %v503
      %v564 = vpack.c.b16 %v508, %v504
      %v565 = vpack.c.b16 %v509, %v505
      %v566 = vpack.c.b16 %v510, %v506
      %v567 = vpack.c.b16 %v515, %v511
      %v568 = vpack.c.b16 %v516, %v512
      %v569 = vpack.c.b16 %v517, %v513
      %v570 = vpack.c.b16 %v518, %v514
      %v571 = vpack.c.b16 %v523, %v519
      %v572 = vpack.c.b16 %v524, %v520
      %v573 = vpack.c.b16 %v525, %v521
      %v574 = vpack.c.b16 %v526, %v522
      %v575 = vpack.c.b16 %v531, %v527
      %v576 = vpack.c.b16 %v532, %v528
      %v577 = vpack.c.b16 %v533, %v529
      %v578 = vpack.c.b16 %v534, %v530
      %v579 = vpack.c.b16 %v539, %v535
      %v580 = vpack.c.b16 %v540, %v536
      %v581 = vpack.c.b16 %v541, %v537
      %v582 = vpack.c.b16 %v542, %v538
      %v583 = vpack.c.b16 %v547, %v543
      %v584 = vpack.c.b16 %v548, %v544
      %v585 = vpack.c.b16 %v549, %v545
      %v586 = vpack.c.b16 %v550, %v546
      %v587 = vpack.c.b16 %v555, %v551
      %v588 = vpack.c.b16 %v556, %v552
      %v589 = vpack.c.b16 %v557, %v553
      %v590 = vpack.c.b16 %v558, %v554
      %v687 = vunpack.c.l.b16 %v399
      %v688 = vunpack.c.l.b16 %v400
      %v689 = vunpack.c.l.b16 %v401
      %v690 = vunpack.c.l.b16 %v402
      %v691 = vunpack.c.l.b16 %v403
      %v692 = vunpack.c.l.b16 %v404
      %v693 = vunpack.c.l.b16 %v405
      %v694 = vunpack.c.l.b16 %v406
      %v695 = vunpack.c.l.b16 %v407
      %v696 = vunpack.c.l.b16 %v408
      %v697 = vunpack.c.l.b16 %v409
      %v698 = vunpack.c.l.b16 %v410
      %v699 = vunpack.c.l.b16 %v411
      %v700 = vunpack.c.l.b16 %v412
      %v701 = vunpack.c.l.b16 %v413
      %v702 = vunpack.c.l.b16 %v414
      %v703 = vunpack.c.l.b16 %v415
      %v704 = vunpack.c.l.b16 %v416
      %v705 = vunpack.c.l.b16 %v417
      %v706 = vunpack.c.l.b16 %v418
      %v707 = vunpack.c.l.b16 %v419
      %v708 = vunpack.c.l.b16 %v420
      %v709 = vunpack.c.l.b16 %v421
      %v710 = vunpack.c.l.b16 %v422
      %v711 = vunpack.c.l.b16 %v423
      %v712 = vunpack.c.l.b16 %v424
      %v713 = vunpack.c.l.b16 %v425
      %v714 = vunpack.c.l.b16 %v426
      %v715 = vunpack.c.l.b16 %v427
      %v716 = vunpack.c.l.b16 %v428
      %v717 = vunpack.c.l.b16 %v429
      %v718 = vunpack.c.l.b16 %v430
      %v719 = vunpack.c.l.b16 %v431
      %v720 = vunpack.c.l.b16 %v432
      %v721 = vunpack.c.l.b16 %v433
      %v722 = vunpack.c.l.b16 %v434
      %v723 = vunpack.c.l.b16 %v435
      %v724 = vunpack.c.l.b16 %v436
      %v725 = vunpack.c.l.b16 %v437
      %v726 = vunpack.c.l.b16 %v438
      %v727 = vunpack.c.l.b16 %v439
      %v728 = vunpack.c.l.b16 %v440
      %v729 = vunpack.c.l.b16 %v441
      %v730 = vunpack.c.l.b16 %v442
      %v731 = vunpack.c.l.b16 %v443
      %v732 = vunpack.c.l.b16 %v444
      %v733 = vunpack.c.l.b16 %v445
      %v734 = vunpack.c.l.b16 %v446
      %v735 = vunpack.c.l.b16 %v447
      %v736 = vunpack.c.l.b16 %v448
      %v737 = vunpack.c.l.b16 %v449
      %v738 = vunpack.c.l.b16 %v450
      %v739 = vunpack.c.l.b16 %v451
      %v740 = vunpack.c.l.b16 %v452
      %v741 = vunpack.c.l.b16 %v453
      %v742 = vunpack.c.l.b16 %v454
      %v743 = vunpack.c.l.b16 %v455
      %v744 = vunpack.c.l.b16 %v456
      %v745 = vunpack.c.l.b16 %v457
      %v746 = vunpack.c.l.b16 %v458
      %v747 = vunpack.c.l.b16 %v459
      %v748 = vunpack.c.l.b16 %v460
      %v749 = vunpack.c.l.b16 %v461
      %v750 = vunpack.c.l.b16 %v462
      %v751 = vpack.c.b16 %v688, %v687
      %v752 = vpack.c.b16 %v690, %v689
      %v753 = vpack.c.b16 %v692, %v691
      %v754 = vpack.c.b16 %v694, %v693
      %v755 = vpack.c.b16 %v696, %v695
      %v756 = vpack.c.b16 %v698, %v697
      %v757 = vpack.c.b16 %v700, %v699
      %v758 = vpack.c.b16 %v702, %v701
      %v759 = vpack.c.b16 %v704, %v703
      %v760 = vpack.c.b16 %v706, %v705
      %v761 = vpack.c.b16 %v708, %v707
      %v762 = vpack.c.b16 %v710, %v709
      %v763 = vpack.c.b16 %v712, %v711
      %v764 = vpack.c.b16 %v714, %v713
      %v765 = vpack.c.b16 %v716, %v715
      %v766 = vpack.c.b16 %v718, %v717
      %v767 = vpack.c.b16 %v720, %v719
      %v768 = vpack.c.b16 %v722, %v721
      %v769 = vpack.c.b16 %v724, %v723
      %v770 = vpack.c.b16 %v726, %v725
      %v771 = vpack.c.b16 %v728, %v727
      %v772 = vpack.c.b16 %v730, %v729
      %v773 = vpack.c.b16 %v732, %v731
      %v774 = vpack.c.b16 %v734, %v733
      %v775 = vpack.c.b16 %v736, %v735
      %v776 = vpack.c.b16 %v738, %v737
      %v777 = vpack.c.b16 %v740, %v739
      %v778 = vpack.c.b16 %v742, %v741
      %v779 = vpack.c.b16 %v744, %v743
      %v780 = vpack.c.b16 %v746, %v745
      %v781 = vpack.c.b16 %v748, %v747
      %v782 = vpack.c.b16 %v750, %v749
      %815 = vmatprep.subr.bf16.mxu0 0
      %816 = vmatpush1.bf16.msra.mxu0 %v751
      %817 = vmatprep.subr.bf16.mxu0 0
      %818 = vmatpush1.bf16.msra.mxu0 %v752
      %819 = vmatprep.subr.bf16.mxu0 0
      %820 = vmatpush1.bf16.msra.mxu0 %v753
      %821 = vmatprep.subr.bf16.mxu0 0
      %822 = vmatpush1.bf16.msra.mxu0 %v754
      %823 = vmatprep.subr.bf16.mxu0 0
      %824 = vmatpush1.bf16.msra.mxu0 %v755
      %825 = vmatprep.subr.bf16.mxu0 0
      %826 = vmatpush1.bf16.msra.mxu0 %v756
      %827 = vmatprep.subr.bf16.mxu0 0
      %828 = vmatpush1.bf16.msra.mxu0 %v757
      %829 = vmatprep.subr.bf16.mxu0 0
      %830 = vmatpush1.bf16.msra.mxu0 %v758
      %831 = vmatprep.subr.bf16.mxu0 0
      %832 = vmatpush1.bf16.msra.mxu0 %v759
      %833 = vmatprep.subr.bf16.mxu0 0
      %834 = vmatpush1.bf16.msra.mxu0 %v760
      %835 = vmatprep.subr.bf16.mxu0 0
      %836 = vmatpush1.bf16.msra.mxu0 %v761
      %837 = vmatprep.subr.bf16.mxu0 0
      %838 = vmatpush1.bf16.msra.mxu0 %v762
      %839 = vmatprep.subr.bf16.mxu0 0
      %840 = vmatpush1.bf16.msra.mxu0 %v763
      %841 = vmatprep.subr.bf16.mxu0 0
      %842 = vmatpush1.bf16.msra.mxu0 %v764
      %843 = vmatprep.subr.bf16.mxu0 0
      %844 = vmatpush1.bf16.msra.mxu0 %v765
      %845 = vmatprep.subr.bf16.mxu0 0
      %846 = vmatpush1.bf16.msra.mxu0 %v766
      %847 = vmatprep.mubr.bf16.mxu0 %v560
      %848 = vmatmul.mubr.bf16.gmra.mrb[0].mxu0 %v559
      %v849 = vpop.f32.mrb[0].mxu0
      %v850 = vadd.f32 0.0, %v849
      %v851 = vpop.f32.mrb[0].mxu0
      %v852 = vpop.f32.mrb[0].mxu0
      %v853 = vadd.f32 0.0, %v852
      %v854 = vpop.f32.mrb[0].mxu0
      %855 = vmatprep.mubr.bf16.mxu0 %v564
      %856 = vmatmul.mubr.bf16.gmra.mrb[0].mxu0 %v563
      %v857 = vpop.f32.mrb[0].mxu0
      %v858 = vadd.f32 0.0, %v857
      %v859 = vpop.f32.mrb[0].mxu0
      %v860 = vpop.f32.mrb[0].mxu0
      %v861 = vadd.f32 0.0, %v860
      %v862 = vpop.f32.mrb[0].mxu0
      %863 = vmatprep.mubr.bf16.mxu0 %v568
      %864 = vmatmul.mubr.bf16.gmra.mrb[0].mxu0 %v567
      %v865 = vpop.f32.mrb[0].mxu0
      %v866 = vadd.f32 0.0, %v865
      %v867 = vpop.f32.mrb[0].mxu0
      %v868 = vpop.f32.mrb[0].mxu0
      %v869 = vadd.f32 0.0, %v868
      %v870 = vpop.f32.mrb[0].mxu0
      %871 = vmatprep.mubr.bf16.mxu0 %v572
      %872 = vmatmul.mubr.bf16.gmra.mrb[0].mxu0 %v571
      %v873 = vpop.f32.mrb[0].mxu0
      %v874 = vadd.f32 0.0, %v873
      %v875 = vpop.f32.mrb[0].mxu0
      %v876 = vpop.f32.mrb[0].mxu0
      %v877 = vadd.f32 0.0, %v876
      %v878 = vpop.f32.mrb[0].mxu0
      %879 = vmatprep.mubr.bf16.mxu0 %v576
      %880 = vmatmul.mubr.bf16.gmra.mrb[0].mxu0 %v575
      %v881 = vpop.f32.mrb[0].mxu0
      %v882 = vadd.f32 0.0, %v881
      %v883 = vpop.f32.mrb[0].mxu0
      %v884 = vpop.f32.mrb[0].mxu0
      %v885 = vadd.f32 0.0, %v884
      %v886 = vpop.f32.mrb[0].mxu0
      %887 = vmatprep.mubr.bf16.mxu0 %v580
      %888 = vmatmul.mubr.bf16.gmra.mrb[0].mxu0 %v579
      %v889 = vpop.f32.mrb[0].mxu0
      %v890 = vadd.f32 0.0, %v889
      %v891 = vpop.f32.mrb[0].mxu0
      %v892 = vpop.f32.mrb[0].mxu0
      %v893 = vadd.f32 0.0, %v892
      %v894 = vpop.f32.mrb[0].mxu0
      %895 = vmatprep.mubr.bf16.mxu0 %v584
      %896 = vmatmul.mubr.bf16.gmra.mrb[0].mxu0 %v583
      %v897 = vpop.f32.mrb[0].mxu0
      %v898 = vadd.f32 0.0, %v897
      %v899 = vpop.f32.mrb[0].mxu0
      %v900 = vpop.f32.mrb[0].mxu0
      %v901 = vadd.f32 0.0, %v900
      %v902 = vpop.f32.mrb[0].mxu0
      %903 = vmatprep.mubr.bf16.mxu0 %v588
      %904 = vmatmul.mubr.bf16.gmra.mrb[0].mxu0 %v587
      %v905 = vpop.f32.mrb[0].mxu0
      %v906 = vadd.f32 0.0, %v905
      %v907 = vpop.f32.mrb[0].mxu0
      %v908 = vpop.f32.mrb[0].mxu0
      %v909 = vadd.f32 0.0, %v908
      %v910 = vpop.f32.mrb[0].mxu0
      %911 = vdwg.mxu0
      %912 = vmatprep.subr.bf16.mxu0 0
      %913 = vmatpush1.bf16.msra.mxu0 %v767
      %914 = vmatprep.subr.bf16.mxu0 0
      %915 = vmatpush1.bf16.msra.mxu0 %v768
      %916 = vmatprep.subr.bf16.mxu0 0
      %917 = vmatpush1.bf16.msra.mxu0 %v769
      %918 = vmatprep.subr.bf16.mxu0 0
      %919 = vmatpush1.bf16.msra.mxu0 %v770
      %920 = vmatprep.subr.bf16.mxu0 0
      %921 = vmatpush1.bf16.msra.mxu0 %v771
      %922 = vmatprep.subr.bf16.mxu0 0
      %923 = vmatpush1.bf16.msra.mxu0 %v772
      %924 = vmatprep.subr.bf16.mxu0 0
      %925 = vmatpush1.bf16.msra.mxu0 %v773
      %926 = vmatprep.subr.bf16.mxu0 0
      %927 = vmatpush1.bf16.msra.mxu0 %v774
      %928 = vmatprep.subr.bf16.mxu0 0
      %929 = vmatpush1.bf16.msra.mxu0 %v775
      %930 = vmatprep.subr.bf16.mxu0 0
      %931 = vmatpush1.bf16.msra.mxu0 %v776
      %932 = vmatprep.subr.bf16.mxu0 0
      %933 = vmatpush1.bf16.msra.mxu0 %v777
      %934 = vmatprep.subr.bf16.mxu0 0
      %935 = vmatpush1.bf16.msra.mxu0 %v778
      %936 = vmatprep.subr.bf16.mxu0 0
      %937 = vmatpush1.bf16.msra.mxu0 %v779
      %938 = vmatprep.subr.bf16.mxu0 0
      %939 = vmatpush1.bf16.msra.mxu0 %v780
      %940 = vmatprep.subr.bf16.mxu0 0
      %941 = vmatpush1.bf16.msra.mxu0 %v781
      %942 = vmatprep.subr.bf16.mxu0 0
      %943 = vmatpush1.bf16.msra.mxu0 %v782
      %944 = vmatprep.mubr.bf16.mxu0 %v562
      %945 = vmatmul.mubr.bf16.gmra.mrb[0].mxu0 %v561
      %v946 = vpop.f32.mrb[0].mxu0
      %v947 = vadd.f32 %v850, %v946
      %v948 = vpop.f32.mrb[0].mxu0
      %v949 = vpop.f32.mrb[0].mxu0
      %v950 = vadd.f32 %v853, %v949
      %v951 = vpop.f32.mrb[0].mxu0
      %952 = vmatprep.mubr.bf16.mxu0 %v566
      %953 = vmatmul.mubr.bf16.gmra.mrb[0].mxu0 %v565
      %v954 = vpop.f32.mrb[0].mxu0
      %v955 = vadd.f32 %v858, %v954
      %v956 = vpop.f32.mrb[0].mxu0
      %v957 = vpop.f32.mrb[0].mxu0
      %v958 = vadd.f32 %v861, %v957
      %v959 = vpop.f32.mrb[0].mxu0
      %960 = vmatprep.mubr.bf16.mxu0 %v570
      %961 = vmatmul.mubr.bf16.gmra.mrb[0].mxu0 %v569
      %v962 = vpop.f32.mrb[0].mxu0
      %v963 = vadd.f32 %v866, %v962
      %v964 = vpop.f32.mrb[0].mxu0
      %v965 = vpop.f32.mrb[0].mxu0
      %v966 = vadd.f32 %v869, %v965
      %v967 = vpop.f32.mrb[0].mxu0
      %968 = vmatprep.mubr.bf16.mxu0 %v574
      %969 = vmatmul.mubr.bf16.gmra.mrb[0].mxu0 %v573
      %v970 = vpop.f32.mrb[0].mxu0
      %v971 = vadd.f32 %v874, %v970
      %v972 = vpop.f32.mrb[0].mxu0
      %v973 = vpop.f32.mrb[0].mxu0
      %v974 = vadd.f32 %v877, %v973
      %v975 = vpop.f32.mrb[0].mxu0
      %976 = vmatprep.mubr.bf16.mxu0 %v578
      %977 = vmatmul.mubr.bf16.gmra.mrb[0].mxu0 %v577
      %v978 = vpop.f32.mrb[0].mxu0
      %v979 = vadd.f32 %v882, %v978
      %v980 = vpop.f32.mrb[0].mxu0
      %v981 = vpop.f32.mrb[0].mxu0
      %v982 = vadd.f32 %v885, %v981
      %v983 = vpop.f32.mrb[0].mxu0
      %984 = vmatprep.mubr.bf16.mxu0 %v582
      %985 = vmatmul.mubr.bf16.gmra.mrb[0].mxu0 %v581
      %v986 = vpop.f32.mrb[0].mxu0
      %v987 = vadd.f32 %v890, %v986
      %v988 = vpop.f32.mrb[0].mxu0
      %v989 = vpop.f32.mrb[0].mxu0
      %v990 = vadd.f32 %v893, %v989
      %v991 = vpop.f32.mrb[0].mxu0
      %992 = vmatprep.mubr.bf16.mxu0 %v586
      %993 = vmatmul.mubr.bf16.gmra.mrb[0].mxu0 %v585
      %v994 = vpop.f32.mrb[0].mxu0
      %v995 = vadd.f32 %v898, %v994
      %v996 = vpop.f32.mrb[0].mxu0
      %v997 = vpop.f32.mrb[0].mxu0
      %v998 = vadd.f32 %v901, %v997
      %v999 = vpop.f32.mrb[0].mxu0
      %1000 = vmatprep.mubr.bf16.mxu0 %v590
      %1001 = vmatmul.mubr.bf16.gmra.mrb[0].mxu0 %v589
      %v1002 = vpop.f32.mrb[0].mxu0
      %v1003 = vadd.f32 %v906, %v1002
      %v1004 = vpop.f32.mrb[0].mxu0
      %v1005 = vpop.f32.mrb[0].mxu0
      %v1006 = vadd.f32 %v909, %v1005
      %v1007 = vpop.f32.mrb[0].mxu0
      %1008 = vdwg.mxu0
      %v1009 = vadd.f32 %v351, %v947
      %v1010 = vadd.f32 %v352, %v950
      %v1011 = vadd.f32 %v353, %v955
      %v1012 = vadd.f32 %v354, %v958
      %v1013 = vadd.f32 %v355, %v963
      %v1014 = vadd.f32 %v356, %v966
      %v1015 = vadd.f32 %v357, %v971
      %v1016 = vadd.f32 %v358, %v974
      %v1017 = vadd.f32 %v359, %v979
      %v1018 = vadd.f32 %v360, %v982
      %v1019 = vadd.f32 %v361, %v987
      %v1020 = vadd.f32 %v362, %v990
      %v1021 = vadd.f32 %v363, %v995
      %v1022 = vadd.f32 %v364, %v998
      %v1023 = vadd.f32 %v365, %v1003
      %v1024 = vadd.f32 %v366, %v1006
      %1025 = vst [vmem:[#allocation2] sm:$0xff] %v1009
      %1026 = vst [vmem:[#allocation2 + $0x8] sm:$0xff] %v1010
      %1027 = vst [vmem:[#allocation2 + $0x10] sm:$0xff] %v1011
      %1028 = vst [vmem:[#allocation2 + $0x18] sm:$0xff] %v1012
      %1029 = vst [vmem:[#allocation2 + $0x20] sm:$0xff] %v1013
      %1030 = vst [vmem:[#allocation2 + $0x28] sm:$0xff] %v1014
      %1031 = vst [vmem:[#allocation2 + $0x30] sm:$0xff] %v1015
      %1032 = vst [vmem:[#allocation2 + $0x38] sm:$0xff] %v1016
      %1033 = vst [vmem:[#allocation2 + $0x40] sm:$0xff] %v1017
      %1034 = vst [vmem:[#allocation2 + $0x48] sm:$0xff] %v1018
      %1035 = vst [vmem:[#allocation2 + $0x50] sm:$0xff] %v1019
      %1036 = vst [vmem:[#allocation2 + $0x58] sm:$0xff] %v1020
      %1037 = vst [vmem:[#allocation2 + $0x60] sm:$0xff] %v1021
      %1038 = vst [vmem:[#allocation2 + $0x68] sm:$0xff] %v1022
      %1039 = vst [vmem:[#allocation2 + $0x70] sm:$0xff] %v1023
      %1040 = vst [vmem:[#allocation2 + $0x78] sm:$0xff] %v1024
      // Predicated region
      $region49: #{run.16} parent=43 // pred_check
        %p1041 = pneg %p331
      $region50: #{run.16} parent=43 // pred_check_branch
        %1043 = sbr.rel (%p1041) target = $region52
      $region51: #{run.16} parent=43 // pred_region
        %v1044 = vld [vmem:[#allocation2] sm:$0xff]
        %v1045 = vld [vmem:[#allocation2 + $0x8] sm:$0xff]
        %v1046 = vld [vmem:[#allocation2 + $0x10] sm:$0xff]
        %v1047 = vld [vmem:[#allocation2 + $0x18] sm:$0xff]
        %v1048 = vld [vmem:[#allocation2 + $0x20] sm:$0xff]
        %v1049 = vld [vmem:[#allocation2 + $0x28] sm:$0xff]
        %v1050 = vld [vmem:[#allocation2 + $0x30] sm:$0xff]
        %v1051 = vld [vmem:[#allocation2 + $0x38] sm:$0xff]
        %v1052 = vld [vmem:[#allocation2 + $0x40] sm:$0xff]
        %v1053 = vld [vmem:[#allocation2 + $0x48] sm:$0xff]
        %v1054 = vld [vmem:[#allocation2 + $0x50] sm:$0xff]
        %v1055 = vld [vmem:[#allocation2 + $0x58] sm:$0xff]
        %v1056 = vld [vmem:[#allocation2 + $0x60] sm:$0xff]
        %v1057 = vld [vmem:[#allocation2 + $0x68] sm:$0xff]
        %v1058 = vld [vmem:[#allocation2 + $0x70] sm:$0xff]
        %v1059 = vld [vmem:[#allocation2 + $0x78] sm:$0xff]
        %v1060 = vld [vmem:[%s2] sm:$0x1]
        %v1062 = vlaneseq
        %v1063 = vshrl.u32 %v1062, 7
        %v1064 = vsub.s32 0, %v1063
        %v1065 = vrot.slane %v1060, %v1064
        %v1067 = vadd.f32 %v1044, %v1065
        %v1068 = vadd.f32 %v1045, %v1065
        %v1069 = vadd.f32 %v1046, %v1065
        %v1070 = vadd.f32 %v1047, %v1065
        %v1071 = vadd.f32 %v1048, %v1065
        %v1072 = vadd.f32 %v1049, %v1065
        %v1073 = vadd.f32 %v1050, %v1065
        %v1074 = vadd.f32 %v1051, %v1065
        %v1075 = vadd.f32 %v1052, %v1065
        %v1076 = vadd.f32 %v1053, %v1065
        %v1077 = vadd.f32 %v1054, %v1065
        %v1078 = vadd.f32 %v1055, %v1065
        %v1079 = vadd.f32 %v1056, %v1065
        %v1080 = vadd.f32 %v1057, %v1065
        %v1081 = vadd.f32 %v1058, %v1065
        %v1082 = vadd.f32 %v1059, %v1065
        %v1083 = vld [vmem:[%s322] sm:$0xf]
        %v1084 = vld [vmem:[%s322 + $0x4] sm:$0xf]
        %v1085 = vld [vmem:[%s322 + $0x8] sm:$0xf]
        %v1086 = vld [vmem:[%s322 + $0xc] sm:$0xf]
        %v1087 = vld [vmem:[%s322 + $0x10] sm:$0xf]
        %v1088 = vld [vmem:[%s322 + $0x14] sm:$0xf]
        %v1089 = vld [vmem:[%s322 + $0x18] sm:$0xf]
        %v1090 = vld [vmem:[%s322 + $0x1c] sm:$0xf]
        %v1091 = vld [vmem:[%s322 + $0x20] sm:$0xf]
        %v1092 = vld [vmem:[%s322 + $0x24] sm:$0xf]
        %v1093 = vld [vmem:[%s322 + $0x28] sm:$0xf]
        %v1094 = vld [vmem:[%s322 + $0x2c] sm:$0xf]
        %v1095 = vld [vmem:[%s322 + $0x30] sm:$0xf]
        %v1096 = vld [vmem:[%s322 + $0x34] sm:$0xf]
        %v1097 = vld [vmem:[%s322 + $0x38] sm:$0xf]
        %v1098 = vld [vmem:[%s322 + $0x3c] sm:$0xf]
        %v1099 = vunpack.c.l.bf16 %v1083
        %v1100 = vunpack.c.l.bf16 %v1084
        %v1101 = vunpack.c.l.bf16 %v1085
        %v1102 = vunpack.c.l.bf16 %v1086
        %v1103 = vunpack.c.l.bf16 %v1087
        %v1104 = vunpack.c.l.bf16 %v1088
        %v1105 = vunpack.c.l.bf16 %v1089
        %v1106 = vunpack.c.l.bf16 %v1090
        %v1107 = vunpack.c.l.bf16 %v1091
        %v1108 = vunpack.c.l.bf16 %v1092
        %v1109 = vunpack.c.l.bf16 %v1093
        %v1110 = vunpack.c.l.bf16 %v1094
        %v1111 = vunpack.c.l.bf16 %v1095
        %v1112 = vunpack.c.l.bf16 %v1096
        %v1113 = vunpack.c.l.bf16 %v1097
        %v1114 = vunpack.c.l.bf16 %v1098
        %v1115 = vadd.f32 %v1067, %v1099
        %v1116 = vadd.f32 %v1068, %v1100
        %v1117 = vadd.f32 %v1069, %v1101
        %v1118 = vadd.f32 %v1070, %v1102
        %v1119 = vadd.f32 %v1071, %v1103
        %v1120 = vadd.f32 %v1072, %v1104
        %v1121 = vadd.f32 %v1073, %v1105
        %v1122 = vadd.f32 %v1074, %v1106
        %v1123 = vadd.f32 %v1075, %v1107
        %v1124 = vadd.f32 %v1076, %v1108
        %v1125 = vadd.f32 %v1077, %v1109
        %v1126 = vadd.f32 %v1078, %v1110
        %v1127 = vadd.f32 %v1079, %v1111
        %v1128 = vadd.f32 %v1080, %v1112
        %v1129 = vadd.f32 %v1081, %v1113
        %v1130 = vadd.f32 %v1082, %v1114
        %1131 = vadd.xlane.f32.xlu0 %v1115
        %v1132 = vpop.xlane.xlu0 %1131
        %1133 = vadd.xlane.f32.xlu0 %v1116
        %v1134 = vpop.xlane.xlu0 %1133
        %1135 = vadd.xlane.f32.xlu0 %v1117
        %v1136 = vpop.xlane.xlu0 %1135
        %1137 = vadd.xlane.f32.xlu0 %v1118
        %v1138 = vpop.xlane.xlu0 %1137
        %1139 = vadd.xlane.f32.xlu0 %v1119
        %v1140 = vpop.xlane.xlu0 %1139
        %1141 = vadd.xlane.f32.xlu0 %v1120
        %v1142 = vpop.xlane.xlu0 %1141
        %1143 = vadd.xlane.f32.xlu0 %v1121
        %v1144 = vpop.xlane.xlu0 %1143
        %1145 = vadd.xlane.f32.xlu0 %v1122
        %v1146 = vpop.xlane.xlu0 %1145
        %1147 = vadd.xlane.f32.xlu0 %v1123
        %v1148 = vpop.xlane.xlu0 %1147
        %1149 = vadd.xlane.f32.xlu0 %v1124
        %v1150 = vpop.xlane.xlu0 %1149
        %1151 = vadd.xlane.f32.xlu0 %v1125
        %v1152 = vpop.xlane.xlu0 %1151
        %1153 = vadd.xlane.f32.xlu0 %v1126
        %v1154 = vpop.xlane.xlu0 %1153
        %1155 = vadd.xlane.f32.xlu0 %v1127
        %v1156 = vpop.xlane.xlu0 %1155
        %1157 = vadd.xlane.f32.xlu0 %v1128
        %v1158 = vpop.xlane.xlu0 %1157
        %1159 = vadd.xlane.f32.xlu0 %v1129
        %v1160 = vpop.xlane.xlu0 %1159
        %1161 = vadd.xlane.f32.xlu0 %v1130
        %v1162 = vpop.xlane.xlu0 %1161
        %v1163 = vrcp.pop 128.0
        %v1164 = vmul.f32 %v1132, %v1163
        %v1165 = vmul.f32 %v1134, %v1163
        %v1166 = vmul.f32 %v1136, %v1163
        %v1167 = vmul.f32 %v1138, %v1163
        %v1168 = vmul.f32 %v1140, %v1163
        %v1169 = vmul.f32 %v1142, %v1163
        %v1170 = vmul.f32 %v1144, %v1163
        %v1171 = vmul.f32 %v1146, %v1163
        %v1172 = vmul.f32 %v1148, %v1163
        %v1173 = vmul.f32 %v1150, %v1163
        %v1174 = vmul.f32 %v1152, %v1163
        %v1175 = vmul.f32 %v1154, %v1163
        %v1176 = vmul.f32 %v1156, %v1163
        %v1177 = vmul.f32 %v1158, %v1163
        %v1178 = vmul.f32 %v1160, %v1163
        %v1179 = vmul.f32 %v1162, %v1163
        %v1180 = vsub.f32 %v1115, %v1164
        %v1181 = vsub.f32 %v1116, %v1165
        %v1182 = vsub.f32 %v1117, %v1166
        %v1183 = vsub.f32 %v1118, %v1167
        %v1184 = vsub.f32 %v1119, %v1168
        %v1185 = vsub.f32 %v1120, %v1169
        %v1186 = vsub.f32 %v1121, %v1170
        %v1187 = vsub.f32 %v1122, %v1171
        %v1188 = vsub.f32 %v1123, %v1172
        %v1189 = vsub.f32 %v1124, %v1173
        %v1190 = vsub.f32 %v1125, %v1174
        %v1191 = vsub.f32 %v1126, %v1175
        %v1192 = vsub.f32 %v1127, %v1176
        %v1193 = vsub.f32 %v1128, %v1177
        %v1194 = vsub.f32 %v1129, %v1178
        %v1195 = vsub.f32 %v1130, %v1179
        %v1196 = vmul.f32 %v1180, %v1180
        %v1197 = vmul.f32 %v1181, %v1181
        %v1198 = vmul.f32 %v1182, %v1182
        %v1199 = vmul.f32 %v1183, %v1183
        %v1200 = vmul.f32 %v1184, %v1184
        %v1201 = vmul.f32 %v1185, %v1185
        %v1202 = vmul.f32 %v1186, %v1186
        %v1203 = vmul.f32 %v1187, %v1187
        %v1204 = vmul.f32 %v1188, %v1188
        %v1205 = vmul.f32 %v1189, %v1189
        %v1206 = vmul.f32 %v1190, %v1190
        %v1207 = vmul.f32 %v1191, %v1191
        %v1208 = vmul.f32 %v1192, %v1192
        %v1209 = vmul.f32 %v1193, %v1193
        %v1210 = vmul.f32 %v1194, %v1194
        %v1211 = vmul.f32 %v1195, %v1195
        %1212 = vadd.xlane.f32.xlu0 %v1196
        %v1213 = vpop.xlane.xlu0 %1212
        %1214 = vadd.xlane.f32.xlu0 %v1197
        %v1215 = vpop.xlane.xlu0 %1214
        %1216 = vadd.xlane.f32.xlu0 %v1198
        %v1217 = vpop.xlane.xlu0 %1216
        %1218 = vadd.xlane.f32.xlu0 %v1199
        %v1219 = vpop.xlane.xlu0 %1218
        %1220 = vadd.xlane.f32.xlu0 %v1200
        %v1221 = vpop.xlane.xlu0 %1220
        %1222 = vadd.xlane.f32.xlu0 %v1201
        %v1223 = vpop.xlane.xlu0 %1222
        %1224 = vadd.xlane.f32.xlu0 %v1202
        %v1225 = vpop.xlane.xlu0 %1224
        %1226 = vadd.xlane.f32.xlu0 %v1203
        %v1227 = vpop.xlane.xlu0 %1226
        %1228 = vadd.xlane.f32.xlu0 %v1204
        %v1229 = vpop.xlane.xlu0 %1228
        %1230 = vadd.xlane.f32.xlu0 %v1205
        %v1231 = vpop.xlane.xlu0 %1230
        %1232 = vadd.xlane.f32.xlu0 %v1206
        %v1233 = vpop.xlane.xlu0 %1232
        %1234 = vadd.xlane.f32.xlu0 %v1207
        %v1235 = vpop.xlane.xlu0 %1234
        %1236 = vadd.xlane.f32.xlu0 %v1208
        %v1237 = vpop.xlane.xlu0 %1236
        %1238 = vadd.xlane.f32.xlu0 %v1209
        %v1239 = vpop.xlane.xlu0 %1238
        %1240 = vadd.xlane.f32.xlu0 %v1210
        %v1241 = vpop.xlane.xlu0 %1240
        %1242 = vadd.xlane.f32.xlu0 %v1211
        %v1243 = vpop.xlane.xlu0 %1242
        %v1244 = vmul.f32 %v1213, %v1163
        %v1245 = vmul.f32 %v1215, %v1163
        %v1246 = vmul.f32 %v1217, %v1163
        %v1247 = vmul.f32 %v1219, %v1163
        %v1248 = vmul.f32 %v1221, %v1163
        %v1249 = vmul.f32 %v1223, %v1163
        %v1250 = vmul.f32 %v1225, %v1163
        %v1251 = vmul.f32 %v1227, %v1163
        %v1252 = vmul.f32 %v1229, %v1163
        %v1253 = vmul.f32 %v1231, %v1163
        %v1254 = vmul.f32 %v1233, %v1163
        %v1255 = vmul.f32 %v1235, %v1163
        %v1256 = vmul.f32 %v1237, %v1163
        %v1257 = vmul.f32 %v1239, %v1163
        %v1258 = vmul.f32 %v1241, %v1163
        %v1259 = vmul.f32 %v1243, %v1163
        %v1260 = vadd.f32 %v1244, 1e-12
        %v1261 = vadd.f32 %v1245, 1e-12
        %v1262 = vadd.f32 %v1246, 1e-12
        %v1263 = vadd.f32 %v1247, 1e-12
        %v1264 = vadd.f32 %v1248, 1e-12
        %v1265 = vadd.f32 %v1249, 1e-12
        %v1266 = vadd.f32 %v1250, 1e-12
        %v1267 = vadd.f32 %v1251, 1e-12
        %v1268 = vadd.f32 %v1252, 1e-12
        %v1269 = vadd.f32 %v1253, 1e-12
        %v1270 = vadd.f32 %v1254, 1e-12
        %v1271 = vadd.f32 %v1255, 1e-12
        %v1272 = vadd.f32 %v1256, 1e-12
        %v1273 = vadd.f32 %v1257, 1e-12
        %v1274 = vadd.f32 %v1258, 1e-12
        %v1275 = vadd.f32 %v1259, 1e-12
        %v1276 = vrsqrt.pop %v1260
        %v1277 = vrsqrt.pop %v1261
        %v1278 = vrsqrt.pop %v1262
        %v1279 = vrsqrt.pop %v1263
        %v1280 = vrsqrt.pop %v1264
        %v1281 = vrsqrt.pop %v1265
        %v1282 = vrsqrt.pop %v1266
        %v1283 = vrsqrt.pop %v1267
        %v1284 = vrsqrt.pop %v1268
        %v1285 = vrsqrt.pop %v1269
        %v1286 = vrsqrt.pop %v1270
        %v1287 = vrsqrt.pop %v1271
        %v1288 = vrsqrt.pop %v1272
        %v1289 = vrsqrt.pop %v1273
        %v1290 = vrsqrt.pop %v1274
        %v1291 = vrsqrt.pop %v1275
        %v1292 = vmul.f32 %v1180, %v1276
        %v1293 = vmul.f32 %v1181, %v1277
        %v1294 = vmul.f32 %v1182, %v1278
        %v1295 = vmul.f32 %v1183, %v1279
        %v1296 = vmul.f32 %v1184, %v1280
        %v1297 = vmul.f32 %v1185, %v1281
        %v1298 = vmul.f32 %v1186, %v1282
        %v1299 = vmul.f32 %v1187, %v1283
        %v1300 = vmul.f32 %v1188, %v1284
        %v1301 = vmul.f32 %v1189, %v1285
        %v1302 = vmul.f32 %v1190, %v1286
        %v1303 = vmul.f32 %v1191, %v1287
        %v1304 = vmul.f32 %v1192, %v1288
        %v1305 = vmul.f32 %v1193, %v1289
        %v1306 = vmul.f32 %v1194, %v1290
        %v1307 = vmul.f32 %v1195, %v1291
        %v1308 = vld [vmem:[%s4] sm:$0x1]
        %v1310 = vlaneseq
        %v1311 = vshrl.u32 %v1310, 7
        %v1312 = vsub.s32 0, %v1311
        %v1313 = vrot.slane %v1308, %v1312
        %v1315 = vmul.f32 %v1292, %v1313
        %v1316 = vmul.f32 %v1293, %v1313
        %v1317 = vmul.f32 %v1294, %v1313
        %v1318 = vmul.f32 %v1295, %v1313
        %v1319 = vmul.f32 %v1296, %v1313
        %v1320 = vmul.f32 %v1297, %v1313
        %v1321 = vmul.f32 %v1298, %v1313
        %v1322 = vmul.f32 %v1299, %v1313
        %v1323 = vmul.f32 %v1300, %v1313
        %v1324 = vmul.f32 %v1301, %v1313
        %v1325 = vmul.f32 %v1302, %v1313
        %v1326 = vmul.f32 %v1303, %v1313
        %v1327 = vmul.f32 %v1304, %v1313
        %v1328 = vmul.f32 %v1305, %v1313
        %v1329 = vmul.f32 %v1306, %v1313
        %v1330 = vmul.f32 %v1307, %v1313
        %v1331 = vld [vmem:[%s5] sm:$0x1]
        %v1333 = vlaneseq
        %v1334 = vshrl.u32 %v1333, 7
        %v1335 = vsub.s32 0, %v1334
        %v1336 = vrot.slane %v1331, %v1335
        %v1338 = vadd.f32 %v1315, %v1336
        %v1339 = vadd.f32 %v1316, %v1336
        %v1340 = vadd.f32 %v1317, %v1336
        %v1341 = vadd.f32 %v1318, %v1336
        %v1342 = vadd.f32 %v1319, %v1336
        %v1343 = vadd.f32 %v1320, %v1336
        %v1344 = vadd.f32 %v1321, %v1336
        %v1345 = vadd.f32 %v1322, %v1336
        %v1346 = vadd.f32 %v1323, %v1336
        %v1347 = vadd.f32 %v1324, %v1336
        %v1348 = vadd.f32 %v1325, %v1336
        %v1349 = vadd.f32 %v1326, %v1336
        %v1350 = vadd.f32 %v1327, %v1336
        %v1351 = vadd.f32 %v1328, %v1336
        %v1352 = vadd.f32 %v1329, %v1336
        %v1353 = vadd.f32 %v1330, %v1336
        %v1354 = vpack.c.bf16 %v1339, %v1338
        %v1355 = vpack.c.bf16 %v1341, %v1340
        %v1356 = vpack.c.bf16 %v1343, %v1342
        %v1357 = vpack.c.bf16 %v1345, %v1344
        %v1358 = vpack.c.bf16 %v1347, %v1346
        %v1359 = vpack.c.bf16 %v1349, %v1348
        %v1360 = vpack.c.bf16 %v1351, %v1350
        %v1361 = vpack.c.bf16 %v1353, %v1352
        %v1370 = vunpack.c.l.b16 %v1354
        %v1371 = vunpack.c.h.b16 %v1354
        %v1372 = vunpack.c.l.b16 %v1355
        %v1373 = vunpack.c.h.b16 %v1355
        %v1374 = vunpack.c.l.b16 %v1356
        %v1375 = vunpack.c.h.b16 %v1356
        %v1376 = vunpack.c.l.b16 %v1357
        %v1377 = vunpack.c.h.b16 %v1357
        %v1378 = vunpack.c.l.b16 %v1358
        %v1379 = vunpack.c.h.b16 %v1358
        %v1380 = vunpack.c.l.b16 %v1359
        %v1381 = vunpack.c.h.b16 %v1359
        %v1382 = vunpack.c.l.b16 %v1360
        %v1383 = vunpack.c.h.b16 %v1360
        %v1384 = vunpack.c.l.b16 %v1361
        %v1385 = vunpack.c.h.b16 %v1361
        %v1386 = vpack.c.b16 %v1370, %v1370
        %v1387 = vpack.c.b16 %v1371, %v1371
        %v1388 = vpack.c.b16 %v1372, %v1372
        %v1389 = vpack.c.b16 %v1373, %v1373
        %v1390 = vpack.c.b16 %v1374, %v1374
        %v1391 = vpack.c.b16 %v1375, %v1375
        %v1392 = vpack.c.b16 %v1376, %v1376
        %v1393 = vpack.c.b16 %v1377, %v1377
        %v1394 = vpack.c.b16 %v1378, %v1378
        %v1395 = vpack.c.b16 %v1379, %v1379
        %v1396 = vpack.c.b16 %v1380, %v1380
        %v1397 = vpack.c.b16 %v1381, %v1381
        %v1398 = vpack.c.b16 %v1382, %v1382
        %v1399 = vpack.c.b16 %v1383, %v1383
        %v1400 = vpack.c.b16 %v1384, %v1384
        %v1401 = vpack.c.b16 %v1385, %v1385
        %1418 = vst [vmem:[%s328] sm:$0xf] %v1386
        %1419 = vst [vmem:[%s328 + $0x4] sm:$0xf] %v1387
        %1420 = vst [vmem:[%s328 + $0x8] sm:$0xf] %v1388
        %1421 = vst [vmem:[%s328 + $0xc] sm:$0xf] %v1389
        %1422 = vst [vmem:[%s328 + $0x10] sm:$0xf] %v1390
        %1423 = vst [vmem:[%s328 + $0x14] sm:$0xf] %v1391
        %1424 = vst [vmem:[%s328 + $0x18] sm:$0xf] %v1392
        %1425 = vst [vmem:[%s328 + $0x1c] sm:$0xf] %v1393
        %1426 = vst [vmem:[%s328 + $0x20] sm:$0xf] %v1394
        %1427 = vst [vmem:[%s328 + $0x24] sm:$0xf] %v1395
        %1428 = vst [vmem:[%s328 + $0x28] sm:$0xf] %v1396
        %1429 = vst [vmem:[%s328 + $0x2c] sm:$0xf] %v1397
        %1430 = vst [vmem:[%s328 + $0x30] sm:$0xf] %v1398
        %1431 = vst [vmem:[%s328 + $0x34] sm:$0xf] %v1399
        %1432 = vst [vmem:[%s328 + $0x38] sm:$0xf] %v1400
        %1433 = vst [vmem:[%s328 + $0x3c] sm:$0xf] %v1401
      $region52: #{run.16} parent=43 // pred_fallthru
        _
      %s1434 = smul.u32 16, %s21
      %p1435 = scmp.lt.s32.totalorder %s1434, 31
      %s1436 = scalar_select %p1435, %s1434, 31
      %s1437 = smul.addr %s1436, 4
      %s1438 = scalar_lea.vmem %s6, %s1437
      // Predicated region
      $region53: #{run.16} parent=43 // pred_check
        %p1439 = pneg %p190
      $region54: #{run.16} parent=43 // pred_check_branch
        %1441 = sbr.rel (%p1439) target = $region56
      $region55: #{run.16} parent=43 // pred_region
        %s1442 = smul.u32 16, %s21
      $region56: #{run.16} parent=43 // pred_fallthru
        _
    $region44: #{run.16} parent=5 // pred_fallthru
      _
    %p1443 = scmp.le.s32.totalorder 2, %s12
    // Predicated region
    $region57: #{run.16} parent=5 // pred_check
      %p1444 = pneg %p1443
    $region58: #{run.16} parent=5 // pred_check_branch
      %1446 = sbr.rel (%p1444) target = $region60
    $region59: #{run.16} parent=5 // pred_region
      %s1447 = ssub.s32 %s12, 2
      // Predicated region
      $region61: #{run.16} parent=59 // pred_check
        %p1448 = pneg %p196
      $region62: #{run.16} parent=59 // pred_check_branch
        %1450 = sbr.rel (%p1448) target = $region64
      $region63: #{run.16} parent=59 // pred_region
        %s1451 = smul.u32 16, %s23
        %p1452 = scmp.lt.s32.totalorder %s1451, 31
        %s1453 = scalar_select %p1452, %s1451, 31
        %s1454 = smul.addr %s1453, 4
        %s1455 = scalar_lea.vmem %s6, %s1454
      $region64: #{run.16} parent=59 // pred_fallthru
        _
    $region60: #{run.16} parent=5 // pred_fallthru
      _
  $region6: #{run.16} parent=0 // loop_footer
    %s16 = sadd.s32 1, %s12
  $region7: #{run.16} parent=0 // loop_footer_branch
    %11 = sbr.rel target = $region3
  $region8: #{run.16} parent=0 // loop_exit
    _

</llo_original>
